<compile_context>
chip_gen: v6e
topology: v6e:2x2x1
jax: 0.10.0
libtpu: 0.0.40
codegen_flags: <defaults>
</compile_context>

<pallas_src>
import jax
import jax.numpy as jnp
from jax.experimental import pallas as pl
from jax.experimental.pallas import tpu as pltpu

EPS = 1e-5


def _round_up(x, m):
    return (x + m - 1) // m * m


def double_convolution_forward(x_nchw, params):
    """Forward pass of the PyTorch `double_convolution` module (training-mode BN)."""
    N, Cin, H, W = x_nchw.shape
    Cout = params['conv1_w'].shape[0]

    f32, bf16 = jnp.float32, jnp.bfloat16
    Cp = _round_up(max(Cout, 128), 128)   # lane-dense channel count (zero padded)
    Wp = W + 2                            # width including the zero padding
    LW = H * Wp                           # wide-flattened rows per image (output slab)
    LIN = (H + 2) * Wp + 2                # flattened padded-input rows (+2 so all 9 tap
                                          # slices of length LW stay in bounds)
    OFFS = [dy * Wp + dx for dy in range(3) for dx in range(3)]

    # ----------------------------- parameter packing (glue) -----------------------------
    def pack_conv(w, b, ci_to):
        # torch layout (Co, Ci, 3, 3) -> tap-major (9, ci_to, Cp), zero padded channels
        co, ci = w.shape[0], w.shape[1]
        wt = jnp.transpose(w, (2, 3, 1, 0)).reshape(9, ci, co)
        wt = jnp.pad(wt, ((0, 0), (0, ci_to - ci), (0, Cp - co)))
        bp = jnp.pad(b, (0, Cp - co)).reshape(1, Cp).astype(f32)
        return wt.astype(bf16), bp

    def pack_affine(g, b):
        return (jnp.pad(g, (0, Cp - Cout)).astype(f32),
                jnp.pad(b, (0, Cp - Cout)).astype(f32))

    w1, b1 = pack_conv(params['conv1_w'], params['conv1_b'], Cin)
    w2, b2 = pack_conv(params['conv2_w'], params['conv2_b'], Cp)
    g1, be1 = pack_affine(params['bn1_g'], params['bn1_b'])
    g2, be2 = pack_affine(params['bn2_g'], params['bn2_b'])

    # input: NCHW -> NHWC -> zero pad -> wide-flattened 2-D slab per image
    x = jnp.transpose(x_nchw, (0, 2, 3, 1)).astype(f32)
    xpad = jnp.pad(x, ((0, 0), (1, 1), (1, 1), (0, 0)))
    xflat = jnp.pad(xpad.reshape(N, (H + 2) * Wp, Cin), ((0, 0), (0, 2), (0, 0)))

    # valid-column mask in the wide layout (columns W, W+1 wrap across image rows)
    mask = ((jnp.arange(LW, dtype=jnp.int32) % Wp) < W).astype(f32).reshape(LW, 1)

    par = pltpu.CompilerParams(dimension_semantics=("parallel",))

    # --------------------------------- kernel bodies ------------------------------------
    def conv_stats_kernel(x_ref, w_ref, b_ref, m_ref, y_ref, s_ref, q_ref):
        # x_ref: (LIN, Cin) f32   w_ref: (9, Cin, Cp) bf16   b_ref: (1, Cp) f32
        xv = x_ref[...]
        acc = jnp.zeros((LW, Cp), f32)
        for t, off in enumerate(OFFS):
            lhs = xv[off:off + LW, :].astype(bf16)
            acc = acc + jnp.dot(lhs, w_ref[t], preferred_element_type=f32)
        acc = acc + b_ref[...]
        y_ref[...] = acc
        m = m_ref[...]
        am = acc * m
        s_ref[...] = jnp.sum(am, axis=0, keepdims=True)
        q_ref[...] = jnp.sum(am * acc, axis=0, keepdims=True)

    def bn_relu_conv_stats_kernel(y_ref, sc_ref, sh_ref, w_ref, b_ref, m_ref,
                                  o_ref, s_ref, q_ref, pad_ref):
        m = m_ref[...]
        # BN1 + ReLU, then zero the wrap columns so the padded slab is exact.
        a = jnp.maximum(y_ref[...] * sc_ref[...] + sh_ref[...], 0.0) * m
        pad_ref[...] = jnp.zeros(pad_ref.shape, pad_ref.dtype)
        pad_ref[pl.ds(Wp + 1, LW), :] = a          # interior of the zero-padded slab
        acc = jnp.zeros((LW, Cp), f32)
        for t, off in enumerate(OFFS):
            lhs = pad_ref[pl.ds(off, LW), :].astype(bf16)
            acc = acc + jnp.dot(lhs, w_ref[t], preferred_element_type=f32)
        acc = acc + b_ref[...]
        o_ref[...] = acc
        am = acc * m
        s_ref[...] = jnp.sum(am, axis=0, keepdims=True)
        q_ref[...] = jnp.sum(am * acc, axis=0, keepdims=True)

    def bn_relu_kernel(y_ref, sc_ref, sh_ref, o_ref):
        o_ref[...] = jnp.maximum(y_ref[...] * sc_ref[...] + sh_ref[...], 0.0)

    # ---------------------------------- BlockSpecs --------------------------------------
    def batch_spec(rows, cols):
        return pl.BlockSpec((None, rows, cols), lambda n: (n, 0, 0))

    def const_spec(shape):
        zeros = (0,) * len(shape)
        return pl.BlockSpec(shape, lambda n: zeros)

    stat_shape = jax.ShapeDtypeStruct((N, 1, Cp), f32)

    # ---------------- kernel 1: conv1 + bias + per-image BN stat partials ---------------
    y1, s1, q1 = pl.pallas_call(
        conv_stats_kernel,
        grid=(N,),
        in_specs=[batch_spec(LIN, Cin), const_spec((9, Cin, Cp)),
                  const_spec((1, Cp)), const_spec((LW, 1))],
        out_specs=[batch_spec(LW, Cp), batch_spec(1, Cp), batch_spec(1, Cp)],
        out_shape=[jax.ShapeDtypeStruct((N, LW, Cp), f32), stat_shape, stat_shape],
        compiler_params=par,
    )(xflat, w1, b1, mask)

    # per-channel BN finalisation (tiny glue; biased variance, training-mode statistics)
    cnt = float(N * H * W)

    def bn_scale_shift(s, q, g, b):
        mean = jnp.sum(s, axis=0) / cnt
        var = jnp.sum(q, axis=0) / cnt - mean * mean
        scale = g.reshape(1, Cp) * jax.lax.rsqrt(var + EPS)
        shift = b.reshape(1, Cp) - mean * scale
        return scale.astype(f32), shift.astype(f32)

    sc1, sh1 = bn_scale_shift(s1, q1, g1, be1)

    # ---------- kernel 2: BN1 + ReLU + zero-pad + conv2 + bias + stat partials ----------
    y2, s2, q2 = pl.pallas_call(
        bn_relu_conv_stats_kernel,
        grid=(N,),
        in_specs=[batch_spec(LW, Cp), const_spec((1, Cp)), const_spec((1, Cp)),
                  const_spec((9, Cp, Cp)), const_spec((1, Cp)), const_spec((LW, 1))],
        out_specs=[batch_spec(LW, Cp), batch_spec(1, Cp), batch_spec(1, Cp)],
        out_shape=[jax.ShapeDtypeStruct((N, LW, Cp), f32), stat_shape, stat_shape],
        scratch_shapes=[pltpu.VMEM((LIN, Cp), f32)],
        compiler_params=par,
    )(y1, sc1, sh1, w2, b2, mask)

    sc2, sh2 = bn_scale_shift(s2, q2, g2, be2)

    # ----------------------------- kernel 3: BN2 + ReLU ---------------------------------
    out_flat = pl.pallas_call(
        bn_relu_kernel,
        grid=(N,),
        in_specs=[batch_spec(LW, Cp), const_spec((1, Cp)), const_spec((1, Cp))],
        out_specs=batch_spec(LW, Cp),
        out_shape=jax.ShapeDtypeStruct((N, LW, Cp), f32),
        compiler_params=par,
    )(y2, sc2, sh2)

    # drop the wrap columns / padded channels and go back to NCHW
    out = out_flat.reshape(N, H, Wp, Cp)[:, :, :W, :Cout]
    return jnp.transpose(out, (0, 3, 1, 2))


# ------------------------------------ reference ------------------------------------------

def double_convolution_reference(x, p):
    """Pure-JAX f32 reference with identical (training-mode) BN semantics."""
    def conv(x, w, b):
        y = jax.lax.conv_general_dilated(
            x, w, window_strides=(1, 1), padding='SAME',
            dimension_numbers=('NCHW', 'OIHW', 'NCHW'),
            precision=jax.lax.Precision.HIGHEST)
        return y + b[None, :, None, None]

    def bn_relu(y, g, b):
        mean = jnp.mean(y, axis=(0, 2, 3), keepdims=True)
        var = jnp.mean(jnp.square(y - mean), axis=(0, 2, 3), keepdims=True)
        yn = (y - mean) * jax.lax.rsqrt(var + EPS)
        return jnp.maximum(yn * g[None, :, None, None] + b[None, :, None, None], 0.0)

    y = bn_relu(conv(x, p['conv1_w'], p['conv1_b']), p['bn1_g'], p['bn1_b'])
    y = bn_relu(conv(y, p['conv2_w'], p['conv2_b']), p['bn2_g'], p['bn2_b'])
    return y


def init_params(key, cin, cout):
    ks = jax.random.split(key, 8)
    n = jax.random.normal
    return {
        'conv1_w': n(ks[0], (cout, cin, 3, 3), jnp.float32) * 0.1,
        'conv1_b': n(ks[1], (cout,), jnp.float32) * 0.1,
        'bn1_g': 1.0 + 0.1 * n(ks[2], (cout,), jnp.float32),
        'bn1_b': 0.1 * n(ks[3], (cout,), jnp.float32),
        'conv2_w': n(ks[4], (cout, cout, 3, 3), jnp.float32) * 0.1,
        'conv2_b': n(ks[5], (cout,), jnp.float32) * 0.1,
        'bn2_g': 1.0 + 0.1 * n(ks[6], (cout,), jnp.float32),
        'bn2_b': 0.1 * n(ks[7], (cout,), jnp.float32),
    }


if __name__ == "__main__":
    key = jax.random.PRNGKey(0)
    kx, kp = jax.random.split(key)

    N, CIN, H, W = 4, 4, 16, 16
    COUT = 64                      # padded to 128 lanes internally

    x = jax.random.normal(kx, (N, CIN, H, W), jnp.float32)
    params = init_params(kp, CIN, COUT)

    fwd = jax.jit(double_convolution_forward)
    out = jax.block_until_ready(fwd(x, params))

    assert out.shape == (N, COUT, H, W), out.shape
    assert bool(jnp.all(jnp.isfinite(out)))

    ref = jax.block_until_ready(jax.jit(double_convolution_reference)(x, params))
    max_err = float(jnp.max(jnp.abs(out - ref)))
    mean_err = float(jnp.mean(jnp.abs(out - ref)))
    # bf16 MXU inputs (with f32 accumulation) vs. the all-f32 reference
    assert max_err < 0.15 and mean_err < 0.02, (max_err, mean_err)

    print("KERNEL_OK")
</pallas_src>

<mosaic_0001>
module attributes {stable_mosaic.version = 11 : i64} {
  func.func @conv_stats_kernel(%arg0: i32, %arg1: memref<1x326x4xf32, #tpu.memory_space<vmem>>, %arg2: memref<9x4x128xbf16, #tpu.memory_space<vmem>>, %arg3: memref<1x128xf32, #tpu.memory_space<vmem>>, %arg4: memref<288x1xf32, #tpu.memory_space<vmem>>, %arg5: memref<1x288x128xf32, #tpu.memory_space<vmem>>, %arg6: memref<1x1x128xf32, #tpu.memory_space<vmem>>, %arg7: memref<1x1x128xf32, #tpu.memory_space<vmem>>) attributes {dimension_semantics = [#tpu.dimension_semantics<parallel>], iteration_bounds = array<i64: 4>, scalar_prefetch = 0 : i64, scratch_operands = 0 : i64, tpu.core_type = #tpu.core_type<tc>, window_params = [{transform_indices = @transform_0, window_bounds = array<i64: 1, 326, 4>}, {pipeline_mode = #tpu.pipeline_mode<synchronous>, transform_indices = @transform_1, window_bounds = array<i64: 9, 4, 128>}, {pipeline_mode = #tpu.pipeline_mode<synchronous>, transform_indices = @transform_2, window_bounds = array<i64: 1, 128>}, {pipeline_mode = #tpu.pipeline_mode<synchronous>, transform_indices = @transform_3, window_bounds = array<i64: 288, 1>}, {transform_indices = @transform_4, window_bounds = array<i64: 1, 288, 128>}, {transform_indices = @transform_5, window_bounds = array<i64: 1, 1, 128>}, {transform_indices = @transform_6, window_bounds = array<i64: 1, 1, 128>}]} {
    %c0 = arith.constant 0 : index
    %c0_0 = arith.constant 0 : index
    %c0_1 = arith.constant 0 : index
    %0 = vector.load %arg1[%c0, %c0_0, %c0_1] : memref<1x326x4xf32, #tpu.memory_space<vmem>>, vector<1x326x4xf32>
    %1 = vector.shape_cast %0 : vector<1x326x4xf32> to vector<326x4xf32>
    %cst = arith.constant 0.000000e+00 : f32
    %2 = vector.broadcast %cst : f32 to vector<288x128xf32>
    %3 = vector.extract_strided_slice %1 {offsets = [0, 0], sizes = [288, 4], strides = [1, 1]} : vector<326x4xf32> to vector<288x4xf32>
    %4 = arith.truncf %3 : vector<288x4xf32> to vector<288x4xbf16>
    %c0_2 = arith.constant 0 : index
    %c0_3 = arith.constant 0 : index
    %c0_4 = arith.constant 0 : index
    %5 = vector.load %arg2[%c0_2, %c0_3, %c0_4] : memref<9x4x128xbf16, #tpu.memory_space<vmem>>, vector<1x4x128xbf16>
    %6 = vector.shape_cast %5 : vector<1x4x128xbf16> to vector<4x128xbf16>
    %cst_5 = arith.constant dense<0.000000e+00> : vector<288x128xf32>
    %7 = tpu.matmul %4, %6, %cst_5 {dimension_numbers = #tpu.dot_dimension_numbers<[1], [0], [0], [1], [0, 0, 1, 1], [], []>} : vector<288x4xbf16>, vector<4x128xbf16>, vector<288x128xf32> -> vector<288x128xf32>
    %8 = arith.addf %2, %7 : vector<288x128xf32>
    %9 = vector.extract_strided_slice %1 {offsets = [1, 0], sizes = [288, 4], strides = [1, 1]} : vector<326x4xf32> to vector<288x4xf32>
    %10 = arith.truncf %9 : vector<288x4xf32> to vector<288x4xbf16>
    %c1 = arith.constant 1 : index
    %c0_6 = arith.constant 0 : index
    %c0_7 = arith.constant 0 : index
    %11 = vector.load %arg2[%c1, %c0_6, %c0_7] : memref<9x4x128xbf16, #tpu.memory_space<vmem>>, vector<1x4x128xbf16>
    %12 = vector.shape_cast %11 : vector<1x4x128xbf16> to vector<4x128xbf16>
    %cst_8 = arith.constant dense<0.000000e+00> : vector<288x128xf32>
    %13 = tpu.matmul %10, %12, %cst_8 {dimension_numbers = #tpu.dot_dimension_numbers<[1], [0], [0], [1], [0, 0, 1, 1], [], []>} : vector<288x4xbf16>, vector<4x128xbf16>, vector<288x128xf32> -> vector<288x128xf32>
    %14 = arith.addf %8, %13 : vector<288x128xf32>
    %15 = vector.extract_strided_slice %1 {offsets = [2, 0], sizes = [288, 4], strides = [1, 1]} : vector<326x4xf32> to vector<288x4xf32>
    %16 = arith.truncf %15 : vector<288x4xf32> to vector<288x4xbf16>
    %c2 = arith.constant 2 : index
    %c0_9 = arith.constant 0 : index
    %c0_10 = arith.constant 0 : index
    %17 = vector.load %arg2[%c2, %c0_9, %c0_10] : memref<9x4x128xbf16, #tpu.memory_space<vmem>>, vector<1x4x128xbf16>
    %18 = vector.shape_cast %17 : vector<1x4x128xbf16> to vector<4x128xbf16>
    %cst_11 = arith.constant dense<0.000000e+00> : vector<288x128xf32>
    %19 = tpu.matmul %16, %18, %cst_11 {dimension_numbers = #tpu.dot_dimension_numbers<[1], [0], [0], [1], [0, 0, 1, 1], [], []>} : vector<288x4xbf16>, vector<4x128xbf16>, vector<288x128xf32> -> vector<288x128xf32>
    %20 = arith.addf %14, %19 : vector<288x128xf32>
    %21 = vector.extract_strided_slice %1 {offsets = [18, 0], sizes = [288, 4], strides = [1, 1]} : vector<326x4xf32> to vector<288x4xf32>
    %22 = arith.truncf %21 : vector<288x4xf32> to vector<288x4xbf16>
    %c3 = arith.constant 3 : index
    %c0_12 = arith.constant 0 : index
    %c0_13 = arith.constant 0 : index
    %23 = vector.load %arg2[%c3, %c0_12, %c0_13] : memref<9x4x128xbf16, #tpu.memory_space<vmem>>, vector<1x4x128xbf16>
    %24 = vector.shape_cast %23 : vector<1x4x128xbf16> to vector<4x128xbf16>
    %cst_14 = arith.constant dense<0.000000e+00> : vector<288x128xf32>
    %25 = tpu.matmul %22, %24, %cst_14 {dimension_numbers = #tpu.dot_dimension_numbers<[1], [0], [0], [1], [0, 0, 1, 1], [], []>} : vector<288x4xbf16>, vector<4x128xbf16>, vector<288x128xf32> -> vector<288x128xf32>
    %26 = arith.addf %20, %25 : vector<288x128xf32>
    %27 = vector.extract_strided_slice %1 {offsets = [19, 0], sizes = [288, 4], strides = [1, 1]} : vector<326x4xf32> to vector<288x4xf32>
    %28 = arith.truncf %27 : vector<288x4xf32> to vector<288x4xbf16>
    %c4 = arith.constant 4 : index
    %c0_15 = arith.constant 0 : index
    %c0_16 = arith.constant 0 : index
    %29 = vector.load %arg2[%c4, %c0_15, %c0_16] : memref<9x4x128xbf16, #tpu.memory_space<vmem>>, vector<1x4x128xbf16>
    %30 = vector.shape_cast %29 : vector<1x4x128xbf16> to vector<4x128xbf16>
    %cst_17 = arith.constant dense<0.000000e+00> : vector<288x128xf32>
    %31 = tpu.matmul %28, %30, %cst_17 {dimension_numbers = #tpu.dot_dimension_numbers<[1], [0], [0], [1], [0, 0, 1, 1], [], []>} : vector<288x4xbf16>, vector<4x128xbf16>, vector<288x128xf32> -> vector<288x128xf32>
    %32 = arith.addf %26, %31 : vector<288x128xf32>
    %33 = vector.extract_strided_slice %1 {offsets = [20, 0], sizes = [288, 4], strides = [1, 1]} : vector<326x4xf32> to vector<288x4xf32>
    %34 = arith.truncf %33 : vector<288x4xf32> to vector<288x4xbf16>
    %c5 = arith.constant 5 : index
    %c0_18 = arith.constant 0 : index
    %c0_19 = arith.constant 0 : index
    %35 = vector.load %arg2[%c5, %c0_18, %c0_19] : memref<9x4x128xbf16, #tpu.memory_space<vmem>>, vector<1x4x128xbf16>
    %36 = vector.shape_cast %35 : vector<1x4x128xbf16> to vector<4x128xbf16>
    %cst_20 = arith.constant dense<0.000000e+00> : vector<288x128xf32>
    %37 = tpu.matmul %34, %36, %cst_20 {dimension_numbers = #tpu.dot_dimension_numbers<[1], [0], [0], [1], [0, 0, 1, 1], [], []>} : vector<288x4xbf16>, vector<4x128xbf16>, vector<288x128xf32> -> vector<288x128xf32>
    %38 = arith.addf %32, %37 : vector<288x128xf32>
    %39 = vector.extract_strided_slice %1 {offsets = [36, 0], sizes = [288, 4], strides = [1, 1]} : vector<326x4xf32> to vector<288x4xf32>
    %40 = arith.truncf %39 : vector<288x4xf32> to vector<288x4xbf16>
    %c6 = arith.constant 6 : index
    %c0_21 = arith.constant 0 : index
    %c0_22 = arith.constant 0 : index
    %41 = vector.load %arg2[%c6, %c0_21, %c0_22] : memref<9x4x128xbf16, #tpu.memory_space<vmem>>, vector<1x4x128xbf16>
    %42 = vector.shape_cast %41 : vector<1x4x128xbf16> to vector<4x128xbf16>
    %cst_23 = arith.constant dense<0.000000e+00> : vector<288x128xf32>
    %43 = tpu.matmul %40, %42, %cst_23 {dimension_numbers = #tpu.dot_dimension_numbers<[1], [0], [0], [1], [0, 0, 1, 1], [], []>} : vector<288x4xbf16>, vector<4x128xbf16>, vector<288x128xf32> -> vector<288x128xf32>
    %44 = arith.addf %38, %43 : vector<288x128xf32>
    %45 = vector.extract_strided_slice %1 {offsets = [37, 0], sizes = [288, 4], strides = [1, 1]} : vector<326x4xf32> to vector<288x4xf32>
    %46 = arith.truncf %45 : vector<288x4xf32> to vector<288x4xbf16>
    %c7 = arith.constant 7 : index
    %c0_24 = arith.constant 0 : index
    %c0_25 = arith.constant 0 : index
    %47 = vector.load %arg2[%c7, %c0_24, %c0_25] : memref<9x4x128xbf16, #tpu.memory_space<vmem>>, vector<1x4x128xbf16>
    %48 = vector.shape_cast %47 : vector<1x4x128xbf16> to vector<4x128xbf16>
    %cst_26 = arith.constant dense<0.000000e+00> : vector<288x128xf32>
    %49 = tpu.matmul %46, %48, %cst_26 {dimension_numbers = #tpu.dot_dimension_numbers<[1], [0], [0], [1], [0, 0, 1, 1], [], []>} : vector<288x4xbf16>, vector<4x128xbf16>, vector<288x128xf32> -> vector<288x128xf32>
    %50 = arith.addf %44, %49 : vector<288x128xf32>
    %51 = vector.extract_strided_slice %1 {offsets = [38, 0], sizes = [288, 4], strides = [1, 1]} : vector<326x4xf32> to vector<288x4xf32>
    %52 = arith.truncf %51 : vector<288x4xf32> to vector<288x4xbf16>
    %c8 = arith.constant 8 : index
    %c0_27 = arith.constant 0 : index
    %c0_28 = arith.constant 0 : index
    %53 = vector.load %arg2[%c8, %c0_27, %c0_28] : memref<9x4x128xbf16, #tpu.memory_space<vmem>>, vector<1x4x128xbf16>
    %54 = vector.shape_cast %53 : vector<1x4x128xbf16> to vector<4x128xbf16>
    %cst_29 = arith.constant dense<0.000000e+00> : vector<288x128xf32>
    %55 = tpu.matmul %52, %54, %cst_29 {dimension_numbers = #tpu.dot_dimension_numbers<[1], [0], [0], [1], [0, 0, 1, 1], [], []>} : vector<288x4xbf16>, vector<4x128xbf16>, vector<288x128xf32> -> vector<288x128xf32>
    %56 = arith.addf %50, %55 : vector<288x128xf32>
    %c0_30 = arith.constant 0 : index
    %c0_31 = arith.constant 0 : index
    %57 = vector.load %arg3[%c0_30, %c0_31] : memref<1x128xf32, #tpu.memory_space<vmem>>, vector<1x128xf32>
    %58 = vector.broadcast %57 : vector<1x128xf32> to vector<288x128xf32>
    %59 = arith.addf %56, %58 : vector<288x128xf32>
    %c0_32 = arith.constant 0 : index
    %c0_33 = arith.constant 0 : index
    %c0_34 = arith.constant 0 : index
    %60 = vector.load %arg5[%c0_32, %c0_33, %c0_34] : memref<1x288x128xf32, #tpu.memory_space<vmem>>, vector<1x288x128xf32>
    %61 = vector.shape_cast %60 : vector<1x288x128xf32> to vector<288x128xf32>
    %62 = vector.shape_cast %59 : vector<288x128xf32> to vector<1x288x128xf32>
    tpu.vector_store %arg5[%c0_32, %c0_33, %c0_34], %62 {strides = array<i32>} : memref<1x288x128xf32, #tpu.memory_space<vmem>>, vector<1x288x128xf32>,
    %c0_35 = arith.constant 0 : index
    %c0_36 = arith.constant 0 : index
    %63 = vector.load %arg4[%c0_35, %c0_36] : memref<288x1xf32, #tpu.memory_space<vmem>>, vector<288x1xf32>
    %64 = vector.broadcast %63 : vector<288x1xf32> to vector<288x128xf32>
    %65 = arith.mulf %59, %64 : vector<288x128xf32>
    %cst_37 = arith.constant dense<0.000000e+00> : vector<128xf32>
    %66 = vector.multi_reduction <add>, %65, %cst_37 [0] : vector<288x128xf32> to vector<128xf32>
    %67 = vector.shape_cast %66 : vector<128xf32> to vector<1x128xf32>
    %c0_38 = arith.constant 0 : index
    %c0_39 = arith.constant 0 : index
    %c0_40 = arith.constant 0 : index
    %68 = vector.load %arg6[%c0_38, %c0_39, %c0_40] : memref<1x1x128xf32, #tpu.memory_space<vmem>>, vector<1x1x128xf32>
    %69 = vector.shape_cast %68 : vector<1x1x128xf32> to vector<1x128xf32>
    %70 = vector.shape_cast %67 : vector<1x128xf32> to vector<1x1x128xf32>
    tpu.vector_store %arg6[%c0_38, %c0_39, %c0_40], %70 {strides = array<i32>} : memref<1x1x128xf32, #tpu.memory_space<vmem>>, vector<1x1x128xf32>,
    %71 = arith.mulf %65, %59 : vector<288x128xf32>
    %cst_41 = arith.constant dense<0.000000e+00> : vector<128xf32>
    %72 = vector.multi_reduction <add>, %71, %cst_41 [0] : vector<288x128xf32> to vector<128xf32>
    %73 = vector.shape_cast %72 : vector<128xf32> to vector<1x128xf32>
    %c0_42 = arith.constant 0 : index
    %c0_43 = arith.constant 0 : index
    %c0_44 = arith.constant 0 : index
    %74 = vector.load %arg7[%c0_42, %c0_43, %c0_44] : memref<1x1x128xf32, #tpu.memory_space<vmem>>, vector<1x1x128xf32>
    %75 = vector.shape_cast %74 : vector<1x1x128xf32> to vector<1x128xf32>
    %76 = vector.shape_cast %73 : vector<1x128xf32> to vector<1x1x128xf32>
    tpu.vector_store %arg7[%c0_42, %c0_43, %c0_44], %76 {strides = array<i32>} : memref<1x1x128xf32, #tpu.memory_space<vmem>>, vector<1x1x128xf32>,
    return
  }
  func.func @transform_0(%arg0: i32) -> (i32, i32, i32) {
    %c0_i32 = arith.constant 0 : i32
    %c0_i32_0 = arith.constant 0 : i32
    %c0_i32_1 = arith.constant 0 : i32
    return %arg0, %c0_i32, %c0_i32_0 : i32, i32, i32
  }
  func.func @transform_1(%arg0: i32) -> (i32, i32, i32) {
    %c0_i32 = arith.constant 0 : i32
    %c0_i32_0 = arith.constant 0 : i32
    %c0_i32_1 = arith.constant 0 : i32
    %c0_i32_2 = arith.constant 0 : i32
    return %c0_i32, %c0_i32_0, %c0_i32_1 : i32, i32, i32
  }
  func.func @transform_2(%arg0: i32) -> (i32, i32) {
    %c0_i32 = arith.constant 0 : i32
    %c0_i32_0 = arith.constant 0 : i32
    %c0_i32_1 = arith.constant 0 : i32
    return %c0_i32, %c0_i32_0 : i32, i32
  }
  func.func @transform_3(%arg0: i32) -> (i32, i32) {
    %c0_i32 = arith.constant 0 : i32
    %c0_i32_0 = arith.constant 0 : i32
    %c0_i32_1 = arith.constant 0 : i32
    return %c0_i32, %c0_i32_0 : i32, i32
  }
  func.func @transform_4(%arg0: i32) -> (i32, i32, i32) {
    %c0_i32 = arith.constant 0 : i32
    %c0_i32_0 = arith.constant 0 : i32
    %c0_i32_1 = arith.constant 0 : i32
    return %arg0, %c0_i32, %c0_i32_0 : i32, i32, i32
  }
  func.func @transform_5(%arg0: i32) -> (i32, i32, i32) {
    %c0_i32 = arith.constant 0 : i32
    %c0_i32_0 = arith.constant 0 : i32
    %c0_i32_1 = arith.constant 0 : i32
    return %arg0, %c0_i32, %c0_i32_0 : i32, i32, i32
  }
  func.func @transform_6(%arg0: i32) -> (i32, i32, i32) {
    %c0_i32 = arith.constant 0 : i32
    %c0_i32_0 = arith.constant 0 : i32
    %c0_i32_1 = arith.constant 0 : i32
    return %arg0, %c0_i32, %c0_i32_0 : i32, i32, i32
  }
}

module attributes {stable_mosaic.version = 11 : i64} {
  func.func @bn_relu_conv_stats_kernel(%arg0: i32, %arg1: memref<1x288x128xf32, #tpu.memory_space<vmem>>, %arg2: memref<1x128xf32, #tpu.memory_space<vmem>>, %arg3: memref<1x128xf32, #tpu.memory_space<vmem>>, %arg4: memref<9x128x128xbf16, #tpu.memory_space<vmem>>, %arg5: memref<1x128xf32, #tpu.memory_space<vmem>>, %arg6: memref<288x1xf32, #tpu.memory_space<vmem>>, %arg7: memref<1x288x128xf32, #tpu.memory_space<vmem>>, %arg8: memref<1x1x128xf32, #tpu.memory_space<vmem>>, %arg9: memref<1x1x128xf32, #tpu.memory_space<vmem>>, %arg10: memref<326x128xf32, #tpu.memory_space<vmem>>) attributes {dimension_semantics = [#tpu.dimension_semantics<parallel>], iteration_bounds = array<i64: 4>, scalar_prefetch = 0 : i64, scratch_operands = 1 : i64, tpu.core_type = #tpu.core_type<tc>, window_params = [{transform_indices = @transform_0, window_bounds = array<i64: 1, 288, 128>}, {pipeline_mode = #tpu.pipeline_mode<synchronous>, transform_indices = @transform_1, window_bounds = array<i64: 1, 128>}, {pipeline_mode = #tpu.pipeline_mode<synchronous>, transform_indices = @transform_2, window_bounds = array<i64: 1, 128>}, {pipeline_mode = #tpu.pipeline_mode<synchronous>, transform_indices = @transform_3, window_bounds = array<i64: 9, 128, 128>}, {pipeline_mode = #tpu.pipeline_mode<synchronous>, transform_indices = @transform_4, window_bounds = array<i64: 1, 128>}, {pipeline_mode = #tpu.pipeline_mode<synchronous>, transform_indices = @transform_5, window_bounds = array<i64: 288, 1>}, {transform_indices = @transform_6, window_bounds = array<i64: 1, 288, 128>}, {transform_indices = @transform_7, window_bounds = array<i64: 1, 1, 128>}, {transform_indices = @transform_8, window_bounds = array<i64: 1, 1, 128>}]} {
    %c0 = arith.constant 0 : index
    %c0_0 = arith.constant 0 : index
    %0 = vector.load %arg6[%c0, %c0_0] : memref<288x1xf32, #tpu.memory_space<vmem>>, vector<288x1xf32>
    %c0_1 = arith.constant 0 : index
    %c0_2 = arith.constant 0 : index
    %c0_3 = arith.constant 0 : index
    %1 = vector.load %arg1[%c0_1, %c0_2, %c0_3] : memref<1x288x128xf32, #tpu.memory_space<vmem>>, vector<1x288x128xf32>
    %2 = vector.shape_cast %1 : vector<1x288x128xf32> to vector<288x128xf32>
    %c0_4 = arith.constant 0 : index
    %c0_5 = arith.constant 0 : index
    %3 = vector.load %arg2[%c0_4, %c0_5] : memref<1x128xf32, #tpu.memory_space<vmem>>, vector<1x128xf32>
    %4 = vector.broadcast %3 : vector<1x128xf32> to vector<288x128xf32>
    %5 = arith.mulf %2, %4 : vector<288x128xf32>
    %c0_6 = arith.constant 0 : index
    %c0_7 = arith.constant 0 : index
    %6 = vector.load %arg3[%c0_6, %c0_7] : memref<1x128xf32, #tpu.memory_space<vmem>>, vector<1x128xf32>
    %7 = vector.broadcast %6 : vector<1x128xf32> to vector<288x128xf32>
    %8 = arith.addf %5, %7 : vector<288x128xf32>
    %cst = arith.constant 0.000000e+00 : f32
    %9 = vector.broadcast %cst : f32 to vector<288x128xf32>
    %10 = arith.maximumf %8, %9 : vector<288x128xf32>
    %11 = vector.broadcast %0 : vector<288x1xf32> to vector<288x128xf32>
    %12 = arith.mulf %10, %11 : vector<288x128xf32>
    %cst_8 = arith.constant 0.000000e+00 : f32
    %13 = vector.broadcast %cst_8 : f32 to vector<326x128xf32>
    %c0_9 = arith.constant 0 : index
    %c0_10 = arith.constant 0 : index
    %14 = vector.load %arg10[%c0_9, %c0_10] : memref<326x128xf32, #tpu.memory_space<vmem>>, vector<326x128xf32>
    tpu.vector_store %arg10[%c0_9, %c0_10], %13 {strides = array<i32>} : memref<326x128xf32, #tpu.memory_space<vmem>>, vector<326x128xf32>,
    %c19 = arith.constant 19 : index
    %c0_11 = arith.constant 0 : index
    %15 = vector.load %arg10[%c19, %c0_11] : memref<326x128xf32, #tpu.memory_space<vmem>>, vector<288x128xf32>
    tpu.vector_store %arg10[%c19, %c0_11], %12 {strides = array<i32>} : memref<326x128xf32, #tpu.memory_space<vmem>>, vector<288x128xf32>,
    %cst_12 = arith.constant 0.000000e+00 : f32
    %16 = vector.broadcast %cst_12 : f32 to vector<288x128xf32>
    %c0_13 = arith.constant 0 : index
    %c0_14 = arith.constant 0 : index
    %17 = vector.load %arg10[%c0_13, %c0_14] : memref<326x128xf32, #tpu.memory_space<vmem>>, vector<288x128xf32>
    %18 = arith.truncf %17 : vector<288x128xf32> to vector<288x128xbf16>
    %c0_15 = arith.constant 0 : index
    %c0_16 = arith.constant 0 : index
    %c0_17 = arith.constant 0 : index
    %19 = vector.load %arg4[%c0_15, %c0_16, %c0_17] : memref<9x128x128xbf16, #tpu.memory_space<vmem>>, vector<1x128x128xbf16>
    %20 = vector.shape_cast %19 : vector<1x128x128xbf16> to vector<128x128xbf16>
    %cst_18 = arith.constant dense<0.000000e+00> : vector<288x128xf32>
    %21 = tpu.matmul %18, %20, %cst_18 {dimension_numbers = #tpu.dot_dimension_numbers<[1], [0], [0], [1], [0, 0, 1, 1], [], []>} : vector<288x128xbf16>, vector<128x128xbf16>, vector<288x128xf32> -> vector<288x128xf32>
    %22 = arith.addf %16, %21 : vector<288x128xf32>
    %c1 = arith.constant 1 : index
    %c0_19 = arith.constant 0 : index
    %23 = vector.load %arg10[%c1, %c0_19] : memref<326x128xf32, #tpu.memory_space<vmem>>, vector<288x128xf32>
    %24 = arith.truncf %23 : vector<288x128xf32> to vector<288x128xbf16>
    %c1_20 = arith.constant 1 : index
    %c0_21 = arith.constant 0 : index
    %c0_22 = arith.constant 0 : index
    %25 = vector.load %arg4[%c1_20, %c0_21, %c0_22] : memref<9x128x128xbf16, #tpu.memory_space<vmem>>, vector<1x128x128xbf16>
    %26 = vector.shape_cast %25 : vector<1x128x128xbf16> to vector<128x128xbf16>
    %cst_23 = arith.constant dense<0.000000e+00> : vector<288x128xf32>
    %27 = tpu.matmul %24, %26, %cst_23 {dimension_numbers = #tpu.dot_dimension_numbers<[1], [0], [0], [1], [0, 0, 1, 1], [], []>} : vector<288x128xbf16>, vector<128x128xbf16>, vector<288x128xf32> -> vector<288x128xf32>
    %28 = arith.addf %22, %27 : vector<288x128xf32>
    %c2 = arith.constant 2 : index
    %c0_24 = arith.constant 0 : index
    %29 = vector.load %arg10[%c2, %c0_24] : memref<326x128xf32, #tpu.memory_space<vmem>>, vector<288x128xf32>
    %30 = arith.truncf %29 : vector<288x128xf32> to vector<288x128xbf16>
    %c2_25 = arith.constant 2 : index
    %c0_26 = arith.constant 0 : index
    %c0_27 = arith.constant 0 : index
    %31 = vector.load %arg4[%c2_25, %c0_26, %c0_27] : memref<9x128x128xbf16, #tpu.memory_space<vmem>>, vector<1x128x128xbf16>
    %32 = vector.shape_cast %31 : vector<1x128x128xbf16> to vector<128x128xbf16>
    %cst_28 = arith.constant dense<0.000000e+00> : vector<288x128xf32>
    %33 = tpu.matmul %30, %32, %cst_28 {dimension_numbers = #tpu.dot_dimension_numbers<[1], [0], [0], [1], [0, 0, 1, 1], [], []>} : vector<288x128xbf16>, vector<128x128xbf16>, vector<288x128xf32> -> vector<288x128xf32>
    %34 = arith.addf %28, %33 : vector<288x128xf32>
    %c18 = arith.constant 18 : index
    %c0_29 = arith.constant 0 : index
    %35 = vector.load %arg10[%c18, %c0_29] : memref<326x128xf32, #tpu.memory_space<vmem>>, vector<288x128xf32>
    %36 = arith.truncf %35 : vector<288x128xf32> to vector<288x128xbf16>
    %c3 = arith.constant 3 : index
    %c0_30 = arith.constant 0 : index
    %c0_31 = arith.constant 0 : index
    %37 = vector.load %arg4[%c3, %c0_30, %c0_31] : memref<9x128x128xbf16, #tpu.memory_space<vmem>>, vector<1x128x128xbf16>
    %38 = vector.shape_cast %37 : vector<1x128x128xbf16> to vector<128x128xbf16>
    %cst_32 = arith.constant dense<0.000000e+00> : vector<288x128xf32>
    %39 = tpu.matmul %36, %38, %cst_32 {dimension_numbers = #tpu.dot_dimension_numbers<[1], [0], [0], [1], [0, 0, 1, 1], [], []>} : vector<288x128xbf16>, vector<128x128xbf16>, vector<288x128xf32> -> vector<288x128xf32>
    %40 = arith.addf %34, %39 : vector<288x128xf32>
    %c19_33 = arith.constant 19 : index
    %c0_34 = arith.constant 0 : index
    %41 = vector.load %arg10[%c19_33, %c0_34] : memref<326x128xf32, #tpu.memory_space<vmem>>, vector<288x128xf32>
    %42 = arith.truncf %41 : vector<288x128xf32> to vector<288x128xbf16>
    %c4 = arith.constant 4 : index
    %c0_35 = arith.constant 0 : index
    %c0_36 = arith.constant 0 : index
    %43 = vector.load %arg4[%c4, %c0_35, %c0_36] : memref<9x128x128xbf16, #tpu.memory_space<vmem>>, vector<1x128x128xbf16>
    %44 = vector.shape_cast %43 : vector<1x128x128xbf16> to vector<128x128xbf16>
    %cst_37 = arith.constant dense<0.000000e+00> : vector<288x128xf32>
    %45 = tpu.matmul %42, %44, %cst_37 {dimension_numbers = #tpu.dot_dimension_numbers<[1], [0], [0], [1], [0, 0, 1, 1], [], []>} : vector<288x128xbf16>, vector<128x128xbf16>, vector<288x128xf32> -> vector<288x128xf32>
    %46 = arith.addf %40, %45 : vector<288x128xf32>
    %c20 = arith.constant 20 : index
    %c0_38 = arith.constant 0 : index
    %47 = vector.load %arg10[%c20, %c0_38] : memref<326x128xf32, #tpu.memory_space<vmem>>, vector<288x128xf32>
    %48 = arith.truncf %47 : vector<288x128xf32> to vector<288x128xbf16>
    %c5 = arith.constant 5 : index
    %c0_39 = arith.constant 0 : index
    %c0_40 = arith.constant 0 : index
    %49 = vector.load %arg4[%c5, %c0_39, %c0_40] : memref<9x128x128xbf16, #tpu.memory_space<vmem>>, vector<1x128x128xbf16>
    %50 = vector.shape_cast %49 : vector<1x128x128xbf16> to vector<128x128xbf16>
    %cst_41 = arith.constant dense<0.000000e+00> : vector<288x128xf32>
    %51 = tpu.matmul %48, %50, %cst_41 {dimension_numbers = #tpu.dot_dimension_numbers<[1], [0], [0], [1], [0, 0, 1, 1], [], []>} : vector<288x128xbf16>, vector<128x128xbf16>, vector<288x128xf32> -> vector<288x128xf32>
    %52 = arith.addf %46, %51 : vector<288x128xf32>
    %c36 = arith.constant 36 : index
    %c0_42 = arith.constant 0 : index
    %53 = vector.load %arg10[%c36, %c0_42] : memref<326x128xf32, #tpu.memory_space<vmem>>, vector<288x128xf32>
    %54 = arith.truncf %53 : vector<288x128xf32> to vector<288x128xbf16>
    %c6 = arith.constant 6 : index
    %c0_43 = arith.constant 0 : index
    %c0_44 = arith.constant 0 : index
    %55 = vector.load %arg4[%c6, %c0_43, %c0_44] : memref<9x128x128xbf16, #tpu.memory_space<vmem>>, vector<1x128x128xbf16>
    %56 = vector.shape_cast %55 : vector<1x128x128xbf16> to vector<128x128xbf16>
    %cst_45 = arith.constant dense<0.000000e+00> : vector<288x128xf32>
    %57 = tpu.matmul %54, %56, %cst_45 {dimension_numbers = #tpu.dot_dimension_numbers<[1], [0], [0], [1], [0, 0, 1, 1], [], []>} : vector<288x128xbf16>, vector<128x128xbf16>, vector<288x128xf32> -> vector<288x128xf32>
    %58 = arith.addf %52, %57 : vector<288x128xf32>
    %c37 = arith.constant 37 : index
    %c0_46 = arith.constant 0 : index
    %59 = vector.load %arg10[%c37, %c0_46] : memref<326x128xf32, #tpu.memory_space<vmem>>, vector<288x128xf32>
    %60 = arith.truncf %59 : vector<288x128xf32> to vector<288x128xbf16>
    %c7 = arith.constant 7 : index
    %c0_47 = arith.constant 0 : index
    %c0_48 = arith.constant 0 : index
    %61 = vector.load %arg4[%c7, %c0_47, %c0_48] : memref<9x128x128xbf16, #tpu.memory_space<vmem>>, vector<1x128x128xbf16>
    %62 = vector.shape_cast %61 : vector<1x128x128xbf16> to vector<128x128xbf16>
    %cst_49 = arith.constant dense<0.000000e+00> : vector<288x128xf32>
    %63 = tpu.matmul %60, %62, %cst_49 {dimension_numbers = #tpu.dot_dimension_numbers<[1], [0], [0], [1], [0, 0, 1, 1], [], []>} : vector<288x128xbf16>, vector<128x128xbf16>, vector<288x128xf32> -> vector<288x128xf32>
    %64 = arith.addf %58, %63 : vector<288x128xf32>
    %c38 = arith.constant 38 : index
    %c0_50 = arith.constant 0 : index
    %65 = vector.load %arg10[%c38, %c0_50] : memref<326x128xf32, #tpu.memory_space<vmem>>, vector<288x128xf32>
    %66 = arith.truncf %65 : vector<288x128xf32> to vector<288x128xbf16>
    %c8 = arith.constant 8 : index
    %c0_51 = arith.constant 0 : index
    %c0_52 = arith.constant 0 : index
    %67 = vector.load %arg4[%c8, %c0_51, %c0_52] : memref<9x128x128xbf16, #tpu.memory_space<vmem>>, vector<1x128x128xbf16>
    %68 = vector.shape_cast %67 : vector<1x128x128xbf16> to vector<128x128xbf16>
    %cst_53 = arith.constant dense<0.000000e+00> : vector<288x128xf32>
    %69 = tpu.matmul %66, %68, %cst_53 {dimension_numbers = #tpu.dot_dimension_numbers<[1], [0], [0], [1], [0, 0, 1, 1], [], []>} : vector<288x128xbf16>, vector<128x128xbf16>, vector<288x128xf32> -> vector<288x128xf32>
    %70 = arith.addf %64, %69 : vector<288x128xf32>
    %c0_54 = arith.constant 0 : index
    %c0_55 = arith.constant 0 : index
    %71 = vector.load %arg5[%c0_54, %c0_55] : memref<1x128xf32, #tpu.memory_space<vmem>>, vector<1x128xf32>
    %72 = vector.broadcast %71 : vector<1x128xf32> to vector<288x128xf32>
    %73 = arith.addf %70, %72 : vector<288x128xf32>
    %c0_56 = arith.constant 0 : index
    %c0_57 = arith.constant 0 : index
    %c0_58 = arith.constant 0 : index
    %74 = vector.load %arg7[%c0_56, %c0_57, %c0_58] : memref<1x288x128xf32, #tpu.memory_space<vmem>>, vector<1x288x128xf32>
    %75 = vector.shape_cast %74 : vector<1x288x128xf32> to vector<288x128xf32>
    %76 = vector.shape_cast %73 : vector<288x128xf32> to vector<1x288x128xf32>
    tpu.vector_store %arg7[%c0_56, %c0_57, %c0_58], %76 {strides = array<i32>} : memref<1x288x128xf32, #tpu.memory_space<vmem>>, vector<1x288x128xf32>,
    %77 = vector.broadcast %0 : vector<288x1xf32> to vector<288x128xf32>
    %78 = arith.mulf %73, %77 : vector<288x128xf32>
    %cst_59 = arith.constant dense<0.000000e+00> : vector<128xf32>
    %79 = vector.multi_reduction <add>, %78, %cst_59 [0] : vector<288x128xf32> to vector<128xf32>
    %80 = vector.shape_cast %79 : vector<128xf32> to vector<1x128xf32>
    %c0_60 = arith.constant 0 : index
    %c0_61 = arith.constant 0 : index
    %c0_62 = arith.constant 0 : index
    %81 = vector.load %arg8[%c0_60, %c0_61, %c0_62] : memref<1x1x128xf32, #tpu.memory_space<vmem>>, vector<1x1x128xf32>
    %82 = vector.shape_cast %81 : vector<1x1x128xf32> to vector<1x128xf32>
    %83 = vector.shape_cast %80 : vector<1x128xf32> to vector<1x1x128xf32>
    tpu.vector_store %arg8[%c0_60, %c0_61, %c0_62], %83 {strides = array<i32>} : memref<1x1x128xf32, #tpu.memory_space<vmem>>, vector<1x1x128xf32>,
    %84 = arith.mulf %78, %73 : vector<288x128xf32>
    %cst_63 = arith.constant dense<0.000000e+00> : vector<128xf32>
    %85 = vector.multi_reduction <add>, %84, %cst_63 [0] : vector<288x128xf32> to vector<128xf32>
    %86 = vector.shape_cast %85 : vector<128xf32> to vector<1x128xf32>
    %c0_64 = arith.constant 0 : index
    %c0_65 = arith.constant 0 : index
    %c0_66 = arith.constant 0 : index
    %87 = vector.load %arg9[%c0_64, %c0_65, %c0_66] : memref<1x1x128xf32, #tpu.memory_space<vmem>>, vector<1x1x128xf32>
    %88 = vector.shape_cast %87 : vector<1x1x128xf32> to vector<1x128xf32>
    %89 = vector.shape_cast %86 : vector<1x128xf32> to vector<1x1x128xf32>
    tpu.vector_store %arg9[%c0_64, %c0_65, %c0_66], %89 {strides = array<i32>} : memref<1x1x128xf32, #tpu.memory_space<vmem>>, vector<1x1x128xf32>,
    return
  }
  func.func @transform_0(%arg0: i32) -> (i32, i32, i32) {
    %c0_i32 = arith.constant 0 : i32
    %c0_i32_0 = arith.constant 0 : i32
    %c0_i32_1 = arith.constant 0 : i32
    return %arg0, %c0_i32, %c0_i32_0 : i32, i32, i32
  }
  func.func @transform_1(%arg0: i32) -> (i32, i32) {
    %c0_i32 = arith.constant 0 : i32
    %c0_i32_0 = arith.constant 0 : i32
    %c0_i32_1 = arith.constant 0 : i32
    return %c0_i32, %c0_i32_0 : i32, i32
  }
  func.func @transform_2(%arg0: i32) -> (i32, i32) {
    %c0_i32 = arith.constant 0 : i32
    %c0_i32_0 = arith.constant 0 : i32
    %c0_i32_1 = arith.constant 0 : i32
    return %c0_i32, %c0_i32_0 : i32, i32
  }
  func.func @transform_3(%arg0: i32) -> (i32, i32, i32) {
    %c0_i32 = arith.constant 0 : i32
    %c0_i32_0 = arith.constant 0 : i32
    %c0_i32_1 = arith.constant 0 : i32
    %c0_i32_2 = arith.constant 0 : i32
    return %c0_i32, %c0_i32_0, %c0_i32_1 : i32, i32, i32
  }
  func.func @transform_4(%arg0: i32) -> (i32, i32) {
    %c0_i32 = arith.constant 0 : i32
    %c0_i32_0 = arith.constant 0 : i32
    %c0_i32_1 = arith.constant 0 : i32
    return %c0_i32, %c0_i32_0 : i32, i32
  }
  func.func @transform_5(%arg0: i32) -> (i32, i32) {
    %c0_i32 = arith.constant 0 : i32
    %c0_i32_0 = arith.constant 0 : i32
    %c0_i32_1 = arith.constant 0 : i32
    return %c0_i32, %c0_i32_0 : i32, i32
  }
  func.func @transform_6(%arg0: i32) -> (i32, i32, i32) {
    %c0_i32 = arith.constant 0 : i32
    %c0_i32_0 = arith.constant 0 : i32
    %c0_i32_1 = arith.constant 0 : i32
    return %arg0, %c0_i32, %c0_i32_0 : i32, i32, i32
  }
  func.func @transform_7(%arg0: i32) -> (i32, i32, i32) {
    %c0_i32 = arith.constant 0 : i32
    %c0_i32_0 = arith.constant 0 : i32
    %c0_i32_1 = arith.constant 0 : i32
    return %arg0, %c0_i32, %c0_i32_0 : i32, i32, i32
  }
  func.func @transform_8(%arg0: i32) -> (i32, i32, i32) {
    %c0_i32 = arith.constant 0 : i32
    %c0_i32_0 = arith.constant 0 : i32
    %c0_i32_1 = arith.constant 0 : i32
    return %arg0, %c0_i32, %c0_i32_0 : i32, i32, i32
  }
}

module attributes {stable_mosaic.version = 11 : i64} {
  func.func @bn_relu_kernel(%arg0: i32, %arg1: memref<1x288x128xf32, #tpu.memory_space<vmem>>, %arg2: memref<1x128xf32, #tpu.memory_space<vmem>>, %arg3: memref<1x128xf32, #tpu.memory_space<vmem>>, %arg4: memref<1x288x128xf32, #tpu.memory_space<vmem>>) attributes {dimension_semantics = [#tpu.dimension_semantics<parallel>], iteration_bounds = array<i64: 4>, scalar_prefetch = 0 : i64, scratch_operands = 0 : i64, tpu.core_type = #tpu.core_type<tc>, window_params = [{transform_indices = @transform_0, window_bounds = array<i64: 1, 288, 128>}, {pipeline_mode = #tpu.pipeline_mode<synchronous>, transform_indices = @transform_1, window_bounds = array<i64: 1, 128>}, {pipeline_mode = #tpu.pipeline_mode<synchronous>, transform_indices = @transform_2, window_bounds = array<i64: 1, 128>}, {transform_indices = @transform_3, window_bounds = array<i64: 1, 288, 128>}]} {
    %c0 = arith.constant 0 : index
    %c0_0 = arith.constant 0 : index
    %c0_1 = arith.constant 0 : index
    %0 = vector.load %arg1[%c0, %c0_0, %c0_1] : memref<1x288x128xf32, #tpu.memory_space<vmem>>, vector<1x288x128xf32>
    %1 = vector.shape_cast %0 : vector<1x288x128xf32> to vector<288x128xf32>
    %c0_2 = arith.constant 0 : index
    %c0_3 = arith.constant 0 : index
    %2 = vector.load %arg2[%c0_2, %c0_3] : memref<1x128xf32, #tpu.memory_space<vmem>>, vector<1x128xf32>
    %3 = vector.broadcast %2 : vector<1x128xf32> to vector<288x128xf32>
    %4 = arith.mulf %1, %3 : vector<288x128xf32>
    %c0_4 = arith.constant 0 : index
    %c0_5 = arith.constant 0 : index
    %5 = vector.load %arg3[%c0_4, %c0_5] : memref<1x128xf32, #tpu.memory_space<vmem>>, vector<1x128xf32>
    %6 = vector.broadcast %5 : vector<1x128xf32> to vector<288x128xf32>
    %7 = arith.addf %4, %6 : vector<288x128xf32>
    %cst = arith.constant 0.000000e+00 : f32
    %8 = vector.broadcast %cst : f32 to vector<288x128xf32>
    %9 = arith.maximumf %7, %8 : vector<288x128xf32>
    %c0_6 = arith.constant 0 : index
    %c0_7 = arith.constant 0 : index
    %c0_8 = arith.constant 0 : index
    %10 = vector.load %arg4[%c0_6, %c0_7, %c0_8] : memref<1x288x128xf32, #tpu.memory_space<vmem>>, vector<1x288x128xf32>
    %11 = vector.shape_cast %10 : vector<1x288x128xf32> to vector<288x128xf32>
    %12 = vector.shape_cast %9 : vector<288x128xf32> to vector<1x288x128xf32>
    tpu.vector_store %arg4[%c0_6, %c0_7, %c0_8], %12 {strides = array<i32>} : memref<1x288x128xf32, #tpu.memory_space<vmem>>, vector<1x288x128xf32>,
    return
  }
  func.func @transform_0(%arg0: i32) -> (i32, i32, i32) {
    %c0_i32 = arith.constant 0 : i32
    %c0_i32_0 = arith.constant 0 : i32
    %c0_i32_1 = arith.constant 0 : i32
    return %arg0, %c0_i32, %c0_i32_0 : i32, i32, i32
  }
  func.func @transform_1(%arg0: i32) -> (i32, i32) {
    %c0_i32 = arith.constant 0 : i32
    %c0_i32_0 = arith.constant 0 : i32
    %c0_i32_1 = arith.constant 0 : i32
    return %c0_i32, %c0_i32_0 : i32, i32
  }
  func.func @transform_2(%arg0: i32) -> (i32, i32) {
    %c0_i32 = arith.constant 0 : i32
    %c0_i32_0 = arith.constant 0 : i32
    %c0_i32_1 = arith.constant 0 : i32
    return %c0_i32, %c0_i32_0 : i32, i32
  }
  func.func @transform_3(%arg0: i32) -> (i32, i32, i32) {
    %c0_i32 = arith.constant 0 : i32
    %c0_i32_0 = arith.constant 0 : i32
    %c0_i32_1 = arith.constant 0 : i32
    return %arg0, %c0_i32, %c0_i32_0 : i32, i32, i32
  }
}

</mosaic_0001>

<llo_original>
// kernel: double_convolution_forward.5
$region0: #{double_convolution_forward.5}
  #allocation0 [shape = 'u32[]', space=smem, size = 0x4, offset = 0x4, fixed_abs, tag = 'smem constant byte address 0x4 - core index']
  #allocation1 [shape = 'u32[144,128]{1,0:T(1,128)}', space=vmem, size = 0x12000, scoped, tag = 'internal scratch']
  %s0 = inlined_call_operand.vmem [shape: f32[4,288,128], index: 0, kind: input, shape index: {}]
  %s1 = inlined_call_operand.vmem [shape: f32[1,128], index: 1, kind: input, shape index: {}]
  %s2 = inlined_call_operand.vmem [shape: f32[1,128], index: 2, kind: input, shape index: {}]
  %s3 = inlined_call_operand.vmem [shape: f32[4,288,128], index: 3, kind: output, shape index: {}]
  %s4 = sld [smem:[#allocation0]]
  $region45: #{double_convolution_forward.5} parent=0
    _
  %s6 = ssub.s32 1, %s4
  %s7 = scalar_select 0, %s6, %s4
  loop: start=0, step=1, limit=6
  $region2: #{double_convolution_forward.5} parent=0 // loop_pre_header
    _
  $region3: #{double_convolution_forward.5} parent=0 // loop_header
    %s9 = sphi 0, %s13
    %p10 = scmp.ge.s32.totalorder %s9, 6
    %s19 = sphi 0, %s21
    %s22 = sphi 0, %s19
    %s23 = sphi 0, %s22
    %s39 = sphi 0, %s23
    %s43 = sphi 0, %s43
    %s45 = sphi 0, %s43
    %s46 = sphi 0, %s45
    %s60 = sphi 0, %s46
    %s64 = sphi 0, %s64
    %s66 = sphi 0, %s64
    %s67 = sphi 0, %s66
    %s81 = sphi 0, %s67
    %s87 = sphi 0, %s89
    %s90 = sphi 0, %s87
    %s91 = sphi 0, %s90
    %s107 = sphi 0, %s91
  $region4: #{double_convolution_forward.5} parent=0 // loop_header_branch
    %12 = sbr.rel (%p10) target = $region8
  $region5: #{double_convolution_forward.5} parent=0 // loop_body
    %s14 = ssub.s32 %s9, 1
    %s15 = ssub.s32 %s9, 2
    %s16 = sadd.s32 %s9, 1
    %s17 = ssub.s32 %s9, %s16
    %p18 = scmp.eq.s32.totalorder %s17, 0
    %s20 = sadd.s32 %s19, 1
    %s21 = scalar_select %p18, %s19, %s20
    %p24 = pneg %p18
    %p25 = scmp.eq.s32.totalorder %s9, 3
    %p26 = por %p24, %p25
    %p27 = scmp.ne.s32.totalorder %s19, %s22
    %p28 = scmp.eq.s32.totalorder %s9, 0
    %p29 = por %p27, %p28
    %p30 = scmp.ne.s32.totalorder %s19, %s22
    %p31 = scmp.eq.s32.totalorder %s14, 3
    %p32 = por %p30, %p31
    %p33 = scmp.ne.s32.totalorder %s22, %s23
    %p34 = scmp.eq.s32.totalorder %s14, 0
    %p35 = por %p33, %p34
    %p36 = scmp.ne.s32.totalorder %s22, %s23
    %p37 = scmp.eq.s32.totalorder %s15, 3
    %p38 = por %p36, %p37
    %p40 = scmp.ne.s32.totalorder %s23, %s39
    %p41 = scmp.eq.s32.totalorder %s15, 0
    %p42 = por %p40, %p41
    %s44 = sadd.s32 %s43, 1
    %p47 = scmp.eq.s32.totalorder %s9, 3
    %p48 = scmp.ne.s32.totalorder %s43, %s45
    %p49 = scmp.eq.s32.totalorder %s9, 0
    %p50 = por %p48, %p49
    %p51 = scmp.ne.s32.totalorder %s43, %s45
    %p52 = scmp.eq.s32.totalorder %s14, 3
    %p53 = por %p51, %p52
    %p54 = scmp.ne.s32.totalorder %s45, %s46
    %p55 = scmp.eq.s32.totalorder %s14, 0
    %p56 = por %p54, %p55
    %p57 = scmp.ne.s32.totalorder %s45, %s46
    %p58 = scmp.eq.s32.totalorder %s15, 3
    %p59 = por %p57, %p58
    %p61 = scmp.ne.s32.totalorder %s46, %s60
    %p62 = scmp.eq.s32.totalorder %s15, 0
    %p63 = por %p61, %p62
    %s65 = sadd.s32 %s64, 1
    %p68 = scmp.eq.s32.totalorder %s9, 3
    %p69 = scmp.ne.s32.totalorder %s64, %s66
    %p70 = scmp.eq.s32.totalorder %s9, 0
    %p71 = por %p69, %p70
    %p72 = scmp.ne.s32.totalorder %s64, %s66
    %p73 = scmp.eq.s32.totalorder %s14, 3
    %p74 = por %p72, %p73
    %p75 = scmp.ne.s32.totalorder %s66, %s67
    %p76 = scmp.eq.s32.totalorder %s14, 0
    %p77 = por %p75, %p76
    %p78 = scmp.ne.s32.totalorder %s66, %s67
    %p79 = scmp.eq.s32.totalorder %s15, 3
    %p80 = por %p78, %p79
    %p82 = scmp.ne.s32.totalorder %s67, %s81
    %p83 = scmp.eq.s32.totalorder %s15, 0
    %p84 = por %p82, %p83
    %s85 = ssub.s32 %s9, %s16
    %p86 = scmp.eq.s32.totalorder %s85, 0
    %s88 = sadd.s32 %s87, 1
    %s89 = scalar_select %p86, %s87, %s88
    %p92 = pneg %p86
    %p93 = scmp.eq.s32.totalorder %s9, 3
    %p94 = por %p92, %p93
    %p95 = scmp.ne.s32.totalorder %s87, %s90
    %p96 = scmp.eq.s32.totalorder %s9, 0
    %p97 = por %p95, %p96
    %p98 = scmp.ne.s32.totalorder %s87, %s90
    %p99 = scmp.eq.s32.totalorder %s14, 3
    %p100 = por %p98, %p99
    %p101 = scmp.ne.s32.totalorder %s90, %s91
    %p102 = scmp.eq.s32.totalorder %s14, 0
    %p103 = por %p101, %p102
    %p104 = scmp.ne.s32.totalorder %s90, %s91
    %p105 = scmp.eq.s32.totalorder %s15, 3
    %p106 = por %p104, %p105
    %p108 = scmp.ne.s32.totalorder %s91, %s107
    %p109 = scmp.eq.s32.totalorder %s15, 0
    %p110 = por %p108, %p109
    %p111 = scmp.le.s32.totalorder 1, %s9
    %p112 = scmp.lt.s32.totalorder %s9, 5
    %p113 = pnand %p111, %p112
    %p114 = pneg %p113
    // Predicated region
    $region9: #{double_convolution_forward.5} parent=5 // pred_check
      _
    $region10: #{double_convolution_forward.5} parent=5 // pred_check_branch
      %116 = sbr.rel (%p113) target = $region12
    $region11: #{double_convolution_forward.5} parent=5 // pred_region
      %s117 = ssub.s32 %s9, 1
      // Predicated region
      $region13: #{double_convolution_forward.5} parent=11 // pred_check
        %p118 = pneg %p56
      $region14: #{double_convolution_forward.5} parent=11 // pred_check_branch
        %120 = sbr.rel (%p118) target = $region16
      $region15: #{double_convolution_forward.5} parent=11 // pred_region
        _
      $region16: #{double_convolution_forward.5} parent=11 // pred_fallthru
        _
      // Predicated region
      $region17: #{double_convolution_forward.5} parent=11 // pred_check
        %p121 = pneg %p77
      $region18: #{double_convolution_forward.5} parent=11 // pred_check_branch
        %123 = sbr.rel (%p121) target = $region20
      $region19: #{double_convolution_forward.5} parent=11 // pred_region
        _
      $region20: #{double_convolution_forward.5} parent=11 // pred_fallthru
        _
    $region12: #{double_convolution_forward.5} parent=5 // pred_fallthru
      _
    %p124 = scmp.lt.s32.totalorder %s9, 4
    // Predicated region
    $region21: #{double_convolution_forward.5} parent=5 // pred_check
      %p125 = pneg %p124
    $region22: #{double_convolution_forward.5} parent=5 // pred_check_branch
      %127 = sbr.rel (%p125) target = $region24
    $region23: #{double_convolution_forward.5} parent=5 // pred_region
      // Predicated region
      $region25: #{double_convolution_forward.5} parent=23 // pred_check
        %p128 = pneg %p29
      $region26: #{double_convolution_forward.5} parent=23 // pred_check_branch
        %130 = sbr.rel (%p128) target = $region28
      $region27: #{double_convolution_forward.5} parent=23 // pred_region
        %p131 = scmp.lt.s32.totalorder %s9, 3
        %s132 = scalar_select %p131, %s9, 3
        %s133 = smul.addr %s132, 36
        %s134 = smul.addr %s133, 8
        %s135 = scalar_lea.vmem %s0, %s134
      $region28: #{double_convolution_forward.5} parent=23 // pred_fallthru
        _
    $region24: #{double_convolution_forward.5} parent=5 // pred_fallthru
      _
    %p136 = scmp.le.s32.totalorder 1, %s9
    %p137 = scmp.lt.s32.totalorder %s9, 5
    %p138 = pnand %p136, %p137
    %p139 = pneg %p138
    // Predicated region
    $region29: #{double_convolution_forward.5} parent=5 // pred_check
      _
    $region30: #{double_convolution_forward.5} parent=5 // pred_check_branch
      %141 = sbr.rel (%p138) target = $region32
    $region31: #{double_convolution_forward.5} parent=5 // pred_region
      %s142 = ssub.s32 %s9, 1
      %p143 = scmp.lt.s32.totalorder %s14, 3
      %s144 = scalar_select %p143, %s14, 3
      %s145 = smul.addr %s144, 36
      %s146 = smul.addr %s145, 8
      %s147 = scalar_lea.vmem %s0, %s146
      %p148 = pneg %p35
      %p149 = pneg %p32
      %p150 = pneg %p56
      %p151 = pneg %p53
      %p152 = pneg %p77
      %p153 = pneg %p74
      %p154 = pneg %p103
      %p155 = pneg %p100
      %p156 = scmp.lt.s32.totalorder %s14, 3
      %s157 = scalar_select %p156, %s14, 3
      %s158 = smul.addr %s157, 36
      %s159 = smul.addr %s158, 8
      %s160 = scalar_lea.vmem %s3, %s159
      %p161 = scmp.lt.s32.totalorder %s14, 3
      %s162 = scalar_select %p161, %s14, 3
      %s163 = smul.addr %s162, 36
      %s164 = smul.addr %s163, 8
      %s165 = scalar_lea.vmem %s0, %s164
      %p166 = scmp.lt.s32.totalorder %s14, 3
      %s167 = scalar_select %p166, %s14, 3
      %s168 = smul.addr %s167, 36
      %s169 = smul.addr %s168, 8
      %s170 = scalar_lea.vmem %s3, %s169
      %v171 = vld [vmem:[%s165] sm:$0xff]
      %v172 = vld [vmem:[%s165 + $0x8] sm:$0xff]
      %v173 = vld [vmem:[%s165 + $0x10] sm:$0xff]
      %v174 = vld [vmem:[%s165 + $0x18] sm:$0xff]
      %v175 = vld [vmem:[%s165 + $0x20] sm:$0xff]
      %v176 = vld [vmem:[%s165 + $0x28] sm:$0xff]
      %v177 = vld [vmem:[%s165 + $0x30] sm:$0xff]
      %v178 = vld [vmem:[%s165 + $0x38] sm:$0xff]
      %v179 = vld [vmem:[%s165 + $0x40] sm:$0xff]
      %v180 = vld [vmem:[%s165 + $0x48] sm:$0xff]
      %v181 = vld [vmem:[%s165 + $0x50] sm:$0xff]
      %v182 = vld [vmem:[%s165 + $0x58] sm:$0xff]
      %v183 = vld [vmem:[%s165 + $0x60] sm:$0xff]
      %v184 = vld [vmem:[%s165 + $0x68] sm:$0xff]
      %v185 = vld [vmem:[%s165 + $0x70] sm:$0xff]
      %v186 = vld [vmem:[%s165 + $0x78] sm:$0xff]
      %v187 = vld [vmem:[%s165 + $0x80] sm:$0xff]
      %v188 = vld [vmem:[%s165 + $0x88] sm:$0xff]
      %v189 = vld [vmem:[%s165 + $0x90] sm:$0xff]
      %v190 = vld [vmem:[%s165 + $0x98] sm:$0xff]
      %v191 = vld [vmem:[%s165 + $0xa0] sm:$0xff]
      %v192 = vld [vmem:[%s165 + $0xa8] sm:$0xff]
      %v193 = vld [vmem:[%s165 + $0xb0] sm:$0xff]
      %v194 = vld [vmem:[%s165 + $0xb8] sm:$0xff]
      %v195 = vld [vmem:[%s165 + $0xc0] sm:$0xff]
      %v196 = vld [vmem:[%s165 + $0xc8] sm:$0xff]
      %v197 = vld [vmem:[%s165 + $0xd0] sm:$0xff]
      %v198 = vld [vmem:[%s165 + $0xd8] sm:$0xff]
      %v199 = vld [vmem:[%s165 + $0xe0] sm:$0xff]
      %v200 = vld [vmem:[%s165 + $0xe8] sm:$0xff]
      %v201 = vld [vmem:[%s165 + $0xf0] sm:$0xff]
      %v202 = vld [vmem:[%s165 + $0xf8] sm:$0xff]
      %v203 = vld [vmem:[%s165 + $0x100] sm:$0xff]
      %v204 = vld [vmem:[%s165 + $0x108] sm:$0xff]
      %v205 = vld [vmem:[%s165 + $0x110] sm:$0xff]
      %v206 = vld [vmem:[%s165 + $0x118] sm:$0xff]
      %v207 = vld [vmem:[%s1] sm:$0x1]
      %v209 = vlaneseq
      %v210 = vshrl.u32 %v209, 7
      %v211 = vsub.s32 0, %v210
      %v212 = vrot.slane %v207, %v211
      %v214 = vmul.f32 %v171, %v212
      %v215 = vmul.f32 %v172, %v212
      %v216 = vmul.f32 %v173, %v212
      %v217 = vmul.f32 %v174, %v212
      %v218 = vmul.f32 %v175, %v212
      %v219 = vmul.f32 %v176, %v212
      %v220 = vmul.f32 %v177, %v212
      %v221 = vmul.f32 %v178, %v212
      %v222 = vmul.f32 %v179, %v212
      %v223 = vmul.f32 %v180, %v212
      %v224 = vmul.f32 %v181, %v212
      %v225 = vmul.f32 %v182, %v212
      %v226 = vmul.f32 %v183, %v212
      %v227 = vmul.f32 %v184, %v212
      %v228 = vmul.f32 %v185, %v212
      %v229 = vmul.f32 %v186, %v212
      %v230 = vmul.f32 %v187, %v212
      %v231 = vmul.f32 %v188, %v212
      %v232 = vmul.f32 %v189, %v212
      %v233 = vmul.f32 %v190, %v212
      %v234 = vmul.f32 %v191, %v212
      %v235 = vmul.f32 %v192, %v212
      %v236 = vmul.f32 %v193, %v212
      %v237 = vmul.f32 %v194, %v212
      %v238 = vmul.f32 %v195, %v212
      %v239 = vmul.f32 %v196, %v212
      %v240 = vmul.f32 %v197, %v212
      %v241 = vmul.f32 %v198, %v212
      %v242 = vmul.f32 %v199, %v212
      %v243 = vmul.f32 %v200, %v212
      %v244 = vmul.f32 %v201, %v212
      %v245 = vmul.f32 %v202, %v212
      %v246 = vmul.f32 %v203, %v212
      %v247 = vmul.f32 %v204, %v212
      %v248 = vmul.f32 %v205, %v212
      %v249 = vmul.f32 %v206, %v212
      %v250 = vld [vmem:[%s2] sm:$0x1]
      %v252 = vlaneseq
      %v253 = vshrl.u32 %v252, 7
      %v254 = vsub.s32 0, %v253
      %v255 = vrot.slane %v250, %v254
      %v257 = vadd.f32 %v214, %v255
      %v258 = vadd.f32 %v215, %v255
      %v259 = vadd.f32 %v216, %v255
      %v260 = vadd.f32 %v217, %v255
      %v261 = vadd.f32 %v218, %v255
      %v262 = vadd.f32 %v219, %v255
      %v263 = vadd.f32 %v220, %v255
      %v264 = vadd.f32 %v221, %v255
      %v265 = vadd.f32 %v222, %v255
      %v266 = vadd.f32 %v223, %v255
      %v267 = vadd.f32 %v224, %v255
      %v268 = vadd.f32 %v225, %v255
      %v269 = vadd.f32 %v226, %v255
      %v270 = vadd.f32 %v227, %v255
      %v271 = vadd.f32 %v228, %v255
      %v272 = vadd.f32 %v229, %v255
      %v273 = vadd.f32 %v230, %v255
      %v274 = vadd.f32 %v231, %v255
      %v275 = vadd.f32 %v232, %v255
      %v276 = vadd.f32 %v233, %v255
      %v277 = vadd.f32 %v234, %v255
      %v278 = vadd.f32 %v235, %v255
      %v279 = vadd.f32 %v236, %v255
      %v280 = vadd.f32 %v237, %v255
      %v281 = vadd.f32 %v238, %v255
      %v282 = vadd.f32 %v239, %v255
      %v283 = vadd.f32 %v240, %v255
      %v284 = vadd.f32 %v241, %v255
      %v285 = vadd.f32 %v242, %v255
      %v286 = vadd.f32 %v243, %v255
      %v287 = vadd.f32 %v244, %v255
      %v288 = vadd.f32 %v245, %v255
      %v289 = vadd.f32 %v246, %v255
      %v290 = vadd.f32 %v247, %v255
      %v291 = vadd.f32 %v248, %v255
      %v292 = vadd.f32 %v249, %v255
      %v293 = vmax.f32 %v257, 0.0
      %v294 = vmax.f32 %v258, 0.0
      %v295 = vmax.f32 %v259, 0.0
      %v296 = vmax.f32 %v260, 0.0
      %v297 = vmax.f32 %v261, 0.0
      %v298 = vmax.f32 %v262, 0.0
      %v299 = vmax.f32 %v263, 0.0
      %v300 = vmax.f32 %v264, 0.0
      %v301 = vmax.f32 %v265, 0.0
      %v302 = vmax.f32 %v266, 0.0
      %v303 = vmax.f32 %v267, 0.0
      %v304 = vmax.f32 %v268, 0.0
      %v305 = vmax.f32 %v269, 0.0
      %v306 = vmax.f32 %v270, 0.0
      %v307 = vmax.f32 %v271, 0.0
      %v308 = vmax.f32 %v272, 0.0
      %v309 = vmax.f32 %v273, 0.0
      %v310 = vmax.f32 %v274, 0.0
      %v311 = vmax.f32 %v275, 0.0
      %v312 = vmax.f32 %v276, 0.0
      %v313 = vmax.f32 %v277, 0.0
      %v314 = vmax.f32 %v278, 0.0
      %v315 = vmax.f32 %v279, 0.0
      %v316 = vmax.f32 %v280, 0.0
      %v317 = vmax.f32 %v281, 0.0
      %v318 = vmax.f32 %v282, 0.0
      %v319 = vmax.f32 %v283, 0.0
      %v320 = vmax.f32 %v284, 0.0
      %v321 = vmax.f32 %v285, 0.0
      %v322 = vmax.f32 %v286, 0.0
      %v323 = vmax.f32 %v287, 0.0
      %v324 = vmax.f32 %v288, 0.0
      %v325 = vmax.f32 %v289, 0.0
      %v326 = vmax.f32 %v290, 0.0
      %v327 = vmax.f32 %v291, 0.0
      %v328 = vmax.f32 %v292, 0.0
      %329 = vst [vmem:[%s170] sm:$0xff] %v293
      %330 = vst [vmem:[%s170 + $0x8] sm:$0xff] %v294
      %331 = vst [vmem:[%s170 + $0x10] sm:$0xff] %v295
      %332 = vst [vmem:[%s170 + $0x18] sm:$0xff] %v296
      %333 = vst [vmem:[%s170 + $0x20] sm:$0xff] %v297
      %334 = vst [vmem:[%s170 + $0x28] sm:$0xff] %v298
      %335 = vst [vmem:[%s170 + $0x30] sm:$0xff] %v299
      %336 = vst [vmem:[%s170 + $0x38] sm:$0xff] %v300
      %337 = vst [vmem:[%s170 + $0x40] sm:$0xff] %v301
      %338 = vst [vmem:[%s170 + $0x48] sm:$0xff] %v302
      %339 = vst [vmem:[%s170 + $0x50] sm:$0xff] %v303
      %340 = vst [vmem:[%s170 + $0x58] sm:$0xff] %v304
      %341 = vst [vmem:[%s170 + $0x60] sm:$0xff] %v305
      %342 = vst [vmem:[%s170 + $0x68] sm:$0xff] %v306
      %343 = vst [vmem:[%s170 + $0x70] sm:$0xff] %v307
      %344 = vst [vmem:[%s170 + $0x78] sm:$0xff] %v308
      %345 = vst [vmem:[%s170 + $0x80] sm:$0xff] %v309
      %346 = vst [vmem:[%s170 + $0x88] sm:$0xff] %v310
      %347 = vst [vmem:[%s170 + $0x90] sm:$0xff] %v311
      %348 = vst [vmem:[%s170 + $0x98] sm:$0xff] %v312
      %349 = vst [vmem:[%s170 + $0xa0] sm:$0xff] %v313
      %350 = vst [vmem:[%s170 + $0xa8] sm:$0xff] %v314
      %351 = vst [vmem:[%s170 + $0xb0] sm:$0xff] %v315
      %352 = vst [vmem:[%s170 + $0xb8] sm:$0xff] %v316
      %353 = vst [vmem:[%s170 + $0xc0] sm:$0xff] %v317
      %354 = vst [vmem:[%s170 + $0xc8] sm:$0xff] %v318
      %355 = vst [vmem:[%s170 + $0xd0] sm:$0xff] %v319
      %356 = vst [vmem:[%s170 + $0xd8] sm:$0xff] %v320
      %357 = vst [vmem:[%s170 + $0xe0] sm:$0xff] %v321
      %358 = vst [vmem:[%s170 + $0xe8] sm:$0xff] %v322
      %359 = vst [vmem:[%s170 + $0xf0] sm:$0xff] %v323
      %360 = vst [vmem:[%s170 + $0xf8] sm:$0xff] %v324
      %361 = vst [vmem:[%s170 + $0x100] sm:$0xff] %v325
      %362 = vst [vmem:[%s170 + $0x108] sm:$0xff] %v326
      %363 = vst [vmem:[%s170 + $0x110] sm:$0xff] %v327
      %364 = vst [vmem:[%s170 + $0x118] sm:$0xff] %v328
      %p365 = scmp.lt.s32.totalorder %s14, 3
      %s366 = scalar_select %p365, %s14, 3
      %s367 = smul.addr %s366, 36
      %s368 = smul.addr %s367, 8
      %s369 = scalar_lea.vmem %s3, %s368
      // Predicated region
      $region33: #{double_convolution_forward.5} parent=31 // pred_check
        %p370 = pneg %p100
      $region34: #{double_convolution_forward.5} parent=31 // pred_check_branch
        %372 = sbr.rel (%p370) target = $region36
      $region35: #{double_convolution_forward.5} parent=31 // pred_region
        _
      $region36: #{double_convolution_forward.5} parent=31 // pred_fallthru
        _
    $region32: #{double_convolution_forward.5} parent=5 // pred_fallthru
      _
    %p373 = scmp.le.s32.totalorder 2, %s9
    // Predicated region
    $region37: #{double_convolution_forward.5} parent=5 // pred_check
      %p374 = pneg %p373
    $region38: #{double_convolution_forward.5} parent=5 // pred_check_branch
      %376 = sbr.rel (%p374) target = $region40
    $region39: #{double_convolution_forward.5} parent=5 // pred_region
      %s377 = ssub.s32 %s9, 2
      // Predicated region
      $region41: #{double_convolution_forward.5} parent=39 // pred_check
        %p378 = pneg %p106
      $region42: #{double_convolution_forward.5} parent=39 // pred_check_branch
        %380 = sbr.rel (%p378) target = $region44
      $region43: #{double_convolution_forward.5} parent=39 // pred_region
        %p381 = scmp.lt.s32.totalorder %s15, 3
        %s382 = scalar_select %p381, %s15, 3
        %s383 = smul.addr %s382, 36
        %s384 = smul.addr %s383, 8
        %s385 = scalar_lea.vmem %s3, %s384
      $region44: #{double_convolution_forward.5} parent=39 // pred_fallthru
        _
    $region40: #{double_convolution_forward.5} parent=5 // pred_fallthru
      _
  $region6: #{double_convolution_forward.5} parent=0 // loop_footer
    %s13 = sadd.s32 1, %s9
  $region7: #{double_convolution_forward.5} parent=0 // loop_footer_branch
    %8 = sbr.rel target = $region3
  $region8: #{double_convolution_forward.5} parent=0 // loop_exit
    _

// kernel: double_convolution_forward.3
$region0: #{double_convolution_forward.3}
  #allocation0 [shape = 'u32[]', space=smem, size = 0x4, offset = 0x4, fixed_abs, tag = 'smem constant byte address 0x4 - core index']
  #allocation1 [shape = 'u32[144,128]{1,0:T(1,128)}', space=vmem, size = 0x12000, scoped, tag = 'internal scratch']
  %s0 = inlined_call_operand.vmem [shape: f32[4,326,4], index: 0, kind: input, shape index: {}]
  %s1 = inlined_call_operand.vmem [shape: bf16[9,4,128], index: 1, kind: input, shape index: {}]
  %s2 = inlined_call_operand.vmem [shape: f32[1,128], index: 2, kind: input, shape index: {}]
  %s3 = inlined_call_operand.vmem [shape: f32[288,1], index: 3, kind: input, shape index: {}]
  %s4 = inlined_call_operand.vmem [shape: f32[4,288,128], index: 4, kind: output, shape index: {0}]
  %s5 = inlined_call_operand.vmem [shape: f32[4,1,128], index: 5, kind: output, shape index: {1}]
  %s6 = inlined_call_operand.vmem [shape: f32[4,1,128], index: 6, kind: output, shape index: {2}]
  %7 = xla_tuple %s4, %s5, %s6
  %s8 = sld [smem:[#allocation0]]
  $region65: #{double_convolution_forward.3} parent=0
    _
  %s10 = ssub.s32 1, %s8
  %s11 = scalar_select 0, %s10, %s8
  loop: start=0, step=1, limit=6
  $region2: #{double_convolution_forward.3} parent=0 // loop_pre_header
    _
  $region3: #{double_convolution_forward.3} parent=0 // loop_header
    %s13 = sphi 0, %s17
    %p14 = scmp.ge.s32.totalorder %s13, 6
    %s23 = sphi 0, %s25
    %s26 = sphi 0, %s23
    %s27 = sphi 0, %s26
    %s43 = sphi 0, %s27
    %s47 = sphi 0, %s47
    %s49 = sphi 0, %s47
    %s50 = sphi 0, %s49
    %s64 = sphi 0, %s50
    %s68 = sphi 0, %s68
    %s70 = sphi 0, %s68
    %s71 = sphi 0, %s70
    %s85 = sphi 0, %s71
    %s89 = sphi 0, %s89
    %s91 = sphi 0, %s89
    %s92 = sphi 0, %s91
    %s106 = sphi 0, %s92
    %s112 = sphi 0, %s114
    %s115 = sphi 0, %s112
    %s116 = sphi 0, %s115
    %s132 = sphi 0, %s116
    %s138 = sphi 0, %s140
    %s141 = sphi 0, %s138
    %s142 = sphi 0, %s141
    %s158 = sphi 0, %s142
    %s164 = sphi 0, %s166
    %s167 = sphi 0, %s164
    %s168 = sphi 0, %s167
    %s184 = sphi 0, %s168
  $region4: #{double_convolution_forward.3} parent=0 // loop_header_branch
    %16 = sbr.rel (%p14) target = $region8
  $region5: #{double_convolution_forward.3} parent=0 // loop_body
    %s18 = ssub.s32 %s13, 1
    %s19 = ssub.s32 %s13, 2
    %s20 = sadd.s32 %s13, 1
    %s21 = ssub.s32 %s13, %s20
    %p22 = scmp.eq.s32.totalorder %s21, 0
    %s24 = sadd.s32 %s23, 1
    %s25 = scalar_select %p22, %s23, %s24
    %p28 = pneg %p22
    %p29 = scmp.eq.s32.totalorder %s13, 3
    %p30 = por %p28, %p29
    %p31 = scmp.ne.s32.totalorder %s23, %s26
    %p32 = scmp.eq.s32.totalorder %s13, 0
    %p33 = por %p31, %p32
    %p34 = scmp.ne.s32.totalorder %s23, %s26
    %p35 = scmp.eq.s32.totalorder %s18, 3
    %p36 = por %p34, %p35
    %p37 = scmp.ne.s32.totalorder %s26, %s27
    %p38 = scmp.eq.s32.totalorder %s18, 0
    %p39 = por %p37, %p38
    %p40 = scmp.ne.s32.totalorder %s26, %s27
    %p41 = scmp.eq.s32.totalorder %s19, 3
    %p42 = por %p40, %p41
    %p44 = scmp.ne.s32.totalorder %s27, %s43
    %p45 = scmp.eq.s32.totalorder %s19, 0
    %p46 = por %p44, %p45
    %s48 = sadd.s32 %s47, 1
    %p51 = scmp.eq.s32.totalorder %s13, 3
    %p52 = scmp.ne.s32.totalorder %s47, %s49
    %p53 = scmp.eq.s32.totalorder %s13, 0
    %p54 = por %p52, %p53
    %p55 = scmp.ne.s32.totalorder %s47, %s49
    %p56 = scmp.eq.s32.totalorder %s18, 3
    %p57 = por %p55, %p56
    %p58 = scmp.ne.s32.totalorder %s49, %s50
    %p59 = scmp.eq.s32.totalorder %s18, 0
    %p60 = por %p58, %p59
    %p61 = scmp.ne.s32.totalorder %s49, %s50
    %p62 = scmp.eq.s32.totalorder %s19, 3
    %p63 = por %p61, %p62
    %p65 = scmp.ne.s32.totalorder %s50, %s64
    %p66 = scmp.eq.s32.totalorder %s19, 0
    %p67 = por %p65, %p66
    %s69 = sadd.s32 %s68, 1
    %p72 = scmp.eq.s32.totalorder %s13, 3
    %p73 = scmp.ne.s32.totalorder %s68, %s70
    %p74 = scmp.eq.s32.totalorder %s13, 0
    %p75 = por %p73, %p74
    %p76 = scmp.ne.s32.totalorder %s68, %s70
    %p77 = scmp.eq.s32.totalorder %s18, 3
    %p78 = por %p76, %p77
    %p79 = scmp.ne.s32.totalorder %s70, %s71
    %p80 = scmp.eq.s32.totalorder %s18, 0
    %p81 = por %p79, %p80
    %p82 = scmp.ne.s32.totalorder %s70, %s71
    %p83 = scmp.eq.s32.totalorder %s19, 3
    %p84 = por %p82, %p83
    %p86 = scmp.ne.s32.totalorder %s71, %s85
    %p87 = scmp.eq.s32.totalorder %s19, 0
    %p88 = por %p86, %p87
    %s90 = sadd.s32 %s89, 1
    %p93 = scmp.eq.s32.totalorder %s13, 3
    %p94 = scmp.ne.s32.totalorder %s89, %s91
    %p95 = scmp.eq.s32.totalorder %s13, 0
    %p96 = por %p94, %p95
    %p97 = scmp.ne.s32.totalorder %s89, %s91
    %p98 = scmp.eq.s32.totalorder %s18, 3
    %p99 = por %p97, %p98
    %p100 = scmp.ne.s32.totalorder %s91, %s92
    %p101 = scmp.eq.s32.totalorder %s18, 0
    %p102 = por %p100, %p101
    %p103 = scmp.ne.s32.totalorder %s91, %s92
    %p104 = scmp.eq.s32.totalorder %s19, 3
    %p105 = por %p103, %p104
    %p107 = scmp.ne.s32.totalorder %s92, %s106
    %p108 = scmp.eq.s32.totalorder %s19, 0
    %p109 = por %p107, %p108
    %s110 = ssub.s32 %s13, %s20
    %p111 = scmp.eq.s32.totalorder %s110, 0
    %s113 = sadd.s32 %s112, 1
    %s114 = scalar_select %p111, %s112, %s113
    %p117 = pneg %p111
    %p118 = scmp.eq.s32.totalorder %s13, 3
    %p119 = por %p117, %p118
    %p120 = scmp.ne.s32.totalorder %s112, %s115
    %p121 = scmp.eq.s32.totalorder %s13, 0
    %p122 = por %p120, %p121
    %p123 = scmp.ne.s32.totalorder %s112, %s115
    %p124 = scmp.eq.s32.totalorder %s18, 3
    %p125 = por %p123, %p124
    %p126 = scmp.ne.s32.totalorder %s115, %s116
    %p127 = scmp.eq.s32.totalorder %s18, 0
    %p128 = por %p126, %p127
    %p129 = scmp.ne.s32.totalorder %s115, %s116
    %p130 = scmp.eq.s32.totalorder %s19, 3
    %p131 = por %p129, %p130
    %p133 = scmp.ne.s32.totalorder %s116, %s132
    %p134 = scmp.eq.s32.totalorder %s19, 0
    %p135 = por %p133, %p134
    %s136 = ssub.s32 %s13, %s20
    %p137 = scmp.eq.s32.totalorder %s136, 0
    %s139 = sadd.s32 %s138, 1
    %s140 = scalar_select %p137, %s138, %s139
    %p143 = pneg %p137
    %p144 = scmp.eq.s32.totalorder %s13, 3
    %p145 = por %p143, %p144
    %p146 = scmp.ne.s32.totalorder %s138, %s141
    %p147 = scmp.eq.s32.totalorder %s13, 0
    %p148 = por %p146, %p147
    %p149 = scmp.ne.s32.totalorder %s138, %s141
    %p150 = scmp.eq.s32.totalorder %s18, 3
    %p151 = por %p149, %p150
    %p152 = scmp.ne.s32.totalorder %s141, %s142
    %p153 = scmp.eq.s32.totalorder %s18, 0
    %p154 = por %p152, %p153
    %p155 = scmp.ne.s32.totalorder %s141, %s142
    %p156 = scmp.eq.s32.totalorder %s19, 3
    %p157 = por %p155, %p156
    %p159 = scmp.ne.s32.totalorder %s142, %s158
    %p160 = scmp.eq.s32.totalorder %s19, 0
    %p161 = por %p159, %p160
    %s162 = ssub.s32 %s13, %s20
    %p163 = scmp.eq.s32.totalorder %s162, 0
    %s165 = sadd.s32 %s164, 1
    %s166 = scalar_select %p163, %s164, %s165
    %p169 = pneg %p163
    %p170 = scmp.eq.s32.totalorder %s13, 3
    %p171 = por %p169, %p170
    %p172 = scmp.ne.s32.totalorder %s164, %s167
    %p173 = scmp.eq.s32.totalorder %s13, 0
    %p174 = por %p172, %p173
    %p175 = scmp.ne.s32.totalorder %s164, %s167
    %p176 = scmp.eq.s32.totalorder %s18, 3
    %p177 = por %p175, %p176
    %p178 = scmp.ne.s32.totalorder %s167, %s168
    %p179 = scmp.eq.s32.totalorder %s18, 0
    %p180 = por %p178, %p179
    %p181 = scmp.ne.s32.totalorder %s167, %s168
    %p182 = scmp.eq.s32.totalorder %s19, 3
    %p183 = por %p181, %p182
    %p185 = scmp.ne.s32.totalorder %s168, %s184
    %p186 = scmp.eq.s32.totalorder %s19, 0
    %p187 = por %p185, %p186
    %p188 = scmp.le.s32.totalorder 1, %s13
    %p189 = scmp.lt.s32.totalorder %s13, 5
    %p190 = pnand %p188, %p189
    %p191 = pneg %p190
    // Predicated region
    $region9: #{double_convolution_forward.3} parent=5 // pred_check
      _
    $region10: #{double_convolution_forward.3} parent=5 // pred_check_branch
      %193 = sbr.rel (%p190) target = $region12
    $region11: #{double_convolution_forward.3} parent=5 // pred_region
      %s194 = ssub.s32 %s13, 1
      // Predicated region
      $region13: #{double_convolution_forward.3} parent=11 // pred_check
        %p195 = pneg %p60
      $region14: #{double_convolution_forward.3} parent=11 // pred_check_branch
        %197 = sbr.rel (%p195) target = $region16
      $region15: #{double_convolution_forward.3} parent=11 // pred_region
        _
      $region16: #{double_convolution_forward.3} parent=11 // pred_fallthru
        _
      // Predicated region
      $region17: #{double_convolution_forward.3} parent=11 // pred_check
        %p198 = pneg %p81
      $region18: #{double_convolution_forward.3} parent=11 // pred_check_branch
        %200 = sbr.rel (%p198) target = $region20
      $region19: #{double_convolution_forward.3} parent=11 // pred_region
        _
      $region20: #{double_convolution_forward.3} parent=11 // pred_fallthru
        _
      // Predicated region
      $region21: #{double_convolution_forward.3} parent=11 // pred_check
        %p201 = pneg %p102
      $region22: #{double_convolution_forward.3} parent=11 // pred_check_branch
        %203 = sbr.rel (%p201) target = $region24
      $region23: #{double_convolution_forward.3} parent=11 // pred_region
        _
      $region24: #{double_convolution_forward.3} parent=11 // pred_fallthru
        _
    $region12: #{double_convolution_forward.3} parent=5 // pred_fallthru
      _
    %p204 = scmp.lt.s32.totalorder %s13, 4
    // Predicated region
    $region25: #{double_convolution_forward.3} parent=5 // pred_check
      %p205 = pneg %p204
    $region26: #{double_convolution_forward.3} parent=5 // pred_check_branch
      %207 = sbr.rel (%p205) target = $region28
    $region27: #{double_convolution_forward.3} parent=5 // pred_region
      // Predicated region
      $region29: #{double_convolution_forward.3} parent=27 // pred_check
        %p208 = pneg %p33
      $region30: #{double_convolution_forward.3} parent=27 // pred_check_branch
        %210 = sbr.rel (%p208) target = $region32
      $region31: #{double_convolution_forward.3} parent=27 // pred_region
        %p211 = scmp.lt.s32.totalorder %s13, 3
        %s212 = scalar_select %p211, %s13, 3
        %s213 = smul.addr %s212, 41
        %s214 = smul.addr %s213, 8
        %s215 = scalar_lea.vmem %s0, %s214
      $region32: #{double_convolution_forward.3} parent=27 // pred_fallthru
        _
    $region28: #{double_convolution_forward.3} parent=5 // pred_fallthru
      _
    %p216 = scmp.le.s32.totalorder 1, %s13
    %p217 = scmp.lt.s32.totalorder %s13, 5
    %p218 = pnand %p216, %p217
    %p219 = pneg %p218
    // Predicated region
    $region33: #{double_convolution_forward.3} parent=5 // pred_check
      _
    $region34: #{double_convolution_forward.3} parent=5 // pred_check_branch
      %221 = sbr.rel (%p218) target = $region36
    $region35: #{double_convolution_forward.3} parent=5 // pred_region
      %s222 = ssub.s32 %s13, 1
      %p223 = scmp.lt.s32.totalorder %s18, 3
      %s224 = scalar_select %p223, %s18, 3
      %s225 = smul.addr %s224, 41
      %s226 = smul.addr %s225, 8
      %s227 = scalar_lea.vmem %s0, %s226
      %p228 = pneg %p39
      %p229 = pneg %p36
      %p230 = pneg %p60
      %p231 = pneg %p57
      %p232 = pneg %p81
      %p233 = pneg %p78
      %p234 = pneg %p102
      %p235 = pneg %p99
      %p236 = pneg %p128
      %p237 = pneg %p125
      %p238 = scmp.lt.s32.totalorder %s18, 3
      %s239 = scalar_select %p238, %s18, 3
      %s240 = smul.addr %s239, 36
      %s241 = smul.addr %s240, 8
      %s242 = scalar_lea.vmem %s4, %s241
      %p243 = pneg %p154
      %p244 = pneg %p151
      %p245 = scmp.lt.s32.totalorder %s18, 3
      %s246 = scalar_select %p245, %s18, 3
      %s247 = scalar_lea.vmem %s5, %s246
      %p248 = pneg %p180
      %p249 = pneg %p177
      %p250 = scmp.lt.s32.totalorder %s18, 3
      %s251 = scalar_select %p250, %s18, 3
      %s252 = scalar_lea.vmem %s6, %s251
      %p253 = scmp.lt.s32.totalorder %s18, 3
      %s254 = scalar_select %p253, %s18, 3
      %s255 = smul.addr %s254, 41
      %s256 = smul.addr %s255, 8
      %s257 = scalar_lea.vmem %s0, %s256
      %p258 = scmp.lt.s32.totalorder %s18, 3
      %s259 = scalar_select %p258, %s18, 3
      %s260 = smul.addr %s259, 36
      %s261 = smul.addr %s260, 8
      %s262 = scalar_lea.vmem %s4, %s261
      %p263 = scmp.lt.s32.totalorder %s18, 3
      %s264 = scalar_select %p263, %s18, 3
      %s265 = scalar_lea.vmem %s5, %s264
      %p266 = scmp.lt.s32.totalorder %s18, 3
      %s267 = scalar_select %p266, %s18, 3
      %s268 = scalar_lea.vmem %s6, %s267
      %v270 = vld [vmem:[%s257] sm:$0xff]
      %v271 = vld [vmem:[%s257 + $0x8] sm:$0xff]
      %v272 = vld [vmem:[%s257 + $0x10] sm:$0xff]
      %v273 = vld [vmem:[%s257 + $0x18] sm:$0xff]
      %v274 = vld [vmem:[%s257 + $0x20] sm:$0xff]
      %v275 = vld [vmem:[%s257 + $0x28] sm:$0xff]
      %v276 = vld [vmem:[%s257 + $0x30] sm:$0xff]
      %v277 = vld [vmem:[%s257 + $0x38] sm:$0xff]
      %v278 = vld [vmem:[%s257 + $0x40] sm:$0xff]
      %v279 = vld [vmem:[%s257 + $0x48] sm:$0xff]
      %v280 = vld [vmem:[%s257 + $0x50] sm:$0xff]
      %v281 = vld [vmem:[%s257 + $0x58] sm:$0xff]
      %v282 = vld [vmem:[%s257 + $0x60] sm:$0xff]
      %v283 = vld [vmem:[%s257 + $0x68] sm:$0xff]
      %v284 = vld [vmem:[%s257 + $0x70] sm:$0xff]
      %v285 = vld [vmem:[%s257 + $0x78] sm:$0xff]
      %v286 = vld [vmem:[%s257 + $0x80] sm:$0xff]
      %v287 = vld [vmem:[%s257 + $0x88] sm:$0xff]
      %v288 = vld [vmem:[%s257 + $0x90] sm:$0xff]
      %v289 = vld [vmem:[%s257 + $0x98] sm:$0xff]
      %v290 = vld [vmem:[%s257 + $0xa0] sm:$0xff]
      %v291 = vld [vmem:[%s257 + $0xa8] sm:$0xff]
      %v292 = vld [vmem:[%s257 + $0xb0] sm:$0xff]
      %v293 = vld [vmem:[%s257 + $0xb8] sm:$0xff]
      %v294 = vld [vmem:[%s257 + $0xc0] sm:$0xff]
      %v295 = vld [vmem:[%s257 + $0xc8] sm:$0xff]
      %v296 = vld [vmem:[%s257 + $0xd0] sm:$0xff]
      %v297 = vld [vmem:[%s257 + $0xd8] sm:$0xff]
      %v298 = vld [vmem:[%s257 + $0xe0] sm:$0xff]
      %v299 = vld [vmem:[%s257 + $0xe8] sm:$0xff]
      %v300 = vld [vmem:[%s257 + $0xf0] sm:$0xff]
      %v301 = vld [vmem:[%s257 + $0xf8] sm:$0xff]
      %v302 = vld [vmem:[%s257 + $0x100] sm:$0xff]
      %v303 = vld [vmem:[%s257 + $0x108] sm:$0xff]
      %v304 = vld [vmem:[%s257 + $0x110] sm:$0xff]
      %v305 = vld [vmem:[%s257 + $0x118] sm:$0xff]
      %v306 = vld [vmem:[%s257 + $0x120] sm:$0xff]
      %v307 = vld [vmem:[%s257 + $0x128] sm:$0xff]
      %v308 = vld [vmem:[%s257 + $0x130] sm:$0xff]
      %v309 = vld [vmem:[%s257 + $0x138] sm:$0xff]
      %v310 = vld [vmem:[%s257 + $0x140] sm:$0x3f]
      %v311 = vpack.c.bf16 %v271, %v270
      %v312 = vpack.c.bf16 %v273, %v272
      %v313 = vpack.c.bf16 %v275, %v274
      %v314 = vpack.c.bf16 %v277, %v276
      %v315 = vpack.c.bf16 %v279, %v278
      %v316 = vpack.c.bf16 %v281, %v280
      %v317 = vpack.c.bf16 %v283, %v282
      %v318 = vpack.c.bf16 %v285, %v284
      %v319 = vpack.c.bf16 %v287, %v286
      %v320 = vpack.c.bf16 %v289, %v288
      %v321 = vpack.c.bf16 %v291, %v290
      %v322 = vpack.c.bf16 %v293, %v292
      %v323 = vpack.c.bf16 %v295, %v294
      %v324 = vpack.c.bf16 %v297, %v296
      %v325 = vpack.c.bf16 %v299, %v298
      %v326 = vpack.c.bf16 %v301, %v300
      %v327 = vpack.c.bf16 %v303, %v302
      %v328 = vpack.c.bf16 %v305, %v304
      %v329 = vld [vmem:[%s1] sm:$0x3]
      %v330 = vpack.c.bf16 %v306, %v306
      %s331 = scalar_lea.vmem %s1, 2
      %v332 = vld [vmem:[%s331] sm:$0x3]
      %vm333 = vsmask.f32 7424
      %v335 = vshrl.u32 %v311, 16
      %v337 = vshll.u32 %v311, 16
      %v339 = vrot.slane %v337, 1
      %v340 = vor.u32 %v335, %v339
      %v342 = vshll.u32 %v312, 16
      %v344 = vrot.slane %v342, 1
      %v345 = vsel %vm333, %v340, %v344
      %v346 = vshrl.u32 %v312, 16
      %v348 = vor.u32 %v346, %v344
      %v350 = vshll.u32 %v313, 16
      %v352 = vrot.slane %v350, 1
      %v353 = vsel %vm333, %v348, %v352
      %v354 = vshrl.u32 %v313, 16
      %v356 = vor.u32 %v354, %v352
      %v358 = vshll.u32 %v314, 16
      %v360 = vrot.slane %v358, 1
      %v361 = vsel %vm333, %v356, %v360
      %v362 = vshrl.u32 %v314, 16
      %v364 = vor.u32 %v362, %v360
      %v366 = vshll.u32 %v315, 16
      %v368 = vrot.slane %v366, 1
      %v369 = vsel %vm333, %v364, %v368
      %v370 = vshrl.u32 %v315, 16
      %v372 = vor.u32 %v370, %v368
      %v374 = vshll.u32 %v316, 16
      %v376 = vrot.slane %v374, 1
      %v377 = vsel %vm333, %v372, %v376
      %v378 = vshrl.u32 %v316, 16
      %v380 = vor.u32 %v378, %v376
      %v382 = vshll.u32 %v317, 16
      %v384 = vrot.slane %v382, 1
      %v385 = vsel %vm333, %v380, %v384
      %v386 = vshrl.u32 %v317, 16
      %v388 = vor.u32 %v386, %v384
      %v390 = vshll.u32 %v318, 16
      %v392 = vrot.slane %v390, 1
      %v393 = vsel %vm333, %v388, %v392
      %v394 = vshrl.u32 %v318, 16
      %v396 = vor.u32 %v394, %v392
      %v398 = vshll.u32 %v319, 16
      %v400 = vrot.slane %v398, 1
      %v401 = vsel %vm333, %v396, %v400
      %v402 = vshrl.u32 %v319, 16
      %v404 = vor.u32 %v402, %v400
      %v406 = vshll.u32 %v320, 16
      %v408 = vrot.slane %v406, 1
      %v409 = vsel %vm333, %v404, %v408
      %v410 = vshrl.u32 %v320, 16
      %v412 = vor.u32 %v410, %v408
      %v414 = vshll.u32 %v321, 16
      %v416 = vrot.slane %v414, 1
      %v417 = vsel %vm333, %v412, %v416
      %v418 = vshrl.u32 %v321, 16
      %v420 = vor.u32 %v418, %v416
      %v422 = vshll.u32 %v322, 16
      %v424 = vrot.slane %v422, 1
      %v425 = vsel %vm333, %v420, %v424
      %v426 = vshrl.u32 %v322, 16
      %v428 = vor.u32 %v426, %v424
      %v430 = vshll.u32 %v323, 16
      %v432 = vrot.slane %v430, 1
      %v433 = vsel %vm333, %v428, %v432
      %v434 = vshrl.u32 %v323, 16
      %v436 = vor.u32 %v434, %v432
      %v438 = vshll.u32 %v324, 16
      %v440 = vrot.slane %v438, 1
      %v441 = vsel %vm333, %v436, %v440
      %v442 = vshrl.u32 %v324, 16
      %v444 = vor.u32 %v442, %v440
      %v446 = vshll.u32 %v325, 16
      %v448 = vrot.slane %v446, 1
      %v449 = vsel %vm333, %v444, %v448
      %v450 = vshrl.u32 %v325, 16
      %v452 = vor.u32 %v450, %v448
      %v454 = vshll.u32 %v326, 16
      %v456 = vrot.slane %v454, 1
      %v457 = vsel %vm333, %v452, %v456
      %v458 = vshrl.u32 %v326, 16
      %v460 = vor.u32 %v458, %v456
      %v462 = vshll.u32 %v327, 16
      %v464 = vrot.slane %v462, 1
      %v465 = vsel %vm333, %v460, %v464
      %v466 = vshrl.u32 %v327, 16
      %v468 = vor.u32 %v466, %v464
      %v470 = vshll.u32 %v328, 16
      %v472 = vrot.slane %v470, 1
      %v473 = vsel %vm333, %v468, %v472
      %v474 = vshrl.u32 %v328, 16
      %v476 = vor.u32 %v474, %v472
      %v478 = vshll.u32 %v330, 16
      %v480 = vrot.slane %v478, 1
      %v481 = vsel %vm333, %v476, %v480
      %vm482 = vcmask 31744
      %v484 = vsel %vm482, %v345, 0
      %v487 = vsel %vm482, %v353, 0
      %v490 = vsel %vm482, %v361, 0
      %v493 = vsel %vm482, %v369, 0
      %v496 = vsel %vm482, %v377, 0
      %v499 = vsel %vm482, %v385, 0
      %v502 = vsel %vm482, %v393, 0
      %v505 = vsel %vm482, %v401, 0
      %v508 = vsel %vm482, %v409, 0
      %v511 = vsel %vm482, %v417, 0
      %v514 = vsel %vm482, %v425, 0
      %v517 = vsel %vm482, %v433, 0
      %v520 = vsel %vm482, %v441, 0
      %v523 = vsel %vm482, %v449, 0
      %v526 = vsel %vm482, %v457, 0
      %v529 = vsel %vm482, %v465, 0
      %v532 = vsel %vm482, %v473, 0
      %v535 = vsel %vm482, %v481, 0
      %vm537 = vcmask 1041408
      %v539 = vsel %vm537, %v332, 0
      %541 = vmatprep.subr.bf16.mxu0 0
      %542 = vmatpush1.bf16.msra.mxu0 0
      %543 = vmatprep.subr.bf16.mxu0 0
      %544 = vmatpush1.bf16.msra.mxu0 0
      %545 = vmatprep.subr.bf16.mxu0 0
      %546 = vmatpush1.bf16.msra.mxu0 0
      %547 = vmatprep.subr.bf16.mxu0 0
      %548 = vmatpush1.bf16.msra.mxu0 0
      %549 = vmatprep.subr.bf16.mxu0 0
      %550 = vmatpush1.bf16.msra.mxu0 0
      %551 = vmatprep.subr.bf16.mxu0 0
      %552 = vmatpush1.bf16.msra.mxu0 0
      %553 = vmatprep.subr.bf16.mxu0 0
      %554 = vmatpush1.bf16.msra.mxu0 0
      %555 = vmatprep.subr.bf16.mxu0 0
      %556 = vmatpush1.bf16.msra.mxu0 %v539
      %557 = vmatprep.subr.bf16.mxu0 0
      %558 = vmatpush2.bf16.msra.mxu0 0
      %559 = vmatprep.subr.bf16.mxu0 0
      %560 = vmatpush2.bf16.msra.mxu0 0
      %561 = vmatprep.subr.bf16.mxu0 0
      %562 = vmatpush2.bf16.msra.mxu0 0
      %563 = vmatprep.subr.bf16.mxu0 0
      %564 = vmatpush2.bf16.msra.mxu0 0
      %565 = vmatprep.subr.bf16.mxu0 0
      %566 = vmatpush2.bf16.msra.mxu0 0
      %567 = vmatprep.subr.bf16.mxu0 0
      %568 = vmatpush2.bf16.msra.mxu0 0
      %569 = vmatprep.subr.bf16.mxu0 0
      %570 = vmatpush2.bf16.msra.mxu0 0
      %571 = vmatprep.subr.bf16.mxu0 0
      %572 = vmatpush2.bf16.msra.mxu0 0
      %573 = vmatprep.mubr.bf16.mxu0 0
      %574 = vmatmul.mubr.bf16.gmra.mxu0 %v484
      %v575 = vpop.f32.mrf.mxu0
      %v576 = vadd.f32 0.0, %v575
      %v577 = vpop.f32.mrf.mxu0
      %v578 = vpop.f32.mrf.mxu0
      %v579 = vadd.f32 0.0, %v578
      %v580 = vpop.f32.mrf.mxu0
      %581 = vmatprep.mubr.bf16.mxu0 0
      %582 = vmatmul.mubr.bf16.gmra.mxu0 %v487
      %v583 = vpop.f32.mrf.mxu0
      %v584 = vadd.f32 0.0, %v583
      %v585 = vpop.f32.mrf.mxu0
      %v586 = vpop.f32.mrf.mxu0
      %v587 = vadd.f32 0.0, %v586
      %v588 = vpop.f32.mrf.mxu0
      %589 = vmatprep.mubr.bf16.mxu0 0
      %590 = vmatmul.mubr.bf16.gmra.mxu0 %v490
      %v591 = vpop.f32.mrf.mxu0
      %v592 = vadd.f32 0.0, %v591
      %v593 = vpop.f32.mrf.mxu0
      %v594 = vpop.f32.mrf.mxu0
      %v595 = vadd.f32 0.0, %v594
      %v596 = vpop.f32.mrf.mxu0
      %597 = vmatprep.mubr.bf16.mxu0 0
      %598 = vmatmul.mubr.bf16.gmra.mxu0 %v493
      %v599 = vpop.f32.mrf.mxu0
      %v600 = vadd.f32 0.0, %v599
      %v601 = vpop.f32.mrf.mxu0
      %v602 = vpop.f32.mrf.mxu0
      %v603 = vadd.f32 0.0, %v602
      %v604 = vpop.f32.mrf.mxu0
      %605 = vmatprep.mubr.bf16.mxu0 0
      %606 = vmatmul.mubr.bf16.gmra.mxu0 %v496
      %v607 = vpop.f32.mrf.mxu0
      %v608 = vadd.f32 0.0, %v607
      %v609 = vpop.f32.mrf.mxu0
      %v610 = vpop.f32.mrf.mxu0
      %v611 = vadd.f32 0.0, %v610
      %v612 = vpop.f32.mrf.mxu0
      %613 = vmatprep.mubr.bf16.mxu0 0
      %614 = vmatmul.mubr.bf16.gmra.mxu0 %v499
      %v615 = vpop.f32.mrf.mxu0
      %v616 = vadd.f32 0.0, %v615
      %v617 = vpop.f32.mrf.mxu0
      %v618 = vpop.f32.mrf.mxu0
      %v619 = vadd.f32 0.0, %v618
      %v620 = vpop.f32.mrf.mxu0
      %621 = vmatprep.mubr.bf16.mxu0 0
      %622 = vmatmul.mubr.bf16.gmra.mxu0 %v502
      %v623 = vpop.f32.mrf.mxu0
      %v624 = vadd.f32 0.0, %v623
      %v625 = vpop.f32.mrf.mxu0
      %v626 = vpop.f32.mrf.mxu0
      %v627 = vadd.f32 0.0, %v626
      %v628 = vpop.f32.mrf.mxu0
      %629 = vmatprep.mubr.bf16.mxu0 0
      %630 = vmatmul.mubr.bf16.gmra.mxu0 %v505
      %v631 = vpop.f32.mrf.mxu0
      %v632 = vadd.f32 0.0, %v631
      %v633 = vpop.f32.mrf.mxu0
      %v634 = vpop.f32.mrf.mxu0
      %v635 = vadd.f32 0.0, %v634
      %v636 = vpop.f32.mrf.mxu0
      %637 = vmatprep.mubr.bf16.mxu0 0
      %638 = vmatmul.mubr.bf16.gmra.mxu0 %v508
      %v639 = vpop.f32.mrf.mxu0
      %v640 = vadd.f32 0.0, %v639
      %v641 = vpop.f32.mrf.mxu0
      %v642 = vpop.f32.mrf.mxu0
      %v643 = vadd.f32 0.0, %v642
      %v644 = vpop.f32.mrf.mxu0
      %645 = vmatprep.mubr.bf16.mxu0 0
      %646 = vmatmul.mubr.bf16.gmra.mxu0 %v511
      %v647 = vpop.f32.mrf.mxu0
      %v648 = vadd.f32 0.0, %v647
      %v649 = vpop.f32.mrf.mxu0
      %v650 = vpop.f32.mrf.mxu0
      %v651 = vadd.f32 0.0, %v650
      %v652 = vpop.f32.mrf.mxu0
      %653 = vmatprep.mubr.bf16.mxu0 0
      %654 = vmatmul.mubr.bf16.gmra.mxu0 %v514
      %v655 = vpop.f32.mrf.mxu0
      %v656 = vadd.f32 0.0, %v655
      %v657 = vpop.f32.mrf.mxu0
      %v658 = vpop.f32.mrf.mxu0
      %v659 = vadd.f32 0.0, %v658
      %v660 = vpop.f32.mrf.mxu0
      %661 = vmatprep.mubr.bf16.mxu0 0
      %662 = vmatmul.mubr.bf16.gmra.mxu0 %v517
      %v663 = vpop.f32.mrf.mxu0
      %v664 = vadd.f32 0.0, %v663
      %v665 = vpop.f32.mrf.mxu0
      %v666 = vpop.f32.mrf.mxu0
      %v667 = vadd.f32 0.0, %v666
      %v668 = vpop.f32.mrf.mxu0
      %669 = vmatprep.mubr.bf16.mxu0 0
      %670 = vmatmul.mubr.bf16.gmra.mxu0 %v520
      %v671 = vpop.f32.mrf.mxu0
      %v672 = vadd.f32 0.0, %v671
      %v673 = vpop.f32.mrf.mxu0
      %v674 = vpop.f32.mrf.mxu0
      %v675 = vadd.f32 0.0, %v674
      %v676 = vpop.f32.mrf.mxu0
      %677 = vmatprep.mubr.bf16.mxu0 0
      %678 = vmatmul.mubr.bf16.gmra.mxu0 %v523
      %v679 = vpop.f32.mrf.mxu0
      %v680 = vadd.f32 0.0, %v679
      %v681 = vpop.f32.mrf.mxu0
      %v682 = vpop.f32.mrf.mxu0
      %v683 = vadd.f32 0.0, %v682
      %v684 = vpop.f32.mrf.mxu0
      %685 = vmatprep.mubr.bf16.mxu0 0
      %686 = vmatmul.mubr.bf16.gmra.mxu0 %v526
      %v687 = vpop.f32.mrf.mxu0
      %v688 = vadd.f32 0.0, %v687
      %v689 = vpop.f32.mrf.mxu0
      %v690 = vpop.f32.mrf.mxu0
      %v691 = vadd.f32 0.0, %v690
      %v692 = vpop.f32.mrf.mxu0
      %693 = vmatprep.mubr.bf16.mxu0 0
      %694 = vmatmul.mubr.bf16.gmra.mxu0 %v529
      %v695 = vpop.f32.mrf.mxu0
      %v696 = vadd.f32 0.0, %v695
      %v697 = vpop.f32.mrf.mxu0
      %v698 = vpop.f32.mrf.mxu0
      %v699 = vadd.f32 0.0, %v698
      %v700 = vpop.f32.mrf.mxu0
      %701 = vmatprep.mubr.bf16.mxu0 0
      %702 = vmatmul.mubr.bf16.gmra.mxu0 %v532
      %v703 = vpop.f32.mrf.mxu0
      %v704 = vadd.f32 0.0, %v703
      %v705 = vpop.f32.mrf.mxu0
      %v706 = vpop.f32.mrf.mxu0
      %v707 = vadd.f32 0.0, %v706
      %v708 = vpop.f32.mrf.mxu0
      %709 = vmatprep.mubr.bf16.mxu0 0
      %710 = vmatmul.mubr.bf16.gmra.mxu0 %v535
      %v711 = vpop.f32.mrf.mxu0
      %v712 = vadd.f32 0.0, %v711
      %v713 = vpop.f32.mrf.mxu0
      %v714 = vpop.f32.mrf.mxu0
      %v715 = vadd.f32 0.0, %v714
      %v716 = vpop.f32.mrf.mxu0
      %717 = vdwg.mxu0
      %v718 = vsel %vm482, %v311, 0
      %v720 = vsel %vm482, %v312, 0
      %v722 = vsel %vm482, %v313, 0
      %v724 = vsel %vm482, %v314, 0
      %v726 = vsel %vm482, %v315, 0
      %v728 = vsel %vm482, %v316, 0
      %v730 = vsel %vm482, %v317, 0
      %v732 = vsel %vm482, %v318, 0
      %v734 = vsel %vm482, %v319, 0
      %v736 = vsel %vm482, %v320, 0
      %v738 = vsel %vm482, %v321, 0
      %v740 = vsel %vm482, %v322, 0
      %v742 = vsel %vm482, %v323, 0
      %v744 = vsel %vm482, %v324, 0
      %v746 = vsel %vm482, %v325, 0
      %v748 = vsel %vm482, %v326, 0
      %v750 = vsel %vm482, %v327, 0
      %v752 = vsel %vm482, %v328, 0
      %v755 = vsel %vm537, %v329, 0
      %757 = vmatprep.subr.bf16.mxu0 0
      %758 = vmatpush1.bf16.msra.mxu0 0
      %759 = vmatprep.subr.bf16.mxu0 0
      %760 = vmatpush1.bf16.msra.mxu0 0
      %761 = vmatprep.subr.bf16.mxu0 0
      %762 = vmatpush1.bf16.msra.mxu0 0
      %763 = vmatprep.subr.bf16.mxu0 0
      %764 = vmatpush1.bf16.msra.mxu0 0
      %765 = vmatprep.subr.bf16.mxu0 0
      %766 = vmatpush1.bf16.msra.mxu0 0
      %767 = vmatprep.subr.bf16.mxu0 0
      %768 = vmatpush1.bf16.msra.mxu0 0
      %769 = vmatprep.subr.bf16.mxu0 0
      %770 = vmatpush1.bf16.msra.mxu0 0
      %771 = vmatprep.subr.bf16.mxu0 0
      %772 = vmatpush1.bf16.msra.mxu0 %v755
      %773 = vmatprep.subr.bf16.mxu0 0
      %774 = vmatpush2.bf16.msra.mxu0 0
      %775 = vmatprep.subr.bf16.mxu0 0
      %776 = vmatpush2.bf16.msra.mxu0 0
      %777 = vmatprep.subr.bf16.mxu0 0
      %778 = vmatpush2.bf16.msra.mxu0 0
      %779 = vmatprep.subr.bf16.mxu0 0
      %780 = vmatpush2.bf16.msra.mxu0 0
      %781 = vmatprep.subr.bf16.mxu0 0
      %782 = vmatpush2.bf16.msra.mxu0 0
      %783 = vmatprep.subr.bf16.mxu0 0
      %784 = vmatpush2.bf16.msra.mxu0 0
      %785 = vmatprep.subr.bf16.mxu0 0
      %786 = vmatpush2.bf16.msra.mxu0 0
      %787 = vmatprep.subr.bf16.mxu0 0
      %788 = vmatpush2.bf16.msra.mxu0 0
      %789 = vmatprep.mubr.bf16.mxu0 0
      %790 = vmatmul.mubr.bf16.gmra.mxu0 %v718
      %v791 = vpop.f32.mrf.mxu0
      %v792 = vadd.f32 %v576, %v791
      %v793 = vpop.f32.mrf.mxu0
      %v794 = vpop.f32.mrf.mxu0
      %v795 = vadd.f32 %v579, %v794
      %v796 = vpop.f32.mrf.mxu0
      %797 = vmatprep.mubr.bf16.mxu0 0
      %798 = vmatmul.mubr.bf16.gmra.mxu0 %v720
      %v799 = vpop.f32.mrf.mxu0
      %v800 = vadd.f32 %v584, %v799
      %v801 = vpop.f32.mrf.mxu0
      %v802 = vpop.f32.mrf.mxu0
      %v803 = vadd.f32 %v587, %v802
      %v804 = vpop.f32.mrf.mxu0
      %805 = vmatprep.mubr.bf16.mxu0 0
      %806 = vmatmul.mubr.bf16.gmra.mxu0 %v722
      %v807 = vpop.f32.mrf.mxu0
      %v808 = vadd.f32 %v592, %v807
      %v809 = vpop.f32.mrf.mxu0
      %v810 = vpop.f32.mrf.mxu0
      %v811 = vadd.f32 %v595, %v810
      %v812 = vpop.f32.mrf.mxu0
      %813 = vmatprep.mubr.bf16.mxu0 0
      %814 = vmatmul.mubr.bf16.gmra.mxu0 %v724
      %v815 = vpop.f32.mrf.mxu0
      %v816 = vadd.f32 %v600, %v815
      %v817 = vpop.f32.mrf.mxu0
      %v818 = vpop.f32.mrf.mxu0
      %v819 = vadd.f32 %v603, %v818
      %v820 = vpop.f32.mrf.mxu0
      %821 = vmatprep.mubr.bf16.mxu0 0
      %822 = vmatmul.mubr.bf16.gmra.mxu0 %v726
      %v823 = vpop.f32.mrf.mxu0
      %v824 = vadd.f32 %v608, %v823
      %v825 = vpop.f32.mrf.mxu0
      %v826 = vpop.f32.mrf.mxu0
      %v827 = vadd.f32 %v611, %v826
      %v828 = vpop.f32.mrf.mxu0
      %829 = vmatprep.mubr.bf16.mxu0 0
      %830 = vmatmul.mubr.bf16.gmra.mxu0 %v728
      %v831 = vpop.f32.mrf.mxu0
      %v832 = vadd.f32 %v616, %v831
      %v833 = vpop.f32.mrf.mxu0
      %v834 = vpop.f32.mrf.mxu0
      %v835 = vadd.f32 %v619, %v834
      %v836 = vpop.f32.mrf.mxu0
      %837 = vmatprep.mubr.bf16.mxu0 0
      %838 = vmatmul.mubr.bf16.gmra.mxu0 %v730
      %v839 = vpop.f32.mrf.mxu0
      %v840 = vadd.f32 %v624, %v839
      %v841 = vpop.f32.mrf.mxu0
      %v842 = vpop.f32.mrf.mxu0
      %v843 = vadd.f32 %v627, %v842
      %v844 = vpop.f32.mrf.mxu0
      %845 = vmatprep.mubr.bf16.mxu0 0
      %846 = vmatmul.mubr.bf16.gmra.mxu0 %v732
      %v847 = vpop.f32.mrf.mxu0
      %v848 = vadd.f32 %v632, %v847
      %v849 = vpop.f32.mrf.mxu0
      %v850 = vpop.f32.mrf.mxu0
      %v851 = vadd.f32 %v635, %v850
      %v852 = vpop.f32.mrf.mxu0
      %853 = vmatprep.mubr.bf16.mxu0 0
      %854 = vmatmul.mubr.bf16.gmra.mxu0 %v734
      %v855 = vpop.f32.mrf.mxu0
      %v856 = vadd.f32 %v640, %v855
      %v857 = vpop.f32.mrf.mxu0
      %v858 = vpop.f32.mrf.mxu0
      %v859 = vadd.f32 %v643, %v858
      %v860 = vpop.f32.mrf.mxu0
      %861 = vmatprep.mubr.bf16.mxu0 0
      %862 = vmatmul.mubr.bf16.gmra.mxu0 %v736
      %v863 = vpop.f32.mrf.mxu0
      %v864 = vadd.f32 %v648, %v863
      %v865 = vpop.f32.mrf.mxu0
      %v866 = vpop.f32.mrf.mxu0
      %v867 = vadd.f32 %v651, %v866
      %v868 = vpop.f32.mrf.mxu0
      %869 = vmatprep.mubr.bf16.mxu0 0
      %870 = vmatmul.mubr.bf16.gmra.mxu0 %v738
      %v871 = vpop.f32.mrf.mxu0
      %v872 = vadd.f32 %v656, %v871
      %v873 = vpop.f32.mrf.mxu0
      %v874 = vpop.f32.mrf.mxu0
      %v875 = vadd.f32 %v659, %v874
      %v876 = vpop.f32.mrf.mxu0
      %877 = vmatprep.mubr.bf16.mxu0 0
      %878 = vmatmul.mubr.bf16.gmra.mxu0 %v740
      %v879 = vpop.f32.mrf.mxu0
      %v880 = vadd.f32 %v664, %v879
      %v881 = vpop.f32.mrf.mxu0
      %v882 = vpop.f32.mrf.mxu0
      %v883 = vadd.f32 %v667, %v882
      %v884 = vpop.f32.mrf.mxu0
      %885 = vmatprep.mubr.bf16.mxu0 0
      %886 = vmatmul.mubr.bf16.gmra.mxu0 %v742
      %v887 = vpop.f32.mrf.mxu0
      %v888 = vadd.f32 %v672, %v887
      %v889 = vpop.f32.mrf.mxu0
      %v890 = vpop.f32.mrf.mxu0
      %v891 = vadd.f32 %v675, %v890
      %v892 = vpop.f32.mrf.mxu0
      %893 = vmatprep.mubr.bf16.mxu0 0
      %894 = vmatmul.mubr.bf16.gmra.mxu0 %v744
      %v895 = vpop.f32.mrf.mxu0
      %v896 = vadd.f32 %v680, %v895
      %v897 = vpop.f32.mrf.mxu0
      %v898 = vpop.f32.mrf.mxu0
      %v899 = vadd.f32 %v683, %v898
      %v900 = vpop.f32.mrf.mxu0
      %901 = vmatprep.mubr.bf16.mxu0 0
      %902 = vmatmul.mubr.bf16.gmra.mxu0 %v746
      %v903 = vpop.f32.mrf.mxu0
      %v904 = vadd.f32 %v688, %v903
      %v905 = vpop.f32.mrf.mxu0
      %v906 = vpop.f32.mrf.mxu0
      %v907 = vadd.f32 %v691, %v906
      %v908 = vpop.f32.mrf.mxu0
      %909 = vmatprep.mubr.bf16.mxu0 0
      %910 = vmatmul.mubr.bf16.gmra.mxu0 %v748
      %v911 = vpop.f32.mrf.mxu0
      %v912 = vadd.f32 %v696, %v911
      %v913 = vpop.f32.mrf.mxu0
      %v914 = vpop.f32.mrf.mxu0
      %v915 = vadd.f32 %v699, %v914
      %v916 = vpop.f32.mrf.mxu0
      %917 = vmatprep.mubr.bf16.mxu0 0
      %918 = vmatmul.mubr.bf16.gmra.mxu0 %v750
      %v919 = vpop.f32.mrf.mxu0
      %v920 = vadd.f32 %v704, %v919
      %v921 = vpop.f32.mrf.mxu0
      %v922 = vpop.f32.mrf.mxu0
      %v923 = vadd.f32 %v707, %v922
      %v924 = vpop.f32.mrf.mxu0
      %925 = vmatprep.mubr.bf16.mxu0 0
      %926 = vmatmul.mubr.bf16.gmra.mxu0 %v752
      %v927 = vpop.f32.mrf.mxu0
      %v928 = vadd.f32 %v712, %v927
      %v929 = vpop.f32.mrf.mxu0
      %v930 = vpop.f32.mrf.mxu0
      %v931 = vadd.f32 %v715, %v930
      %v932 = vpop.f32.mrf.mxu0
      %933 = vdwg.mxu0
      %s934 = scalar_lea.vmem %s1, 4
      %v935 = vld [vmem:[%s934] sm:$0x3]
      %vm955 = vcmask 1046528
      %v956 = vrot.slane %v311, 1
      %v957 = vrot.slane %v312, 1
      %v958 = vsel %vm955, %v956, %v957
      %v959 = vrot.slane %v313, 1
      %v960 = vsel %vm955, %v957, %v959
      %v961 = vrot.slane %v314, 1
      %v962 = vsel %vm955, %v959, %v961
      %v963 = vrot.slane %v315, 1
      %v964 = vsel %vm955, %v961, %v963
      %v965 = vrot.slane %v316, 1
      %v966 = vsel %vm955, %v963, %v965
      %v967 = vrot.slane %v317, 1
      %v968 = vsel %vm955, %v965, %v967
      %v969 = vrot.slane %v318, 1
      %v970 = vsel %vm955, %v967, %v969
      %v971 = vrot.slane %v319, 1
      %v972 = vsel %vm955, %v969, %v971
      %v973 = vrot.slane %v320, 1
      %v974 = vsel %vm955, %v971, %v973
      %v975 = vrot.slane %v321, 1
      %v976 = vsel %vm955, %v973, %v975
      %v977 = vrot.slane %v322, 1
      %v978 = vsel %vm955, %v975, %v977
      %v979 = vrot.slane %v323, 1
      %v980 = vsel %vm955, %v977, %v979
      %v981 = vrot.slane %v324, 1
      %v982 = vsel %vm955, %v979, %v981
      %v983 = vrot.slane %v325, 1
      %v984 = vsel %vm955, %v981, %v983
      %v985 = vrot.slane %v326, 1
      %v986 = vsel %vm955, %v983, %v985
      %v987 = vrot.slane %v327, 1
      %v988 = vsel %vm955, %v985, %v987
      %v989 = vrot.slane %v328, 1
      %v990 = vsel %vm955, %v987, %v989
      %v991 = vrot.slane %v330, 1
      %v992 = vsel %vm955, %v989, %v991
      %v994 = vsel %vm482, %v958, 0
      %v997 = vsel %vm482, %v960, 0
      %v1000 = vsel %vm482, %v962, 0
      %v1003 = vsel %vm482, %v964, 0
      %v1006 = vsel %vm482, %v966, 0
      %v1009 = vsel %vm482, %v968, 0
      %v1012 = vsel %vm482, %v970, 0
      %v1015 = vsel %vm482, %v972, 0
      %v1018 = vsel %vm482, %v974, 0
      %v1021 = vsel %vm482, %v976, 0
      %v1024 = vsel %vm482, %v978, 0
      %v1027 = vsel %vm482, %v980, 0
      %v1030 = vsel %vm482, %v982, 0
      %v1033 = vsel %vm482, %v984, 0
      %v1036 = vsel %vm482, %v986, 0
      %v1039 = vsel %vm482, %v988, 0
      %v1042 = vsel %vm482, %v990, 0
      %v1045 = vsel %vm482, %v992, 0
      %v1048 = vsel %vm537, %v935, 0
      %1050 = vmatprep.subr.bf16.mxu0 0
      %1051 = vmatpush1.bf16.msra.mxu0 0
      %1052 = vmatprep.subr.bf16.mxu0 0
      %1053 = vmatpush1.bf16.msra.mxu0 0
      %1054 = vmatprep.subr.bf16.mxu0 0
      %1055 = vmatpush1.bf16.msra.mxu0 0
      %1056 = vmatprep.subr.bf16.mxu0 0
      %1057 = vmatpush1.bf16.msra.mxu0 0
      %1058 = vmatprep.subr.bf16.mxu0 0
      %1059 = vmatpush1.bf16.msra.mxu0 0
      %1060 = vmatprep.subr.bf16.mxu0 0
      %1061 = vmatpush1.bf16.msra.mxu0 0
      %1062 = vmatprep.subr.bf16.mxu0 0
      %1063 = vmatpush1.bf16.msra.mxu0 0
      %1064 = vmatprep.subr.bf16.mxu0 0
      %1065 = vmatpush1.bf16.msra.mxu0 %v1048
      %1066 = vmatprep.subr.bf16.mxu0 0
      %1067 = vmatpush2.bf16.msra.mxu0 0
      %1068 = vmatprep.subr.bf16.mxu0 0
      %1069 = vmatpush2.bf16.msra.mxu0 0
      %1070 = vmatprep.subr.bf16.mxu0 0
      %1071 = vmatpush2.bf16.msra.mxu0 0
      %1072 = vmatprep.subr.bf16.mxu0 0
      %1073 = vmatpush2.bf16.msra.mxu0 0
      %1074 = vmatprep.subr.bf16.mxu0 0
      %1075 = vmatpush2.bf16.msra.mxu0 0
      %1076 = vmatprep.subr.bf16.mxu0 0
      %1077 = vmatpush2.bf16.msra.mxu0 0
      %1078 = vmatprep.subr.bf16.mxu0 0
      %1079 = vmatpush2.bf16.msra.mxu0 0
      %1080 = vmatprep.subr.bf16.mxu0 0
      %1081 = vmatpush2.bf16.msra.mxu0 0
      %1082 = vmatprep.mubr.bf16.mxu0 0
      %1083 = vmatmul.mubr.bf16.gmra.mxu0 %v994
      %v1084 = vpop.f32.mrf.mxu0
      %v1085 = vadd.f32 0.0, %v1084
      %v1086 = vpop.f32.mrf.mxu0
      %v1087 = vpop.f32.mrf.mxu0
      %v1088 = vadd.f32 0.0, %v1087
      %v1089 = vpop.f32.mrf.mxu0
      %1090 = vmatprep.mubr.bf16.mxu0 0
      %1091 = vmatmul.mubr.bf16.gmra.mxu0 %v997
      %v1092 = vpop.f32.mrf.mxu0
      %v1093 = vadd.f32 0.0, %v1092
      %v1094 = vpop.f32.mrf.mxu0
      %v1095 = vpop.f32.mrf.mxu0
      %v1096 = vadd.f32 0.0, %v1095
      %v1097 = vpop.f32.mrf.mxu0
      %1098 = vmatprep.mubr.bf16.mxu0 0
      %1099 = vmatmul.mubr.bf16.gmra.mxu0 %v1000
      %v1100 = vpop.f32.mrf.mxu0
      %v1101 = vadd.f32 0.0, %v1100
      %v1102 = vpop.f32.mrf.mxu0
      %v1103 = vpop.f32.mrf.mxu0
      %v1104 = vadd.f32 0.0, %v1103
      %v1105 = vpop.f32.mrf.mxu0
      %1106 = vmatprep.mubr.bf16.mxu0 0
      %1107 = vmatmul.mubr.bf16.gmra.mxu0 %v1003
      %v1108 = vpop.f32.mrf.mxu0
      %v1109 = vadd.f32 0.0, %v1108
      %v1110 = vpop.f32.mrf.mxu0
      %v1111 = vpop.f32.mrf.mxu0
      %v1112 = vadd.f32 0.0, %v1111
      %v1113 = vpop.f32.mrf.mxu0
      %1114 = vmatprep.mubr.bf16.mxu0 0
      %1115 = vmatmul.mubr.bf16.gmra.mxu0 %v1006
      %v1116 = vpop.f32.mrf.mxu0
      %v1117 = vadd.f32 0.0, %v1116
      %v1118 = vpop.f32.mrf.mxu0
      %v1119 = vpop.f32.mrf.mxu0
      %v1120 = vadd.f32 0.0, %v1119
      %v1121 = vpop.f32.mrf.mxu0
      %1122 = vmatprep.mubr.bf16.mxu0 0
      %1123 = vmatmul.mubr.bf16.gmra.mxu0 %v1009
      %v1124 = vpop.f32.mrf.mxu0
      %v1125 = vadd.f32 0.0, %v1124
      %v1126 = vpop.f32.mrf.mxu0
      %v1127 = vpop.f32.mrf.mxu0
      %v1128 = vadd.f32 0.0, %v1127
      %v1129 = vpop.f32.mrf.mxu0
      %1130 = vmatprep.mubr.bf16.mxu0 0
      %1131 = vmatmul.mubr.bf16.gmra.mxu0 %v1012
      %v1132 = vpop.f32.mrf.mxu0
      %v1133 = vadd.f32 0.0, %v1132
      %v1134 = vpop.f32.mrf.mxu0
      %v1135 = vpop.f32.mrf.mxu0
      %v1136 = vadd.f32 0.0, %v1135
      %v1137 = vpop.f32.mrf.mxu0
      %1138 = vmatprep.mubr.bf16.mxu0 0
      %1139 = vmatmul.mubr.bf16.gmra.mxu0 %v1015
      %v1140 = vpop.f32.mrf.mxu0
      %v1141 = vadd.f32 0.0, %v1140
      %v1142 = vpop.f32.mrf.mxu0
      %v1143 = vpop.f32.mrf.mxu0
      %v1144 = vadd.f32 0.0, %v1143
      %v1145 = vpop.f32.mrf.mxu0
      %1146 = vmatprep.mubr.bf16.mxu0 0
      %1147 = vmatmul.mubr.bf16.gmra.mxu0 %v1018
      %v1148 = vpop.f32.mrf.mxu0
      %v1149 = vadd.f32 0.0, %v1148
      %v1150 = vpop.f32.mrf.mxu0
      %v1151 = vpop.f32.mrf.mxu0
      %v1152 = vadd.f32 0.0, %v1151
      %v1153 = vpop.f32.mrf.mxu0
      %1154 = vmatprep.mubr.bf16.mxu0 0
      %1155 = vmatmul.mubr.bf16.gmra.mxu0 %v1021
      %v1156 = vpop.f32.mrf.mxu0
      %v1157 = vadd.f32 0.0, %v1156
      %v1158 = vpop.f32.mrf.mxu0
      %v1159 = vpop.f32.mrf.mxu0
      %v1160 = vadd.f32 0.0, %v1159
      %v1161 = vpop.f32.mrf.mxu0
      %1162 = vmatprep.mubr.bf16.mxu0 0
      %1163 = vmatmul.mubr.bf16.gmra.mxu0 %v1024
      %v1164 = vpop.f32.mrf.mxu0
      %v1165 = vadd.f32 0.0, %v1164
      %v1166 = vpop.f32.mrf.mxu0
      %v1167 = vpop.f32.mrf.mxu0
      %v1168 = vadd.f32 0.0, %v1167
      %v1169 = vpop.f32.mrf.mxu0
      %1170 = vmatprep.mubr.bf16.mxu0 0
      %1171 = vmatmul.mubr.bf16.gmra.mxu0 %v1027
      %v1172 = vpop.f32.mrf.mxu0
      %v1173 = vadd.f32 0.0, %v1172
      %v1174 = vpop.f32.mrf.mxu0
      %v1175 = vpop.f32.mrf.mxu0
      %v1176 = vadd.f32 0.0, %v1175
      %v1177 = vpop.f32.mrf.mxu0
      %1178 = vmatprep.mubr.bf16.mxu0 0
      %1179 = vmatmul.mubr.bf16.gmra.mxu0 %v1030
      %v1180 = vpop.f32.mrf.mxu0
      %v1181 = vadd.f32 0.0, %v1180
      %v1182 = vpop.f32.mrf.mxu0
      %v1183 = vpop.f32.mrf.mxu0
      %v1184 = vadd.f32 0.0, %v1183
      %v1185 = vpop.f32.mrf.mxu0
      %1186 = vmatprep.mubr.bf16.mxu0 0
      %1187 = vmatmul.mubr.bf16.gmra.mxu0 %v1033
      %v1188 = vpop.f32.mrf.mxu0
      %v1189 = vadd.f32 0.0, %v1188
      %v1190 = vpop.f32.mrf.mxu0
      %v1191 = vpop.f32.mrf.mxu0
      %v1192 = vadd.f32 0.0, %v1191
      %v1193 = vpop.f32.mrf.mxu0
      %1194 = vmatprep.mubr.bf16.mxu0 0
      %1195 = vmatmul.mubr.bf16.gmra.mxu0 %v1036
      %v1196 = vpop.f32.mrf.mxu0
      %v1197 = vadd.f32 0.0, %v1196
      %v1198 = vpop.f32.mrf.mxu0
      %v1199 = vpop.f32.mrf.mxu0
      %v1200 = vadd.f32 0.0, %v1199
      %v1201 = vpop.f32.mrf.mxu0
      %1202 = vmatprep.mubr.bf16.mxu0 0
      %1203 = vmatmul.mubr.bf16.gmra.mxu0 %v1039
      %v1204 = vpop.f32.mrf.mxu0
      %v1205 = vadd.f32 0.0, %v1204
      %v1206 = vpop.f32.mrf.mxu0
      %v1207 = vpop.f32.mrf.mxu0
      %v1208 = vadd.f32 0.0, %v1207
      %v1209 = vpop.f32.mrf.mxu0
      %1210 = vmatprep.mubr.bf16.mxu0 0
      %1211 = vmatmul.mubr.bf16.gmra.mxu0 %v1042
      %v1212 = vpop.f32.mrf.mxu0
      %v1213 = vadd.f32 0.0, %v1212
      %v1214 = vpop.f32.mrf.mxu0
      %v1215 = vpop.f32.mrf.mxu0
      %v1216 = vadd.f32 0.0, %v1215
      %v1217 = vpop.f32.mrf.mxu0
      %1218 = vmatprep.mubr.bf16.mxu0 0
      %1219 = vmatmul.mubr.bf16.gmra.mxu0 %v1045
      %v1220 = vpop.f32.mrf.mxu0
      %v1221 = vadd.f32 0.0, %v1220
      %v1222 = vpop.f32.mrf.mxu0
      %v1223 = vpop.f32.mrf.mxu0
      %v1224 = vadd.f32 0.0, %v1223
      %v1225 = vpop.f32.mrf.mxu0
      %1226 = vdwg.mxu0
      %v1227 = vadd.f32 %v792, %v1085
      %v1228 = vadd.f32 %v795, %v1088
      %v1229 = vadd.f32 %v800, %v1093
      %v1230 = vadd.f32 %v803, %v1096
      %v1231 = vadd.f32 %v808, %v1101
      %v1232 = vadd.f32 %v811, %v1104
      %v1233 = vadd.f32 %v816, %v1109
      %v1234 = vadd.f32 %v819, %v1112
      %v1235 = vadd.f32 %v824, %v1117
      %v1236 = vadd.f32 %v827, %v1120
      %v1237 = vadd.f32 %v832, %v1125
      %v1238 = vadd.f32 %v835, %v1128
      %v1239 = vadd.f32 %v840, %v1133
      %v1240 = vadd.f32 %v843, %v1136
      %v1241 = vadd.f32 %v848, %v1141
      %v1242 = vadd.f32 %v851, %v1144
      %v1243 = vadd.f32 %v856, %v1149
      %v1244 = vadd.f32 %v859, %v1152
      %v1245 = vadd.f32 %v864, %v1157
      %v1246 = vadd.f32 %v867, %v1160
      %v1247 = vadd.f32 %v872, %v1165
      %v1248 = vadd.f32 %v875, %v1168
      %v1249 = vadd.f32 %v880, %v1173
      %v1250 = vadd.f32 %v883, %v1176
      %v1251 = vadd.f32 %v888, %v1181
      %v1252 = vadd.f32 %v891, %v1184
      %v1253 = vadd.f32 %v896, %v1189
      %v1254 = vadd.f32 %v899, %v1192
      %v1255 = vadd.f32 %v904, %v1197
      %v1256 = vadd.f32 %v907, %v1200
      %v1257 = vadd.f32 %v912, %v1205
      %v1258 = vadd.f32 %v915, %v1208
      %v1259 = vadd.f32 %v920, %v1213
      %v1260 = vadd.f32 %v923, %v1216
      %v1261 = vadd.f32 %v928, %v1221
      %v1262 = vadd.f32 %v931, %v1224
      %v1263 = vpack.c.bf16 %v307, %v306
      %v1264 = vpack.c.bf16 %v308, %v308
      %s1265 = scalar_lea.vmem %s1, 6
      %v1266 = vld [vmem:[%s1265] sm:$0x3]
      %v1269 = vrot.slane %v1263, 1
      %v1270 = vsel %vm955, %v989, %v1269
      %v1271 = vrot.slane %v1264, 1
      %v1272 = vsel %vm955, %v1269, %v1271
      %v1274 = vsel %vm482, %v1270, 0
      %v1277 = vsel %vm482, %v1272, 0
      %v1280 = vsel %vm537, %v1266, 0
      %1282 = vmatprep.subr.bf16.mxu0 0
      %1283 = vmatpush1.bf16.msra.mxu0 0
      %1284 = vmatprep.subr.bf16.mxu0 0
      %1285 = vmatpush1.bf16.msra.mxu0 0
      %1286 = vmatprep.subr.bf16.mxu0 0
      %1287 = vmatpush1.bf16.msra.mxu0 0
      %1288 = vmatprep.subr.bf16.mxu0 0
      %1289 = vmatpush1.bf16.msra.mxu0 0
      %1290 = vmatprep.subr.bf16.mxu0 0
      %1291 = vmatpush1.bf16.msra.mxu0 0
      %1292 = vmatprep.subr.bf16.mxu0 0
      %1293 = vmatpush1.bf16.msra.mxu0 0
      %1294 = vmatprep.subr.bf16.mxu0 0
      %1295 = vmatpush1.bf16.msra.mxu0 0
      %1296 = vmatprep.subr.bf16.mxu0 0
      %1297 = vmatpush1.bf16.msra.mxu0 %v1280
      %1298 = vmatprep.subr.bf16.mxu0 0
      %1299 = vmatpush2.bf16.msra.mxu0 0
      %1300 = vmatprep.subr.bf16.mxu0 0
      %1301 = vmatpush2.bf16.msra.mxu0 0
      %1302 = vmatprep.subr.bf16.mxu0 0
      %1303 = vmatpush2.bf16.msra.mxu0 0
      %1304 = vmatprep.subr.bf16.mxu0 0
      %1305 = vmatpush2.bf16.msra.mxu0 0
      %1306 = vmatprep.subr.bf16.mxu0 0
      %1307 = vmatpush2.bf16.msra.mxu0 0
      %1308 = vmatprep.subr.bf16.mxu0 0
      %1309 = vmatpush2.bf16.msra.mxu0 0
      %1310 = vmatprep.subr.bf16.mxu0 0
      %1311 = vmatpush2.bf16.msra.mxu0 0
      %1312 = vmatprep.subr.bf16.mxu0 0
      %1313 = vmatpush2.bf16.msra.mxu0 0
      %1314 = vmatprep.mubr.bf16.mxu0 0
      %1315 = vmatmul.mubr.bf16.gmra.mxu0 %v997
      %v1316 = vpop.f32.mrf.mxu0
      %v1317 = vadd.f32 0.0, %v1316
      %v1318 = vpop.f32.mrf.mxu0
      %v1319 = vpop.f32.mrf.mxu0
      %v1320 = vadd.f32 0.0, %v1319
      %v1321 = vpop.f32.mrf.mxu0
      %1322 = vmatprep.mubr.bf16.mxu0 0
      %1323 = vmatmul.mubr.bf16.gmra.mxu0 %v1000
      %v1324 = vpop.f32.mrf.mxu0
      %v1325 = vadd.f32 0.0, %v1324
      %v1326 = vpop.f32.mrf.mxu0
      %v1327 = vpop.f32.mrf.mxu0
      %v1328 = vadd.f32 0.0, %v1327
      %v1329 = vpop.f32.mrf.mxu0
      %1330 = vmatprep.mubr.bf16.mxu0 0
      %1331 = vmatmul.mubr.bf16.gmra.mxu0 %v1003
      %v1332 = vpop.f32.mrf.mxu0
      %v1333 = vadd.f32 0.0, %v1332
      %v1334 = vpop.f32.mrf.mxu0
      %v1335 = vpop.f32.mrf.mxu0
      %v1336 = vadd.f32 0.0, %v1335
      %v1337 = vpop.f32.mrf.mxu0
      %1338 = vmatprep.mubr.bf16.mxu0 0
      %1339 = vmatmul.mubr.bf16.gmra.mxu0 %v1006
      %v1340 = vpop.f32.mrf.mxu0
      %v1341 = vadd.f32 0.0, %v1340
      %v1342 = vpop.f32.mrf.mxu0
      %v1343 = vpop.f32.mrf.mxu0
      %v1344 = vadd.f32 0.0, %v1343
      %v1345 = vpop.f32.mrf.mxu0
      %1346 = vmatprep.mubr.bf16.mxu0 0
      %1347 = vmatmul.mubr.bf16.gmra.mxu0 %v1009
      %v1348 = vpop.f32.mrf.mxu0
      %v1349 = vadd.f32 0.0, %v1348
      %v1350 = vpop.f32.mrf.mxu0
      %v1351 = vpop.f32.mrf.mxu0
      %v1352 = vadd.f32 0.0, %v1351
      %v1353 = vpop.f32.mrf.mxu0
      %1354 = vmatprep.mubr.bf16.mxu0 0
      %1355 = vmatmul.mubr.bf16.gmra.mxu0 %v1012
      %v1356 = vpop.f32.mrf.mxu0
      %v1357 = vadd.f32 0.0, %v1356
      %v1358 = vpop.f32.mrf.mxu0
      %v1359 = vpop.f32.mrf.mxu0
      %v1360 = vadd.f32 0.0, %v1359
      %v1361 = vpop.f32.mrf.mxu0
      %1362 = vmatprep.mubr.bf16.mxu0 0
      %1363 = vmatmul.mubr.bf16.gmra.mxu0 %v1015
      %v1364 = vpop.f32.mrf.mxu0
      %v1365 = vadd.f32 0.0, %v1364
      %v1366 = vpop.f32.mrf.mxu0
      %v1367 = vpop.f32.mrf.mxu0
      %v1368 = vadd.f32 0.0, %v1367
      %v1369 = vpop.f32.mrf.mxu0
      %1370 = vmatprep.mubr.bf16.mxu0 0
      %1371 = vmatmul.mubr.bf16.gmra.mxu0 %v1018
      %v1372 = vpop.f32.mrf.mxu0
      %v1373 = vadd.f32 0.0, %v1372
      %v1374 = vpop.f32.mrf.mxu0
      %v1375 = vpop.f32.mrf.mxu0
      %v1376 = vadd.f32 0.0, %v1375
      %v1377 = vpop.f32.mrf.mxu0
      %1378 = vmatprep.mubr.bf16.mxu0 0
      %1379 = vmatmul.mubr.bf16.gmra.mxu0 %v1021
      %v1380 = vpop.f32.mrf.mxu0
      %v1381 = vadd.f32 0.0, %v1380
      %v1382 = vpop.f32.mrf.mxu0
      %v1383 = vpop.f32.mrf.mxu0
      %v1384 = vadd.f32 0.0, %v1383
      %v1385 = vpop.f32.mrf.mxu0
      %1386 = vmatprep.mubr.bf16.mxu0 0
      %1387 = vmatmul.mubr.bf16.gmra.mxu0 %v1024
      %v1388 = vpop.f32.mrf.mxu0
      %v1389 = vadd.f32 0.0, %v1388
      %v1390 = vpop.f32.mrf.mxu0
      %v1391 = vpop.f32.mrf.mxu0
      %v1392 = vadd.f32 0.0, %v1391
      %v1393 = vpop.f32.mrf.mxu0
      %1394 = vmatprep.mubr.bf16.mxu0 0
      %1395 = vmatmul.mubr.bf16.gmra.mxu0 %v1027
      %v1396 = vpop.f32.mrf.mxu0
      %v1397 = vadd.f32 0.0, %v1396
      %v1398 = vpop.f32.mrf.mxu0
      %v1399 = vpop.f32.mrf.mxu0
      %v1400 = vadd.f32 0.0, %v1399
      %v1401 = vpop.f32.mrf.mxu0
      %1402 = vmatprep.mubr.bf16.mxu0 0
      %1403 = vmatmul.mubr.bf16.gmra.mxu0 %v1030
      %v1404 = vpop.f32.mrf.mxu0
      %v1405 = vadd.f32 0.0, %v1404
      %v1406 = vpop.f32.mrf.mxu0
      %v1407 = vpop.f32.mrf.mxu0
      %v1408 = vadd.f32 0.0, %v1407
      %v1409 = vpop.f32.mrf.mxu0
      %1410 = vmatprep.mubr.bf16.mxu0 0
      %1411 = vmatmul.mubr.bf16.gmra.mxu0 %v1033
      %v1412 = vpop.f32.mrf.mxu0
      %v1413 = vadd.f32 0.0, %v1412
      %v1414 = vpop.f32.mrf.mxu0
      %v1415 = vpop.f32.mrf.mxu0
      %v1416 = vadd.f32 0.0, %v1415
      %v1417 = vpop.f32.mrf.mxu0
      %1418 = vmatprep.mubr.bf16.mxu0 0
      %1419 = vmatmul.mubr.bf16.gmra.mxu0 %v1036
      %v1420 = vpop.f32.mrf.mxu0
      %v1421 = vadd.f32 0.0, %v1420
      %v1422 = vpop.f32.mrf.mxu0
      %v1423 = vpop.f32.mrf.mxu0
      %v1424 = vadd.f32 0.0, %v1423
      %v1425 = vpop.f32.mrf.mxu0
      %1426 = vmatprep.mubr.bf16.mxu0 0
      %1427 = vmatmul.mubr.bf16.gmra.mxu0 %v1039
      %v1428 = vpop.f32.mrf.mxu0
      %v1429 = vadd.f32 0.0, %v1428
      %v1430 = vpop.f32.mrf.mxu0
      %v1431 = vpop.f32.mrf.mxu0
      %v1432 = vadd.f32 0.0, %v1431
      %v1433 = vpop.f32.mrf.mxu0
      %1434 = vmatprep.mubr.bf16.mxu0 0
      %1435 = vmatmul.mubr.bf16.gmra.mxu0 %v1042
      %v1436 = vpop.f32.mrf.mxu0
      %v1437 = vadd.f32 0.0, %v1436
      %v1438 = vpop.f32.mrf.mxu0
      %v1439 = vpop.f32.mrf.mxu0
      %v1440 = vadd.f32 0.0, %v1439
      %v1441 = vpop.f32.mrf.mxu0
      %1442 = vmatprep.mubr.bf16.mxu0 0
      %1443 = vmatmul.mubr.bf16.gmra.mxu0 %v1274
      %v1444 = vpop.f32.mrf.mxu0
      %v1445 = vadd.f32 0.0, %v1444
      %v1446 = vpop.f32.mrf.mxu0
      %v1447 = vpop.f32.mrf.mxu0
      %v1448 = vadd.f32 0.0, %v1447
      %v1449 = vpop.f32.mrf.mxu0
      %1450 = vmatprep.mubr.bf16.mxu0 0
      %1451 = vmatmul.mubr.bf16.gmra.mxu0 %v1277
      %v1452 = vpop.f32.mrf.mxu0
      %v1453 = vadd.f32 0.0, %v1452
      %v1454 = vpop.f32.mrf.mxu0
      %v1455 = vpop.f32.mrf.mxu0
      %v1456 = vadd.f32 0.0, %v1455
      %v1457 = vpop.f32.mrf.mxu0
      %1458 = vdwg.mxu0
      %v1459 = vadd.f32 %v1227, %v1317
      %v1460 = vadd.f32 %v1228, %v1320
      %v1461 = vadd.f32 %v1229, %v1325
      %v1462 = vadd.f32 %v1230, %v1328
      %v1463 = vadd.f32 %v1231, %v1333
      %v1464 = vadd.f32 %v1232, %v1336
      %v1465 = vadd.f32 %v1233, %v1341
      %v1466 = vadd.f32 %v1234, %v1344
      %v1467 = vadd.f32 %v1235, %v1349
      %v1468 = vadd.f32 %v1236, %v1352
      %v1469 = vadd.f32 %v1237, %v1357
      %v1470 = vadd.f32 %v1238, %v1360
      %v1471 = vadd.f32 %v1239, %v1365
      %v1472 = vadd.f32 %v1240, %v1368
      %v1473 = vadd.f32 %v1241, %v1373
      %v1474 = vadd.f32 %v1242, %v1376
      %v1475 = vadd.f32 %v1243, %v1381
      %v1476 = vadd.f32 %v1244, %v1384
      %v1477 = vadd.f32 %v1245, %v1389
      %v1478 = vadd.f32 %v1246, %v1392
      %v1479 = vadd.f32 %v1247, %v1397
      %v1480 = vadd.f32 %v1248, %v1400
      %v1481 = vadd.f32 %v1249, %v1405
      %v1482 = vadd.f32 %v1250, %v1408
      %v1483 = vadd.f32 %v1251, %v1413
      %v1484 = vadd.f32 %v1252, %v1416
      %v1485 = vadd.f32 %v1253, %v1421
      %v1486 = vadd.f32 %v1254, %v1424
      %v1487 = vadd.f32 %v1255, %v1429
      %v1488 = vadd.f32 %v1256, %v1432
      %v1489 = vadd.f32 %v1257, %v1437
      %v1490 = vadd.f32 %v1258, %v1440
      %v1491 = vadd.f32 %v1259, %v1445
      %v1492 = vadd.f32 %v1260, %v1448
      %v1493 = vadd.f32 %v1261, %v1453
      %v1494 = vadd.f32 %v1262, %v1456
      %s1495 = scalar_lea.vmem %s1, 8
      %v1496 = vld [vmem:[%s1495] sm:$0x3]
      %vm1497 = vsmask.f32 6400
      %v1498 = vrot.slane %v346, 1
      %v1499 = vrot.slane %v342, 2
      %v1500 = vor.u32 %v1498, %v1499
      %v1501 = vrot.slane %v354, 1
      %v1502 = vrot.slane %v350, 2
      %v1503 = vor.u32 %v1501, %v1502
      %v1504 = vsel %vm1497, %v1500, %v1503
      %v1505 = vrot.slane %v362, 1
      %v1506 = vrot.slane %v358, 2
      %v1507 = vor.u32 %v1505, %v1506
      %v1508 = vsel %vm1497, %v1503, %v1507
      %v1509 = vrot.slane %v370, 1
      %v1510 = vrot.slane %v366, 2
      %v1511 = vor.u32 %v1509, %v1510
      %v1512 = vsel %vm1497, %v1507, %v1511
      %v1513 = vrot.slane %v378, 1
      %v1514 = vrot.slane %v374, 2
      %v1515 = vor.u32 %v1513, %v1514
      %v1516 = vsel %vm1497, %v1511, %v1515
      %v1517 = vrot.slane %v386, 1
      %v1518 = vrot.slane %v382, 2
      %v1519 = vor.u32 %v1517, %v1518
      %v1520 = vsel %vm1497, %v1515, %v1519
      %v1521 = vrot.slane %v394, 1
      %v1522 = vrot.slane %v390, 2
      %v1523 = vor.u32 %v1521, %v1522
      %v1524 = vsel %vm1497, %v1519, %v1523
      %v1525 = vrot.slane %v402, 1
      %v1526 = vrot.slane %v398, 2
      %v1527 = vor.u32 %v1525, %v1526
      %v1528 = vsel %vm1497, %v1523, %v1527
      %v1529 = vrot.slane %v410, 1
      %v1530 = vrot.slane %v406, 2
      %v1531 = vor.u32 %v1529, %v1530
      %v1532 = vsel %vm1497, %v1527, %v1531
      %v1533 = vrot.slane %v418, 1
      %v1534 = vrot.slane %v414, 2
      %v1535 = vor.u32 %v1533, %v1534
      %v1536 = vsel %vm1497, %v1531, %v1535
      %v1537 = vrot.slane %v426, 1
      %v1538 = vrot.slane %v422, 2
      %v1539 = vor.u32 %v1537, %v1538
      %v1540 = vsel %vm1497, %v1535, %v1539
      %v1541 = vrot.slane %v434, 1
      %v1542 = vrot.slane %v430, 2
      %v1543 = vor.u32 %v1541, %v1542
      %v1544 = vsel %vm1497, %v1539, %v1543
      %v1545 = vrot.slane %v442, 1
      %v1546 = vrot.slane %v438, 2
      %v1547 = vor.u32 %v1545, %v1546
      %v1548 = vsel %vm1497, %v1543, %v1547
      %v1549 = vrot.slane %v450, 1
      %v1550 = vrot.slane %v446, 2
      %v1551 = vor.u32 %v1549, %v1550
      %v1552 = vsel %vm1497, %v1547, %v1551
      %v1553 = vrot.slane %v458, 1
      %v1554 = vrot.slane %v454, 2
      %v1555 = vor.u32 %v1553, %v1554
      %v1556 = vsel %vm1497, %v1551, %v1555
      %v1557 = vrot.slane %v466, 1
      %v1558 = vrot.slane %v462, 2
      %v1559 = vor.u32 %v1557, %v1558
      %v1560 = vsel %vm1497, %v1555, %v1559
      %v1561 = vrot.slane %v474, 1
      %v1562 = vrot.slane %v470, 2
      %v1563 = vor.u32 %v1561, %v1562
      %v1564 = vsel %vm1497, %v1559, %v1563
      %v1566 = vshrl.u32 %v1263, 16
      %v1568 = vrot.slane %v1566, 1
      %v1569 = vshll.u32 %v1263, 16
      %v1571 = vrot.slane %v1569, 2
      %v1572 = vor.u32 %v1568, %v1571
      %v1573 = vsel %vm1497, %v1563, %v1572
      %v1575 = vshrl.u32 %v1264, 16
      %v1577 = vrot.slane %v1575, 1
      %v1578 = vshll.u32 %v1264, 16
      %v1580 = vrot.slane %v1578, 2
      %v1581 = vor.u32 %v1577, %v1580
      %v1582 = vsel %vm1497, %v1572, %v1581
      %v1584 = vsel %vm482, %v1504, 0
      %v1587 = vsel %vm482, %v1508, 0
      %v1590 = vsel %vm482, %v1512, 0
      %v1593 = vsel %vm482, %v1516, 0
      %v1596 = vsel %vm482, %v1520, 0
      %v1599 = vsel %vm482, %v1524, 0
      %v1602 = vsel %vm482, %v1528, 0
      %v1605 = vsel %vm482, %v1532, 0
      %v1608 = vsel %vm482, %v1536, 0
      %v1611 = vsel %vm482, %v1540, 0
      %v1614 = vsel %vm482, %v1544, 0
      %v1617 = vsel %vm482, %v1548, 0
      %v1620 = vsel %vm482, %v1552, 0
      %v1623 = vsel %vm482, %v1556, 0
      %v1626 = vsel %vm482, %v1560, 0
      %v1629 = vsel %vm482, %v1564, 0
      %v1632 = vsel %vm482, %v1573, 0
      %v1635 = vsel %vm482, %v1582, 0
      %v1638 = vsel %vm537, %v1496, 0
      %1640 = vmatprep.subr.bf16.mxu0 0
      %1641 = vmatpush1.bf16.msra.mxu0 0
      %1642 = vmatprep.subr.bf16.mxu0 0
      %1643 = vmatpush1.bf16.msra.mxu0 0
      %1644 = vmatprep.subr.bf16.mxu0 0
      %1645 = vmatpush1.bf16.msra.mxu0 0
      %1646 = vmatprep.subr.bf16.mxu0 0
      %1647 = vmatpush1.bf16.msra.mxu0 0
      %1648 = vmatprep.subr.bf16.mxu0 0
      %1649 = vmatpush1.bf16.msra.mxu0 0
      %1650 = vmatprep.subr.bf16.mxu0 0
      %1651 = vmatpush1.bf16.msra.mxu0 0
      %1652 = vmatprep.subr.bf16.mxu0 0
      %1653 = vmatpush1.bf16.msra.mxu0 0
      %1654 = vmatprep.subr.bf16.mxu0 0
      %1655 = vmatpush1.bf16.msra.mxu0 %v1638
      %1656 = vmatprep.subr.bf16.mxu0 0
      %1657 = vmatpush2.bf16.msra.mxu0 0
      %1658 = vmatprep.subr.bf16.mxu0 0
      %1659 = vmatpush2.bf16.msra.mxu0 0
      %1660 = vmatprep.subr.bf16.mxu0 0
      %1661 = vmatpush2.bf16.msra.mxu0 0
      %1662 = vmatprep.subr.bf16.mxu0 0
      %1663 = vmatpush2.bf16.msra.mxu0 0
      %1664 = vmatprep.subr.bf16.mxu0 0
      %1665 = vmatpush2.bf16.msra.mxu0 0
      %1666 = vmatprep.subr.bf16.mxu0 0
      %1667 = vmatpush2.bf16.msra.mxu0 0
      %1668 = vmatprep.subr.bf16.mxu0 0
      %1669 = vmatpush2.bf16.msra.mxu0 0
      %1670 = vmatprep.subr.bf16.mxu0 0
      %1671 = vmatpush2.bf16.msra.mxu0 0
      %1672 = vmatprep.mubr.bf16.mxu0 0
      %1673 = vmatmul.mubr.bf16.gmra.mxu0 %v1584
      %v1674 = vpop.f32.mrf.mxu0
      %v1675 = vadd.f32 0.0, %v1674
      %v1676 = vpop.f32.mrf.mxu0
      %v1677 = vpop.f32.mrf.mxu0
      %v1678 = vadd.f32 0.0, %v1677
      %v1679 = vpop.f32.mrf.mxu0
      %1680 = vmatprep.mubr.bf16.mxu0 0
      %1681 = vmatmul.mubr.bf16.gmra.mxu0 %v1587
      %v1682 = vpop.f32.mrf.mxu0
      %v1683 = vadd.f32 0.0, %v1682
      %v1684 = vpop.f32.mrf.mxu0
      %v1685 = vpop.f32.mrf.mxu0
      %v1686 = vadd.f32 0.0, %v1685
      %v1687 = vpop.f32.mrf.mxu0
      %1688 = vmatprep.mubr.bf16.mxu0 0
      %1689 = vmatmul.mubr.bf16.gmra.mxu0 %v1590
      %v1690 = vpop.f32.mrf.mxu0
      %v1691 = vadd.f32 0.0, %v1690
      %v1692 = vpop.f32.mrf.mxu0
      %v1693 = vpop.f32.mrf.mxu0
      %v1694 = vadd.f32 0.0, %v1693
      %v1695 = vpop.f32.mrf.mxu0
      %1696 = vmatprep.mubr.bf16.mxu0 0
      %1697 = vmatmul.mubr.bf16.gmra.mxu0 %v1593
      %v1698 = vpop.f32.mrf.mxu0
      %v1699 = vadd.f32 0.0, %v1698
      %v1700 = vpop.f32.mrf.mxu0
      %v1701 = vpop.f32.mrf.mxu0
      %v1702 = vadd.f32 0.0, %v1701
      %v1703 = vpop.f32.mrf.mxu0
      %1704 = vmatprep.mubr.bf16.mxu0 0
      %1705 = vmatmul.mubr.bf16.gmra.mxu0 %v1596
      %v1706 = vpop.f32.mrf.mxu0
      %v1707 = vadd.f32 0.0, %v1706
      %v1708 = vpop.f32.mrf.mxu0
      %v1709 = vpop.f32.mrf.mxu0
      %v1710 = vadd.f32 0.0, %v1709
      %v1711 = vpop.f32.mrf.mxu0
      %1712 = vmatprep.mubr.bf16.mxu0 0
      %1713 = vmatmul.mubr.bf16.gmra.mxu0 %v1599
      %v1714 = vpop.f32.mrf.mxu0
      %v1715 = vadd.f32 0.0, %v1714
      %v1716 = vpop.f32.mrf.mxu0
      %v1717 = vpop.f32.mrf.mxu0
      %v1718 = vadd.f32 0.0, %v1717
      %v1719 = vpop.f32.mrf.mxu0
      %1720 = vmatprep.mubr.bf16.mxu0 0
      %1721 = vmatmul.mubr.bf16.gmra.mxu0 %v1602
      %v1722 = vpop.f32.mrf.mxu0
      %v1723 = vadd.f32 0.0, %v1722
      %v1724 = vpop.f32.mrf.mxu0
      %v1725 = vpop.f32.mrf.mxu0
      %v1726 = vadd.f32 0.0, %v1725
      %v1727 = vpop.f32.mrf.mxu0
      %1728 = vmatprep.mubr.bf16.mxu0 0
      %1729 = vmatmul.mubr.bf16.gmra.mxu0 %v1605
      %v1730 = vpop.f32.mrf.mxu0
      %v1731 = vadd.f32 0.0, %v1730
      %v1732 = vpop.f32.mrf.mxu0
      %v1733 = vpop.f32.mrf.mxu0
      %v1734 = vadd.f32 0.0, %v1733
      %v1735 = vpop.f32.mrf.mxu0
      %1736 = vmatprep.mubr.bf16.mxu0 0
      %1737 = vmatmul.mubr.bf16.gmra.mxu0 %v1608
      %v1738 = vpop.f32.mrf.mxu0
      %v1739 = vadd.f32 0.0, %v1738
      %v1740 = vpop.f32.mrf.mxu0
      %v1741 = vpop.f32.mrf.mxu0
      %v1742 = vadd.f32 0.0, %v1741
      %v1743 = vpop.f32.mrf.mxu0
      %1744 = vmatprep.mubr.bf16.mxu0 0
      %1745 = vmatmul.mubr.bf16.gmra.mxu0 %v1611
      %v1746 = vpop.f32.mrf.mxu0
      %v1747 = vadd.f32 0.0, %v1746
      %v1748 = vpop.f32.mrf.mxu0
      %v1749 = vpop.f32.mrf.mxu0
      %v1750 = vadd.f32 0.0, %v1749
      %v1751 = vpop.f32.mrf.mxu0
      %1752 = vmatprep.mubr.bf16.mxu0 0
      %1753 = vmatmul.mubr.bf16.gmra.mxu0 %v1614
      %v1754 = vpop.f32.mrf.mxu0
      %v1755 = vadd.f32 0.0, %v1754
      %v1756 = vpop.f32.mrf.mxu0
      %v1757 = vpop.f32.mrf.mxu0
      %v1758 = vadd.f32 0.0, %v1757
      %v1759 = vpop.f32.mrf.mxu0
      %1760 = vmatprep.mubr.bf16.mxu0 0
      %1761 = vmatmul.mubr.bf16.gmra.mxu0 %v1617
      %v1762 = vpop.f32.mrf.mxu0
      %v1763 = vadd.f32 0.0, %v1762
      %v1764 = vpop.f32.mrf.mxu0
      %v1765 = vpop.f32.mrf.mxu0
      %v1766 = vadd.f32 0.0, %v1765
      %v1767 = vpop.f32.mrf.mxu0
      %1768 = vmatprep.mubr.bf16.mxu0 0
      %1769 = vmatmul.mubr.bf16.gmra.mxu0 %v1620
      %v1770 = vpop.f32.mrf.mxu0
      %v1771 = vadd.f32 0.0, %v1770
      %v1772 = vpop.f32.mrf.mxu0
      %v1773 = vpop.f32.mrf.mxu0
      %v1774 = vadd.f32 0.0, %v1773
      %v1775 = vpop.f32.mrf.mxu0
      %1776 = vmatprep.mubr.bf16.mxu0 0
      %1777 = vmatmul.mubr.bf16.gmra.mxu0 %v1623
      %v1778 = vpop.f32.mrf.mxu0
      %v1779 = vadd.f32 0.0, %v1778
      %v1780 = vpop.f32.mrf.mxu0
      %v1781 = vpop.f32.mrf.mxu0
      %v1782 = vadd.f32 0.0, %v1781
      %v1783 = vpop.f32.mrf.mxu0
      %1784 = vmatprep.mubr.bf16.mxu0 0
      %1785 = vmatmul.mubr.bf16.gmra.mxu0 %v1626
      %v1786 = vpop.f32.mrf.mxu0
      %v1787 = vadd.f32 0.0, %v1786
      %v1788 = vpop.f32.mrf.mxu0
      %v1789 = vpop.f32.mrf.mxu0
      %v1790 = vadd.f32 0.0, %v1789
      %v1791 = vpop.f32.mrf.mxu0
      %1792 = vmatprep.mubr.bf16.mxu0 0
      %1793 = vmatmul.mubr.bf16.gmra.mxu0 %v1629
      %v1794 = vpop.f32.mrf.mxu0
      %v1795 = vadd.f32 0.0, %v1794
      %v1796 = vpop.f32.mrf.mxu0
      %v1797 = vpop.f32.mrf.mxu0
      %v1798 = vadd.f32 0.0, %v1797
      %v1799 = vpop.f32.mrf.mxu0
      %1800 = vmatprep.mubr.bf16.mxu0 0
      %1801 = vmatmul.mubr.bf16.gmra.mxu0 %v1632
      %v1802 = vpop.f32.mrf.mxu0
      %v1803 = vadd.f32 0.0, %v1802
      %v1804 = vpop.f32.mrf.mxu0
      %v1805 = vpop.f32.mrf.mxu0
      %v1806 = vadd.f32 0.0, %v1805
      %v1807 = vpop.f32.mrf.mxu0
      %1808 = vmatprep.mubr.bf16.mxu0 0
      %1809 = vmatmul.mubr.bf16.gmra.mxu0 %v1635
      %v1810 = vpop.f32.mrf.mxu0
      %v1811 = vadd.f32 0.0, %v1810
      %v1812 = vpop.f32.mrf.mxu0
      %v1813 = vpop.f32.mrf.mxu0
      %v1814 = vadd.f32 0.0, %v1813
      %v1815 = vpop.f32.mrf.mxu0
      %1816 = vdwg.mxu0
      %v1817 = vadd.f32 %v1459, %v1675
      %v1818 = vadd.f32 %v1460, %v1678
      %v1819 = vadd.f32 %v1461, %v1683
      %v1820 = vadd.f32 %v1462, %v1686
      %v1821 = vadd.f32 %v1463, %v1691
      %v1822 = vadd.f32 %v1464, %v1694
      %v1823 = vadd.f32 %v1465, %v1699
      %v1824 = vadd.f32 %v1466, %v1702
      %v1825 = vadd.f32 %v1467, %v1707
      %v1826 = vadd.f32 %v1468, %v1710
      %v1827 = vadd.f32 %v1469, %v1715
      %v1828 = vadd.f32 %v1470, %v1718
      %v1829 = vadd.f32 %v1471, %v1723
      %v1830 = vadd.f32 %v1472, %v1726
      %v1831 = vadd.f32 %v1473, %v1731
      %v1832 = vadd.f32 %v1474, %v1734
      %v1833 = vadd.f32 %v1475, %v1739
      %v1834 = vadd.f32 %v1476, %v1742
      %v1835 = vadd.f32 %v1477, %v1747
      %v1836 = vadd.f32 %v1478, %v1750
      %v1837 = vadd.f32 %v1479, %v1755
      %v1838 = vadd.f32 %v1480, %v1758
      %v1839 = vadd.f32 %v1481, %v1763
      %v1840 = vadd.f32 %v1482, %v1766
      %v1841 = vadd.f32 %v1483, %v1771
      %v1842 = vadd.f32 %v1484, %v1774
      %v1843 = vadd.f32 %v1485, %v1779
      %v1844 = vadd.f32 %v1486, %v1782
      %v1845 = vadd.f32 %v1487, %v1787
      %v1846 = vadd.f32 %v1488, %v1790
      %v1847 = vadd.f32 %v1489, %v1795
      %v1848 = vadd.f32 %v1490, %v1798
      %v1849 = vadd.f32 %v1491, %v1803
      %v1850 = vadd.f32 %v1492, %v1806
      %v1851 = vadd.f32 %v1493, %v1811
      %v1852 = vadd.f32 %v1494, %v1814
      %s1853 = scalar_lea.vmem %s1, 10
      %v1854 = vld [vmem:[%s1853] sm:$0x3]
      %vm1855 = vcmask 1045504
      %v1856 = vrot.slane %v312, 2
      %v1857 = vrot.slane %v313, 2
      %v1858 = vsel %vm1855, %v1856, %v1857
      %v1859 = vrot.slane %v314, 2
      %v1860 = vsel %vm1855, %v1857, %v1859
      %v1861 = vrot.slane %v315, 2
      %v1862 = vsel %vm1855, %v1859, %v1861
      %v1863 = vrot.slane %v316, 2
      %v1864 = vsel %vm1855, %v1861, %v1863
      %v1865 = vrot.slane %v317, 2
      %v1866 = vsel %vm1855, %v1863, %v1865
      %v1867 = vrot.slane %v318, 2
      %v1868 = vsel %vm1855, %v1865, %v1867
      %v1869 = vrot.slane %v319, 2
      %v1870 = vsel %vm1855, %v1867, %v1869
      %v1871 = vrot.slane %v320, 2
      %v1872 = vsel %vm1855, %v1869, %v1871
      %v1873 = vrot.slane %v321, 2
      %v1874 = vsel %vm1855, %v1871, %v1873
      %v1875 = vrot.slane %v322, 2
      %v1876 = vsel %vm1855, %v1873, %v1875
      %v1877 = vrot.slane %v323, 2
      %v1878 = vsel %vm1855, %v1875, %v1877
      %v1879 = vrot.slane %v324, 2
      %v1880 = vsel %vm1855, %v1877, %v1879
      %v1881 = vrot.slane %v325, 2
      %v1882 = vsel %vm1855, %v1879, %v1881
      %v1883 = vrot.slane %v326, 2
      %v1884 = vsel %vm1855, %v1881, %v1883
      %v1885 = vrot.slane %v327, 2
      %v1886 = vsel %vm1855, %v1883, %v1885
      %v1887 = vrot.slane %v328, 2
      %v1888 = vsel %vm1855, %v1885, %v1887
      %v1889 = vrot.slane %v1263, 2
      %v1890 = vsel %vm1855, %v1887, %v1889
      %v1891 = vrot.slane %v1264, 2
      %v1892 = vsel %vm1855, %v1889, %v1891
      %v1894 = vsel %vm482, %v1858, 0
      %v1897 = vsel %vm482, %v1860, 0
      %v1900 = vsel %vm482, %v1862, 0
      %v1903 = vsel %vm482, %v1864, 0
      %v1906 = vsel %vm482, %v1866, 0
      %v1909 = vsel %vm482, %v1868, 0
      %v1912 = vsel %vm482, %v1870, 0
      %v1915 = vsel %vm482, %v1872, 0
      %v1918 = vsel %vm482, %v1874, 0
      %v1921 = vsel %vm482, %v1876, 0
      %v1924 = vsel %vm482, %v1878, 0
      %v1927 = vsel %vm482, %v1880, 0
      %v1930 = vsel %vm482, %v1882, 0
      %v1933 = vsel %vm482, %v1884, 0
      %v1936 = vsel %vm482, %v1886, 0
      %v1939 = vsel %vm482, %v1888, 0
      %v1942 = vsel %vm482, %v1890, 0
      %v1945 = vsel %vm482, %v1892, 0
      %v1948 = vsel %vm537, %v1854, 0
      %1950 = vmatprep.subr.bf16.mxu0 0
      %1951 = vmatpush1.bf16.msra.mxu0 0
      %1952 = vmatprep.subr.bf16.mxu0 0
      %1953 = vmatpush1.bf16.msra.mxu0 0
      %1954 = vmatprep.subr.bf16.mxu0 0
      %1955 = vmatpush1.bf16.msra.mxu0 0
      %1956 = vmatprep.subr.bf16.mxu0 0
      %1957 = vmatpush1.bf16.msra.mxu0 0
      %1958 = vmatprep.subr.bf16.mxu0 0
      %1959 = vmatpush1.bf16.msra.mxu0 0
      %1960 = vmatprep.subr.bf16.mxu0 0
      %1961 = vmatpush1.bf16.msra.mxu0 0
      %1962 = vmatprep.subr.bf16.mxu0 0
      %1963 = vmatpush1.bf16.msra.mxu0 0
      %1964 = vmatprep.subr.bf16.mxu0 0
      %1965 = vmatpush1.bf16.msra.mxu0 %v1948
      %1966 = vmatprep.subr.bf16.mxu0 0
      %1967 = vmatpush2.bf16.msra.mxu0 0
      %1968 = vmatprep.subr.bf16.mxu0 0
      %1969 = vmatpush2.bf16.msra.mxu0 0
      %1970 = vmatprep.subr.bf16.mxu0 0
      %1971 = vmatpush2.bf16.msra.mxu0 0
      %1972 = vmatprep.subr.bf16.mxu0 0
      %1973 = vmatpush2.bf16.msra.mxu0 0
      %1974 = vmatprep.subr.bf16.mxu0 0
      %1975 = vmatpush2.bf16.msra.mxu0 0
      %1976 = vmatprep.subr.bf16.mxu0 0
      %1977 = vmatpush2.bf16.msra.mxu0 0
      %1978 = vmatprep.subr.bf16.mxu0 0
      %1979 = vmatpush2.bf16.msra.mxu0 0
      %1980 = vmatprep.subr.bf16.mxu0 0
      %1981 = vmatpush2.bf16.msra.mxu0 0
      %1982 = vmatprep.mubr.bf16.mxu0 0
      %1983 = vmatmul.mubr.bf16.gmra.mxu0 %v1894
      %v1984 = vpop.f32.mrf.mxu0
      %v1985 = vadd.f32 0.0, %v1984
      %v1986 = vpop.f32.mrf.mxu0
      %v1987 = vpop.f32.mrf.mxu0
      %v1988 = vadd.f32 0.0, %v1987
      %v1989 = vpop.f32.mrf.mxu0
      %1990 = vmatprep.mubr.bf16.mxu0 0
      %1991 = vmatmul.mubr.bf16.gmra.mxu0 %v1897
      %v1992 = vpop.f32.mrf.mxu0
      %v1993 = vadd.f32 0.0, %v1992
      %v1994 = vpop.f32.mrf.mxu0
      %v1995 = vpop.f32.mrf.mxu0
      %v1996 = vadd.f32 0.0, %v1995
      %v1997 = vpop.f32.mrf.mxu0
      %1998 = vmatprep.mubr.bf16.mxu0 0
      %1999 = vmatmul.mubr.bf16.gmra.mxu0 %v1900
      %v2000 = vpop.f32.mrf.mxu0
      %v2001 = vadd.f32 0.0, %v2000
      %v2002 = vpop.f32.mrf.mxu0
      %v2003 = vpop.f32.mrf.mxu0
      %v2004 = vadd.f32 0.0, %v2003
      %v2005 = vpop.f32.mrf.mxu0
      %2006 = vmatprep.mubr.bf16.mxu0 0
      %2007 = vmatmul.mubr.bf16.gmra.mxu0 %v1903
      %v2008 = vpop.f32.mrf.mxu0
      %v2009 = vadd.f32 0.0, %v2008
      %v2010 = vpop.f32.mrf.mxu0
      %v2011 = vpop.f32.mrf.mxu0
      %v2012 = vadd.f32 0.0, %v2011
      %v2013 = vpop.f32.mrf.mxu0
      %2014 = vmatprep.mubr.bf16.mxu0 0
      %2015 = vmatmul.mubr.bf16.gmra.mxu0 %v1906
      %v2016 = vpop.f32.mrf.mxu0
      %v2017 = vadd.f32 0.0, %v2016
      %v2018 = vpop.f32.mrf.mxu0
      %v2019 = vpop.f32.mrf.mxu0
      %v2020 = vadd.f32 0.0, %v2019
      %v2021 = vpop.f32.mrf.mxu0
      %2022 = vmatprep.mubr.bf16.mxu0 0
      %2023 = vmatmul.mubr.bf16.gmra.mxu0 %v1909
      %v2024 = vpop.f32.mrf.mxu0
      %v2025 = vadd.f32 0.0, %v2024
      %v2026 = vpop.f32.mrf.mxu0
      %v2027 = vpop.f32.mrf.mxu0
      %v2028 = vadd.f32 0.0, %v2027
      %v2029 = vpop.f32.mrf.mxu0
      %2030 = vmatprep.mubr.bf16.mxu0 0
      %2031 = vmatmul.mubr.bf16.gmra.mxu0 %v1912
      %v2032 = vpop.f32.mrf.mxu0
      %v2033 = vadd.f32 0.0, %v2032
      %v2034 = vpop.f32.mrf.mxu0
      %v2035 = vpop.f32.mrf.mxu0
      %v2036 = vadd.f32 0.0, %v2035
      %v2037 = vpop.f32.mrf.mxu0
      %2038 = vmatprep.mubr.bf16.mxu0 0
      %2039 = vmatmul.mubr.bf16.gmra.mxu0 %v1915
      %v2040 = vpop.f32.mrf.mxu0
      %v2041 = vadd.f32 0.0, %v2040
      %v2042 = vpop.f32.mrf.mxu0
      %v2043 = vpop.f32.mrf.mxu0
      %v2044 = vadd.f32 0.0, %v2043
      %v2045 = vpop.f32.mrf.mxu0
      %2046 = vmatprep.mubr.bf16.mxu0 0
      %2047 = vmatmul.mubr.bf16.gmra.mxu0 %v1918
      %v2048 = vpop.f32.mrf.mxu0
      %v2049 = vadd.f32 0.0, %v2048
      %v2050 = vpop.f32.mrf.mxu0
      %v2051 = vpop.f32.mrf.mxu0
      %v2052 = vadd.f32 0.0, %v2051
      %v2053 = vpop.f32.mrf.mxu0
      %2054 = vmatprep.mubr.bf16.mxu0 0
      %2055 = vmatmul.mubr.bf16.gmra.mxu0 %v1921
      %v2056 = vpop.f32.mrf.mxu0
      %v2057 = vadd.f32 0.0, %v2056
      %v2058 = vpop.f32.mrf.mxu0
      %v2059 = vpop.f32.mrf.mxu0
      %v2060 = vadd.f32 0.0, %v2059
      %v2061 = vpop.f32.mrf.mxu0
      %2062 = vmatprep.mubr.bf16.mxu0 0
      %2063 = vmatmul.mubr.bf16.gmra.mxu0 %v1924
      %v2064 = vpop.f32.mrf.mxu0
      %v2065 = vadd.f32 0.0, %v2064
      %v2066 = vpop.f32.mrf.mxu0
      %v2067 = vpop.f32.mrf.mxu0
      %v2068 = vadd.f32 0.0, %v2067
      %v2069 = vpop.f32.mrf.mxu0
      %2070 = vmatprep.mubr.bf16.mxu0 0
      %2071 = vmatmul.mubr.bf16.gmra.mxu0 %v1927
      %v2072 = vpop.f32.mrf.mxu0
      %v2073 = vadd.f32 0.0, %v2072
      %v2074 = vpop.f32.mrf.mxu0
      %v2075 = vpop.f32.mrf.mxu0
      %v2076 = vadd.f32 0.0, %v2075
      %v2077 = vpop.f32.mrf.mxu0
      %2078 = vmatprep.mubr.bf16.mxu0 0
      %2079 = vmatmul.mubr.bf16.gmra.mxu0 %v1930
      %v2080 = vpop.f32.mrf.mxu0
      %v2081 = vadd.f32 0.0, %v2080
      %v2082 = vpop.f32.mrf.mxu0
      %v2083 = vpop.f32.mrf.mxu0
      %v2084 = vadd.f32 0.0, %v2083
      %v2085 = vpop.f32.mrf.mxu0
      %2086 = vmatprep.mubr.bf16.mxu0 0
      %2087 = vmatmul.mubr.bf16.gmra.mxu0 %v1933
      %v2088 = vpop.f32.mrf.mxu0
      %v2089 = vadd.f32 0.0, %v2088
      %v2090 = vpop.f32.mrf.mxu0
      %v2091 = vpop.f32.mrf.mxu0
      %v2092 = vadd.f32 0.0, %v2091
      %v2093 = vpop.f32.mrf.mxu0
      %2094 = vmatprep.mubr.bf16.mxu0 0
      %2095 = vmatmul.mubr.bf16.gmra.mxu0 %v1936
      %v2096 = vpop.f32.mrf.mxu0
      %v2097 = vadd.f32 0.0, %v2096
      %v2098 = vpop.f32.mrf.mxu0
      %v2099 = vpop.f32.mrf.mxu0
      %v2100 = vadd.f32 0.0, %v2099
      %v2101 = vpop.f32.mrf.mxu0
      %2102 = vmatprep.mubr.bf16.mxu0 0
      %2103 = vmatmul.mubr.bf16.gmra.mxu0 %v1939
      %v2104 = vpop.f32.mrf.mxu0
      %v2105 = vadd.f32 0.0, %v2104
      %v2106 = vpop.f32.mrf.mxu0
      %v2107 = vpop.f32.mrf.mxu0
      %v2108 = vadd.f32 0.0, %v2107
      %v2109 = vpop.f32.mrf.mxu0
      %2110 = vmatprep.mubr.bf16.mxu0 0
      %2111 = vmatmul.mubr.bf16.gmra.mxu0 %v1942
      %v2112 = vpop.f32.mrf.mxu0
      %v2113 = vadd.f32 0.0, %v2112
      %v2114 = vpop.f32.mrf.mxu0
      %v2115 = vpop.f32.mrf.mxu0
      %v2116 = vadd.f32 0.0, %v2115
      %v2117 = vpop.f32.mrf.mxu0
      %2118 = vmatprep.mubr.bf16.mxu0 0
      %2119 = vmatmul.mubr.bf16.gmra.mxu0 %v1945
      %v2120 = vpop.f32.mrf.mxu0
      %v2121 = vadd.f32 0.0, %v2120
      %v2122 = vpop.f32.mrf.mxu0
      %v2123 = vpop.f32.mrf.mxu0
      %v2124 = vadd.f32 0.0, %v2123
      %v2125 = vpop.f32.mrf.mxu0
      %2126 = vdwg.mxu0
      %v2127 = vadd.f32 %v1817, %v1985
      %v2128 = vadd.f32 %v1818, %v1988
      %v2129 = vadd.f32 %v1819, %v1993
      %v2130 = vadd.f32 %v1820, %v1996
      %v2131 = vadd.f32 %v1821, %v2001
      %v2132 = vadd.f32 %v1822, %v2004
      %v2133 = vadd.f32 %v1823, %v2009
      %v2134 = vadd.f32 %v1824, %v2012
      %v2135 = vadd.f32 %v1825, %v2017
      %v2136 = vadd.f32 %v1826, %v2020
      %v2137 = vadd.f32 %v1827, %v2025
      %v2138 = vadd.f32 %v1828, %v2028
      %v2139 = vadd.f32 %v1829, %v2033
      %v2140 = vadd.f32 %v1830, %v2036
      %v2141 = vadd.f32 %v1831, %v2041
      %v2142 = vadd.f32 %v1832, %v2044
      %v2143 = vadd.f32 %v1833, %v2049
      %v2144 = vadd.f32 %v1834, %v2052
      %v2145 = vadd.f32 %v1835, %v2057
      %v2146 = vadd.f32 %v1836, %v2060
      %v2147 = vadd.f32 %v1837, %v2065
      %v2148 = vadd.f32 %v1838, %v2068
      %v2149 = vadd.f32 %v1839, %v2073
      %v2150 = vadd.f32 %v1840, %v2076
      %v2151 = vadd.f32 %v1841, %v2081
      %v2152 = vadd.f32 %v1842, %v2084
      %v2153 = vadd.f32 %v1843, %v2089
      %v2154 = vadd.f32 %v1844, %v2092
      %v2155 = vadd.f32 %v1845, %v2097
      %v2156 = vadd.f32 %v1846, %v2100
      %v2157 = vadd.f32 %v1847, %v2105
      %v2158 = vadd.f32 %v1848, %v2108
      %v2159 = vadd.f32 %v1849, %v2113
      %v2160 = vadd.f32 %v1850, %v2116
      %v2161 = vadd.f32 %v1851, %v2121
      %v2162 = vadd.f32 %v1852, %v2124
      %v2163 = vpack.c.bf16 %v309, %v308
      %v2164 = vpack.c.bf16 %v310, %v310
      %s2165 = scalar_lea.vmem %s1, 12
      %v2166 = vld [vmem:[%s2165] sm:$0x3]
      %v2169 = vrot.slane %v2163, 2
      %v2170 = vsel %vm1855, %v1889, %v2169
      %v2171 = vrot.slane %v2164, 2
      %v2172 = vsel %vm1855, %v2169, %v2171
      %v2174 = vsel %vm482, %v2170, 0
      %v2177 = vsel %vm482, %v2172, 0
      %v2180 = vsel %vm537, %v2166, 0
      %2182 = vmatprep.subr.bf16.mxu0 0
      %2183 = vmatpush1.bf16.msra.mxu0 0
      %2184 = vmatprep.subr.bf16.mxu0 0
      %2185 = vmatpush1.bf16.msra.mxu0 0
      %2186 = vmatprep.subr.bf16.mxu0 0
      %2187 = vmatpush1.bf16.msra.mxu0 0
      %2188 = vmatprep.subr.bf16.mxu0 0
      %2189 = vmatpush1.bf16.msra.mxu0 0
      %2190 = vmatprep.subr.bf16.mxu0 0
      %2191 = vmatpush1.bf16.msra.mxu0 0
      %2192 = vmatprep.subr.bf16.mxu0 0
      %2193 = vmatpush1.bf16.msra.mxu0 0
      %2194 = vmatprep.subr.bf16.mxu0 0
      %2195 = vmatpush1.bf16.msra.mxu0 0
      %2196 = vmatprep.subr.bf16.mxu0 0
      %2197 = vmatpush1.bf16.msra.mxu0 %v2180
      %2198 = vmatprep.subr.bf16.mxu0 0
      %2199 = vmatpush2.bf16.msra.mxu0 0
      %2200 = vmatprep.subr.bf16.mxu0 0
      %2201 = vmatpush2.bf16.msra.mxu0 0
      %2202 = vmatprep.subr.bf16.mxu0 0
      %2203 = vmatpush2.bf16.msra.mxu0 0
      %2204 = vmatprep.subr.bf16.mxu0 0
      %2205 = vmatpush2.bf16.msra.mxu0 0
      %2206 = vmatprep.subr.bf16.mxu0 0
      %2207 = vmatpush2.bf16.msra.mxu0 0
      %2208 = vmatprep.subr.bf16.mxu0 0
      %2209 = vmatpush2.bf16.msra.mxu0 0
      %2210 = vmatprep.subr.bf16.mxu0 0
      %2211 = vmatpush2.bf16.msra.mxu0 0
      %2212 = vmatprep.subr.bf16.mxu0 0
      %2213 = vmatpush2.bf16.msra.mxu0 0
      %2214 = vmatprep.mubr.bf16.mxu0 0
      %2215 = vmatmul.mubr.bf16.gmra.mxu0 %v1897
      %v2216 = vpop.f32.mrf.mxu0
      %v2217 = vadd.f32 0.0, %v2216
      %v2218 = vpop.f32.mrf.mxu0
      %v2219 = vpop.f32.mrf.mxu0
      %v2220 = vadd.f32 0.0, %v2219
      %v2221 = vpop.f32.mrf.mxu0
      %2222 = vmatprep.mubr.bf16.mxu0 0
      %2223 = vmatmul.mubr.bf16.gmra.mxu0 %v1900
      %v2224 = vpop.f32.mrf.mxu0
      %v2225 = vadd.f32 0.0, %v2224
      %v2226 = vpop.f32.mrf.mxu0
      %v2227 = vpop.f32.mrf.mxu0
      %v2228 = vadd.f32 0.0, %v2227
      %v2229 = vpop.f32.mrf.mxu0
      %2230 = vmatprep.mubr.bf16.mxu0 0
      %2231 = vmatmul.mubr.bf16.gmra.mxu0 %v1903
      %v2232 = vpop.f32.mrf.mxu0
      %v2233 = vadd.f32 0.0, %v2232
      %v2234 = vpop.f32.mrf.mxu0
      %v2235 = vpop.f32.mrf.mxu0
      %v2236 = vadd.f32 0.0, %v2235
      %v2237 = vpop.f32.mrf.mxu0
      %2238 = vmatprep.mubr.bf16.mxu0 0
      %2239 = vmatmul.mubr.bf16.gmra.mxu0 %v1906
      %v2240 = vpop.f32.mrf.mxu0
      %v2241 = vadd.f32 0.0, %v2240
      %v2242 = vpop.f32.mrf.mxu0
      %v2243 = vpop.f32.mrf.mxu0
      %v2244 = vadd.f32 0.0, %v2243
      %v2245 = vpop.f32.mrf.mxu0
      %2246 = vmatprep.mubr.bf16.mxu0 0
      %2247 = vmatmul.mubr.bf16.gmra.mxu0 %v1909
      %v2248 = vpop.f32.mrf.mxu0
      %v2249 = vadd.f32 0.0, %v2248
      %v2250 = vpop.f32.mrf.mxu0
      %v2251 = vpop.f32.mrf.mxu0
      %v2252 = vadd.f32 0.0, %v2251
      %v2253 = vpop.f32.mrf.mxu0
      %2254 = vmatprep.mubr.bf16.mxu0 0
      %2255 = vmatmul.mubr.bf16.gmra.mxu0 %v1912
      %v2256 = vpop.f32.mrf.mxu0
      %v2257 = vadd.f32 0.0, %v2256
      %v2258 = vpop.f32.mrf.mxu0
      %v2259 = vpop.f32.mrf.mxu0
      %v2260 = vadd.f32 0.0, %v2259
      %v2261 = vpop.f32.mrf.mxu0
      %2262 = vmatprep.mubr.bf16.mxu0 0
      %2263 = vmatmul.mubr.bf16.gmra.mxu0 %v1915
      %v2264 = vpop.f32.mrf.mxu0
      %v2265 = vadd.f32 0.0, %v2264
      %v2266 = vpop.f32.mrf.mxu0
      %v2267 = vpop.f32.mrf.mxu0
      %v2268 = vadd.f32 0.0, %v2267
      %v2269 = vpop.f32.mrf.mxu0
      %2270 = vmatprep.mubr.bf16.mxu0 0
      %2271 = vmatmul.mubr.bf16.gmra.mxu0 %v1918
      %v2272 = vpop.f32.mrf.mxu0
      %v2273 = vadd.f32 0.0, %v2272
      %v2274 = vpop.f32.mrf.mxu0
      %v2275 = vpop.f32.mrf.mxu0
      %v2276 = vadd.f32 0.0, %v2275
      %v2277 = vpop.f32.mrf.mxu0
      %2278 = vmatprep.mubr.bf16.mxu0 0
      %2279 = vmatmul.mubr.bf16.gmra.mxu0 %v1921
      %v2280 = vpop.f32.mrf.mxu0
      %v2281 = vadd.f32 0.0, %v2280
      %v2282 = vpop.f32.mrf.mxu0
      %v2283 = vpop.f32.mrf.mxu0
      %v2284 = vadd.f32 0.0, %v2283
      %v2285 = vpop.f32.mrf.mxu0
      %2286 = vmatprep.mubr.bf16.mxu0 0
      %2287 = vmatmul.mubr.bf16.gmra.mxu0 %v1924
      %v2288 = vpop.f32.mrf.mxu0
      %v2289 = vadd.f32 0.0, %v2288
      %v2290 = vpop.f32.mrf.mxu0
      %v2291 = vpop.f32.mrf.mxu0
      %v2292 = vadd.f32 0.0, %v2291
      %v2293 = vpop.f32.mrf.mxu0
      %2294 = vmatprep.mubr.bf16.mxu0 0
      %2295 = vmatmul.mubr.bf16.gmra.mxu0 %v1927
      %v2296 = vpop.f32.mrf.mxu0
      %v2297 = vadd.f32 0.0, %v2296
      %v2298 = vpop.f32.mrf.mxu0
      %v2299 = vpop.f32.mrf.mxu0
      %v2300 = vadd.f32 0.0, %v2299
      %v2301 = vpop.f32.mrf.mxu0
      %2302 = vmatprep.mubr.bf16.mxu0 0
      %2303 = vmatmul.mubr.bf16.gmra.mxu0 %v1930
      %v2304 = vpop.f32.mrf.mxu0
      %v2305 = vadd.f32 0.0, %v2304
      %v2306 = vpop.f32.mrf.mxu0
      %v2307 = vpop.f32.mrf.mxu0
      %v2308 = vadd.f32 0.0, %v2307
      %v2309 = vpop.f32.mrf.mxu0
      %2310 = vmatprep.mubr.bf16.mxu0 0
      %2311 = vmatmul.mubr.bf16.gmra.mxu0 %v1933
      %v2312 = vpop.f32.mrf.mxu0
      %v2313 = vadd.f32 0.0, %v2312
      %v2314 = vpop.f32.mrf.mxu0
      %v2315 = vpop.f32.mrf.mxu0
      %v2316 = vadd.f32 0.0, %v2315
      %v2317 = vpop.f32.mrf.mxu0
      %2318 = vmatprep.mubr.bf16.mxu0 0
      %2319 = vmatmul.mubr.bf16.gmra.mxu0 %v1936
      %v2320 = vpop.f32.mrf.mxu0
      %v2321 = vadd.f32 0.0, %v2320
      %v2322 = vpop.f32.mrf.mxu0
      %v2323 = vpop.f32.mrf.mxu0
      %v2324 = vadd.f32 0.0, %v2323
      %v2325 = vpop.f32.mrf.mxu0
      %2326 = vmatprep.mubr.bf16.mxu0 0
      %2327 = vmatmul.mubr.bf16.gmra.mxu0 %v1939
      %v2328 = vpop.f32.mrf.mxu0
      %v2329 = vadd.f32 0.0, %v2328
      %v2330 = vpop.f32.mrf.mxu0
      %v2331 = vpop.f32.mrf.mxu0
      %v2332 = vadd.f32 0.0, %v2331
      %v2333 = vpop.f32.mrf.mxu0
      %2334 = vmatprep.mubr.bf16.mxu0 0
      %2335 = vmatmul.mubr.bf16.gmra.mxu0 %v1942
      %v2336 = vpop.f32.mrf.mxu0
      %v2337 = vadd.f32 0.0, %v2336
      %v2338 = vpop.f32.mrf.mxu0
      %v2339 = vpop.f32.mrf.mxu0
      %v2340 = vadd.f32 0.0, %v2339
      %v2341 = vpop.f32.mrf.mxu0
      %2342 = vmatprep.mubr.bf16.mxu0 0
      %2343 = vmatmul.mubr.bf16.gmra.mxu0 %v2174
      %v2344 = vpop.f32.mrf.mxu0
      %v2345 = vadd.f32 0.0, %v2344
      %v2346 = vpop.f32.mrf.mxu0
      %v2347 = vpop.f32.mrf.mxu0
      %v2348 = vadd.f32 0.0, %v2347
      %v2349 = vpop.f32.mrf.mxu0
      %2350 = vmatprep.mubr.bf16.mxu0 0
      %2351 = vmatmul.mubr.bf16.gmra.mxu0 %v2177
      %v2352 = vpop.f32.mrf.mxu0
      %v2353 = vadd.f32 0.0, %v2352
      %v2354 = vpop.f32.mrf.mxu0
      %v2355 = vpop.f32.mrf.mxu0
      %v2356 = vadd.f32 0.0, %v2355
      %v2357 = vpop.f32.mrf.mxu0
      %2358 = vdwg.mxu0
      %v2359 = vadd.f32 %v2127, %v2217
      %v2360 = vadd.f32 %v2128, %v2220
      %v2361 = vadd.f32 %v2129, %v2225
      %v2362 = vadd.f32 %v2130, %v2228
      %v2363 = vadd.f32 %v2131, %v2233
      %v2364 = vadd.f32 %v2132, %v2236
      %v2365 = vadd.f32 %v2133, %v2241
      %v2366 = vadd.f32 %v2134, %v2244
      %v2367 = vadd.f32 %v2135, %v2249
      %v2368 = vadd.f32 %v2136, %v2252
      %v2369 = vadd.f32 %v2137, %v2257
      %v2370 = vadd.f32 %v2138, %v2260
      %v2371 = vadd.f32 %v2139, %v2265
      %v2372 = vadd.f32 %v2140, %v2268
      %v2373 = vadd.f32 %v2141, %v2273
      %v2374 = vadd.f32 %v2142, %v2276
      %v2375 = vadd.f32 %v2143, %v2281
      %v2376 = vadd.f32 %v2144, %v2284
      %v2377 = vadd.f32 %v2145, %v2289
      %v2378 = vadd.f32 %v2146, %v2292
      %v2379 = vadd.f32 %v2147, %v2297
      %v2380 = vadd.f32 %v2148, %v2300
      %v2381 = vadd.f32 %v2149, %v2305
      %v2382 = vadd.f32 %v2150, %v2308
      %v2383 = vadd.f32 %v2151, %v2313
      %v2384 = vadd.f32 %v2152, %v2316
      %v2385 = vadd.f32 %v2153, %v2321
      %v2386 = vadd.f32 %v2154, %v2324
      %v2387 = vadd.f32 %v2155, %v2329
      %v2388 = vadd.f32 %v2156, %v2332
      %v2389 = vadd.f32 %v2157, %v2337
      %v2390 = vadd.f32 %v2158, %v2340
      %v2391 = vadd.f32 %v2159, %v2345
      %v2392 = vadd.f32 %v2160, %v2348
      %v2393 = vadd.f32 %v2161, %v2353
      %v2394 = vadd.f32 %v2162, %v2356
      %s2395 = scalar_lea.vmem %s1, 14
      %v2396 = vld [vmem:[%s2395] sm:$0x3]
      %vm2397 = vsmask.f32 5376
      %v2398 = vrot.slane %v354, 2
      %v2399 = vrot.slane %v350, 3
      %v2400 = vor.u32 %v2398, %v2399
      %v2401 = vrot.slane %v362, 2
      %v2402 = vrot.slane %v358, 3
      %v2403 = vor.u32 %v2401, %v2402
      %v2404 = vsel %vm2397, %v2400, %v2403
      %v2405 = vrot.slane %v370, 2
      %v2406 = vrot.slane %v366, 3
      %v2407 = vor.u32 %v2405, %v2406
      %v2408 = vsel %vm2397, %v2403, %v2407
      %v2409 = vrot.slane %v378, 2
      %v2410 = vrot.slane %v374, 3
      %v2411 = vor.u32 %v2409, %v2410
      %v2412 = vsel %vm2397, %v2407, %v2411
      %v2413 = vrot.slane %v386, 2
      %v2414 = vrot.slane %v382, 3
      %v2415 = vor.u32 %v2413, %v2414
      %v2416 = vsel %vm2397, %v2411, %v2415
      %v2417 = vrot.slane %v394, 2
      %v2418 = vrot.slane %v390, 3
      %v2419 = vor.u32 %v2417, %v2418
      %v2420 = vsel %vm2397, %v2415, %v2419
      %v2421 = vrot.slane %v402, 2
      %v2422 = vrot.slane %v398, 3
      %v2423 = vor.u32 %v2421, %v2422
      %v2424 = vsel %vm2397, %v2419, %v2423
      %v2425 = vrot.slane %v410, 2
      %v2426 = vrot.slane %v406, 3
      %v2427 = vor.u32 %v2425, %v2426
      %v2428 = vsel %vm2397, %v2423, %v2427
      %v2429 = vrot.slane %v418, 2
      %v2430 = vrot.slane %v414, 3
      %v2431 = vor.u32 %v2429, %v2430
      %v2432 = vsel %vm2397, %v2427, %v2431
      %v2433 = vrot.slane %v426, 2
      %v2434 = vrot.slane %v422, 3
      %v2435 = vor.u32 %v2433, %v2434
      %v2436 = vsel %vm2397, %v2431, %v2435
      %v2437 = vrot.slane %v434, 2
      %v2438 = vrot.slane %v430, 3
      %v2439 = vor.u32 %v2437, %v2438
      %v2440 = vsel %vm2397, %v2435, %v2439
      %v2441 = vrot.slane %v442, 2
      %v2442 = vrot.slane %v438, 3
      %v2443 = vor.u32 %v2441, %v2442
      %v2444 = vsel %vm2397, %v2439, %v2443
      %v2445 = vrot.slane %v450, 2
      %v2446 = vrot.slane %v446, 3
      %v2447 = vor.u32 %v2445, %v2446
      %v2448 = vsel %vm2397, %v2443, %v2447
      %v2449 = vrot.slane %v458, 2
      %v2450 = vrot.slane %v454, 3
      %v2451 = vor.u32 %v2449, %v2450
      %v2452 = vsel %vm2397, %v2447, %v2451
      %v2453 = vrot.slane %v466, 2
      %v2454 = vrot.slane %v462, 3
      %v2455 = vor.u32 %v2453, %v2454
      %v2456 = vsel %vm2397, %v2451, %v2455
      %v2457 = vrot.slane %v474, 2
      %v2458 = vrot.slane %v470, 3
      %v2459 = vor.u32 %v2457, %v2458
      %v2460 = vsel %vm2397, %v2455, %v2459
      %v2461 = vrot.slane %v1566, 2
      %v2462 = vrot.slane %v1569, 3
      %v2463 = vor.u32 %v2461, %v2462
      %v2464 = vsel %vm2397, %v2459, %v2463
      %v2466 = vshrl.u32 %v2163, 16
      %v2468 = vrot.slane %v2466, 2
      %v2469 = vshll.u32 %v2163, 16
      %v2471 = vrot.slane %v2469, 3
      %v2472 = vor.u32 %v2468, %v2471
      %v2473 = vsel %vm2397, %v2463, %v2472
      %v2475 = vshrl.u32 %v2164, 16
      %v2477 = vrot.slane %v2475, 2
      %v2478 = vshll.u32 %v2164, 16
      %v2480 = vrot.slane %v2478, 3
      %v2481 = vor.u32 %v2477, %v2480
      %v2482 = vsel %vm2397, %v2472, %v2481
      %v2484 = vsel %vm482, %v2404, 0
      %v2487 = vsel %vm482, %v2408, 0
      %v2490 = vsel %vm482, %v2412, 0
      %v2493 = vsel %vm482, %v2416, 0
      %v2496 = vsel %vm482, %v2420, 0
      %v2499 = vsel %vm482, %v2424, 0
      %v2502 = vsel %vm482, %v2428, 0
      %v2505 = vsel %vm482, %v2432, 0
      %v2508 = vsel %vm482, %v2436, 0
      %v2511 = vsel %vm482, %v2440, 0
      %v2514 = vsel %vm482, %v2444, 0
      %v2517 = vsel %vm482, %v2448, 0
      %v2520 = vsel %vm482, %v2452, 0
      %v2523 = vsel %vm482, %v2456, 0
      %v2526 = vsel %vm482, %v2460, 0
      %v2529 = vsel %vm482, %v2464, 0
      %v2532 = vsel %vm482, %v2473, 0
      %v2535 = vsel %vm482, %v2482, 0
      %v2538 = vsel %vm537, %v2396, 0
      %2540 = vmatprep.subr.bf16.mxu0 0
      %2541 = vmatpush1.bf16.msra.mxu0 0
      %2542 = vmatprep.subr.bf16.mxu0 0
      %2543 = vmatpush1.bf16.msra.mxu0 0
      %2544 = vmatprep.subr.bf16.mxu0 0
      %2545 = vmatpush1.bf16.msra.mxu0 0
      %2546 = vmatprep.subr.bf16.mxu0 0
      %2547 = vmatpush1.bf16.msra.mxu0 0
      %2548 = vmatprep.subr.bf16.mxu0 0
      %2549 = vmatpush1.bf16.msra.mxu0 0
      %2550 = vmatprep.subr.bf16.mxu0 0
      %2551 = vmatpush1.bf16.msra.mxu0 0
      %2552 = vmatprep.subr.bf16.mxu0 0
      %2553 = vmatpush1.bf16.msra.mxu0 0
      %2554 = vmatprep.subr.bf16.mxu0 0
      %2555 = vmatpush1.bf16.msra.mxu0 %v2538
      %2556 = vmatprep.subr.bf16.mxu0 0
      %2557 = vmatpush2.bf16.msra.mxu0 0
      %2558 = vmatprep.subr.bf16.mxu0 0
      %2559 = vmatpush2.bf16.msra.mxu0 0
      %2560 = vmatprep.subr.bf16.mxu0 0
      %2561 = vmatpush2.bf16.msra.mxu0 0
      %2562 = vmatprep.subr.bf16.mxu0 0
      %2563 = vmatpush2.bf16.msra.mxu0 0
      %2564 = vmatprep.subr.bf16.mxu0 0
      %2565 = vmatpush2.bf16.msra.mxu0 0
      %2566 = vmatprep.subr.bf16.mxu0 0
      %2567 = vmatpush2.bf16.msra.mxu0 0
      %2568 = vmatprep.subr.bf16.mxu0 0
      %2569 = vmatpush2.bf16.msra.mxu0 0
      %2570 = vmatprep.subr.bf16.mxu0 0
      %2571 = vmatpush2.bf16.msra.mxu0 0
      %2572 = vmatprep.mubr.bf16.mxu0 0
      %2573 = vmatmul.mubr.bf16.gmra.mxu0 %v2484
      %v2574 = vpop.f32.mrf.mxu0
      %v2575 = vadd.f32 0.0, %v2574
      %v2576 = vpop.f32.mrf.mxu0
      %v2577 = vpop.f32.mrf.mxu0
      %v2578 = vadd.f32 0.0, %v2577
      %v2579 = vpop.f32.mrf.mxu0
      %2580 = vmatprep.mubr.bf16.mxu0 0
      %2581 = vmatmul.mubr.bf16.gmra.mxu0 %v2487
      %v2582 = vpop.f32.mrf.mxu0
      %v2583 = vadd.f32 0.0, %v2582
      %v2584 = vpop.f32.mrf.mxu0
      %v2585 = vpop.f32.mrf.mxu0
      %v2586 = vadd.f32 0.0, %v2585
      %v2587 = vpop.f32.mrf.mxu0
      %2588 = vmatprep.mubr.bf16.mxu0 0
      %2589 = vmatmul.mubr.bf16.gmra.mxu0 %v2490
      %v2590 = vpop.f32.mrf.mxu0
      %v2591 = vadd.f32 0.0, %v2590
      %v2592 = vpop.f32.mrf.mxu0
      %v2593 = vpop.f32.mrf.mxu0
      %v2594 = vadd.f32 0.0, %v2593
      %v2595 = vpop.f32.mrf.mxu0
      %2596 = vmatprep.mubr.bf16.mxu0 0
      %2597 = vmatmul.mubr.bf16.gmra.mxu0 %v2493
      %v2598 = vpop.f32.mrf.mxu0
      %v2599 = vadd.f32 0.0, %v2598
      %v2600 = vpop.f32.mrf.mxu0
      %v2601 = vpop.f32.mrf.mxu0
      %v2602 = vadd.f32 0.0, %v2601
      %v2603 = vpop.f32.mrf.mxu0
      %2604 = vmatprep.mubr.bf16.mxu0 0
      %2605 = vmatmul.mubr.bf16.gmra.mxu0 %v2496
      %v2606 = vpop.f32.mrf.mxu0
      %v2607 = vadd.f32 0.0, %v2606
      %v2608 = vpop.f32.mrf.mxu0
      %v2609 = vpop.f32.mrf.mxu0
      %v2610 = vadd.f32 0.0, %v2609
      %v2611 = vpop.f32.mrf.mxu0
      %2612 = vmatprep.mubr.bf16.mxu0 0
      %2613 = vmatmul.mubr.bf16.gmra.mxu0 %v2499
      %v2614 = vpop.f32.mrf.mxu0
      %v2615 = vadd.f32 0.0, %v2614
      %v2616 = vpop.f32.mrf.mxu0
      %v2617 = vpop.f32.mrf.mxu0
      %v2618 = vadd.f32 0.0, %v2617
      %v2619 = vpop.f32.mrf.mxu0
      %2620 = vmatprep.mubr.bf16.mxu0 0
      %2621 = vmatmul.mubr.bf16.gmra.mxu0 %v2502
      %v2622 = vpop.f32.mrf.mxu0
      %v2623 = vadd.f32 0.0, %v2622
      %v2624 = vpop.f32.mrf.mxu0
      %v2625 = vpop.f32.mrf.mxu0
      %v2626 = vadd.f32 0.0, %v2625
      %v2627 = vpop.f32.mrf.mxu0
      %2628 = vmatprep.mubr.bf16.mxu0 0
      %2629 = vmatmul.mubr.bf16.gmra.mxu0 %v2505
      %v2630 = vpop.f32.mrf.mxu0
      %v2631 = vadd.f32 0.0, %v2630
      %v2632 = vpop.f32.mrf.mxu0
      %v2633 = vpop.f32.mrf.mxu0
      %v2634 = vadd.f32 0.0, %v2633
      %v2635 = vpop.f32.mrf.mxu0
      %2636 = vmatprep.mubr.bf16.mxu0 0
      %2637 = vmatmul.mubr.bf16.gmra.mxu0 %v2508
      %v2638 = vpop.f32.mrf.mxu0
      %v2639 = vadd.f32 0.0, %v2638
      %v2640 = vpop.f32.mrf.mxu0
      %v2641 = vpop.f32.mrf.mxu0
      %v2642 = vadd.f32 0.0, %v2641
      %v2643 = vpop.f32.mrf.mxu0
      %2644 = vmatprep.mubr.bf16.mxu0 0
      %2645 = vmatmul.mubr.bf16.gmra.mxu0 %v2511
      %v2646 = vpop.f32.mrf.mxu0
      %v2647 = vadd.f32 0.0, %v2646
      %v2648 = vpop.f32.mrf.mxu0
      %v2649 = vpop.f32.mrf.mxu0
      %v2650 = vadd.f32 0.0, %v2649
      %v2651 = vpop.f32.mrf.mxu0
      %2652 = vmatprep.mubr.bf16.mxu0 0
      %2653 = vmatmul.mubr.bf16.gmra.mxu0 %v2514
      %v2654 = vpop.f32.mrf.mxu0
      %v2655 = vadd.f32 0.0, %v2654
      %v2656 = vpop.f32.mrf.mxu0
      %v2657 = vpop.f32.mrf.mxu0
      %v2658 = vadd.f32 0.0, %v2657
      %v2659 = vpop.f32.mrf.mxu0
      %2660 = vmatprep.mubr.bf16.mxu0 0
      %2661 = vmatmul.mubr.bf16.gmra.mxu0 %v2517
      %v2662 = vpop.f32.mrf.mxu0
      %v2663 = vadd.f32 0.0, %v2662
      %v2664 = vpop.f32.mrf.mxu0
      %v2665 = vpop.f32.mrf.mxu0
      %v2666 = vadd.f32 0.0, %v2665
      %v2667 = vpop.f32.mrf.mxu0
      %2668 = vmatprep.mubr.bf16.mxu0 0
      %2669 = vmatmul.mubr.bf16.gmra.mxu0 %v2520
      %v2670 = vpop.f32.mrf.mxu0
      %v2671 = vadd.f32 0.0, %v2670
      %v2672 = vpop.f32.mrf.mxu0
      %v2673 = vpop.f32.mrf.mxu0
      %v2674 = vadd.f32 0.0, %v2673
      %v2675 = vpop.f32.mrf.mxu0
      %2676 = vmatprep.mubr.bf16.mxu0 0
      %2677 = vmatmul.mubr.bf16.gmra.mxu0 %v2523
      %v2678 = vpop.f32.mrf.mxu0
      %v2679 = vadd.f32 0.0, %v2678
      %v2680 = vpop.f32.mrf.mxu0
      %v2681 = vpop.f32.mrf.mxu0
      %v2682 = vadd.f32 0.0, %v2681
      %v2683 = vpop.f32.mrf.mxu0
      %2684 = vmatprep.mubr.bf16.mxu0 0
      %2685 = vmatmul.mubr.bf16.gmra.mxu0 %v2526
      %v2686 = vpop.f32.mrf.mxu0
      %v2687 = vadd.f32 0.0, %v2686
      %v2688 = vpop.f32.mrf.mxu0
      %v2689 = vpop.f32.mrf.mxu0
      %v2690 = vadd.f32 0.0, %v2689
      %v2691 = vpop.f32.mrf.mxu0
      %2692 = vmatprep.mubr.bf16.mxu0 0
      %2693 = vmatmul.mubr.bf16.gmra.mxu0 %v2529
      %v2694 = vpop.f32.mrf.mxu0
      %v2695 = vadd.f32 0.0, %v2694
      %v2696 = vpop.f32.mrf.mxu0
      %v2697 = vpop.f32.mrf.mxu0
      %v2698 = vadd.f32 0.0, %v2697
      %v2699 = vpop.f32.mrf.mxu0
      %2700 = vmatprep.mubr.bf16.mxu0 0
      %2701 = vmatmul.mubr.bf16.gmra.mxu0 %v2532
      %v2702 = vpop.f32.mrf.mxu0
      %v2703 = vadd.f32 0.0, %v2702
      %v2704 = vpop.f32.mrf.mxu0
      %v2705 = vpop.f32.mrf.mxu0
      %v2706 = vadd.f32 0.0, %v2705
      %v2707 = vpop.f32.mrf.mxu0
      %2708 = vmatprep.mubr.bf16.mxu0 0
      %2709 = vmatmul.mubr.bf16.gmra.mxu0 %v2535
      %v2710 = vpop.f32.mrf.mxu0
      %v2711 = vadd.f32 0.0, %v2710
      %v2712 = vpop.f32.mrf.mxu0
      %v2713 = vpop.f32.mrf.mxu0
      %v2714 = vadd.f32 0.0, %v2713
      %v2715 = vpop.f32.mrf.mxu0
      %2716 = vdwg.mxu0
      %v2717 = vadd.f32 %v2359, %v2575
      %v2718 = vadd.f32 %v2360, %v2578
      %v2719 = vadd.f32 %v2361, %v2583
      %v2720 = vadd.f32 %v2362, %v2586
      %v2721 = vadd.f32 %v2363, %v2591
      %v2722 = vadd.f32 %v2364, %v2594
      %v2723 = vadd.f32 %v2365, %v2599
      %v2724 = vadd.f32 %v2366, %v2602
      %v2725 = vadd.f32 %v2367, %v2607
      %v2726 = vadd.f32 %v2368, %v2610
      %v2727 = vadd.f32 %v2369, %v2615
      %v2728 = vadd.f32 %v2370, %v2618
      %v2729 = vadd.f32 %v2371, %v2623
      %v2730 = vadd.f32 %v2372, %v2626
      %v2731 = vadd.f32 %v2373, %v2631
      %v2732 = vadd.f32 %v2374, %v2634
      %v2733 = vadd.f32 %v2375, %v2639
      %v2734 = vadd.f32 %v2376, %v2642
      %v2735 = vadd.f32 %v2377, %v2647
      %v2736 = vadd.f32 %v2378, %v2650
      %v2737 = vadd.f32 %v2379, %v2655
      %v2738 = vadd.f32 %v2380, %v2658
      %v2739 = vadd.f32 %v2381, %v2663
      %v2740 = vadd.f32 %v2382, %v2666
      %v2741 = vadd.f32 %v2383, %v2671
      %v2742 = vadd.f32 %v2384, %v2674
      %v2743 = vadd.f32 %v2385, %v2679
      %v2744 = vadd.f32 %v2386, %v2682
      %v2745 = vadd.f32 %v2387, %v2687
      %v2746 = vadd.f32 %v2388, %v2690
      %v2747 = vadd.f32 %v2389, %v2695
      %v2748 = vadd.f32 %v2390, %v2698
      %v2749 = vadd.f32 %v2391, %v2703
      %v2750 = vadd.f32 %v2392, %v2706
      %v2751 = vadd.f32 %v2393, %v2711
      %v2752 = vadd.f32 %v2394, %v2714
      %s2753 = scalar_lea.vmem %s1, 16
      %v2754 = vld [vmem:[%s2753] sm:$0x3]
      %vm2755 = vcmask 1044480
      %v2756 = vrot.slane %v313, 3
      %v2757 = vrot.slane %v314, 3
      %v2758 = vsel %vm2755, %v2756, %v2757
      %v2759 = vrot.slane %v315, 3
      %v2760 = vsel %vm2755, %v2757, %v2759
      %v2761 = vrot.slane %v316, 3
      %v2762 = vsel %vm2755, %v2759, %v2761
      %v2763 = vrot.slane %v317, 3
      %v2764 = vsel %vm2755, %v2761, %v2763
      %v2765 = vrot.slane %v318, 3
      %v2766 = vsel %vm2755, %v2763, %v2765
      %v2767 = vrot.slane %v319, 3
      %v2768 = vsel %vm2755, %v2765, %v2767
      %v2769 = vrot.slane %v320, 3
      %v2770 = vsel %vm2755, %v2767, %v2769
      %v2771 = vrot.slane %v321, 3
      %v2772 = vsel %vm2755, %v2769, %v2771
      %v2773 = vrot.slane %v322, 3
      %v2774 = vsel %vm2755, %v2771, %v2773
      %v2775 = vrot.slane %v323, 3
      %v2776 = vsel %vm2755, %v2773, %v2775
      %v2777 = vrot.slane %v324, 3
      %v2778 = vsel %vm2755, %v2775, %v2777
      %v2779 = vrot.slane %v325, 3
      %v2780 = vsel %vm2755, %v2777, %v2779
      %v2781 = vrot.slane %v326, 3
      %v2782 = vsel %vm2755, %v2779, %v2781
      %v2783 = vrot.slane %v327, 3
      %v2784 = vsel %vm2755, %v2781, %v2783
      %v2785 = vrot.slane %v328, 3
      %v2786 = vsel %vm2755, %v2783, %v2785
      %v2787 = vrot.slane %v1263, 3
      %v2788 = vsel %vm2755, %v2785, %v2787
      %v2789 = vrot.slane %v2163, 3
      %v2790 = vsel %vm2755, %v2787, %v2789
      %v2791 = vrot.slane %v2164, 3
      %v2792 = vsel %vm2755, %v2789, %v2791
      %v2794 = vsel %vm482, %v2758, 0
      %v2797 = vsel %vm482, %v2760, 0
      %v2800 = vsel %vm482, %v2762, 0
      %v2803 = vsel %vm482, %v2764, 0
      %v2806 = vsel %vm482, %v2766, 0
      %v2809 = vsel %vm482, %v2768, 0
      %v2812 = vsel %vm482, %v2770, 0
      %v2815 = vsel %vm482, %v2772, 0
      %v2818 = vsel %vm482, %v2774, 0
      %v2821 = vsel %vm482, %v2776, 0
      %v2824 = vsel %vm482, %v2778, 0
      %v2827 = vsel %vm482, %v2780, 0
      %v2830 = vsel %vm482, %v2782, 0
      %v2833 = vsel %vm482, %v2784, 0
      %v2836 = vsel %vm482, %v2786, 0
      %v2839 = vsel %vm482, %v2788, 0
      %v2842 = vsel %vm482, %v2790, 0
      %v2845 = vsel %vm482, %v2792, 0
      %v2848 = vsel %vm537, %v2754, 0
      %2850 = vmatprep.subr.bf16.mxu0 0
      %2851 = vmatpush1.bf16.msra.mxu0 0
      %2852 = vmatprep.subr.bf16.mxu0 0
      %2853 = vmatpush1.bf16.msra.mxu0 0
      %2854 = vmatprep.subr.bf16.mxu0 0
      %2855 = vmatpush1.bf16.msra.mxu0 0
      %2856 = vmatprep.subr.bf16.mxu0 0
      %2857 = vmatpush1.bf16.msra.mxu0 0
      %2858 = vmatprep.subr.bf16.mxu0 0
      %2859 = vmatpush1.bf16.msra.mxu0 0
      %2860 = vmatprep.subr.bf16.mxu0 0
      %2861 = vmatpush1.bf16.msra.mxu0 0
      %2862 = vmatprep.subr.bf16.mxu0 0
      %2863 = vmatpush1.bf16.msra.mxu0 0
      %2864 = vmatprep.subr.bf16.mxu0 0
      %2865 = vmatpush1.bf16.msra.mxu0 %v2848
      %2866 = vmatprep.subr.bf16.mxu0 0
      %2867 = vmatpush2.bf16.msra.mxu0 0
      %2868 = vmatprep.subr.bf16.mxu0 0
      %2869 = vmatpush2.bf16.msra.mxu0 0
      %2870 = vmatprep.subr.bf16.mxu0 0
      %2871 = vmatpush2.bf16.msra.mxu0 0
      %2872 = vmatprep.subr.bf16.mxu0 0
      %2873 = vmatpush2.bf16.msra.mxu0 0
      %2874 = vmatprep.subr.bf16.mxu0 0
      %2875 = vmatpush2.bf16.msra.mxu0 0
      %2876 = vmatprep.subr.bf16.mxu0 0
      %2877 = vmatpush2.bf16.msra.mxu0 0
      %2878 = vmatprep.subr.bf16.mxu0 0
      %2879 = vmatpush2.bf16.msra.mxu0 0
      %2880 = vmatprep.subr.bf16.mxu0 0
      %2881 = vmatpush2.bf16.msra.mxu0 0
      %2882 = vmatprep.mubr.bf16.mxu0 0
      %2883 = vmatmul.mubr.bf16.gmra.mxu0 %v2794
      %v2884 = vpop.f32.mrf.mxu0
      %v2885 = vadd.f32 0.0, %v2884
      %v2886 = vpop.f32.mrf.mxu0
      %v2887 = vpop.f32.mrf.mxu0
      %v2888 = vadd.f32 0.0, %v2887
      %v2889 = vpop.f32.mrf.mxu0
      %2890 = vmatprep.mubr.bf16.mxu0 0
      %2891 = vmatmul.mubr.bf16.gmra.mxu0 %v2797
      %v2892 = vpop.f32.mrf.mxu0
      %v2893 = vadd.f32 0.0, %v2892
      %v2894 = vpop.f32.mrf.mxu0
      %v2895 = vpop.f32.mrf.mxu0
      %v2896 = vadd.f32 0.0, %v2895
      %v2897 = vpop.f32.mrf.mxu0
      %2898 = vmatprep.mubr.bf16.mxu0 0
      %2899 = vmatmul.mubr.bf16.gmra.mxu0 %v2800
      %v2900 = vpop.f32.mrf.mxu0
      %v2901 = vadd.f32 0.0, %v2900
      %v2902 = vpop.f32.mrf.mxu0
      %v2903 = vpop.f32.mrf.mxu0
      %v2904 = vadd.f32 0.0, %v2903
      %v2905 = vpop.f32.mrf.mxu0
      %2906 = vmatprep.mubr.bf16.mxu0 0
      %2907 = vmatmul.mubr.bf16.gmra.mxu0 %v2803
      %v2908 = vpop.f32.mrf.mxu0
      %v2909 = vadd.f32 0.0, %v2908
      %v2910 = vpop.f32.mrf.mxu0
      %v2911 = vpop.f32.mrf.mxu0
      %v2912 = vadd.f32 0.0, %v2911
      %v2913 = vpop.f32.mrf.mxu0
      %2914 = vmatprep.mubr.bf16.mxu0 0
      %2915 = vmatmul.mubr.bf16.gmra.mxu0 %v2806
      %v2916 = vpop.f32.mrf.mxu0
      %v2917 = vadd.f32 0.0, %v2916
      %v2918 = vpop.f32.mrf.mxu0
      %v2919 = vpop.f32.mrf.mxu0
      %v2920 = vadd.f32 0.0, %v2919
      %v2921 = vpop.f32.mrf.mxu0
      %2922 = vmatprep.mubr.bf16.mxu0 0
      %2923 = vmatmul.mubr.bf16.gmra.mxu0 %v2809
      %v2924 = vpop.f32.mrf.mxu0
      %v2925 = vadd.f32 0.0, %v2924
      %v2926 = vpop.f32.mrf.mxu0
      %v2927 = vpop.f32.mrf.mxu0
      %v2928 = vadd.f32 0.0, %v2927
      %v2929 = vpop.f32.mrf.mxu0
      %2930 = vmatprep.mubr.bf16.mxu0 0
      %2931 = vmatmul.mubr.bf16.gmra.mxu0 %v2812
      %v2932 = vpop.f32.mrf.mxu0
      %v2933 = vadd.f32 0.0, %v2932
      %v2934 = vpop.f32.mrf.mxu0
      %v2935 = vpop.f32.mrf.mxu0
      %v2936 = vadd.f32 0.0, %v2935
      %v2937 = vpop.f32.mrf.mxu0
      %2938 = vmatprep.mubr.bf16.mxu0 0
      %2939 = vmatmul.mubr.bf16.gmra.mxu0 %v2815
      %v2940 = vpop.f32.mrf.mxu0
      %v2941 = vadd.f32 0.0, %v2940
      %v2942 = vpop.f32.mrf.mxu0
      %v2943 = vpop.f32.mrf.mxu0
      %v2944 = vadd.f32 0.0, %v2943
      %v2945 = vpop.f32.mrf.mxu0
      %2946 = vmatprep.mubr.bf16.mxu0 0
      %2947 = vmatmul.mubr.bf16.gmra.mxu0 %v2818
      %v2948 = vpop.f32.mrf.mxu0
      %v2949 = vadd.f32 0.0, %v2948
      %v2950 = vpop.f32.mrf.mxu0
      %v2951 = vpop.f32.mrf.mxu0
      %v2952 = vadd.f32 0.0, %v2951
      %v2953 = vpop.f32.mrf.mxu0
      %2954 = vmatprep.mubr.bf16.mxu0 0
      %2955 = vmatmul.mubr.bf16.gmra.mxu0 %v2821
      %v2956 = vpop.f32.mrf.mxu0
      %v2957 = vadd.f32 0.0, %v2956
      %v2958 = vpop.f32.mrf.mxu0
      %v2959 = vpop.f32.mrf.mxu0
      %v2960 = vadd.f32 0.0, %v2959
      %v2961 = vpop.f32.mrf.mxu0
      %2962 = vmatprep.mubr.bf16.mxu0 0
      %2963 = vmatmul.mubr.bf16.gmra.mxu0 %v2824
      %v2964 = vpop.f32.mrf.mxu0
      %v2965 = vadd.f32 0.0, %v2964
      %v2966 = vpop.f32.mrf.mxu0
      %v2967 = vpop.f32.mrf.mxu0
      %v2968 = vadd.f32 0.0, %v2967
      %v2969 = vpop.f32.mrf.mxu0
      %2970 = vmatprep.mubr.bf16.mxu0 0
      %2971 = vmatmul.mubr.bf16.gmra.mxu0 %v2827
      %v2972 = vpop.f32.mrf.mxu0
      %v2973 = vadd.f32 0.0, %v2972
      %v2974 = vpop.f32.mrf.mxu0
      %v2975 = vpop.f32.mrf.mxu0
      %v2976 = vadd.f32 0.0, %v2975
      %v2977 = vpop.f32.mrf.mxu0
      %2978 = vmatprep.mubr.bf16.mxu0 0
      %2979 = vmatmul.mubr.bf16.gmra.mxu0 %v2830
      %v2980 = vpop.f32.mrf.mxu0
      %v2981 = vadd.f32 0.0, %v2980
      %v2982 = vpop.f32.mrf.mxu0
      %v2983 = vpop.f32.mrf.mxu0
      %v2984 = vadd.f32 0.0, %v2983
      %v2985 = vpop.f32.mrf.mxu0
      %2986 = vmatprep.mubr.bf16.mxu0 0
      %2987 = vmatmul.mubr.bf16.gmra.mxu0 %v2833
      %v2988 = vpop.f32.mrf.mxu0
      %v2989 = vadd.f32 0.0, %v2988
      %v2990 = vpop.f32.mrf.mxu0
      %v2991 = vpop.f32.mrf.mxu0
      %v2992 = vadd.f32 0.0, %v2991
      %v2993 = vpop.f32.mrf.mxu0
      %2994 = vmatprep.mubr.bf16.mxu0 0
      %2995 = vmatmul.mubr.bf16.gmra.mxu0 %v2836
      %v2996 = vpop.f32.mrf.mxu0
      %v2997 = vadd.f32 0.0, %v2996
      %v2998 = vpop.f32.mrf.mxu0
      %v2999 = vpop.f32.mrf.mxu0
      %v3000 = vadd.f32 0.0, %v2999
      %v3001 = vpop.f32.mrf.mxu0
      %3002 = vmatprep.mubr.bf16.mxu0 0
      %3003 = vmatmul.mubr.bf16.gmra.mxu0 %v2839
      %v3004 = vpop.f32.mrf.mxu0
      %v3005 = vadd.f32 0.0, %v3004
      %v3006 = vpop.f32.mrf.mxu0
      %v3007 = vpop.f32.mrf.mxu0
      %v3008 = vadd.f32 0.0, %v3007
      %v3009 = vpop.f32.mrf.mxu0
      %3010 = vmatprep.mubr.bf16.mxu0 0
      %3011 = vmatmul.mubr.bf16.gmra.mxu0 %v2842
      %v3012 = vpop.f32.mrf.mxu0
      %v3013 = vadd.f32 0.0, %v3012
      %v3014 = vpop.f32.mrf.mxu0
      %v3015 = vpop.f32.mrf.mxu0
      %v3016 = vadd.f32 0.0, %v3015
      %v3017 = vpop.f32.mrf.mxu0
      %3018 = vmatprep.mubr.bf16.mxu0 0
      %3019 = vmatmul.mubr.bf16.gmra.mxu0 %v2845
      %v3020 = vpop.f32.mrf.mxu0
      %v3021 = vadd.f32 0.0, %v3020
      %v3022 = vpop.f32.mrf.mxu0
      %v3023 = vpop.f32.mrf.mxu0
      %v3024 = vadd.f32 0.0, %v3023
      %v3025 = vpop.f32.mrf.mxu0
      %3026 = vdwg.mxu0
      %v3027 = vadd.f32 %v2717, %v2885
      %v3028 = vadd.f32 %v2718, %v2888
      %v3029 = vadd.f32 %v2719, %v2893
      %v3030 = vadd.f32 %v2720, %v2896
      %v3031 = vadd.f32 %v2721, %v2901
      %v3032 = vadd.f32 %v2722, %v2904
      %v3033 = vadd.f32 %v2723, %v2909
      %v3034 = vadd.f32 %v2724, %v2912
      %v3035 = vadd.f32 %v2725, %v2917
      %v3036 = vadd.f32 %v2726, %v2920
      %v3037 = vadd.f32 %v2727, %v2925
      %v3038 = vadd.f32 %v2728, %v2928
      %v3039 = vadd.f32 %v2729, %v2933
      %v3040 = vadd.f32 %v2730, %v2936
      %v3041 = vadd.f32 %v2731, %v2941
      %v3042 = vadd.f32 %v2732, %v2944
      %v3043 = vadd.f32 %v2733, %v2949
      %v3044 = vadd.f32 %v2734, %v2952
      %v3045 = vadd.f32 %v2735, %v2957
      %v3046 = vadd.f32 %v2736, %v2960
      %v3047 = vadd.f32 %v2737, %v2965
      %v3048 = vadd.f32 %v2738, %v2968
      %v3049 = vadd.f32 %v2739, %v2973
      %v3050 = vadd.f32 %v2740, %v2976
      %v3051 = vadd.f32 %v2741, %v2981
      %v3052 = vadd.f32 %v2742, %v2984
      %v3053 = vadd.f32 %v2743, %v2989
      %v3054 = vadd.f32 %v2744, %v2992
      %v3055 = vadd.f32 %v2745, %v2997
      %v3056 = vadd.f32 %v2746, %v3000
      %v3057 = vadd.f32 %v2747, %v3005
      %v3058 = vadd.f32 %v2748, %v3008
      %v3059 = vadd.f32 %v2749, %v3013
      %v3060 = vadd.f32 %v2750, %v3016
      %v3061 = vadd.f32 %v2751, %v3021
      %v3062 = vadd.f32 %v2752, %v3024
      %v3063 = vld [vmem:[%s2] sm:$0x1]
      %v3065 = vlaneseq
      %v3066 = vshrl.u32 %v3065, 7
      %v3067 = vsub.s32 0, %v3066
      %v3068 = vrot.slane %v3063, %v3067
      %v3070 = vadd.f32 %v3027, %v3068
      %v3071 = vadd.f32 %v3028, %v3068
      %v3072 = vadd.f32 %v3029, %v3068
      %v3073 = vadd.f32 %v3030, %v3068
      %v3074 = vadd.f32 %v3031, %v3068
      %v3075 = vadd.f32 %v3032, %v3068
      %v3076 = vadd.f32 %v3033, %v3068
      %v3077 = vadd.f32 %v3034, %v3068
      %v3078 = vadd.f32 %v3035, %v3068
      %v3079 = vadd.f32 %v3036, %v3068
      %v3080 = vadd.f32 %v3037, %v3068
      %v3081 = vadd.f32 %v3038, %v3068
      %v3082 = vadd.f32 %v3039, %v3068
      %v3083 = vadd.f32 %v3040, %v3068
      %v3084 = vadd.f32 %v3041, %v3068
      %v3085 = vadd.f32 %v3042, %v3068
      %v3086 = vadd.f32 %v3043, %v3068
      %v3087 = vadd.f32 %v3044, %v3068
      %v3088 = vadd.f32 %v3045, %v3068
      %v3089 = vadd.f32 %v3046, %v3068
      %v3090 = vadd.f32 %v3047, %v3068
      %v3091 = vadd.f32 %v3048, %v3068
      %v3092 = vadd.f32 %v3049, %v3068
      %v3093 = vadd.f32 %v3050, %v3068
      %v3094 = vadd.f32 %v3051, %v3068
      %v3095 = vadd.f32 %v3052, %v3068
      %v3096 = vadd.f32 %v3053, %v3068
      %v3097 = vadd.f32 %v3054, %v3068
      %v3098 = vadd.f32 %v3055, %v3068
      %v3099 = vadd.f32 %v3056, %v3068
      %v3100 = vadd.f32 %v3057, %v3068
      %v3101 = vadd.f32 %v3058, %v3068
      %v3102 = vadd.f32 %v3059, %v3068
      %v3103 = vadd.f32 %v3060, %v3068
      %v3104 = vadd.f32 %v3061, %v3068
      %v3105 = vadd.f32 %v3062, %v3068
      %3106 = vst [vmem:[%s262] sm:$0xff] %v3070
      %3107 = vst [vmem:[%s262 + $0x8] sm:$0xff] %v3071
      %3108 = vst [vmem:[%s262 + $0x10] sm:$0xff] %v3072
      %3109 = vst [vmem:[%s262 + $0x18] sm:$0xff] %v3073
      %3110 = vst [vmem:[%s262 + $0x20] sm:$0xff] %v3074
      %3111 = vst [vmem:[%s262 + $0x28] sm:$0xff] %v3075
      %3112 = vst [vmem:[%s262 + $0x30] sm:$0xff] %v3076
      %3113 = vst [vmem:[%s262 + $0x38] sm:$0xff] %v3077
      %3114 = vst [vmem:[%s262 + $0x40] sm:$0xff] %v3078
      %3115 = vst [vmem:[%s262 + $0x48] sm:$0xff] %v3079
      %3116 = vst [vmem:[%s262 + $0x50] sm:$0xff] %v3080
      %3117 = vst [vmem:[%s262 + $0x58] sm:$0xff] %v3081
      %3118 = vst [vmem:[%s262 + $0x60] sm:$0xff] %v3082
      %3119 = vst [vmem:[%s262 + $0x68] sm:$0xff] %v3083
      %3120 = vst [vmem:[%s262 + $0x70] sm:$0xff] %v3084
      %3121 = vst [vmem:[%s262 + $0x78] sm:$0xff] %v3085
      %3122 = vst [vmem:[%s262 + $0x80] sm:$0xff] %v3086
      %3123 = vst [vmem:[%s262 + $0x88] sm:$0xff] %v3087
      %3124 = vst [vmem:[%s262 + $0x90] sm:$0xff] %v3088
      %3125 = vst [vmem:[%s262 + $0x98] sm:$0xff] %v3089
      %3126 = vst [vmem:[%s262 + $0xa0] sm:$0xff] %v3090
      %3127 = vst [vmem:[%s262 + $0xa8] sm:$0xff] %v3091
      %3128 = vst [vmem:[%s262 + $0xb0] sm:$0xff] %v3092
      %3129 = vst [vmem:[%s262 + $0xb8] sm:$0xff] %v3093
      %3130 = vst [vmem:[%s262 + $0xc0] sm:$0xff] %v3094
      %3131 = vst [vmem:[%s262 + $0xc8] sm:$0xff] %v3095
      %3132 = vst [vmem:[%s262 + $0xd0] sm:$0xff] %v3096
      %3133 = vst [vmem:[%s262 + $0xd8] sm:$0xff] %v3097
      %3134 = vst [vmem:[%s262 + $0xe0] sm:$0xff] %v3098
      %3135 = vst [vmem:[%s262 + $0xe8] sm:$0xff] %v3099
      %3136 = vst [vmem:[%s262 + $0xf0] sm:$0xff] %v3100
      %3137 = vst [vmem:[%s262 + $0xf8] sm:$0xff] %v3101
      %3138 = vst [vmem:[%s262 + $0x100] sm:$0xff] %v3102
      %3139 = vst [vmem:[%s262 + $0x108] sm:$0xff] %v3103
      %3140 = vst [vmem:[%s262 + $0x110] sm:$0xff] %v3104
      %3141 = vst [vmem:[%s262 + $0x118] sm:$0xff] %v3105
      %v3142 = vld [vmem:[%s3] sm:$0xff]
      %v3143 = vld [vmem:[%s3 + $0x8] sm:$0xff]
      %v3144 = vld [vmem:[%s3 + $0x10] sm:$0xff]
      %v3145 = vld [vmem:[%s3 + $0x18] sm:$0xff]
      %v3146 = vld [vmem:[%s3 + $0x20] sm:$0xff]
      %v3147 = vld [vmem:[%s3 + $0x28] sm:$0xff]
      %v3148 = vld [vmem:[%s3 + $0x30] sm:$0xff]
      %v3149 = vld [vmem:[%s3 + $0x38] sm:$0xff]
      %v3150 = vld [vmem:[%s3 + $0x40] sm:$0xff]
      %v3151 = vld [vmem:[%s3 + $0x48] sm:$0xff]
      %v3152 = vld [vmem:[%s3 + $0x50] sm:$0xff]
      %v3153 = vld [vmem:[%s3 + $0x58] sm:$0xff]
      %v3154 = vld [vmem:[%s3 + $0x60] sm:$0xff]
      %v3155 = vld [vmem:[%s3 + $0x68] sm:$0xff]
      %v3156 = vld [vmem:[%s3 + $0x70] sm:$0xff]
      %v3157 = vld [vmem:[%s3 + $0x78] sm:$0xff]
      %v3158 = vld [vmem:[%s3 + $0x80] sm:$0xff]
      %v3159 = vld [vmem:[%s3 + $0x88] sm:$0xff]
      %v3160 = vld [vmem:[%s3 + $0x90] sm:$0xff]
      %v3161 = vld [vmem:[%s3 + $0x98] sm:$0xff]
      %v3162 = vld [vmem:[%s3 + $0xa0] sm:$0xff]
      %v3163 = vld [vmem:[%s3 + $0xa8] sm:$0xff]
      %v3164 = vld [vmem:[%s3 + $0xb0] sm:$0xff]
      %v3165 = vld [vmem:[%s3 + $0xb8] sm:$0xff]
      %v3166 = vld [vmem:[%s3 + $0xc0] sm:$0xff]
      %v3167 = vld [vmem:[%s3 + $0xc8] sm:$0xff]
      %v3168 = vld [vmem:[%s3 + $0xd0] sm:$0xff]
      %v3169 = vld [vmem:[%s3 + $0xd8] sm:$0xff]
      %v3170 = vld [vmem:[%s3 + $0xe0] sm:$0xff]
      %v3171 = vld [vmem:[%s3 + $0xe8] sm:$0xff]
      %v3172 = vld [vmem:[%s3 + $0xf0] sm:$0xff]
      %v3173 = vld [vmem:[%s3 + $0xf8] sm:$0xff]
      %v3174 = vld [vmem:[%s3 + $0x100] sm:$0xff]
      %v3175 = vld [vmem:[%s3 + $0x108] sm:$0xff]
      %v3176 = vld [vmem:[%s3 + $0x110] sm:$0xff]
      %v3177 = vld [vmem:[%s3 + $0x118] sm:$0xff]
      %3179 = vset.pattern.permute.xlu0 0
      %3180 = vperm.xlu0 %3179, %v3142
      %v3181 = vpop.permute.xlu0 %3180
      %3184 = vset.pattern.permute.xlu0 0
      %3185 = vperm.xlu0 %3184, %v3143
      %v3186 = vpop.permute.xlu0 %3185
      %3189 = vset.pattern.permute.xlu0 0
      %3190 = vperm.xlu0 %3189, %v3144
      %v3191 = vpop.permute.xlu0 %3190
      %3194 = vset.pattern.permute.xlu0 0
      %3195 = vperm.xlu0 %3194, %v3145
      %v3196 = vpop.permute.xlu0 %3195
      %3199 = vset.pattern.permute.xlu0 0
      %3200 = vperm.xlu0 %3199, %v3146
      %v3201 = vpop.permute.xlu0 %3200
      %3204 = vset.pattern.permute.xlu0 0
      %3205 = vperm.xlu0 %3204, %v3147
      %v3206 = vpop.permute.xlu0 %3205
      %3209 = vset.pattern.permute.xlu0 0
      %3210 = vperm.xlu0 %3209, %v3148
      %v3211 = vpop.permute.xlu0 %3210
      %3214 = vset.pattern.permute.xlu0 0
      %3215 = vperm.xlu0 %3214, %v3149
      %v3216 = vpop.permute.xlu0 %3215
      %3219 = vset.pattern.permute.xlu0 0
      %3220 = vperm.xlu0 %3219, %v3150
      %v3221 = vpop.permute.xlu0 %3220
      %3224 = vset.pattern.permute.xlu0 0
      %3225 = vperm.xlu0 %3224, %v3151
      %v3226 = vpop.permute.xlu0 %3225
      %3229 = vset.pattern.permute.xlu0 0
      %3230 = vperm.xlu0 %3229, %v3152
      %v3231 = vpop.permute.xlu0 %3230
      %3234 = vset.pattern.permute.xlu0 0
      %3235 = vperm.xlu0 %3234, %v3153
      %v3236 = vpop.permute.xlu0 %3235
      %3239 = vset.pattern.permute.xlu0 0
      %3240 = vperm.xlu0 %3239, %v3154
      %v3241 = vpop.permute.xlu0 %3240
      %3244 = vset.pattern.permute.xlu0 0
      %3245 = vperm.xlu0 %3244, %v3155
      %v3246 = vpop.permute.xlu0 %3245
      %3249 = vset.pattern.permute.xlu0 0
      %3250 = vperm.xlu0 %3249, %v3156
      %v3251 = vpop.permute.xlu0 %3250
      %3254 = vset.pattern.permute.xlu0 0
      %3255 = vperm.xlu0 %3254, %v3157
      %v3256 = vpop.permute.xlu0 %3255
      %3259 = vset.pattern.permute.xlu0 0
      %3260 = vperm.xlu0 %3259, %v3158
      %v3261 = vpop.permute.xlu0 %3260
      %3264 = vset.pattern.permute.xlu0 0
      %3265 = vperm.xlu0 %3264, %v3159
      %v3266 = vpop.permute.xlu0 %3265
      %3269 = vset.pattern.permute.xlu0 0
      %3270 = vperm.xlu0 %3269, %v3160
      %v3271 = vpop.permute.xlu0 %3270
      %3274 = vset.pattern.permute.xlu0 0
      %3275 = vperm.xlu0 %3274, %v3161
      %v3276 = vpop.permute.xlu0 %3275
      %3279 = vset.pattern.permute.xlu0 0
      %3280 = vperm.xlu0 %3279, %v3162
      %v3281 = vpop.permute.xlu0 %3280
      %3284 = vset.pattern.permute.xlu0 0
      %3285 = vperm.xlu0 %3284, %v3163
      %v3286 = vpop.permute.xlu0 %3285
      %3289 = vset.pattern.permute.xlu0 0
      %3290 = vperm.xlu0 %3289, %v3164
      %v3291 = vpop.permute.xlu0 %3290
      %3294 = vset.pattern.permute.xlu0 0
      %3295 = vperm.xlu0 %3294, %v3165
      %v3296 = vpop.permute.xlu0 %3295
      %3299 = vset.pattern.permute.xlu0 0
      %3300 = vperm.xlu0 %3299, %v3166
      %v3301 = vpop.permute.xlu0 %3300
      %3304 = vset.pattern.permute.xlu0 0
      %3305 = vperm.xlu0 %3304, %v3167
      %v3306 = vpop.permute.xlu0 %3305
      %3309 = vset.pattern.permute.xlu0 0
      %3310 = vperm.xlu0 %3309, %v3168
      %v3311 = vpop.permute.xlu0 %3310
      %3314 = vset.pattern.permute.xlu0 0
      %3315 = vperm.xlu0 %3314, %v3169
      %v3316 = vpop.permute.xlu0 %3315
      %3319 = vset.pattern.permute.xlu0 0
      %3320 = vperm.xlu0 %3319, %v3170
      %v3321 = vpop.permute.xlu0 %3320
      %3324 = vset.pattern.permute.xlu0 0
      %3325 = vperm.xlu0 %3324, %v3171
      %v3326 = vpop.permute.xlu0 %3325
      %3329 = vset.pattern.permute.xlu0 0
      %3330 = vperm.xlu0 %3329, %v3172
      %v3331 = vpop.permute.xlu0 %3330
      %3334 = vset.pattern.permute.xlu0 0
      %3335 = vperm.xlu0 %3334, %v3173
      %v3336 = vpop.permute.xlu0 %3335
      %3339 = vset.pattern.permute.xlu0 0
      %3340 = vperm.xlu0 %3339, %v3174
      %v3341 = vpop.permute.xlu0 %3340
      %3344 = vset.pattern.permute.xlu0 0
      %3345 = vperm.xlu0 %3344, %v3175
      %v3346 = vpop.permute.xlu0 %3345
      %3349 = vset.pattern.permute.xlu0 0
      %3350 = vperm.xlu0 %3349, %v3176
      %v3351 = vpop.permute.xlu0 %3350
      %3354 = vset.pattern.permute.xlu0 0
      %3355 = vperm.xlu0 %3354, %v3177
      %v3356 = vpop.permute.xlu0 %3355
      %v3358 = vmul.f32 %v3070, %v3181
      %v3359 = vmul.f32 %v3071, %v3186
      %v3360 = vmul.f32 %v3072, %v3191
      %v3361 = vmul.f32 %v3073, %v3196
      %v3362 = vmul.f32 %v3074, %v3201
      %v3363 = vmul.f32 %v3075, %v3206
      %v3364 = vmul.f32 %v3076, %v3211
      %v3365 = vmul.f32 %v3077, %v3216
      %v3366 = vmul.f32 %v3078, %v3221
      %v3367 = vmul.f32 %v3079, %v3226
      %v3368 = vmul.f32 %v3080, %v3231
      %v3369 = vmul.f32 %v3081, %v3236
      %v3370 = vmul.f32 %v3082, %v3241
      %v3371 = vmul.f32 %v3083, %v3246
      %v3372 = vmul.f32 %v3084, %v3251
      %v3373 = vmul.f32 %v3085, %v3256
      %v3374 = vmul.f32 %v3086, %v3261
      %v3375 = vmul.f32 %v3087, %v3266
      %v3376 = vmul.f32 %v3088, %v3271
      %v3377 = vmul.f32 %v3089, %v3276
      %v3378 = vmul.f32 %v3090, %v3281
      %v3379 = vmul.f32 %v3091, %v3286
      %v3380 = vmul.f32 %v3092, %v3291
      %v3381 = vmul.f32 %v3093, %v3296
      %v3382 = vmul.f32 %v3094, %v3301
      %v3383 = vmul.f32 %v3095, %v3306
      %v3384 = vmul.f32 %v3096, %v3311
      %v3385 = vmul.f32 %v3097, %v3316
      %v3386 = vmul.f32 %v3098, %v3321
      %v3387 = vmul.f32 %v3099, %v3326
      %v3388 = vmul.f32 %v3100, %v3331
      %v3389 = vmul.f32 %v3101, %v3336
      %v3390 = vmul.f32 %v3102, %v3341
      %v3391 = vmul.f32 %v3103, %v3346
      %v3392 = vmul.f32 %v3104, %v3351
      %v3393 = vmul.f32 %v3105, %v3356
      %v3394 = vadd.f32 %v3358, %v3359
      %v3395 = vadd.f32 %v3394, %v3360
      %v3396 = vadd.f32 %v3395, %v3361
      %v3397 = vadd.f32 %v3396, %v3362
      %v3398 = vadd.f32 %v3397, %v3363
      %v3399 = vadd.f32 %v3398, %v3364
      %v3400 = vadd.f32 %v3399, %v3365
      %v3401 = vadd.f32 %v3400, %v3366
      %v3402 = vadd.f32 %v3401, %v3367
      %v3403 = vadd.f32 %v3402, %v3368
      %v3404 = vadd.f32 %v3403, %v3369
      %v3405 = vadd.f32 %v3404, %v3370
      %v3406 = vadd.f32 %v3405, %v3371
      %v3407 = vadd.f32 %v3406, %v3372
      %v3408 = vadd.f32 %v3407, %v3373
      %v3409 = vadd.f32 %v3408, %v3374
      %v3410 = vadd.f32 %v3409, %v3375
      %v3411 = vadd.f32 %v3410, %v3376
      %v3412 = vadd.f32 %v3411, %v3377
      %v3413 = vadd.f32 %v3412, %v3378
      %v3414 = vadd.f32 %v3413, %v3379
      %v3415 = vadd.f32 %v3414, %v3380
      %v3416 = vadd.f32 %v3415, %v3381
      %v3417 = vadd.f32 %v3416, %v3382
      %v3418 = vadd.f32 %v3417, %v3383
      %v3419 = vadd.f32 %v3418, %v3384
      %v3420 = vadd.f32 %v3419, %v3385
      %v3421 = vadd.f32 %v3420, %v3386
      %v3422 = vadd.f32 %v3421, %v3387
      %v3423 = vadd.f32 %v3422, %v3388
      %v3424 = vadd.f32 %v3423, %v3389
      %v3425 = vadd.f32 %v3424, %v3390
      %v3426 = vadd.f32 %v3425, %v3391
      %v3427 = vadd.f32 %v3426, %v3392
      %v3428 = vadd.f32 %v3427, %v3393
      %v3429 = vrot.slane %v3428, 4
      %v3430 = vadd.f32 %v3428, %v3429
      %v3431 = vrot.slane %v3430, 2
      %v3432 = vadd.f32 %v3430, %v3431
      %v3433 = vrot.slane %v3432, 1
      %v3434 = vadd.f32 %v3432, %v3433
      %3435 = vst [vmem:[%s265] sm:$0x1] %v3434
      %v3436 = vmul.f32 %v3358, %v3070
      %v3437 = vmul.f32 %v3359, %v3071
      %v3438 = vmul.f32 %v3360, %v3072
      %v3439 = vmul.f32 %v3361, %v3073
      %v3440 = vmul.f32 %v3362, %v3074
      %v3441 = vmul.f32 %v3363, %v3075
      %v3442 = vmul.f32 %v3364, %v3076
      %v3443 = vmul.f32 %v3365, %v3077
      %v3444 = vmul.f32 %v3366, %v3078
      %v3445 = vmul.f32 %v3367, %v3079
      %v3446 = vmul.f32 %v3368, %v3080
      %v3447 = vmul.f32 %v3369, %v3081
      %v3448 = vmul.f32 %v3370, %v3082
      %v3449 = vmul.f32 %v3371, %v3083
      %v3450 = vmul.f32 %v3372, %v3084
      %v3451 = vmul.f32 %v3373, %v3085
      %v3452 = vmul.f32 %v3374, %v3086
      %v3453 = vmul.f32 %v3375, %v3087
      %v3454 = vmul.f32 %v3376, %v3088
      %v3455 = vmul.f32 %v3377, %v3089
      %v3456 = vmul.f32 %v3378, %v3090
      %v3457 = vmul.f32 %v3379, %v3091
      %v3458 = vmul.f32 %v3380, %v3092
      %v3459 = vmul.f32 %v3381, %v3093
      %v3460 = vmul.f32 %v3382, %v3094
      %v3461 = vmul.f32 %v3383, %v3095
      %v3462 = vmul.f32 %v3384, %v3096
      %v3463 = vmul.f32 %v3385, %v3097
      %v3464 = vmul.f32 %v3386, %v3098
      %v3465 = vmul.f32 %v3387, %v3099
      %v3466 = vmul.f32 %v3388, %v3100
      %v3467 = vmul.f32 %v3389, %v3101
      %v3468 = vmul.f32 %v3390, %v3102
      %v3469 = vmul.f32 %v3391, %v3103
      %v3470 = vmul.f32 %v3392, %v3104
      %v3471 = vmul.f32 %v3393, %v3105
      %v3472 = vadd.f32 %v3436, %v3437
      %v3473 = vadd.f32 %v3472, %v3438
      %v3474 = vadd.f32 %v3473, %v3439
      %v3475 = vadd.f32 %v3474, %v3440
      %v3476 = vadd.f32 %v3475, %v3441
      %v3477 = vadd.f32 %v3476, %v3442
      %v3478 = vadd.f32 %v3477, %v3443
      %v3479 = vadd.f32 %v3478, %v3444
      %v3480 = vadd.f32 %v3479, %v3445
      %v3481 = vadd.f32 %v3480, %v3446
      %v3482 = vadd.f32 %v3481, %v3447
      %v3483 = vadd.f32 %v3482, %v3448
      %v3484 = vadd.f32 %v3483, %v3449
      %v3485 = vadd.f32 %v3484, %v3450
      %v3486 = vadd.f32 %v3485, %v3451
      %v3487 = vadd.f32 %v3486, %v3452
      %v3488 = vadd.f32 %v3487, %v3453
      %v3489 = vadd.f32 %v3488, %v3454
      %v3490 = vadd.f32 %v3489, %v3455
      %v3491 = vadd.f32 %v3490, %v3456
      %v3492 = vadd.f32 %v3491, %v3457
      %v3493 = vadd.f32 %v3492, %v3458
      %v3494 = vadd.f32 %v3493, %v3459
      %v3495 = vadd.f32 %v3494, %v3460
      %v3496 = vadd.f32 %v3495, %v3461
      %v3497 = vadd.f32 %v3496, %v3462
      %v3498 = vadd.f32 %v3497, %v3463
      %v3499 = vadd.f32 %v3498, %v3464
      %v3500 = vadd.f32 %v3499, %v3465
      %v3501 = vadd.f32 %v3500, %v3466
      %v3502 = vadd.f32 %v3501, %v3467
      %v3503 = vadd.f32 %v3502, %v3468
      %v3504 = vadd.f32 %v3503, %v3469
      %v3505 = vadd.f32 %v3504, %v3470
      %v3506 = vadd.f32 %v3505, %v3471
      %v3507 = vrot.slane %v3506, 4
      %v3508 = vadd.f32 %v3506, %v3507
      %v3509 = vrot.slane %v3508, 2
      %v3510 = vadd.f32 %v3508, %v3509
      %v3511 = vrot.slane %v3510, 1
      %v3512 = vadd.f32 %v3510, %v3511
      %3513 = vst [vmem:[%s268] sm:$0x1] %v3512
      %p3514 = scmp.lt.s32.totalorder %s18, 3
      %s3515 = scalar_select %p3514, %s18, 3
      %s3516 = smul.addr %s3515, 36
      %s3517 = smul.addr %s3516, 8
      %s3518 = scalar_lea.vmem %s4, %s3517
      %p3519 = scmp.lt.s32.totalorder %s18, 3
      %s3520 = scalar_select %p3519, %s18, 3
      %s3521 = scalar_lea.vmem %s5, %s3520
      %p3522 = scmp.lt.s32.totalorder %s18, 3
      %s3523 = scalar_select %p3522, %s18, 3
      %s3524 = scalar_lea.vmem %s6, %s3523
      // Predicated region
      $region37: #{double_convolution_forward.3} parent=35 // pred_check
        %p3525 = pneg %p125
      $region38: #{double_convolution_forward.3} parent=35 // pred_check_branch
        %3527 = sbr.rel (%p3525) target = $region40
      $region39: #{double_convolution_forward.3} parent=35 // pred_region
        _
      $region40: #{double_convolution_forward.3} parent=35 // pred_fallthru
        _
      // Predicated region
      $region41: #{double_convolution_forward.3} parent=35 // pred_check
        %p3528 = pneg %p151
      $region42: #{double_convolution_forward.3} parent=35 // pred_check_branch
        %3530 = sbr.rel (%p3528) target = $region44
      $region43: #{double_convolution_forward.3} parent=35 // pred_region
        _
      $region44: #{double_convolution_forward.3} parent=35 // pred_fallthru
        _
      // Predicated region
      $region45: #{double_convolution_forward.3} parent=35 // pred_check
        %p3531 = pneg %p177
      $region46: #{double_convolution_forward.3} parent=35 // pred_check_branch
        %3533 = sbr.rel (%p3531) target = $region48
      $region47: #{double_convolution_forward.3} parent=35 // pred_region
        _
      $region48: #{double_convolution_forward.3} parent=35 // pred_fallthru
        _
    $region36: #{double_convolution_forward.3} parent=5 // pred_fallthru
      _
    %p3534 = scmp.le.s32.totalorder 2, %s13
    // Predicated region
    $region49: #{double_convolution_forward.3} parent=5 // pred_check
      %p3535 = pneg %p3534
    $region50: #{double_convolution_forward.3} parent=5 // pred_check_branch
      %3537 = sbr.rel (%p3535) target = $region52
    $region51: #{double_convolution_forward.3} parent=5 // pred_region
      %s3538 = ssub.s32 %s13, 2
      // Predicated region
      $region53: #{double_convolution_forward.3} parent=51 // pred_check
        %p3539 = pneg %p131
      $region54: #{double_convolution_forward.3} parent=51 // pred_check_branch
        %3541 = sbr.rel (%p3539) target = $region56
      $region55: #{double_convolution_forward.3} parent=51 // pred_region
        %p3542 = scmp.lt.s32.totalorder %s19, 3
        %s3543 = scalar_select %p3542, %s19, 3
        %s3544 = smul.addr %s3543, 36
        %s3545 = smul.addr %s3544, 8
        %s3546 = scalar_lea.vmem %s4, %s3545
      $region56: #{double_convolution_forward.3} parent=51 // pred_fallthru
        _
      // Predicated region
      $region57: #{double_convolution_forward.3} parent=51 // pred_check
        %p3547 = pneg %p157
      $region58: #{double_convolution_forward.3} parent=51 // pred_check_branch
        %3549 = sbr.rel (%p3547) target = $region60
      $region59: #{double_convolution_forward.3} parent=51 // pred_region
        %p3550 = scmp.lt.s32.totalorder %s19, 3
        %s3551 = scalar_select %p3550, %s19, 3
        %s3552 = scalar_lea.vmem %s5, %s3551
      $region60: #{double_convolution_forward.3} parent=51 // pred_fallthru
        _
      // Predicated region
      $region61: #{double_convolution_forward.3} parent=51 // pred_check
        %p3553 = pneg %p183
      $region62: #{double_convolution_forward.3} parent=51 // pred_check_branch
        %3555 = sbr.rel (%p3553) target = $region64
      $region63: #{double_convolution_forward.3} parent=51 // pred_region
        %p3556 = scmp.lt.s32.totalorder %s19, 3
        %s3557 = scalar_select %p3556, %s19, 3
        %s3558 = scalar_lea.vmem %s6, %s3557
      $region64: #{double_convolution_forward.3} parent=51 // pred_fallthru
        _
    $region52: #{double_convolution_forward.3} parent=5 // pred_fallthru
      _
  $region6: #{double_convolution_forward.3} parent=0 // loop_footer
    %s17 = sadd.s32 1, %s13
  $region7: #{double_convolution_forward.3} parent=0 // loop_footer_branch
    %12 = sbr.rel target = $region3
  $region8: #{double_convolution_forward.3} parent=0 // loop_exit
    _

// kernel: double_convolution_forward.4
$region0: #{double_convolution_forward.4}
  #allocation0 [shape = 'u32[]', space=smem, size = 0x4, offset = 0x4, fixed_abs, tag = 'smem constant byte address 0x4 - core index']
  #allocation1 [shape = 'u32[144,128]{1,0:T(1,128)}', space=vmem, size = 0x12000, scoped, tag = 'internal scratch']
  #allocation2 [shape = 'f32[326,128]{1,0:T(8,128)}', space=vmem, size = 0x29000, scoped, tag = 'scratch operand']
  %s0 = inlined_call_operand.vmem [shape: f32[4,288,128], index: 0, kind: input, shape index: {}]
  %s1 = inlined_call_operand.vmem [shape: f32[1,128], index: 1, kind: input, shape index: {}]
  %s2 = inlined_call_operand.vmem [shape: f32[1,128], index: 2, kind: input, shape index: {}]
  %s3 = inlined_call_operand.vmem [shape: bf16[9,128,128], index: 3, kind: input, shape index: {}]
  %s4 = inlined_call_operand.vmem [shape: f32[1,128], index: 4, kind: input, shape index: {}]
  %s5 = inlined_call_operand.vmem [shape: f32[288,1], index: 5, kind: input, shape index: {}]
  %s6 = inlined_call_operand.vmem [shape: f32[4,288,128], index: 6, kind: output, shape index: {0}]
  %s7 = inlined_call_operand.vmem [shape: f32[4,1,128], index: 7, kind: output, shape index: {1}]
  %s8 = inlined_call_operand.vmem [shape: f32[4,1,128], index: 8, kind: output, shape index: {2}]
  %9 = xla_tuple %s6, %s7, %s8
  %s10 = sld [smem:[#allocation0]]
  $region73: #{double_convolution_forward.4} parent=0
    _
  %s12 = ssub.s32 1, %s10
  %s13 = scalar_select 0, %s12, %s10
  loop: start=0, step=1, limit=6
  $region2: #{double_convolution_forward.4} parent=0 // loop_pre_header
    _
  $region3: #{double_convolution_forward.4} parent=0 // loop_header
    %s15 = sphi 0, %s19
    %p16 = scmp.ge.s32.totalorder %s15, 6
    %s25 = sphi 0, %s27
    %s28 = sphi 0, %s25
    %s29 = sphi 0, %s28
    %s45 = sphi 0, %s29
    %s49 = sphi 0, %s49
    %s51 = sphi 0, %s49
    %s52 = sphi 0, %s51
    %s66 = sphi 0, %s52
    %s70 = sphi 0, %s70
    %s72 = sphi 0, %s70
    %s73 = sphi 0, %s72
    %s87 = sphi 0, %s73
    %s91 = sphi 0, %s91
    %s93 = sphi 0, %s91
    %s94 = sphi 0, %s93
    %s108 = sphi 0, %s94
    %s112 = sphi 0, %s112
    %s114 = sphi 0, %s112
    %s115 = sphi 0, %s114
    %s129 = sphi 0, %s115
    %s133 = sphi 0, %s133
    %s135 = sphi 0, %s133
    %s136 = sphi 0, %s135
    %s150 = sphi 0, %s136
    %s156 = sphi 0, %s158
    %s159 = sphi 0, %s156
    %s160 = sphi 0, %s159
    %s176 = sphi 0, %s160
    %s182 = sphi 0, %s184
    %s185 = sphi 0, %s182
    %s186 = sphi 0, %s185
    %s202 = sphi 0, %s186
    %s208 = sphi 0, %s210
    %s211 = sphi 0, %s208
    %s212 = sphi 0, %s211
    %s228 = sphi 0, %s212
  $region4: #{double_convolution_forward.4} parent=0 // loop_header_branch
    %18 = sbr.rel (%p16) target = $region8
  $region5: #{double_convolution_forward.4} parent=0 // loop_body
    %s20 = ssub.s32 %s15, 1
    %s21 = ssub.s32 %s15, 2
    %s22 = sadd.s32 %s15, 1
    %s23 = ssub.s32 %s15, %s22
    %p24 = scmp.eq.s32.totalorder %s23, 0
    %s26 = sadd.s32 %s25, 1
    %s27 = scalar_select %p24, %s25, %s26
    %p30 = pneg %p24
    %p31 = scmp.eq.s32.totalorder %s15, 3
    %p32 = por %p30, %p31
    %p33 = scmp.ne.s32.totalorder %s25, %s28
    %p34 = scmp.eq.s32.totalorder %s15, 0
    %p35 = por %p33, %p34
    %p36 = scmp.ne.s32.totalorder %s25, %s28
    %p37 = scmp.eq.s32.totalorder %s20, 3
    %p38 = por %p36, %p37
    %p39 = scmp.ne.s32.totalorder %s28, %s29
    %p40 = scmp.eq.s32.totalorder %s20, 0
    %p41 = por %p39, %p40
    %p42 = scmp.ne.s32.totalorder %s28, %s29
    %p43 = scmp.eq.s32.totalorder %s21, 3
    %p44 = por %p42, %p43
    %p46 = scmp.ne.s32.totalorder %s29, %s45
    %p47 = scmp.eq.s32.totalorder %s21, 0
    %p48 = por %p46, %p47
    %s50 = sadd.s32 %s49, 1
    %p53 = scmp.eq.s32.totalorder %s15, 3
    %p54 = scmp.ne.s32.totalorder %s49, %s51
    %p55 = scmp.eq.s32.totalorder %s15, 0
    %p56 = por %p54, %p55
    %p57 = scmp.ne.s32.totalorder %s49, %s51
    %p58 = scmp.eq.s32.totalorder %s20, 3
    %p59 = por %p57, %p58
    %p60 = scmp.ne.s32.totalorder %s51, %s52
    %p61 = scmp.eq.s32.totalorder %s20, 0
    %p62 = por %p60, %p61
    %p63 = scmp.ne.s32.totalorder %s51, %s52
    %p64 = scmp.eq.s32.totalorder %s21, 3
    %p65 = por %p63, %p64
    %p67 = scmp.ne.s32.totalorder %s52, %s66
    %p68 = scmp.eq.s32.totalorder %s21, 0
    %p69 = por %p67, %p68
    %s71 = sadd.s32 %s70, 1
    %p74 = scmp.eq.s32.totalorder %s15, 3
    %p75 = scmp.ne.s32.totalorder %s70, %s72
    %p76 = scmp.eq.s32.totalorder %s15, 0
    %p77 = por %p75, %p76
    %p78 = scmp.ne.s32.totalorder %s70, %s72
    %p79 = scmp.eq.s32.totalorder %s20, 3
    %p80 = por %p78, %p79
    %p81 = scmp.ne.s32.totalorder %s72, %s73
    %p82 = scmp.eq.s32.totalorder %s20, 0
    %p83 = por %p81, %p82
    %p84 = scmp.ne.s32.totalorder %s72, %s73
    %p85 = scmp.eq.s32.totalorder %s21, 3
    %p86 = por %p84, %p85
    %p88 = scmp.ne.s32.totalorder %s73, %s87
    %p89 = scmp.eq.s32.totalorder %s21, 0
    %p90 = por %p88, %p89
    %s92 = sadd.s32 %s91, 1
    %p95 = scmp.eq.s32.totalorder %s15, 3
    %p96 = scmp.ne.s32.totalorder %s91, %s93
    %p97 = scmp.eq.s32.totalorder %s15, 0
    %p98 = por %p96, %p97
    %p99 = scmp.ne.s32.totalorder %s91, %s93
    %p100 = scmp.eq.s32.totalorder %s20, 3
    %p101 = por %p99, %p100
    %p102 = scmp.ne.s32.totalorder %s93, %s94
    %p103 = scmp.eq.s32.totalorder %s20, 0
    %p104 = por %p102, %p103
    %p105 = scmp.ne.s32.totalorder %s93, %s94
    %p106 = scmp.eq.s32.totalorder %s21, 3
    %p107 = por %p105, %p106
    %p109 = scmp.ne.s32.totalorder %s94, %s108
    %p110 = scmp.eq.s32.totalorder %s21, 0
    %p111 = por %p109, %p110
    %s113 = sadd.s32 %s112, 1
    %p116 = scmp.eq.s32.totalorder %s15, 3
    %p117 = scmp.ne.s32.totalorder %s112, %s114
    %p118 = scmp.eq.s32.totalorder %s15, 0
    %p119 = por %p117, %p118
    %p120 = scmp.ne.s32.totalorder %s112, %s114
    %p121 = scmp.eq.s32.totalorder %s20, 3
    %p122 = por %p120, %p121
    %p123 = scmp.ne.s32.totalorder %s114, %s115
    %p124 = scmp.eq.s32.totalorder %s20, 0
    %p125 = por %p123, %p124
    %p126 = scmp.ne.s32.totalorder %s114, %s115
    %p127 = scmp.eq.s32.totalorder %s21, 3
    %p128 = por %p126, %p127
    %p130 = scmp.ne.s32.totalorder %s115, %s129
    %p131 = scmp.eq.s32.totalorder %s21, 0
    %p132 = por %p130, %p131
    %s134 = sadd.s32 %s133, 1
    %p137 = scmp.eq.s32.totalorder %s15, 3
    %p138 = scmp.ne.s32.totalorder %s133, %s135
    %p139 = scmp.eq.s32.totalorder %s15, 0
    %p140 = por %p138, %p139
    %p141 = scmp.ne.s32.totalorder %s133, %s135
    %p142 = scmp.eq.s32.totalorder %s20, 3
    %p143 = por %p141, %p142
    %p144 = scmp.ne.s32.totalorder %s135, %s136
    %p145 = scmp.eq.s32.totalorder %s20, 0
    %p146 = por %p144, %p145
    %p147 = scmp.ne.s32.totalorder %s135, %s136
    %p148 = scmp.eq.s32.totalorder %s21, 3
    %p149 = por %p147, %p148
    %p151 = scmp.ne.s32.totalorder %s136, %s150
    %p152 = scmp.eq.s32.totalorder %s21, 0
    %p153 = por %p151, %p152
    %s154 = ssub.s32 %s15, %s22
    %p155 = scmp.eq.s32.totalorder %s154, 0
    %s157 = sadd.s32 %s156, 1
    %s158 = scalar_select %p155, %s156, %s157
    %p161 = pneg %p155
    %p162 = scmp.eq.s32.totalorder %s15, 3
    %p163 = por %p161, %p162
    %p164 = scmp.ne.s32.totalorder %s156, %s159
    %p165 = scmp.eq.s32.totalorder %s15, 0
    %p166 = por %p164, %p165
    %p167 = scmp.ne.s32.totalorder %s156, %s159
    %p168 = scmp.eq.s32.totalorder %s20, 3
    %p169 = por %p167, %p168
    %p170 = scmp.ne.s32.totalorder %s159, %s160
    %p171 = scmp.eq.s32.totalorder %s20, 0
    %p172 = por %p170, %p171
    %p173 = scmp.ne.s32.totalorder %s159, %s160
    %p174 = scmp.eq.s32.totalorder %s21, 3
    %p175 = por %p173, %p174
    %p177 = scmp.ne.s32.totalorder %s160, %s176
    %p178 = scmp.eq.s32.totalorder %s21, 0
    %p179 = por %p177, %p178
    %s180 = ssub.s32 %s15, %s22
    %p181 = scmp.eq.s32.totalorder %s180, 0
    %s183 = sadd.s32 %s182, 1
    %s184 = scalar_select %p181, %s182, %s183
    %p187 = pneg %p181
    %p188 = scmp.eq.s32.totalorder %s15, 3
    %p189 = por %p187, %p188
    %p190 = scmp.ne.s32.totalorder %s182, %s185
    %p191 = scmp.eq.s32.totalorder %s15, 0
    %p192 = por %p190, %p191
    %p193 = scmp.ne.s32.totalorder %s182, %s185
    %p194 = scmp.eq.s32.totalorder %s20, 3
    %p195 = por %p193, %p194
    %p196 = scmp.ne.s32.totalorder %s185, %s186
    %p197 = scmp.eq.s32.totalorder %s20, 0
    %p198 = por %p196, %p197
    %p199 = scmp.ne.s32.totalorder %s185, %s186
    %p200 = scmp.eq.s32.totalorder %s21, 3
    %p201 = por %p199, %p200
    %p203 = scmp.ne.s32.totalorder %s186, %s202
    %p204 = scmp.eq.s32.totalorder %s21, 0
    %p205 = por %p203, %p204
    %s206 = ssub.s32 %s15, %s22
    %p207 = scmp.eq.s32.totalorder %s206, 0
    %s209 = sadd.s32 %s208, 1
    %s210 = scalar_select %p207, %s208, %s209
    %p213 = pneg %p207
    %p214 = scmp.eq.s32.totalorder %s15, 3
    %p215 = por %p213, %p214
    %p216 = scmp.ne.s32.totalorder %s208, %s211
    %p217 = scmp.eq.s32.totalorder %s15, 0
    %p218 = por %p216, %p217
    %p219 = scmp.ne.s32.totalorder %s208, %s211
    %p220 = scmp.eq.s32.totalorder %s20, 3
    %p221 = por %p219, %p220
    %p222 = scmp.ne.s32.totalorder %s211, %s212
    %p223 = scmp.eq.s32.totalorder %s20, 0
    %p224 = por %p222, %p223
    %p225 = scmp.ne.s32.totalorder %s211, %s212
    %p226 = scmp.eq.s32.totalorder %s21, 3
    %p227 = por %p225, %p226
    %p229 = scmp.ne.s32.totalorder %s212, %s228
    %p230 = scmp.eq.s32.totalorder %s21, 0
    %p231 = por %p229, %p230
    %p232 = scmp.le.s32.totalorder 1, %s15
    %p233 = scmp.lt.s32.totalorder %s15, 5
    %p234 = pnand %p232, %p233
    %p235 = pneg %p234
    // Predicated region
    $region9: #{double_convolution_forward.4} parent=5 // pred_check
      _
    $region10: #{double_convolution_forward.4} parent=5 // pred_check_branch
      %237 = sbr.rel (%p234) target = $region12
    $region11: #{double_convolution_forward.4} parent=5 // pred_region
      %s238 = ssub.s32 %s15, 1
      // Predicated region
      $region13: #{double_convolution_forward.4} parent=11 // pred_check
        %p239 = pneg %p62
      $region14: #{double_convolution_forward.4} parent=11 // pred_check_branch
        %241 = sbr.rel (%p239) target = $region16
      $region15: #{double_convolution_forward.4} parent=11 // pred_region
        _
      $region16: #{double_convolution_forward.4} parent=11 // pred_fallthru
        _
      // Predicated region
      $region17: #{double_convolution_forward.4} parent=11 // pred_check
        %p242 = pneg %p83
      $region18: #{double_convolution_forward.4} parent=11 // pred_check_branch
        %244 = sbr.rel (%p242) target = $region20
      $region19: #{double_convolution_forward.4} parent=11 // pred_region
        _
      $region20: #{double_convolution_forward.4} parent=11 // pred_fallthru
        _
      // Predicated region
      $region21: #{double_convolution_forward.4} parent=11 // pred_check
        %p245 = pneg %p104
      $region22: #{double_convolution_forward.4} parent=11 // pred_check_branch
        %247 = sbr.rel (%p245) target = $region24
      $region23: #{double_convolution_forward.4} parent=11 // pred_region
        _
      $region24: #{double_convolution_forward.4} parent=11 // pred_fallthru
        _
      // Predicated region
      $region25: #{double_convolution_forward.4} parent=11 // pred_check
        %p248 = pneg %p125
      $region26: #{double_convolution_forward.4} parent=11 // pred_check_branch
        %250 = sbr.rel (%p248) target = $region28
      $region27: #{double_convolution_forward.4} parent=11 // pred_region
        _
      $region28: #{double_convolution_forward.4} parent=11 // pred_fallthru
        _
      // Predicated region
      $region29: #{double_convolution_forward.4} parent=11 // pred_check
        %p251 = pneg %p146
      $region30: #{double_convolution_forward.4} parent=11 // pred_check_branch
        %253 = sbr.rel (%p251) target = $region32
      $region31: #{double_convolution_forward.4} parent=11 // pred_region
        _
      $region32: #{double_convolution_forward.4} parent=11 // pred_fallthru
        _
    $region12: #{double_convolution_forward.4} parent=5 // pred_fallthru
      _
    %p254 = scmp.lt.s32.totalorder %s15, 4
    // Predicated region
    $region33: #{double_convolution_forward.4} parent=5 // pred_check
      %p255 = pneg %p254
    $region34: #{double_convolution_forward.4} parent=5 // pred_check_branch
      %257 = sbr.rel (%p255) target = $region36
    $region35: #{double_convolution_forward.4} parent=5 // pred_region
      // Predicated region
      $region37: #{double_convolution_forward.4} parent=35 // pred_check
        %p258 = pneg %p35
      $region38: #{double_convolution_forward.4} parent=35 // pred_check_branch
        %260 = sbr.rel (%p258) target = $region40
      $region39: #{double_convolution_forward.4} parent=35 // pred_region
        %p261 = scmp.lt.s32.totalorder %s15, 3
        %s262 = scalar_select %p261, %s15, 3
        %s263 = smul.addr %s262, 36
        %s264 = smul.addr %s263, 8
        %s265 = scalar_lea.vmem %s0, %s264
      $region40: #{double_convolution_forward.4} parent=35 // pred_fallthru
        _
    $region36: #{double_convolution_forward.4} parent=5 // pred_fallthru
      _
    %p266 = scmp.le.s32.totalorder 1, %s15
    %p267 = scmp.lt.s32.totalorder %s15, 5
    %p268 = pnand %p266, %p267
    %p269 = pneg %p268
    // Predicated region
    $region41: #{double_convolution_forward.4} parent=5 // pred_check
      _
    $region42: #{double_convolution_forward.4} parent=5 // pred_check_branch
      %271 = sbr.rel (%p268) target = $region44
    $region43: #{double_convolution_forward.4} parent=5 // pred_region
      %s272 = ssub.s32 %s15, 1
      %p273 = scmp.lt.s32.totalorder %s20, 3
      %s274 = scalar_select %p273, %s20, 3
      %s275 = smul.addr %s274, 36
      %s276 = smul.addr %s275, 8
      %s277 = scalar_lea.vmem %s0, %s276
      %p278 = pneg %p41
      %p279 = pneg %p38
      %p280 = pneg %p62
      %p281 = pneg %p59
      %p282 = pneg %p83
      %p283 = pneg %p80
      %p284 = pneg %p104
      %p285 = pneg %p101
      %p286 = pneg %p125
      %p287 = pneg %p122
      %p288 = pneg %p146
      %p289 = pneg %p143
      %p290 = pneg %p172
      %p291 = pneg %p169
      %p292 = scmp.lt.s32.totalorder %s20, 3
      %s293 = scalar_select %p292, %s20, 3
      %s294 = smul.addr %s293, 36
      %s295 = smul.addr %s294, 8
      %s296 = scalar_lea.vmem %s6, %s295
      %p297 = pneg %p198
      %p298 = pneg %p195
      %p299 = scmp.lt.s32.totalorder %s20, 3
      %s300 = scalar_select %p299, %s20, 3
      %s301 = scalar_lea.vmem %s7, %s300
      %p302 = pneg %p224
      %p303 = pneg %p221
      %p304 = scmp.lt.s32.totalorder %s20, 3
      %s305 = scalar_select %p304, %s20, 3
      %s306 = scalar_lea.vmem %s8, %s305
      %p307 = scmp.lt.s32.totalorder %s20, 3
      %s308 = scalar_select %p307, %s20, 3
      %s309 = smul.addr %s308, 36
      %s310 = smul.addr %s309, 8
      %s311 = scalar_lea.vmem %s0, %s310
      %p312 = scmp.lt.s32.totalorder %s20, 3
      %s313 = scalar_select %p312, %s20, 3
      %s314 = smul.addr %s313, 36
      %s315 = smul.addr %s314, 8
      %s316 = scalar_lea.vmem %s6, %s315
      %p317 = scmp.lt.s32.totalorder %s20, 3
      %s318 = scalar_select %p317, %s20, 3
      %s319 = scalar_lea.vmem %s7, %s318
      %p320 = scmp.lt.s32.totalorder %s20, 3
      %s321 = scalar_select %p320, %s20, 3
      %s322 = scalar_lea.vmem %s8, %s321
      %v324 = vld [vmem:[%s5] sm:$0xff]
      %v325 = vld [vmem:[%s5 + $0x8] sm:$0xff]
      %v326 = vld [vmem:[%s5 + $0x10] sm:$0xff]
      %v327 = vld [vmem:[%s5 + $0x18] sm:$0xff]
      %v328 = vld [vmem:[%s5 + $0x20] sm:$0xff]
      %v329 = vld [vmem:[%s5 + $0x28] sm:$0xff]
      %v330 = vld [vmem:[%s5 + $0x30] sm:$0xff]
      %v331 = vld [vmem:[%s5 + $0x38] sm:$0xff]
      %v332 = vld [vmem:[%s5 + $0x40] sm:$0xff]
      %v333 = vld [vmem:[%s5 + $0x48] sm:$0xff]
      %v334 = vld [vmem:[%s5 + $0x50] sm:$0xff]
      %v335 = vld [vmem:[%s5 + $0x58] sm:$0xff]
      %v336 = vld [vmem:[%s5 + $0x60] sm:$0xff]
      %v337 = vld [vmem:[%s5 + $0x68] sm:$0xff]
      %v338 = vld [vmem:[%s5 + $0x70] sm:$0xff]
      %v339 = vld [vmem:[%s5 + $0x78] sm:$0xff]
      %v340 = vld [vmem:[%s5 + $0x80] sm:$0xff]
      %v341 = vld [vmem:[%s5 + $0x88] sm:$0xff]
      %v342 = vld [vmem:[%s5 + $0x90] sm:$0xff]
      %v343 = vld [vmem:[%s5 + $0x98] sm:$0xff]
      %v344 = vld [vmem:[%s5 + $0xa0] sm:$0xff]
      %v345 = vld [vmem:[%s5 + $0xa8] sm:$0xff]
      %v346 = vld [vmem:[%s5 + $0xb0] sm:$0xff]
      %v347 = vld [vmem:[%s5 + $0xb8] sm:$0xff]
      %v348 = vld [vmem:[%s5 + $0xc0] sm:$0xff]
      %v349 = vld [vmem:[%s5 + $0xc8] sm:$0xff]
      %v350 = vld [vmem:[%s5 + $0xd0] sm:$0xff]
      %v351 = vld [vmem:[%s5 + $0xd8] sm:$0xff]
      %v352 = vld [vmem:[%s5 + $0xe0] sm:$0xff]
      %v353 = vld [vmem:[%s5 + $0xe8] sm:$0xff]
      %v354 = vld [vmem:[%s5 + $0xf0] sm:$0xff]
      %v355 = vld [vmem:[%s5 + $0xf8] sm:$0xff]
      %v356 = vld [vmem:[%s5 + $0x100] sm:$0xff]
      %v357 = vld [vmem:[%s5 + $0x108] sm:$0xff]
      %v358 = vld [vmem:[%s5 + $0x110] sm:$0xff]
      %v359 = vld [vmem:[%s5 + $0x118] sm:$0xff]
      %v360 = vld [vmem:[%s311] sm:$0xff]
      %v361 = vld [vmem:[%s311 + $0x8] sm:$0xff]
      %v362 = vld [vmem:[%s311 + $0x10] sm:$0xff]
      %v363 = vld [vmem:[%s311 + $0x18] sm:$0xff]
      %v364 = vld [vmem:[%s311 + $0x20] sm:$0xff]
      %v365 = vld [vmem:[%s311 + $0x28] sm:$0xff]
      %v366 = vld [vmem:[%s311 + $0x30] sm:$0xff]
      %v367 = vld [vmem:[%s311 + $0x38] sm:$0xff]
      %v368 = vld [vmem:[%s311 + $0x40] sm:$0xff]
      %v369 = vld [vmem:[%s311 + $0x48] sm:$0xff]
      %v370 = vld [vmem:[%s311 + $0x50] sm:$0xff]
      %v371 = vld [vmem:[%s311 + $0x58] sm:$0xff]
      %v372 = vld [vmem:[%s311 + $0x60] sm:$0xff]
      %v373 = vld [vmem:[%s311 + $0x68] sm:$0xff]
      %v374 = vld [vmem:[%s311 + $0x70] sm:$0xff]
      %v375 = vld [vmem:[%s311 + $0x78] sm:$0xff]
      %v376 = vld [vmem:[%s311 + $0x80] sm:$0xff]
      %v377 = vld [vmem:[%s311 + $0x88] sm:$0xff]
      %v378 = vld [vmem:[%s311 + $0x90] sm:$0xff]
      %v379 = vld [vmem:[%s311 + $0x98] sm:$0xff]
      %v380 = vld [vmem:[%s311 + $0xa0] sm:$0xff]
      %v381 = vld [vmem:[%s311 + $0xa8] sm:$0xff]
      %v382 = vld [vmem:[%s311 + $0xb0] sm:$0xff]
      %v383 = vld [vmem:[%s311 + $0xb8] sm:$0xff]
      %v384 = vld [vmem:[%s311 + $0xc0] sm:$0xff]
      %v385 = vld [vmem:[%s311 + $0xc8] sm:$0xff]
      %v386 = vld [vmem:[%s311 + $0xd0] sm:$0xff]
      %v387 = vld [vmem:[%s311 + $0xd8] sm:$0xff]
      %v388 = vld [vmem:[%s311 + $0xe0] sm:$0xff]
      %v389 = vld [vmem:[%s311 + $0xe8] sm:$0xff]
      %v390 = vld [vmem:[%s311 + $0xf0] sm:$0xff]
      %v391 = vld [vmem:[%s311 + $0xf8] sm:$0xff]
      %v392 = vld [vmem:[%s311 + $0x100] sm:$0xff]
      %v393 = vld [vmem:[%s311 + $0x108] sm:$0xff]
      %v394 = vld [vmem:[%s311 + $0x110] sm:$0xff]
      %v395 = vld [vmem:[%s311 + $0x118] sm:$0xff]
      %v396 = vld [vmem:[%s1] sm:$0x1]
      %v398 = vlaneseq
      %v399 = vshrl.u32 %v398, 7
      %v400 = vsub.s32 0, %v399
      %v401 = vrot.slane %v396, %v400
      %v403 = vmul.f32 %v360, %v401
      %v404 = vmul.f32 %v361, %v401
      %v405 = vmul.f32 %v362, %v401
      %v406 = vmul.f32 %v363, %v401
      %v407 = vmul.f32 %v364, %v401
      %v408 = vmul.f32 %v365, %v401
      %v409 = vmul.f32 %v366, %v401
      %v410 = vmul.f32 %v367, %v401
      %v411 = vmul.f32 %v368, %v401
      %v412 = vmul.f32 %v369, %v401
      %v413 = vmul.f32 %v370, %v401
      %v414 = vmul.f32 %v371, %v401
      %v415 = vmul.f32 %v372, %v401
      %v416 = vmul.f32 %v373, %v401
      %v417 = vmul.f32 %v374, %v401
      %v418 = vmul.f32 %v375, %v401
      %v419 = vmul.f32 %v376, %v401
      %v420 = vmul.f32 %v377, %v401
      %v421 = vmul.f32 %v378, %v401
      %v422 = vmul.f32 %v379, %v401
      %v423 = vmul.f32 %v380, %v401
      %v424 = vmul.f32 %v381, %v401
      %v425 = vmul.f32 %v382, %v401
      %v426 = vmul.f32 %v383, %v401
      %v427 = vmul.f32 %v384, %v401
      %v428 = vmul.f32 %v385, %v401
      %v429 = vmul.f32 %v386, %v401
      %v430 = vmul.f32 %v387, %v401
      %v431 = vmul.f32 %v388, %v401
      %v432 = vmul.f32 %v389, %v401
      %v433 = vmul.f32 %v390, %v401
      %v434 = vmul.f32 %v391, %v401
      %v435 = vmul.f32 %v392, %v401
      %v436 = vmul.f32 %v393, %v401
      %v437 = vmul.f32 %v394, %v401
      %v438 = vmul.f32 %v395, %v401
      %v439 = vld [vmem:[%s2] sm:$0x1]
      %v441 = vlaneseq
      %v442 = vshrl.u32 %v441, 7
      %v443 = vsub.s32 0, %v442
      %v444 = vrot.slane %v439, %v443
      %v446 = vadd.f32 %v403, %v444
      %v447 = vadd.f32 %v404, %v444
      %v448 = vadd.f32 %v405, %v444
      %v449 = vadd.f32 %v406, %v444
      %v450 = vadd.f32 %v407, %v444
      %v451 = vadd.f32 %v408, %v444
      %v452 = vadd.f32 %v409, %v444
      %v453 = vadd.f32 %v410, %v444
      %v454 = vadd.f32 %v411, %v444
      %v455 = vadd.f32 %v412, %v444
      %v456 = vadd.f32 %v413, %v444
      %v457 = vadd.f32 %v414, %v444
      %v458 = vadd.f32 %v415, %v444
      %v459 = vadd.f32 %v416, %v444
      %v460 = vadd.f32 %v417, %v444
      %v461 = vadd.f32 %v418, %v444
      %v462 = vadd.f32 %v419, %v444
      %v463 = vadd.f32 %v420, %v444
      %v464 = vadd.f32 %v421, %v444
      %v465 = vadd.f32 %v422, %v444
      %v466 = vadd.f32 %v423, %v444
      %v467 = vadd.f32 %v424, %v444
      %v468 = vadd.f32 %v425, %v444
      %v469 = vadd.f32 %v426, %v444
      %v470 = vadd.f32 %v427, %v444
      %v471 = vadd.f32 %v428, %v444
      %v472 = vadd.f32 %v429, %v444
      %v473 = vadd.f32 %v430, %v444
      %v474 = vadd.f32 %v431, %v444
      %v475 = vadd.f32 %v432, %v444
      %v476 = vadd.f32 %v433, %v444
      %v477 = vadd.f32 %v434, %v444
      %v478 = vadd.f32 %v435, %v444
      %v479 = vadd.f32 %v436, %v444
      %v480 = vadd.f32 %v437, %v444
      %v481 = vadd.f32 %v438, %v444
      %v482 = vmax.f32 %v446, 0.0
      %v483 = vmax.f32 %v447, 0.0
      %v484 = vmax.f32 %v448, 0.0
      %v485 = vmax.f32 %v449, 0.0
      %v486 = vmax.f32 %v450, 0.0
      %v487 = vmax.f32 %v451, 0.0
      %v488 = vmax.f32 %v452, 0.0
      %v489 = vmax.f32 %v453, 0.0
      %v490 = vmax.f32 %v454, 0.0
      %v491 = vmax.f32 %v455, 0.0
      %v492 = vmax.f32 %v456, 0.0
      %v493 = vmax.f32 %v457, 0.0
      %v494 = vmax.f32 %v458, 0.0
      %v495 = vmax.f32 %v459, 0.0
      %v496 = vmax.f32 %v460, 0.0
      %v497 = vmax.f32 %v461, 0.0
      %v498 = vmax.f32 %v462, 0.0
      %v499 = vmax.f32 %v463, 0.0
      %v500 = vmax.f32 %v464, 0.0
      %v501 = vmax.f32 %v465, 0.0
      %v502 = vmax.f32 %v466, 0.0
      %v503 = vmax.f32 %v467, 0.0
      %v504 = vmax.f32 %v468, 0.0
      %v505 = vmax.f32 %v469, 0.0
      %v506 = vmax.f32 %v470, 0.0
      %v507 = vmax.f32 %v471, 0.0
      %v508 = vmax.f32 %v472, 0.0
      %v509 = vmax.f32 %v473, 0.0
      %v510 = vmax.f32 %v474, 0.0
      %v511 = vmax.f32 %v475, 0.0
      %v512 = vmax.f32 %v476, 0.0
      %v513 = vmax.f32 %v477, 0.0
      %v514 = vmax.f32 %v478, 0.0
      %v515 = vmax.f32 %v479, 0.0
      %v516 = vmax.f32 %v480, 0.0
      %v517 = vmax.f32 %v481, 0.0
      %519 = vset.pattern.permute.xlu0 0
      %520 = vperm.xlu0 %519, %v324
      %v521 = vpop.permute.xlu0 %520
      %524 = vset.pattern.permute.xlu0 0
      %525 = vperm.xlu0 %524, %v325
      %v526 = vpop.permute.xlu0 %525
      %529 = vset.pattern.permute.xlu0 0
      %530 = vperm.xlu0 %529, %v326
      %v531 = vpop.permute.xlu0 %530
      %534 = vset.pattern.permute.xlu0 0
      %535 = vperm.xlu0 %534, %v327
      %v536 = vpop.permute.xlu0 %535
      %539 = vset.pattern.permute.xlu0 0
      %540 = vperm.xlu0 %539, %v328
      %v541 = vpop.permute.xlu0 %540
      %544 = vset.pattern.permute.xlu0 0
      %545 = vperm.xlu0 %544, %v329
      %v546 = vpop.permute.xlu0 %545
      %549 = vset.pattern.permute.xlu0 0
      %550 = vperm.xlu0 %549, %v330
      %v551 = vpop.permute.xlu0 %550
      %554 = vset.pattern.permute.xlu0 0
      %555 = vperm.xlu0 %554, %v331
      %v556 = vpop.permute.xlu0 %555
      %559 = vset.pattern.permute.xlu0 0
      %560 = vperm.xlu0 %559, %v332
      %v561 = vpop.permute.xlu0 %560
      %564 = vset.pattern.permute.xlu0 0
      %565 = vperm.xlu0 %564, %v333
      %v566 = vpop.permute.xlu0 %565
      %569 = vset.pattern.permute.xlu0 0
      %570 = vperm.xlu0 %569, %v334
      %v571 = vpop.permute.xlu0 %570
      %574 = vset.pattern.permute.xlu0 0
      %575 = vperm.xlu0 %574, %v335
      %v576 = vpop.permute.xlu0 %575
      %579 = vset.pattern.permute.xlu0 0
      %580 = vperm.xlu0 %579, %v336
      %v581 = vpop.permute.xlu0 %580
      %584 = vset.pattern.permute.xlu0 0
      %585 = vperm.xlu0 %584, %v337
      %v586 = vpop.permute.xlu0 %585
      %589 = vset.pattern.permute.xlu0 0
      %590 = vperm.xlu0 %589, %v338
      %v591 = vpop.permute.xlu0 %590
      %594 = vset.pattern.permute.xlu0 0
      %595 = vperm.xlu0 %594, %v339
      %v596 = vpop.permute.xlu0 %595
      %599 = vset.pattern.permute.xlu0 0
      %600 = vperm.xlu0 %599, %v340
      %v601 = vpop.permute.xlu0 %600
      %604 = vset.pattern.permute.xlu0 0
      %605 = vperm.xlu0 %604, %v341
      %v606 = vpop.permute.xlu0 %605
      %609 = vset.pattern.permute.xlu0 0
      %610 = vperm.xlu0 %609, %v342
      %v611 = vpop.permute.xlu0 %610
      %614 = vset.pattern.permute.xlu0 0
      %615 = vperm.xlu0 %614, %v343
      %v616 = vpop.permute.xlu0 %615
      %619 = vset.pattern.permute.xlu0 0
      %620 = vperm.xlu0 %619, %v344
      %v621 = vpop.permute.xlu0 %620
      %624 = vset.pattern.permute.xlu0 0
      %625 = vperm.xlu0 %624, %v345
      %v626 = vpop.permute.xlu0 %625
      %629 = vset.pattern.permute.xlu0 0
      %630 = vperm.xlu0 %629, %v346
      %v631 = vpop.permute.xlu0 %630
      %634 = vset.pattern.permute.xlu0 0
      %635 = vperm.xlu0 %634, %v347
      %v636 = vpop.permute.xlu0 %635
      %639 = vset.pattern.permute.xlu0 0
      %640 = vperm.xlu0 %639, %v348
      %v641 = vpop.permute.xlu0 %640
      %644 = vset.pattern.permute.xlu0 0
      %645 = vperm.xlu0 %644, %v349
      %v646 = vpop.permute.xlu0 %645
      %649 = vset.pattern.permute.xlu0 0
      %650 = vperm.xlu0 %649, %v350
      %v651 = vpop.permute.xlu0 %650
      %654 = vset.pattern.permute.xlu0 0
      %655 = vperm.xlu0 %654, %v351
      %v656 = vpop.permute.xlu0 %655
      %659 = vset.pattern.permute.xlu0 0
      %660 = vperm.xlu0 %659, %v352
      %v661 = vpop.permute.xlu0 %660
      %664 = vset.pattern.permute.xlu0 0
      %665 = vperm.xlu0 %664, %v353
      %v666 = vpop.permute.xlu0 %665
      %669 = vset.pattern.permute.xlu0 0
      %670 = vperm.xlu0 %669, %v354
      %v671 = vpop.permute.xlu0 %670
      %674 = vset.pattern.permute.xlu0 0
      %675 = vperm.xlu0 %674, %v355
      %v676 = vpop.permute.xlu0 %675
      %679 = vset.pattern.permute.xlu0 0
      %680 = vperm.xlu0 %679, %v356
      %v681 = vpop.permute.xlu0 %680
      %684 = vset.pattern.permute.xlu0 0
      %685 = vperm.xlu0 %684, %v357
      %v686 = vpop.permute.xlu0 %685
      %689 = vset.pattern.permute.xlu0 0
      %690 = vperm.xlu0 %689, %v358
      %v691 = vpop.permute.xlu0 %690
      %694 = vset.pattern.permute.xlu0 0
      %695 = vperm.xlu0 %694, %v359
      %v696 = vpop.permute.xlu0 %695
      %v698 = vmul.f32 %v482, %v521
      %v699 = vmul.f32 %v483, %v526
      %v700 = vmul.f32 %v484, %v531
      %v701 = vmul.f32 %v485, %v536
      %v702 = vmul.f32 %v486, %v541
      %v703 = vmul.f32 %v487, %v546
      %v704 = vmul.f32 %v488, %v551
      %v705 = vmul.f32 %v489, %v556
      %v706 = vmul.f32 %v490, %v561
      %v707 = vmul.f32 %v491, %v566
      %v708 = vmul.f32 %v492, %v571
      %v709 = vmul.f32 %v493, %v576
      %v710 = vmul.f32 %v494, %v581
      %v711 = vmul.f32 %v495, %v586
      %v712 = vmul.f32 %v496, %v591
      %v713 = vmul.f32 %v497, %v596
      %v714 = vmul.f32 %v498, %v601
      %v715 = vmul.f32 %v499, %v606
      %v716 = vmul.f32 %v500, %v611
      %v717 = vmul.f32 %v501, %v616
      %v718 = vmul.f32 %v502, %v621
      %v719 = vmul.f32 %v503, %v626
      %v720 = vmul.f32 %v504, %v631
      %v721 = vmul.f32 %v505, %v636
      %v722 = vmul.f32 %v506, %v641
      %v723 = vmul.f32 %v507, %v646
      %v724 = vmul.f32 %v508, %v651
      %v725 = vmul.f32 %v509, %v656
      %v726 = vmul.f32 %v510, %v661
      %v727 = vmul.f32 %v511, %v666
      %v728 = vmul.f32 %v512, %v671
      %v729 = vmul.f32 %v513, %v676
      %v730 = vmul.f32 %v514, %v681
      %v731 = vmul.f32 %v515, %v686
      %v732 = vmul.f32 %v516, %v691
      %v733 = vmul.f32 %v517, %v696
      %734 = vst [vmem:[#allocation2] sm:$0xff] 0.0
      %735 = vst [vmem:[#allocation2 + $0x8] sm:$0xff] 0.0
      %736 = vst [vmem:[#allocation2 + $0x10] sm:$0xff] 0.0
      %737 = vst [vmem:[#allocation2 + $0x18] sm:$0xff] 0.0
      %738 = vst [vmem:[#allocation2 + $0x20] sm:$0xff] 0.0
      %739 = vst [vmem:[#allocation2 + $0x28] sm:$0xff] 0.0
      %740 = vst [vmem:[#allocation2 + $0x30] sm:$0xff] 0.0
      %741 = vst [vmem:[#allocation2 + $0x38] sm:$0xff] 0.0
      %742 = vst [vmem:[#allocation2 + $0x40] sm:$0xff] 0.0
      %743 = vst [vmem:[#allocation2 + $0x48] sm:$0xff] 0.0
      %744 = vst [vmem:[#allocation2 + $0x50] sm:$0xff] 0.0
      %745 = vst [vmem:[#allocation2 + $0x58] sm:$0xff] 0.0
      %746 = vst [vmem:[#allocation2 + $0x60] sm:$0xff] 0.0
      %747 = vst [vmem:[#allocation2 + $0x68] sm:$0xff] 0.0
      %748 = vst [vmem:[#allocation2 + $0x70] sm:$0xff] 0.0
      %749 = vst [vmem:[#allocation2 + $0x78] sm:$0xff] 0.0
      %750 = vst [vmem:[#allocation2 + $0x80] sm:$0xff] 0.0
      %751 = vst [vmem:[#allocation2 + $0x88] sm:$0xff] 0.0
      %752 = vst [vmem:[#allocation2 + $0x90] sm:$0xff] 0.0
      %753 = vst [vmem:[#allocation2 + $0x98] sm:$0xff] 0.0
      %754 = vst [vmem:[#allocation2 + $0xa0] sm:$0xff] 0.0
      %755 = vst [vmem:[#allocation2 + $0xa8] sm:$0xff] 0.0
      %756 = vst [vmem:[#allocation2 + $0xb0] sm:$0xff] 0.0
      %757 = vst [vmem:[#allocation2 + $0xb8] sm:$0xff] 0.0
      %758 = vst [vmem:[#allocation2 + $0xc0] sm:$0xff] 0.0
      %759 = vst [vmem:[#allocation2 + $0xc8] sm:$0xff] 0.0
      %760 = vst [vmem:[#allocation2 + $0xd0] sm:$0xff] 0.0
      %761 = vst [vmem:[#allocation2 + $0xd8] sm:$0xff] 0.0
      %762 = vst [vmem:[#allocation2 + $0xe0] sm:$0xff] 0.0
      %763 = vst [vmem:[#allocation2 + $0xe8] sm:$0xff] 0.0
      %764 = vst [vmem:[#allocation2 + $0xf0] sm:$0xff] 0.0
      %765 = vst [vmem:[#allocation2 + $0xf8] sm:$0xff] 0.0
      %766 = vst [vmem:[#allocation2 + $0x100] sm:$0xff] 0.0
      %767 = vst [vmem:[#allocation2 + $0x108] sm:$0xff] 0.0
      %768 = vst [vmem:[#allocation2 + $0x110] sm:$0xff] 0.0
      %769 = vst [vmem:[#allocation2 + $0x118] sm:$0xff] 0.0
      %770 = vst [vmem:[#allocation2 + $0x120] sm:$0xff] 0.0
      %771 = vst [vmem:[#allocation2 + $0x128] sm:$0xff] 0.0
      %772 = vst [vmem:[#allocation2 + $0x130] sm:$0xff] 0.0
      %773 = vst [vmem:[#allocation2 + $0x138] sm:$0xff] 0.0
      %774 = vst [vmem:[#allocation2 + $0x140] sm:$0x3f] 0.0
      %775 = vst [vmem:[#allocation2 + $0x13] sm:$0xff] %v698
      %776 = vst [vmem:[#allocation2 + $0x1b] sm:$0xff] %v699
      %777 = vst [vmem:[#allocation2 + $0x23] sm:$0xff] %v700
      %778 = vst [vmem:[#allocation2 + $0x2b] sm:$0xff] %v701
      %779 = vst [vmem:[#allocation2 + $0x33] sm:$0xff] %v702
      %780 = vst [vmem:[#allocation2 + $0x3b] sm:$0xff] %v703
      %781 = vst [vmem:[#allocation2 + $0x43] sm:$0xff] %v704
      %782 = vst [vmem:[#allocation2 + $0x4b] sm:$0xff] %v705
      %783 = vst [vmem:[#allocation2 + $0x53] sm:$0xff] %v706
      %784 = vst [vmem:[#allocation2 + $0x5b] sm:$0xff] %v707
      %785 = vst [vmem:[#allocation2 + $0x63] sm:$0xff] %v708
      %786 = vst [vmem:[#allocation2 + $0x6b] sm:$0xff] %v709
      %787 = vst [vmem:[#allocation2 + $0x73] sm:$0xff] %v710
      %788 = vst [vmem:[#allocation2 + $0x7b] sm:$0xff] %v711
      %789 = vst [vmem:[#allocation2 + $0x83] sm:$0xff] %v712
      %790 = vst [vmem:[#allocation2 + $0x8b] sm:$0xff] %v713
      %791 = vst [vmem:[#allocation2 + $0x93] sm:$0xff] %v714
      %792 = vst [vmem:[#allocation2 + $0x9b] sm:$0xff] %v715
      %793 = vst [vmem:[#allocation2 + $0xa3] sm:$0xff] %v716
      %794 = vst [vmem:[#allocation2 + $0xab] sm:$0xff] %v717
      %795 = vst [vmem:[#allocation2 + $0xb3] sm:$0xff] %v718
      %796 = vst [vmem:[#allocation2 + $0xbb] sm:$0xff] %v719
      %797 = vst [vmem:[#allocation2 + $0xc3] sm:$0xff] %v720
      %798 = vst [vmem:[#allocation2 + $0xcb] sm:$0xff] %v721
      %799 = vst [vmem:[#allocation2 + $0xd3] sm:$0xff] %v722
      %800 = vst [vmem:[#allocation2 + $0xdb] sm:$0xff] %v723
      %801 = vst [vmem:[#allocation2 + $0xe3] sm:$0xff] %v724
      %802 = vst [vmem:[#allocation2 + $0xeb] sm:$0xff] %v725
      %803 = vst [vmem:[#allocation2 + $0xf3] sm:$0xff] %v726
      %804 = vst [vmem:[#allocation2 + $0xfb] sm:$0xff] %v727
      %805 = vst [vmem:[#allocation2 + $0x103] sm:$0xff] %v728
      %806 = vst [vmem:[#allocation2 + $0x10b] sm:$0xff] %v729
      %807 = vst [vmem:[#allocation2 + $0x113] sm:$0xff] %v730
      %808 = vst [vmem:[#allocation2 + $0x11b] sm:$0xff] %v731
      %809 = vst [vmem:[#allocation2 + $0x123] sm:$0xff] %v732
      %810 = vst [vmem:[#allocation2 + $0x12b] sm:$0xff] %v733
      %v811 = vld [vmem:[#allocation2] sm:$0xff]
      %v812 = vld [vmem:[#allocation2 + $0x8] sm:$0xff]
      %v813 = vld [vmem:[#allocation2 + $0x10] sm:$0xff]
      %v814 = vld [vmem:[#allocation2 + $0x18] sm:$0xff]
      %v815 = vld [vmem:[#allocation2 + $0x20] sm:$0xff]
      %v816 = vld [vmem:[#allocation2 + $0x28] sm:$0xff]
      %v817 = vld [vmem:[#allocation2 + $0x30] sm:$0xff]
      %v818 = vld [vmem:[#allocation2 + $0x38] sm:$0xff]
      %v819 = vld [vmem:[#allocation2 + $0x40] sm:$0xff]
      %v820 = vld [vmem:[#allocation2 + $0x48] sm:$0xff]
      %v821 = vld [vmem:[#allocation2 + $0x50] sm:$0xff]
      %v822 = vld [vmem:[#allocation2 + $0x58] sm:$0xff]
      %v823 = vld [vmem:[#allocation2 + $0x60] sm:$0xff]
      %v824 = vld [vmem:[#allocation2 + $0x68] sm:$0xff]
      %v825 = vld [vmem:[#allocation2 + $0x70] sm:$0xff]
      %v826 = vld [vmem:[#allocation2 + $0x78] sm:$0xff]
      %v827 = vld [vmem:[#allocation2 + $0x80] sm:$0xff]
      %v828 = vld [vmem:[#allocation2 + $0x88] sm:$0xff]
      %v829 = vld [vmem:[#allocation2 + $0x90] sm:$0xff]
      %v830 = vld [vmem:[#allocation2 + $0x98] sm:$0xff]
      %v831 = vld [vmem:[#allocation2 + $0xa0] sm:$0xff]
      %v832 = vld [vmem:[#allocation2 + $0xa8] sm:$0xff]
      %v833 = vld [vmem:[#allocation2 + $0xb0] sm:$0xff]
      %v834 = vld [vmem:[#allocation2 + $0xb8] sm:$0xff]
      %v835 = vld [vmem:[#allocation2 + $0xc0] sm:$0xff]
      %v836 = vld [vmem:[#allocation2 + $0xc8] sm:$0xff]
      %v837 = vld [vmem:[#allocation2 + $0xd0] sm:$0xff]
      %v838 = vld [vmem:[#allocation2 + $0xd8] sm:$0xff]
      %v839 = vld [vmem:[#allocation2 + $0xe0] sm:$0xff]
      %v840 = vld [vmem:[#allocation2 + $0xe8] sm:$0xff]
      %v841 = vld [vmem:[#allocation2 + $0xf0] sm:$0xff]
      %v842 = vld [vmem:[#allocation2 + $0xf8] sm:$0xff]
      %v843 = vld [vmem:[#allocation2 + $0x100] sm:$0xff]
      %v844 = vld [vmem:[#allocation2 + $0x108] sm:$0xff]
      %v845 = vld [vmem:[#allocation2 + $0x110] sm:$0xff]
      %v846 = vld [vmem:[#allocation2 + $0x118] sm:$0xff]
      %v847 = vpack.c.bf16 %v812, %v811
      %v848 = vpack.c.bf16 %v814, %v813
      %v849 = vpack.c.bf16 %v816, %v815
      %v850 = vpack.c.bf16 %v818, %v817
      %v851 = vpack.c.bf16 %v820, %v819
      %v852 = vpack.c.bf16 %v822, %v821
      %v853 = vpack.c.bf16 %v824, %v823
      %v854 = vpack.c.bf16 %v826, %v825
      %v855 = vpack.c.bf16 %v828, %v827
      %v856 = vpack.c.bf16 %v830, %v829
      %v857 = vpack.c.bf16 %v832, %v831
      %v858 = vpack.c.bf16 %v834, %v833
      %v859 = vpack.c.bf16 %v836, %v835
      %v860 = vpack.c.bf16 %v838, %v837
      %v861 = vpack.c.bf16 %v840, %v839
      %v862 = vpack.c.bf16 %v842, %v841
      %v863 = vpack.c.bf16 %v844, %v843
      %v864 = vpack.c.bf16 %v846, %v845
      %v865 = vld [vmem:[%s3] sm:$0xf]
      %v866 = vld [vmem:[%s3 + $0x4] sm:$0xf]
      %v867 = vld [vmem:[%s3 + $0x8] sm:$0xf]
      %v868 = vld [vmem:[%s3 + $0xc] sm:$0xf]
      %v869 = vld [vmem:[%s3 + $0x10] sm:$0xf]
      %v870 = vld [vmem:[%s3 + $0x14] sm:$0xf]
      %v871 = vld [vmem:[%s3 + $0x18] sm:$0xf]
      %v872 = vld [vmem:[%s3 + $0x1c] sm:$0xf]
      %v873 = vld [vmem:[%s3 + $0x20] sm:$0xf]
      %v874 = vld [vmem:[%s3 + $0x24] sm:$0xf]
      %v875 = vld [vmem:[%s3 + $0x28] sm:$0xf]
      %v876 = vld [vmem:[%s3 + $0x2c] sm:$0xf]
      %v877 = vld [vmem:[%s3 + $0x30] sm:$0xf]
      %v878 = vld [vmem:[%s3 + $0x34] sm:$0xf]
      %v879 = vld [vmem:[%s3 + $0x38] sm:$0xf]
      %v880 = vld [vmem:[%s3 + $0x3c] sm:$0xf]
      %v881 = vld [vmem:[#allocation2 + $0x1] sm:$0xff]
      %v882 = vld [vmem:[#allocation2 + $0x9] sm:$0xff]
      %v883 = vld [vmem:[#allocation2 + $0x11] sm:$0xff]
      %v884 = vld [vmem:[#allocation2 + $0x19] sm:$0xff]
      %v885 = vld [vmem:[#allocation2 + $0x21] sm:$0xff]
      %v886 = vld [vmem:[#allocation2 + $0x29] sm:$0xff]
      %v887 = vld [vmem:[#allocation2 + $0x31] sm:$0xff]
      %v888 = vld [vmem:[#allocation2 + $0x39] sm:$0xff]
      %v889 = vld [vmem:[#allocation2 + $0x41] sm:$0xff]
      %v890 = vld [vmem:[#allocation2 + $0x49] sm:$0xff]
      %v891 = vld [vmem:[#allocation2 + $0x51] sm:$0xff]
      %v892 = vld [vmem:[#allocation2 + $0x59] sm:$0xff]
      %v893 = vld [vmem:[#allocation2 + $0x61] sm:$0xff]
      %v894 = vld [vmem:[#allocation2 + $0x69] sm:$0xff]
      %v895 = vld [vmem:[#allocation2 + $0x71] sm:$0xff]
      %v896 = vld [vmem:[#allocation2 + $0x79] sm:$0xff]
      %v897 = vld [vmem:[#allocation2 + $0x81] sm:$0xff]
      %v898 = vld [vmem:[#allocation2 + $0x89] sm:$0xff]
      %v899 = vld [vmem:[#allocation2 + $0x91] sm:$0xff]
      %v900 = vld [vmem:[#allocation2 + $0x99] sm:$0xff]
      %v901 = vld [vmem:[#allocation2 + $0xa1] sm:$0xff]
      %v902 = vld [vmem:[#allocation2 + $0xa9] sm:$0xff]
      %v903 = vld [vmem:[#allocation2 + $0xb1] sm:$0xff]
      %v904 = vld [vmem:[#allocation2 + $0xb9] sm:$0xff]
      %v905 = vld [vmem:[#allocation2 + $0xc1] sm:$0xff]
      %v906 = vld [vmem:[#allocation2 + $0xc9] sm:$0xff]
      %v907 = vld [vmem:[#allocation2 + $0xd1] sm:$0xff]
      %v908 = vld [vmem:[#allocation2 + $0xd9] sm:$0xff]
      %v909 = vld [vmem:[#allocation2 + $0xe1] sm:$0xff]
      %v910 = vld [vmem:[#allocation2 + $0xe9] sm:$0xff]
      %v911 = vld [vmem:[#allocation2 + $0xf1] sm:$0xff]
      %v912 = vld [vmem:[#allocation2 + $0xf9] sm:$0xff]
      %v913 = vld [vmem:[#allocation2 + $0x101] sm:$0xff]
      %v914 = vld [vmem:[#allocation2 + $0x109] sm:$0xff]
      %v915 = vld [vmem:[#allocation2 + $0x111] sm:$0xff]
      %v916 = vld [vmem:[#allocation2 + $0x119] sm:$0xff]
      %v917 = vpack.c.bf16 %v882, %v881
      %v918 = vpack.c.bf16 %v884, %v883
      %v919 = vpack.c.bf16 %v886, %v885
      %v920 = vpack.c.bf16 %v888, %v887
      %v921 = vpack.c.bf16 %v890, %v889
      %v922 = vpack.c.bf16 %v892, %v891
      %v923 = vpack.c.bf16 %v894, %v893
      %v924 = vpack.c.bf16 %v896, %v895
      %v925 = vpack.c.bf16 %v898, %v897
      %v926 = vpack.c.bf16 %v900, %v899
      %v927 = vpack.c.bf16 %v902, %v901
      %v928 = vpack.c.bf16 %v904, %v903
      %v929 = vpack.c.bf16 %v906, %v905
      %v930 = vpack.c.bf16 %v908, %v907
      %v931 = vpack.c.bf16 %v910, %v909
      %v932 = vpack.c.bf16 %v912, %v911
      %v933 = vpack.c.bf16 %v914, %v913
      %v934 = vpack.c.bf16 %v916, %v915
      %s935 = scalar_lea.vmem %s3, 64
      %v936 = vld [vmem:[%s935] sm:$0xf]
      %v937 = vld [vmem:[%s935 + $0x4] sm:$0xf]
      %v938 = vld [vmem:[%s935 + $0x8] sm:$0xf]
      %v939 = vld [vmem:[%s935 + $0xc] sm:$0xf]
      %v940 = vld [vmem:[%s935 + $0x10] sm:$0xf]
      %v941 = vld [vmem:[%s935 + $0x14] sm:$0xf]
      %v942 = vld [vmem:[%s935 + $0x18] sm:$0xf]
      %v943 = vld [vmem:[%s935 + $0x1c] sm:$0xf]
      %v944 = vld [vmem:[%s935 + $0x20] sm:$0xf]
      %v945 = vld [vmem:[%s935 + $0x24] sm:$0xf]
      %v946 = vld [vmem:[%s935 + $0x28] sm:$0xf]
      %v947 = vld [vmem:[%s935 + $0x2c] sm:$0xf]
      %v948 = vld [vmem:[%s935 + $0x30] sm:$0xf]
      %v949 = vld [vmem:[%s935 + $0x34] sm:$0xf]
      %v950 = vld [vmem:[%s935 + $0x38] sm:$0xf]
      %v951 = vld [vmem:[%s935 + $0x3c] sm:$0xf]
      %v968 = vunpack.c.l.b16 %v936
      %v969 = vunpack.c.l.b16 %v937
      %v970 = vunpack.c.l.b16 %v938
      %v971 = vunpack.c.l.b16 %v939
      %v972 = vunpack.c.l.b16 %v940
      %v973 = vunpack.c.l.b16 %v941
      %v974 = vunpack.c.l.b16 %v942
      %v975 = vunpack.c.l.b16 %v943
      %v976 = vunpack.c.l.b16 %v944
      %v977 = vunpack.c.l.b16 %v945
      %v978 = vunpack.c.l.b16 %v946
      %v979 = vunpack.c.l.b16 %v947
      %v980 = vunpack.c.l.b16 %v948
      %v981 = vunpack.c.l.b16 %v949
      %v982 = vunpack.c.l.b16 %v950
      %v983 = vunpack.c.l.b16 %v951
      %v984 = vpack.c.b16 %v969, %v968
      %v985 = vpack.c.b16 %v971, %v970
      %v986 = vpack.c.b16 %v973, %v972
      %v987 = vpack.c.b16 %v975, %v974
      %v988 = vpack.c.b16 %v977, %v976
      %v989 = vpack.c.b16 %v979, %v978
      %v990 = vpack.c.b16 %v981, %v980
      %v991 = vpack.c.b16 %v983, %v982
      %1000 = vmatprep.subr.bf16.mxu0 0
      %1001 = vmatpush1.bf16.msra.mxu0 %v991
      %1002 = vmatprep.subr.bf16.mxu0 0
      %1003 = vmatpush1.bf16.msra.mxu0 %v990
      %1004 = vmatprep.subr.bf16.mxu0 0
      %1005 = vmatpush1.bf16.msra.mxu0 %v989
      %1006 = vmatprep.subr.bf16.mxu0 0
      %1007 = vmatpush1.bf16.msra.mxu0 %v988
      %1008 = vmatprep.subr.bf16.mxu0 0
      %1009 = vmatpush1.bf16.msra.mxu0 %v987
      %1010 = vmatprep.subr.bf16.mxu0 0
      %1011 = vmatpush1.bf16.msra.mxu0 %v986
      %1012 = vmatprep.subr.bf16.mxu0 0
      %1013 = vmatpush1.bf16.msra.mxu0 %v985
      %1014 = vmatprep.subr.bf16.mxu0 0
      %1015 = vmatpush1.bf16.msra.mxu0 %v984
      %1016 = vmatprep.subr.bf16.mxu0 0
      %1017 = vmatpush2.bf16.msra.mxu0 0
      %1018 = vmatprep.subr.bf16.mxu0 0
      %1019 = vmatpush2.bf16.msra.mxu0 0
      %1020 = vmatprep.subr.bf16.mxu0 0
      %1021 = vmatpush2.bf16.msra.mxu0 0
      %1022 = vmatprep.subr.bf16.mxu0 0
      %1023 = vmatpush2.bf16.msra.mxu0 0
      %1024 = vmatprep.subr.bf16.mxu0 0
      %1025 = vmatpush2.bf16.msra.mxu0 0
      %1026 = vmatprep.subr.bf16.mxu0 0
      %1027 = vmatpush2.bf16.msra.mxu0 0
      %1028 = vmatprep.subr.bf16.mxu0 0
      %1029 = vmatpush2.bf16.msra.mxu0 0
      %1030 = vmatprep.subr.bf16.mxu0 0
      %1031 = vmatpush2.bf16.msra.mxu0 0
      %1032 = vmatprep.mubr.bf16.mxu0 0
      %1033 = vmatmul.mubr.bf16.gmra.mxu0 %v917
      %v1034 = vpop.f32.mrf.mxu0
      %v1035 = vadd.f32 0.0, %v1034
      %v1036 = vpop.f32.mrf.mxu0
      %v1037 = vpop.f32.mrf.mxu0
      %v1038 = vadd.f32 0.0, %v1037
      %v1039 = vpop.f32.mrf.mxu0
      %1040 = vmatprep.mubr.bf16.mxu0 0
      %1041 = vmatmul.mubr.bf16.gmra.mxu0 %v918
      %v1042 = vpop.f32.mrf.mxu0
      %v1043 = vadd.f32 0.0, %v1042
      %v1044 = vpop.f32.mrf.mxu0
      %v1045 = vpop.f32.mrf.mxu0
      %v1046 = vadd.f32 0.0, %v1045
      %v1047 = vpop.f32.mrf.mxu0
      %1048 = vmatprep.mubr.bf16.mxu0 0
      %1049 = vmatmul.mubr.bf16.gmra.mxu0 %v919
      %v1050 = vpop.f32.mrf.mxu0
      %v1051 = vadd.f32 0.0, %v1050
      %v1052 = vpop.f32.mrf.mxu0
      %v1053 = vpop.f32.mrf.mxu0
      %v1054 = vadd.f32 0.0, %v1053
      %v1055 = vpop.f32.mrf.mxu0
      %1056 = vmatprep.mubr.bf16.mxu0 0
      %1057 = vmatmul.mubr.bf16.gmra.mxu0 %v920
      %v1058 = vpop.f32.mrf.mxu0
      %v1059 = vadd.f32 0.0, %v1058
      %v1060 = vpop.f32.mrf.mxu0
      %v1061 = vpop.f32.mrf.mxu0
      %v1062 = vadd.f32 0.0, %v1061
      %v1063 = vpop.f32.mrf.mxu0
      %1064 = vmatprep.mubr.bf16.mxu0 0
      %1065 = vmatmul.mubr.bf16.gmra.mxu0 %v921
      %v1066 = vpop.f32.mrf.mxu0
      %v1067 = vadd.f32 0.0, %v1066
      %v1068 = vpop.f32.mrf.mxu0
      %v1069 = vpop.f32.mrf.mxu0
      %v1070 = vadd.f32 0.0, %v1069
      %v1071 = vpop.f32.mrf.mxu0
      %1072 = vmatprep.mubr.bf16.mxu0 0
      %1073 = vmatmul.mubr.bf16.gmra.mxu0 %v922
      %v1074 = vpop.f32.mrf.mxu0
      %v1075 = vadd.f32 0.0, %v1074
      %v1076 = vpop.f32.mrf.mxu0
      %v1077 = vpop.f32.mrf.mxu0
      %v1078 = vadd.f32 0.0, %v1077
      %v1079 = vpop.f32.mrf.mxu0
      %1080 = vmatprep.mubr.bf16.mxu0 0
      %1081 = vmatmul.mubr.bf16.gmra.mxu0 %v923
      %v1082 = vpop.f32.mrf.mxu0
      %v1083 = vadd.f32 0.0, %v1082
      %v1084 = vpop.f32.mrf.mxu0
      %v1085 = vpop.f32.mrf.mxu0
      %v1086 = vadd.f32 0.0, %v1085
      %v1087 = vpop.f32.mrf.mxu0
      %1088 = vmatprep.mubr.bf16.mxu0 0
      %1089 = vmatmul.mubr.bf16.gmra.mxu0 %v924
      %v1090 = vpop.f32.mrf.mxu0
      %v1091 = vadd.f32 0.0, %v1090
      %v1092 = vpop.f32.mrf.mxu0
      %v1093 = vpop.f32.mrf.mxu0
      %v1094 = vadd.f32 0.0, %v1093
      %v1095 = vpop.f32.mrf.mxu0
      %1096 = vmatprep.mubr.bf16.mxu0 0
      %1097 = vmatmul.mubr.bf16.gmra.mxu0 %v925
      %v1098 = vpop.f32.mrf.mxu0
      %v1099 = vadd.f32 0.0, %v1098
      %v1100 = vpop.f32.mrf.mxu0
      %v1101 = vpop.f32.mrf.mxu0
      %v1102 = vadd.f32 0.0, %v1101
      %v1103 = vpop.f32.mrf.mxu0
      %1104 = vmatprep.mubr.bf16.mxu0 0
      %1105 = vmatmul.mubr.bf16.gmra.mxu0 %v926
      %v1106 = vpop.f32.mrf.mxu0
      %v1107 = vadd.f32 0.0, %v1106
      %v1108 = vpop.f32.mrf.mxu0
      %v1109 = vpop.f32.mrf.mxu0
      %v1110 = vadd.f32 0.0, %v1109
      %v1111 = vpop.f32.mrf.mxu0
      %1112 = vmatprep.mubr.bf16.mxu0 0
      %1113 = vmatmul.mubr.bf16.gmra.mxu0 %v927
      %v1114 = vpop.f32.mrf.mxu0
      %v1115 = vadd.f32 0.0, %v1114
      %v1116 = vpop.f32.mrf.mxu0
      %v1117 = vpop.f32.mrf.mxu0
      %v1118 = vadd.f32 0.0, %v1117
      %v1119 = vpop.f32.mrf.mxu0
      %1120 = vmatprep.mubr.bf16.mxu0 0
      %1121 = vmatmul.mubr.bf16.gmra.mxu0 %v928
      %v1122 = vpop.f32.mrf.mxu0
      %v1123 = vadd.f32 0.0, %v1122
      %v1124 = vpop.f32.mrf.mxu0
      %v1125 = vpop.f32.mrf.mxu0
      %v1126 = vadd.f32 0.0, %v1125
      %v1127 = vpop.f32.mrf.mxu0
      %1128 = vmatprep.mubr.bf16.mxu0 0
      %1129 = vmatmul.mubr.bf16.gmra.mxu0 %v929
      %v1130 = vpop.f32.mrf.mxu0
      %v1131 = vadd.f32 0.0, %v1130
      %v1132 = vpop.f32.mrf.mxu0
      %v1133 = vpop.f32.mrf.mxu0
      %v1134 = vadd.f32 0.0, %v1133
      %v1135 = vpop.f32.mrf.mxu0
      %1136 = vmatprep.mubr.bf16.mxu0 0
      %1137 = vmatmul.mubr.bf16.gmra.mxu0 %v930
      %v1138 = vpop.f32.mrf.mxu0
      %v1139 = vadd.f32 0.0, %v1138
      %v1140 = vpop.f32.mrf.mxu0
      %v1141 = vpop.f32.mrf.mxu0
      %v1142 = vadd.f32 0.0, %v1141
      %v1143 = vpop.f32.mrf.mxu0
      %1144 = vmatprep.mubr.bf16.mxu0 0
      %1145 = vmatmul.mubr.bf16.gmra.mxu0 %v931
      %v1146 = vpop.f32.mrf.mxu0
      %v1147 = vadd.f32 0.0, %v1146
      %v1148 = vpop.f32.mrf.mxu0
      %v1149 = vpop.f32.mrf.mxu0
      %v1150 = vadd.f32 0.0, %v1149
      %v1151 = vpop.f32.mrf.mxu0
      %1152 = vmatprep.mubr.bf16.mxu0 0
      %1153 = vmatmul.mubr.bf16.gmra.mxu0 %v932
      %v1154 = vpop.f32.mrf.mxu0
      %v1155 = vadd.f32 0.0, %v1154
      %v1156 = vpop.f32.mrf.mxu0
      %v1157 = vpop.f32.mrf.mxu0
      %v1158 = vadd.f32 0.0, %v1157
      %v1159 = vpop.f32.mrf.mxu0
      %1160 = vmatprep.mubr.bf16.mxu0 0
      %1161 = vmatmul.mubr.bf16.gmra.mxu0 %v933
      %v1162 = vpop.f32.mrf.mxu0
      %v1163 = vadd.f32 0.0, %v1162
      %v1164 = vpop.f32.mrf.mxu0
      %v1165 = vpop.f32.mrf.mxu0
      %v1166 = vadd.f32 0.0, %v1165
      %v1167 = vpop.f32.mrf.mxu0
      %1168 = vmatprep.mubr.bf16.mxu0 0
      %1169 = vmatmul.mubr.bf16.gmra.mxu0 %v934
      %v1170 = vpop.f32.mrf.mxu0
      %v1171 = vadd.f32 0.0, %v1170
      %v1172 = vpop.f32.mrf.mxu0
      %v1173 = vpop.f32.mrf.mxu0
      %v1174 = vadd.f32 0.0, %v1173
      %v1175 = vpop.f32.mrf.mxu0
      %1176 = vdwg.mxu0
      %v1193 = vunpack.c.l.b16 %v865
      %v1194 = vunpack.c.l.b16 %v866
      %v1195 = vunpack.c.l.b16 %v867
      %v1196 = vunpack.c.l.b16 %v868
      %v1197 = vunpack.c.l.b16 %v869
      %v1198 = vunpack.c.l.b16 %v870
      %v1199 = vunpack.c.l.b16 %v871
      %v1200 = vunpack.c.l.b16 %v872
      %v1201 = vunpack.c.l.b16 %v873
      %v1202 = vunpack.c.l.b16 %v874
      %v1203 = vunpack.c.l.b16 %v875
      %v1204 = vunpack.c.l.b16 %v876
      %v1205 = vunpack.c.l.b16 %v877
      %v1206 = vunpack.c.l.b16 %v878
      %v1207 = vunpack.c.l.b16 %v879
      %v1208 = vunpack.c.l.b16 %v880
      %v1209 = vpack.c.b16 %v1194, %v1193
      %v1210 = vpack.c.b16 %v1196, %v1195
      %v1211 = vpack.c.b16 %v1198, %v1197
      %v1212 = vpack.c.b16 %v1200, %v1199
      %v1213 = vpack.c.b16 %v1202, %v1201
      %v1214 = vpack.c.b16 %v1204, %v1203
      %v1215 = vpack.c.b16 %v1206, %v1205
      %v1216 = vpack.c.b16 %v1208, %v1207
      %1225 = vmatprep.subr.bf16.mxu0 0
      %1226 = vmatpush1.bf16.msra.mxu0 %v1216
      %1227 = vmatprep.subr.bf16.mxu0 0
      %1228 = vmatpush1.bf16.msra.mxu0 %v1215
      %1229 = vmatprep.subr.bf16.mxu0 0
      %1230 = vmatpush1.bf16.msra.mxu0 %v1214
      %1231 = vmatprep.subr.bf16.mxu0 0
      %1232 = vmatpush1.bf16.msra.mxu0 %v1213
      %1233 = vmatprep.subr.bf16.mxu0 0
      %1234 = vmatpush1.bf16.msra.mxu0 %v1212
      %1235 = vmatprep.subr.bf16.mxu0 0
      %1236 = vmatpush1.bf16.msra.mxu0 %v1211
      %1237 = vmatprep.subr.bf16.mxu0 0
      %1238 = vmatpush1.bf16.msra.mxu0 %v1210
      %1239 = vmatprep.subr.bf16.mxu0 0
      %1240 = vmatpush1.bf16.msra.mxu0 %v1209
      %1241 = vmatprep.subr.bf16.mxu0 0
      %1242 = vmatpush2.bf16.msra.mxu0 0
      %1243 = vmatprep.subr.bf16.mxu0 0
      %1244 = vmatpush2.bf16.msra.mxu0 0
      %1245 = vmatprep.subr.bf16.mxu0 0
      %1246 = vmatpush2.bf16.msra.mxu0 0
      %1247 = vmatprep.subr.bf16.mxu0 0
      %1248 = vmatpush2.bf16.msra.mxu0 0
      %1249 = vmatprep.subr.bf16.mxu0 0
      %1250 = vmatpush2.bf16.msra.mxu0 0
      %1251 = vmatprep.subr.bf16.mxu0 0
      %1252 = vmatpush2.bf16.msra.mxu0 0
      %1253 = vmatprep.subr.bf16.mxu0 0
      %1254 = vmatpush2.bf16.msra.mxu0 0
      %1255 = vmatprep.subr.bf16.mxu0 0
      %1256 = vmatpush2.bf16.msra.mxu0 0
      %1257 = vmatprep.mubr.bf16.mxu0 0
      %1258 = vmatmul.mubr.bf16.gmra.mxu0 %v847
      %v1259 = vpop.f32.mrf.mxu0
      %v1260 = vadd.f32 %v1035, %v1259
      %v1261 = vpop.f32.mrf.mxu0
      %v1262 = vpop.f32.mrf.mxu0
      %v1263 = vadd.f32 %v1038, %v1262
      %v1264 = vpop.f32.mrf.mxu0
      %1265 = vmatprep.mubr.bf16.mxu0 0
      %1266 = vmatmul.mubr.bf16.gmra.mxu0 %v848
      %v1267 = vpop.f32.mrf.mxu0
      %v1268 = vadd.f32 %v1043, %v1267
      %v1269 = vpop.f32.mrf.mxu0
      %v1270 = vpop.f32.mrf.mxu0
      %v1271 = vadd.f32 %v1046, %v1270
      %v1272 = vpop.f32.mrf.mxu0
      %1273 = vmatprep.mubr.bf16.mxu0 0
      %1274 = vmatmul.mubr.bf16.gmra.mxu0 %v849
      %v1275 = vpop.f32.mrf.mxu0
      %v1276 = vadd.f32 %v1051, %v1275
      %v1277 = vpop.f32.mrf.mxu0
      %v1278 = vpop.f32.mrf.mxu0
      %v1279 = vadd.f32 %v1054, %v1278
      %v1280 = vpop.f32.mrf.mxu0
      %1281 = vmatprep.mubr.bf16.mxu0 0
      %1282 = vmatmul.mubr.bf16.gmra.mxu0 %v850
      %v1283 = vpop.f32.mrf.mxu0
      %v1284 = vadd.f32 %v1059, %v1283
      %v1285 = vpop.f32.mrf.mxu0
      %v1286 = vpop.f32.mrf.mxu0
      %v1287 = vadd.f32 %v1062, %v1286
      %v1288 = vpop.f32.mrf.mxu0
      %1289 = vmatprep.mubr.bf16.mxu0 0
      %1290 = vmatmul.mubr.bf16.gmra.mxu0 %v851
      %v1291 = vpop.f32.mrf.mxu0
      %v1292 = vadd.f32 %v1067, %v1291
      %v1293 = vpop.f32.mrf.mxu0
      %v1294 = vpop.f32.mrf.mxu0
      %v1295 = vadd.f32 %v1070, %v1294
      %v1296 = vpop.f32.mrf.mxu0
      %1297 = vmatprep.mubr.bf16.mxu0 0
      %1298 = vmatmul.mubr.bf16.gmra.mxu0 %v852
      %v1299 = vpop.f32.mrf.mxu0
      %v1300 = vadd.f32 %v1075, %v1299
      %v1301 = vpop.f32.mrf.mxu0
      %v1302 = vpop.f32.mrf.mxu0
      %v1303 = vadd.f32 %v1078, %v1302
      %v1304 = vpop.f32.mrf.mxu0
      %1305 = vmatprep.mubr.bf16.mxu0 0
      %1306 = vmatmul.mubr.bf16.gmra.mxu0 %v853
      %v1307 = vpop.f32.mrf.mxu0
      %v1308 = vadd.f32 %v1083, %v1307
      %v1309 = vpop.f32.mrf.mxu0
      %v1310 = vpop.f32.mrf.mxu0
      %v1311 = vadd.f32 %v1086, %v1310
      %v1312 = vpop.f32.mrf.mxu0
      %1313 = vmatprep.mubr.bf16.mxu0 0
      %1314 = vmatmul.mubr.bf16.gmra.mxu0 %v854
      %v1315 = vpop.f32.mrf.mxu0
      %v1316 = vadd.f32 %v1091, %v1315
      %v1317 = vpop.f32.mrf.mxu0
      %v1318 = vpop.f32.mrf.mxu0
      %v1319 = vadd.f32 %v1094, %v1318
      %v1320 = vpop.f32.mrf.mxu0
      %1321 = vmatprep.mubr.bf16.mxu0 0
      %1322 = vmatmul.mubr.bf16.gmra.mxu0 %v855
      %v1323 = vpop.f32.mrf.mxu0
      %v1324 = vadd.f32 %v1099, %v1323
      %v1325 = vpop.f32.mrf.mxu0
      %v1326 = vpop.f32.mrf.mxu0
      %v1327 = vadd.f32 %v1102, %v1326
      %v1328 = vpop.f32.mrf.mxu0
      %1329 = vmatprep.mubr.bf16.mxu0 0
      %1330 = vmatmul.mubr.bf16.gmra.mxu0 %v856
      %v1331 = vpop.f32.mrf.mxu0
      %v1332 = vadd.f32 %v1107, %v1331
      %v1333 = vpop.f32.mrf.mxu0
      %v1334 = vpop.f32.mrf.mxu0
      %v1335 = vadd.f32 %v1110, %v1334
      %v1336 = vpop.f32.mrf.mxu0
      %1337 = vmatprep.mubr.bf16.mxu0 0
      %1338 = vmatmul.mubr.bf16.gmra.mxu0 %v857
      %v1339 = vpop.f32.mrf.mxu0
      %v1340 = vadd.f32 %v1115, %v1339
      %v1341 = vpop.f32.mrf.mxu0
      %v1342 = vpop.f32.mrf.mxu0
      %v1343 = vadd.f32 %v1118, %v1342
      %v1344 = vpop.f32.mrf.mxu0
      %1345 = vmatprep.mubr.bf16.mxu0 0
      %1346 = vmatmul.mubr.bf16.gmra.mxu0 %v858
      %v1347 = vpop.f32.mrf.mxu0
      %v1348 = vadd.f32 %v1123, %v1347
      %v1349 = vpop.f32.mrf.mxu0
      %v1350 = vpop.f32.mrf.mxu0
      %v1351 = vadd.f32 %v1126, %v1350
      %v1352 = vpop.f32.mrf.mxu0
      %1353 = vmatprep.mubr.bf16.mxu0 0
      %1354 = vmatmul.mubr.bf16.gmra.mxu0 %v859
      %v1355 = vpop.f32.mrf.mxu0
      %v1356 = vadd.f32 %v1131, %v1355
      %v1357 = vpop.f32.mrf.mxu0
      %v1358 = vpop.f32.mrf.mxu0
      %v1359 = vadd.f32 %v1134, %v1358
      %v1360 = vpop.f32.mrf.mxu0
      %1361 = vmatprep.mubr.bf16.mxu0 0
      %1362 = vmatmul.mubr.bf16.gmra.mxu0 %v860
      %v1363 = vpop.f32.mrf.mxu0
      %v1364 = vadd.f32 %v1139, %v1363
      %v1365 = vpop.f32.mrf.mxu0
      %v1366 = vpop.f32.mrf.mxu0
      %v1367 = vadd.f32 %v1142, %v1366
      %v1368 = vpop.f32.mrf.mxu0
      %1369 = vmatprep.mubr.bf16.mxu0 0
      %1370 = vmatmul.mubr.bf16.gmra.mxu0 %v861
      %v1371 = vpop.f32.mrf.mxu0
      %v1372 = vadd.f32 %v1147, %v1371
      %v1373 = vpop.f32.mrf.mxu0
      %v1374 = vpop.f32.mrf.mxu0
      %v1375 = vadd.f32 %v1150, %v1374
      %v1376 = vpop.f32.mrf.mxu0
      %1377 = vmatprep.mubr.bf16.mxu0 0
      %1378 = vmatmul.mubr.bf16.gmra.mxu0 %v862
      %v1379 = vpop.f32.mrf.mxu0
      %v1380 = vadd.f32 %v1155, %v1379
      %v1381 = vpop.f32.mrf.mxu0
      %v1382 = vpop.f32.mrf.mxu0
      %v1383 = vadd.f32 %v1158, %v1382
      %v1384 = vpop.f32.mrf.mxu0
      %1385 = vmatprep.mubr.bf16.mxu0 0
      %1386 = vmatmul.mubr.bf16.gmra.mxu0 %v863
      %v1387 = vpop.f32.mrf.mxu0
      %v1388 = vadd.f32 %v1163, %v1387
      %v1389 = vpop.f32.mrf.mxu0
      %v1390 = vpop.f32.mrf.mxu0
      %v1391 = vadd.f32 %v1166, %v1390
      %v1392 = vpop.f32.mrf.mxu0
      %1393 = vmatprep.mubr.bf16.mxu0 0
      %1394 = vmatmul.mubr.bf16.gmra.mxu0 %v864
      %v1395 = vpop.f32.mrf.mxu0
      %v1396 = vadd.f32 %v1171, %v1395
      %v1397 = vpop.f32.mrf.mxu0
      %v1398 = vpop.f32.mrf.mxu0
      %v1399 = vadd.f32 %v1174, %v1398
      %v1400 = vpop.f32.mrf.mxu0
      %1401 = vdwg.mxu0
      %v1402 = vld [vmem:[#allocation2 + $0x2] sm:$0xff]
      %v1403 = vld [vmem:[#allocation2 + $0xa] sm:$0xff]
      %v1404 = vld [vmem:[#allocation2 + $0x12] sm:$0xff]
      %v1405 = vld [vmem:[#allocation2 + $0x1a] sm:$0xff]
      %v1406 = vld [vmem:[#allocation2 + $0x22] sm:$0xff]
      %v1407 = vld [vmem:[#allocation2 + $0x2a] sm:$0xff]
      %v1408 = vld [vmem:[#allocation2 + $0x32] sm:$0xff]
      %v1409 = vld [vmem:[#allocation2 + $0x3a] sm:$0xff]
      %v1410 = vld [vmem:[#allocation2 + $0x42] sm:$0xff]
      %v1411 = vld [vmem:[#allocation2 + $0x4a] sm:$0xff]
      %v1412 = vld [vmem:[#allocation2 + $0x52] sm:$0xff]
      %v1413 = vld [vmem:[#allocation2 + $0x5a] sm:$0xff]
      %v1414 = vld [vmem:[#allocation2 + $0x62] sm:$0xff]
      %v1415 = vld [vmem:[#allocation2 + $0x6a] sm:$0xff]
      %v1416 = vld [vmem:[#allocation2 + $0x72] sm:$0xff]
      %v1417 = vld [vmem:[#allocation2 + $0x7a] sm:$0xff]
      %v1418 = vld [vmem:[#allocation2 + $0x82] sm:$0xff]
      %v1419 = vld [vmem:[#allocation2 + $0x8a] sm:$0xff]
      %v1420 = vld [vmem:[#allocation2 + $0x92] sm:$0xff]
      %v1421 = vld [vmem:[#allocation2 + $0x9a] sm:$0xff]
      %v1422 = vld [vmem:[#allocation2 + $0xa2] sm:$0xff]
      %v1423 = vld [vmem:[#allocation2 + $0xaa] sm:$0xff]
      %v1424 = vld [vmem:[#allocation2 + $0xb2] sm:$0xff]
      %v1425 = vld [vmem:[#allocation2 + $0xba] sm:$0xff]
      %v1426 = vld [vmem:[#allocation2 + $0xc2] sm:$0xff]
      %v1427 = vld [vmem:[#allocation2 + $0xca] sm:$0xff]
      %v1428 = vld [vmem:[#allocation2 + $0xd2] sm:$0xff]
      %v1429 = vld [vmem:[#allocation2 + $0xda] sm:$0xff]
      %v1430 = vld [vmem:[#allocation2 + $0xe2] sm:$0xff]
      %v1431 = vld [vmem:[#allocation2 + $0xea] sm:$0xff]
      %v1432 = vld [vmem:[#allocation2 + $0xf2] sm:$0xff]
      %v1433 = vld [vmem:[#allocation2 + $0xfa] sm:$0xff]
      %v1434 = vld [vmem:[#allocation2 + $0x102] sm:$0xff]
      %v1435 = vld [vmem:[#allocation2 + $0x10a] sm:$0xff]
      %v1436 = vld [vmem:[#allocation2 + $0x112] sm:$0xff]
      %v1437 = vld [vmem:[#allocation2 + $0x11a] sm:$0xff]
      %v1438 = vpack.c.bf16 %v1403, %v1402
      %v1439 = vpack.c.bf16 %v1405, %v1404
      %v1440 = vpack.c.bf16 %v1407, %v1406
      %v1441 = vpack.c.bf16 %v1409, %v1408
      %v1442 = vpack.c.bf16 %v1411, %v1410
      %v1443 = vpack.c.bf16 %v1413, %v1412
      %v1444 = vpack.c.bf16 %v1415, %v1414
      %v1445 = vpack.c.bf16 %v1417, %v1416
      %v1446 = vpack.c.bf16 %v1419, %v1418
      %v1447 = vpack.c.bf16 %v1421, %v1420
      %v1448 = vpack.c.bf16 %v1423, %v1422
      %v1449 = vpack.c.bf16 %v1425, %v1424
      %v1450 = vpack.c.bf16 %v1427, %v1426
      %v1451 = vpack.c.bf16 %v1429, %v1428
      %v1452 = vpack.c.bf16 %v1431, %v1430
      %v1453 = vpack.c.bf16 %v1433, %v1432
      %v1454 = vpack.c.bf16 %v1435, %v1434
      %v1455 = vpack.c.bf16 %v1437, %v1436
      %s1456 = scalar_lea.vmem %s3, 128
      %v1457 = vld [vmem:[%s1456] sm:$0xf]
      %v1458 = vld [vmem:[%s1456 + $0x4] sm:$0xf]
      %v1459 = vld [vmem:[%s1456 + $0x8] sm:$0xf]
      %v1460 = vld [vmem:[%s1456 + $0xc] sm:$0xf]
      %v1461 = vld [vmem:[%s1456 + $0x10] sm:$0xf]
      %v1462 = vld [vmem:[%s1456 + $0x14] sm:$0xf]
      %v1463 = vld [vmem:[%s1456 + $0x18] sm:$0xf]
      %v1464 = vld [vmem:[%s1456 + $0x1c] sm:$0xf]
      %v1465 = vld [vmem:[%s1456 + $0x20] sm:$0xf]
      %v1466 = vld [vmem:[%s1456 + $0x24] sm:$0xf]
      %v1467 = vld [vmem:[%s1456 + $0x28] sm:$0xf]
      %v1468 = vld [vmem:[%s1456 + $0x2c] sm:$0xf]
      %v1469 = vld [vmem:[%s1456 + $0x30] sm:$0xf]
      %v1470 = vld [vmem:[%s1456 + $0x34] sm:$0xf]
      %v1471 = vld [vmem:[%s1456 + $0x38] sm:$0xf]
      %v1472 = vld [vmem:[%s1456 + $0x3c] sm:$0xf]
      %v1489 = vunpack.c.l.b16 %v1457
      %v1490 = vunpack.c.l.b16 %v1458
      %v1491 = vunpack.c.l.b16 %v1459
      %v1492 = vunpack.c.l.b16 %v1460
      %v1493 = vunpack.c.l.b16 %v1461
      %v1494 = vunpack.c.l.b16 %v1462
      %v1495 = vunpack.c.l.b16 %v1463
      %v1496 = vunpack.c.l.b16 %v1464
      %v1497 = vunpack.c.l.b16 %v1465
      %v1498 = vunpack.c.l.b16 %v1466
      %v1499 = vunpack.c.l.b16 %v1467
      %v1500 = vunpack.c.l.b16 %v1468
      %v1501 = vunpack.c.l.b16 %v1469
      %v1502 = vunpack.c.l.b16 %v1470
      %v1503 = vunpack.c.l.b16 %v1471
      %v1504 = vunpack.c.l.b16 %v1472
      %v1505 = vpack.c.b16 %v1490, %v1489
      %v1506 = vpack.c.b16 %v1492, %v1491
      %v1507 = vpack.c.b16 %v1494, %v1493
      %v1508 = vpack.c.b16 %v1496, %v1495
      %v1509 = vpack.c.b16 %v1498, %v1497
      %v1510 = vpack.c.b16 %v1500, %v1499
      %v1511 = vpack.c.b16 %v1502, %v1501
      %v1512 = vpack.c.b16 %v1504, %v1503
      %1521 = vmatprep.subr.bf16.mxu0 0
      %1522 = vmatpush1.bf16.msra.mxu0 %v1512
      %1523 = vmatprep.subr.bf16.mxu0 0
      %1524 = vmatpush1.bf16.msra.mxu0 %v1511
      %1525 = vmatprep.subr.bf16.mxu0 0
      %1526 = vmatpush1.bf16.msra.mxu0 %v1510
      %1527 = vmatprep.subr.bf16.mxu0 0
      %1528 = vmatpush1.bf16.msra.mxu0 %v1509
      %1529 = vmatprep.subr.bf16.mxu0 0
      %1530 = vmatpush1.bf16.msra.mxu0 %v1508
      %1531 = vmatprep.subr.bf16.mxu0 0
      %1532 = vmatpush1.bf16.msra.mxu0 %v1507
      %1533 = vmatprep.subr.bf16.mxu0 0
      %1534 = vmatpush1.bf16.msra.mxu0 %v1506
      %1535 = vmatprep.subr.bf16.mxu0 0
      %1536 = vmatpush1.bf16.msra.mxu0 %v1505
      %1537 = vmatprep.subr.bf16.mxu0 0
      %1538 = vmatpush2.bf16.msra.mxu0 0
      %1539 = vmatprep.subr.bf16.mxu0 0
      %1540 = vmatpush2.bf16.msra.mxu0 0
      %1541 = vmatprep.subr.bf16.mxu0 0
      %1542 = vmatpush2.bf16.msra.mxu0 0
      %1543 = vmatprep.subr.bf16.mxu0 0
      %1544 = vmatpush2.bf16.msra.mxu0 0
      %1545 = vmatprep.subr.bf16.mxu0 0
      %1546 = vmatpush2.bf16.msra.mxu0 0
      %1547 = vmatprep.subr.bf16.mxu0 0
      %1548 = vmatpush2.bf16.msra.mxu0 0
      %1549 = vmatprep.subr.bf16.mxu0 0
      %1550 = vmatpush2.bf16.msra.mxu0 0
      %1551 = vmatprep.subr.bf16.mxu0 0
      %1552 = vmatpush2.bf16.msra.mxu0 0
      %1553 = vmatprep.mubr.bf16.mxu0 0
      %1554 = vmatmul.mubr.bf16.gmra.mxu0 %v1438
      %v1555 = vpop.f32.mrf.mxu0
      %v1556 = vadd.f32 0.0, %v1555
      %v1557 = vpop.f32.mrf.mxu0
      %v1558 = vpop.f32.mrf.mxu0
      %v1559 = vadd.f32 0.0, %v1558
      %v1560 = vpop.f32.mrf.mxu0
      %1561 = vmatprep.mubr.bf16.mxu0 0
      %1562 = vmatmul.mubr.bf16.gmra.mxu0 %v1439
      %v1563 = vpop.f32.mrf.mxu0
      %v1564 = vadd.f32 0.0, %v1563
      %v1565 = vpop.f32.mrf.mxu0
      %v1566 = vpop.f32.mrf.mxu0
      %v1567 = vadd.f32 0.0, %v1566
      %v1568 = vpop.f32.mrf.mxu0
      %1569 = vmatprep.mubr.bf16.mxu0 0
      %1570 = vmatmul.mubr.bf16.gmra.mxu0 %v1440
      %v1571 = vpop.f32.mrf.mxu0
      %v1572 = vadd.f32 0.0, %v1571
      %v1573 = vpop.f32.mrf.mxu0
      %v1574 = vpop.f32.mrf.mxu0
      %v1575 = vadd.f32 0.0, %v1574
      %v1576 = vpop.f32.mrf.mxu0
      %1577 = vmatprep.mubr.bf16.mxu0 0
      %1578 = vmatmul.mubr.bf16.gmra.mxu0 %v1441
      %v1579 = vpop.f32.mrf.mxu0
      %v1580 = vadd.f32 0.0, %v1579
      %v1581 = vpop.f32.mrf.mxu0
      %v1582 = vpop.f32.mrf.mxu0
      %v1583 = vadd.f32 0.0, %v1582
      %v1584 = vpop.f32.mrf.mxu0
      %1585 = vmatprep.mubr.bf16.mxu0 0
      %1586 = vmatmul.mubr.bf16.gmra.mxu0 %v1442
      %v1587 = vpop.f32.mrf.mxu0
      %v1588 = vadd.f32 0.0, %v1587
      %v1589 = vpop.f32.mrf.mxu0
      %v1590 = vpop.f32.mrf.mxu0
      %v1591 = vadd.f32 0.0, %v1590
      %v1592 = vpop.f32.mrf.mxu0
      %1593 = vmatprep.mubr.bf16.mxu0 0
      %1594 = vmatmul.mubr.bf16.gmra.mxu0 %v1443
      %v1595 = vpop.f32.mrf.mxu0
      %v1596 = vadd.f32 0.0, %v1595
      %v1597 = vpop.f32.mrf.mxu0
      %v1598 = vpop.f32.mrf.mxu0
      %v1599 = vadd.f32 0.0, %v1598
      %v1600 = vpop.f32.mrf.mxu0
      %1601 = vmatprep.mubr.bf16.mxu0 0
      %1602 = vmatmul.mubr.bf16.gmra.mxu0 %v1444
      %v1603 = vpop.f32.mrf.mxu0
      %v1604 = vadd.f32 0.0, %v1603
      %v1605 = vpop.f32.mrf.mxu0
      %v1606 = vpop.f32.mrf.mxu0
      %v1607 = vadd.f32 0.0, %v1606
      %v1608 = vpop.f32.mrf.mxu0
      %1609 = vmatprep.mubr.bf16.mxu0 0
      %1610 = vmatmul.mubr.bf16.gmra.mxu0 %v1445
      %v1611 = vpop.f32.mrf.mxu0
      %v1612 = vadd.f32 0.0, %v1611
      %v1613 = vpop.f32.mrf.mxu0
      %v1614 = vpop.f32.mrf.mxu0
      %v1615 = vadd.f32 0.0, %v1614
      %v1616 = vpop.f32.mrf.mxu0
      %1617 = vmatprep.mubr.bf16.mxu0 0
      %1618 = vmatmul.mubr.bf16.gmra.mxu0 %v1446
      %v1619 = vpop.f32.mrf.mxu0
      %v1620 = vadd.f32 0.0, %v1619
      %v1621 = vpop.f32.mrf.mxu0
      %v1622 = vpop.f32.mrf.mxu0
      %v1623 = vadd.f32 0.0, %v1622
      %v1624 = vpop.f32.mrf.mxu0
      %1625 = vmatprep.mubr.bf16.mxu0 0
      %1626 = vmatmul.mubr.bf16.gmra.mxu0 %v1447
      %v1627 = vpop.f32.mrf.mxu0
      %v1628 = vadd.f32 0.0, %v1627
      %v1629 = vpop.f32.mrf.mxu0
      %v1630 = vpop.f32.mrf.mxu0
      %v1631 = vadd.f32 0.0, %v1630
      %v1632 = vpop.f32.mrf.mxu0
      %1633 = vmatprep.mubr.bf16.mxu0 0
      %1634 = vmatmul.mubr.bf16.gmra.mxu0 %v1448
      %v1635 = vpop.f32.mrf.mxu0
      %v1636 = vadd.f32 0.0, %v1635
      %v1637 = vpop.f32.mrf.mxu0
      %v1638 = vpop.f32.mrf.mxu0
      %v1639 = vadd.f32 0.0, %v1638
      %v1640 = vpop.f32.mrf.mxu0
      %1641 = vmatprep.mubr.bf16.mxu0 0
      %1642 = vmatmul.mubr.bf16.gmra.mxu0 %v1449
      %v1643 = vpop.f32.mrf.mxu0
      %v1644 = vadd.f32 0.0, %v1643
      %v1645 = vpop.f32.mrf.mxu0
      %v1646 = vpop.f32.mrf.mxu0
      %v1647 = vadd.f32 0.0, %v1646
      %v1648 = vpop.f32.mrf.mxu0
      %1649 = vmatprep.mubr.bf16.mxu0 0
      %1650 = vmatmul.mubr.bf16.gmra.mxu0 %v1450
      %v1651 = vpop.f32.mrf.mxu0
      %v1652 = vadd.f32 0.0, %v1651
      %v1653 = vpop.f32.mrf.mxu0
      %v1654 = vpop.f32.mrf.mxu0
      %v1655 = vadd.f32 0.0, %v1654
      %v1656 = vpop.f32.mrf.mxu0
      %1657 = vmatprep.mubr.bf16.mxu0 0
      %1658 = vmatmul.mubr.bf16.gmra.mxu0 %v1451
      %v1659 = vpop.f32.mrf.mxu0
      %v1660 = vadd.f32 0.0, %v1659
      %v1661 = vpop.f32.mrf.mxu0
      %v1662 = vpop.f32.mrf.mxu0
      %v1663 = vadd.f32 0.0, %v1662
      %v1664 = vpop.f32.mrf.mxu0
      %1665 = vmatprep.mubr.bf16.mxu0 0
      %1666 = vmatmul.mubr.bf16.gmra.mxu0 %v1452
      %v1667 = vpop.f32.mrf.mxu0
      %v1668 = vadd.f32 0.0, %v1667
      %v1669 = vpop.f32.mrf.mxu0
      %v1670 = vpop.f32.mrf.mxu0
      %v1671 = vadd.f32 0.0, %v1670
      %v1672 = vpop.f32.mrf.mxu0
      %1673 = vmatprep.mubr.bf16.mxu0 0
      %1674 = vmatmul.mubr.bf16.gmra.mxu0 %v1453
      %v1675 = vpop.f32.mrf.mxu0
      %v1676 = vadd.f32 0.0, %v1675
      %v1677 = vpop.f32.mrf.mxu0
      %v1678 = vpop.f32.mrf.mxu0
      %v1679 = vadd.f32 0.0, %v1678
      %v1680 = vpop.f32.mrf.mxu0
      %1681 = vmatprep.mubr.bf16.mxu0 0
      %1682 = vmatmul.mubr.bf16.gmra.mxu0 %v1454
      %v1683 = vpop.f32.mrf.mxu0
      %v1684 = vadd.f32 0.0, %v1683
      %v1685 = vpop.f32.mrf.mxu0
      %v1686 = vpop.f32.mrf.mxu0
      %v1687 = vadd.f32 0.0, %v1686
      %v1688 = vpop.f32.mrf.mxu0
      %1689 = vmatprep.mubr.bf16.mxu0 0
      %1690 = vmatmul.mubr.bf16.gmra.mxu0 %v1455
      %v1691 = vpop.f32.mrf.mxu0
      %v1692 = vadd.f32 0.0, %v1691
      %v1693 = vpop.f32.mrf.mxu0
      %v1694 = vpop.f32.mrf.mxu0
      %v1695 = vadd.f32 0.0, %v1694
      %v1696 = vpop.f32.mrf.mxu0
      %1697 = vdwg.mxu0
      %v1698 = vadd.f32 %v1260, %v1556
      %v1699 = vadd.f32 %v1263, %v1559
      %v1700 = vadd.f32 %v1268, %v1564
      %v1701 = vadd.f32 %v1271, %v1567
      %v1702 = vadd.f32 %v1276, %v1572
      %v1703 = vadd.f32 %v1279, %v1575
      %v1704 = vadd.f32 %v1284, %v1580
      %v1705 = vadd.f32 %v1287, %v1583
      %v1706 = vadd.f32 %v1292, %v1588
      %v1707 = vadd.f32 %v1295, %v1591
      %v1708 = vadd.f32 %v1300, %v1596
      %v1709 = vadd.f32 %v1303, %v1599
      %v1710 = vadd.f32 %v1308, %v1604
      %v1711 = vadd.f32 %v1311, %v1607
      %v1712 = vadd.f32 %v1316, %v1612
      %v1713 = vadd.f32 %v1319, %v1615
      %v1714 = vadd.f32 %v1324, %v1620
      %v1715 = vadd.f32 %v1327, %v1623
      %v1716 = vadd.f32 %v1332, %v1628
      %v1717 = vadd.f32 %v1335, %v1631
      %v1718 = vadd.f32 %v1340, %v1636
      %v1719 = vadd.f32 %v1343, %v1639
      %v1720 = vadd.f32 %v1348, %v1644
      %v1721 = vadd.f32 %v1351, %v1647
      %v1722 = vadd.f32 %v1356, %v1652
      %v1723 = vadd.f32 %v1359, %v1655
      %v1724 = vadd.f32 %v1364, %v1660
      %v1725 = vadd.f32 %v1367, %v1663
      %v1726 = vadd.f32 %v1372, %v1668
      %v1727 = vadd.f32 %v1375, %v1671
      %v1728 = vadd.f32 %v1380, %v1676
      %v1729 = vadd.f32 %v1383, %v1679
      %v1730 = vadd.f32 %v1388, %v1684
      %v1731 = vadd.f32 %v1391, %v1687
      %v1732 = vadd.f32 %v1396, %v1692
      %v1733 = vadd.f32 %v1399, %v1695
      %v1734 = vld [vmem:[#allocation2 + $0x12] sm:$0xff]
      %v1735 = vld [vmem:[#allocation2 + $0x1a] sm:$0xff]
      %v1736 = vld [vmem:[#allocation2 + $0x22] sm:$0xff]
      %v1737 = vld [vmem:[#allocation2 + $0x2a] sm:$0xff]
      %v1738 = vld [vmem:[#allocation2 + $0x32] sm:$0xff]
      %v1739 = vld [vmem:[#allocation2 + $0x3a] sm:$0xff]
      %v1740 = vld [vmem:[#allocation2 + $0x42] sm:$0xff]
      %v1741 = vld [vmem:[#allocation2 + $0x4a] sm:$0xff]
      %v1742 = vld [vmem:[#allocation2 + $0x52] sm:$0xff]
      %v1743 = vld [vmem:[#allocation2 + $0x5a] sm:$0xff]
      %v1744 = vld [vmem:[#allocation2 + $0x62] sm:$0xff]
      %v1745 = vld [vmem:[#allocation2 + $0x6a] sm:$0xff]
      %v1746 = vld [vmem:[#allocation2 + $0x72] sm:$0xff]
      %v1747 = vld [vmem:[#allocation2 + $0x7a] sm:$0xff]
      %v1748 = vld [vmem:[#allocation2 + $0x82] sm:$0xff]
      %v1749 = vld [vmem:[#allocation2 + $0x8a] sm:$0xff]
      %v1750 = vld [vmem:[#allocation2 + $0x92] sm:$0xff]
      %v1751 = vld [vmem:[#allocation2 + $0x9a] sm:$0xff]
      %v1752 = vld [vmem:[#allocation2 + $0xa2] sm:$0xff]
      %v1753 = vld [vmem:[#allocation2 + $0xaa] sm:$0xff]
      %v1754 = vld [vmem:[#allocation2 + $0xb2] sm:$0xff]
      %v1755 = vld [vmem:[#allocation2 + $0xba] sm:$0xff]
      %v1756 = vld [vmem:[#allocation2 + $0xc2] sm:$0xff]
      %v1757 = vld [vmem:[#allocation2 + $0xca] sm:$0xff]
      %v1758 = vld [vmem:[#allocation2 + $0xd2] sm:$0xff]
      %v1759 = vld [vmem:[#allocation2 + $0xda] sm:$0xff]
      %v1760 = vld [vmem:[#allocation2 + $0xe2] sm:$0xff]
      %v1761 = vld [vmem:[#allocation2 + $0xea] sm:$0xff]
      %v1762 = vld [vmem:[#allocation2 + $0xf2] sm:$0xff]
      %v1763 = vld [vmem:[#allocation2 + $0xfa] sm:$0xff]
      %v1764 = vld [vmem:[#allocation2 + $0x102] sm:$0xff]
      %v1765 = vld [vmem:[#allocation2 + $0x10a] sm:$0xff]
      %v1766 = vld [vmem:[#allocation2 + $0x112] sm:$0xff]
      %v1767 = vld [vmem:[#allocation2 + $0x11a] sm:$0xff]
      %v1768 = vld [vmem:[#allocation2 + $0x122] sm:$0xff]
      %v1769 = vld [vmem:[#allocation2 + $0x12a] sm:$0xff]
      %v1770 = vpack.c.bf16 %v1735, %v1734
      %v1771 = vpack.c.bf16 %v1737, %v1736
      %v1772 = vpack.c.bf16 %v1739, %v1738
      %v1773 = vpack.c.bf16 %v1741, %v1740
      %v1774 = vpack.c.bf16 %v1743, %v1742
      %v1775 = vpack.c.bf16 %v1745, %v1744
      %v1776 = vpack.c.bf16 %v1747, %v1746
      %v1777 = vpack.c.bf16 %v1749, %v1748
      %v1778 = vpack.c.bf16 %v1751, %v1750
      %v1779 = vpack.c.bf16 %v1753, %v1752
      %v1780 = vpack.c.bf16 %v1755, %v1754
      %v1781 = vpack.c.bf16 %v1757, %v1756
      %v1782 = vpack.c.bf16 %v1759, %v1758
      %v1783 = vpack.c.bf16 %v1761, %v1760
      %v1784 = vpack.c.bf16 %v1763, %v1762
      %v1785 = vpack.c.bf16 %v1765, %v1764
      %v1786 = vpack.c.bf16 %v1767, %v1766
      %v1787 = vpack.c.bf16 %v1769, %v1768
      %s1788 = scalar_lea.vmem %s3, 192
      %v1789 = vld [vmem:[%s1788] sm:$0xf]
      %v1790 = vld [vmem:[%s1788 + $0x4] sm:$0xf]
      %v1791 = vld [vmem:[%s1788 + $0x8] sm:$0xf]
      %v1792 = vld [vmem:[%s1788 + $0xc] sm:$0xf]
      %v1793 = vld [vmem:[%s1788 + $0x10] sm:$0xf]
      %v1794 = vld [vmem:[%s1788 + $0x14] sm:$0xf]
      %v1795 = vld [vmem:[%s1788 + $0x18] sm:$0xf]
      %v1796 = vld [vmem:[%s1788 + $0x1c] sm:$0xf]
      %v1797 = vld [vmem:[%s1788 + $0x20] sm:$0xf]
      %v1798 = vld [vmem:[%s1788 + $0x24] sm:$0xf]
      %v1799 = vld [vmem:[%s1788 + $0x28] sm:$0xf]
      %v1800 = vld [vmem:[%s1788 + $0x2c] sm:$0xf]
      %v1801 = vld [vmem:[%s1788 + $0x30] sm:$0xf]
      %v1802 = vld [vmem:[%s1788 + $0x34] sm:$0xf]
      %v1803 = vld [vmem:[%s1788 + $0x38] sm:$0xf]
      %v1804 = vld [vmem:[%s1788 + $0x3c] sm:$0xf]
      %v1821 = vunpack.c.l.b16 %v1789
      %v1822 = vunpack.c.l.b16 %v1790
      %v1823 = vunpack.c.l.b16 %v1791
      %v1824 = vunpack.c.l.b16 %v1792
      %v1825 = vunpack.c.l.b16 %v1793
      %v1826 = vunpack.c.l.b16 %v1794
      %v1827 = vunpack.c.l.b16 %v1795
      %v1828 = vunpack.c.l.b16 %v1796
      %v1829 = vunpack.c.l.b16 %v1797
      %v1830 = vunpack.c.l.b16 %v1798
      %v1831 = vunpack.c.l.b16 %v1799
      %v1832 = vunpack.c.l.b16 %v1800
      %v1833 = vunpack.c.l.b16 %v1801
      %v1834 = vunpack.c.l.b16 %v1802
      %v1835 = vunpack.c.l.b16 %v1803
      %v1836 = vunpack.c.l.b16 %v1804
      %v1837 = vpack.c.b16 %v1822, %v1821
      %v1838 = vpack.c.b16 %v1824, %v1823
      %v1839 = vpack.c.b16 %v1826, %v1825
      %v1840 = vpack.c.b16 %v1828, %v1827
      %v1841 = vpack.c.b16 %v1830, %v1829
      %v1842 = vpack.c.b16 %v1832, %v1831
      %v1843 = vpack.c.b16 %v1834, %v1833
      %v1844 = vpack.c.b16 %v1836, %v1835
      %1853 = vmatprep.subr.bf16.mxu0 0
      %1854 = vmatpush1.bf16.msra.mxu0 %v1844
      %1855 = vmatprep.subr.bf16.mxu0 0
      %1856 = vmatpush1.bf16.msra.mxu0 %v1843
      %1857 = vmatprep.subr.bf16.mxu0 0
      %1858 = vmatpush1.bf16.msra.mxu0 %v1842
      %1859 = vmatprep.subr.bf16.mxu0 0
      %1860 = vmatpush1.bf16.msra.mxu0 %v1841
      %1861 = vmatprep.subr.bf16.mxu0 0
      %1862 = vmatpush1.bf16.msra.mxu0 %v1840
      %1863 = vmatprep.subr.bf16.mxu0 0
      %1864 = vmatpush1.bf16.msra.mxu0 %v1839
      %1865 = vmatprep.subr.bf16.mxu0 0
      %1866 = vmatpush1.bf16.msra.mxu0 %v1838
      %1867 = vmatprep.subr.bf16.mxu0 0
      %1868 = vmatpush1.bf16.msra.mxu0 %v1837
      %1869 = vmatprep.subr.bf16.mxu0 0
      %1870 = vmatpush2.bf16.msra.mxu0 0
      %1871 = vmatprep.subr.bf16.mxu0 0
      %1872 = vmatpush2.bf16.msra.mxu0 0
      %1873 = vmatprep.subr.bf16.mxu0 0
      %1874 = vmatpush2.bf16.msra.mxu0 0
      %1875 = vmatprep.subr.bf16.mxu0 0
      %1876 = vmatpush2.bf16.msra.mxu0 0
      %1877 = vmatprep.subr.bf16.mxu0 0
      %1878 = vmatpush2.bf16.msra.mxu0 0
      %1879 = vmatprep.subr.bf16.mxu0 0
      %1880 = vmatpush2.bf16.msra.mxu0 0
      %1881 = vmatprep.subr.bf16.mxu0 0
      %1882 = vmatpush2.bf16.msra.mxu0 0
      %1883 = vmatprep.subr.bf16.mxu0 0
      %1884 = vmatpush2.bf16.msra.mxu0 0
      %1885 = vmatprep.mubr.bf16.mxu0 0
      %1886 = vmatmul.mubr.bf16.gmra.mxu0 %v1770
      %v1887 = vpop.f32.mrf.mxu0
      %v1888 = vadd.f32 0.0, %v1887
      %v1889 = vpop.f32.mrf.mxu0
      %v1890 = vpop.f32.mrf.mxu0
      %v1891 = vadd.f32 0.0, %v1890
      %v1892 = vpop.f32.mrf.mxu0
      %1893 = vmatprep.mubr.bf16.mxu0 0
      %1894 = vmatmul.mubr.bf16.gmra.mxu0 %v1771
      %v1895 = vpop.f32.mrf.mxu0
      %v1896 = vadd.f32 0.0, %v1895
      %v1897 = vpop.f32.mrf.mxu0
      %v1898 = vpop.f32.mrf.mxu0
      %v1899 = vadd.f32 0.0, %v1898
      %v1900 = vpop.f32.mrf.mxu0
      %1901 = vmatprep.mubr.bf16.mxu0 0
      %1902 = vmatmul.mubr.bf16.gmra.mxu0 %v1772
      %v1903 = vpop.f32.mrf.mxu0
      %v1904 = vadd.f32 0.0, %v1903
      %v1905 = vpop.f32.mrf.mxu0
      %v1906 = vpop.f32.mrf.mxu0
      %v1907 = vadd.f32 0.0, %v1906
      %v1908 = vpop.f32.mrf.mxu0
      %1909 = vmatprep.mubr.bf16.mxu0 0
      %1910 = vmatmul.mubr.bf16.gmra.mxu0 %v1773
      %v1911 = vpop.f32.mrf.mxu0
      %v1912 = vadd.f32 0.0, %v1911
      %v1913 = vpop.f32.mrf.mxu0
      %v1914 = vpop.f32.mrf.mxu0
      %v1915 = vadd.f32 0.0, %v1914
      %v1916 = vpop.f32.mrf.mxu0
      %1917 = vmatprep.mubr.bf16.mxu0 0
      %1918 = vmatmul.mubr.bf16.gmra.mxu0 %v1774
      %v1919 = vpop.f32.mrf.mxu0
      %v1920 = vadd.f32 0.0, %v1919
      %v1921 = vpop.f32.mrf.mxu0
      %v1922 = vpop.f32.mrf.mxu0
      %v1923 = vadd.f32 0.0, %v1922
      %v1924 = vpop.f32.mrf.mxu0
      %1925 = vmatprep.mubr.bf16.mxu0 0
      %1926 = vmatmul.mubr.bf16.gmra.mxu0 %v1775
      %v1927 = vpop.f32.mrf.mxu0
      %v1928 = vadd.f32 0.0, %v1927
      %v1929 = vpop.f32.mrf.mxu0
      %v1930 = vpop.f32.mrf.mxu0
      %v1931 = vadd.f32 0.0, %v1930
      %v1932 = vpop.f32.mrf.mxu0
      %1933 = vmatprep.mubr.bf16.mxu0 0
      %1934 = vmatmul.mubr.bf16.gmra.mxu0 %v1776
      %v1935 = vpop.f32.mrf.mxu0
      %v1936 = vadd.f32 0.0, %v1935
      %v1937 = vpop.f32.mrf.mxu0
      %v1938 = vpop.f32.mrf.mxu0
      %v1939 = vadd.f32 0.0, %v1938
      %v1940 = vpop.f32.mrf.mxu0
      %1941 = vmatprep.mubr.bf16.mxu0 0
      %1942 = vmatmul.mubr.bf16.gmra.mxu0 %v1777
      %v1943 = vpop.f32.mrf.mxu0
      %v1944 = vadd.f32 0.0, %v1943
      %v1945 = vpop.f32.mrf.mxu0
      %v1946 = vpop.f32.mrf.mxu0
      %v1947 = vadd.f32 0.0, %v1946
      %v1948 = vpop.f32.mrf.mxu0
      %1949 = vmatprep.mubr.bf16.mxu0 0
      %1950 = vmatmul.mubr.bf16.gmra.mxu0 %v1778
      %v1951 = vpop.f32.mrf.mxu0
      %v1952 = vadd.f32 0.0, %v1951
      %v1953 = vpop.f32.mrf.mxu0
      %v1954 = vpop.f32.mrf.mxu0
      %v1955 = vadd.f32 0.0, %v1954
      %v1956 = vpop.f32.mrf.mxu0
      %1957 = vmatprep.mubr.bf16.mxu0 0
      %1958 = vmatmul.mubr.bf16.gmra.mxu0 %v1779
      %v1959 = vpop.f32.mrf.mxu0
      %v1960 = vadd.f32 0.0, %v1959
      %v1961 = vpop.f32.mrf.mxu0
      %v1962 = vpop.f32.mrf.mxu0
      %v1963 = vadd.f32 0.0, %v1962
      %v1964 = vpop.f32.mrf.mxu0
      %1965 = vmatprep.mubr.bf16.mxu0 0
      %1966 = vmatmul.mubr.bf16.gmra.mxu0 %v1780
      %v1967 = vpop.f32.mrf.mxu0
      %v1968 = vadd.f32 0.0, %v1967
      %v1969 = vpop.f32.mrf.mxu0
      %v1970 = vpop.f32.mrf.mxu0
      %v1971 = vadd.f32 0.0, %v1970
      %v1972 = vpop.f32.mrf.mxu0
      %1973 = vmatprep.mubr.bf16.mxu0 0
      %1974 = vmatmul.mubr.bf16.gmra.mxu0 %v1781
      %v1975 = vpop.f32.mrf.mxu0
      %v1976 = vadd.f32 0.0, %v1975
      %v1977 = vpop.f32.mrf.mxu0
      %v1978 = vpop.f32.mrf.mxu0
      %v1979 = vadd.f32 0.0, %v1978
      %v1980 = vpop.f32.mrf.mxu0
      %1981 = vmatprep.mubr.bf16.mxu0 0
      %1982 = vmatmul.mubr.bf16.gmra.mxu0 %v1782
      %v1983 = vpop.f32.mrf.mxu0
      %v1984 = vadd.f32 0.0, %v1983
      %v1985 = vpop.f32.mrf.mxu0
      %v1986 = vpop.f32.mrf.mxu0
      %v1987 = vadd.f32 0.0, %v1986
      %v1988 = vpop.f32.mrf.mxu0
      %1989 = vmatprep.mubr.bf16.mxu0 0
      %1990 = vmatmul.mubr.bf16.gmra.mxu0 %v1783
      %v1991 = vpop.f32.mrf.mxu0
      %v1992 = vadd.f32 0.0, %v1991
      %v1993 = vpop.f32.mrf.mxu0
      %v1994 = vpop.f32.mrf.mxu0
      %v1995 = vadd.f32 0.0, %v1994
      %v1996 = vpop.f32.mrf.mxu0
      %1997 = vmatprep.mubr.bf16.mxu0 0
      %1998 = vmatmul.mubr.bf16.gmra.mxu0 %v1784
      %v1999 = vpop.f32.mrf.mxu0
      %v2000 = vadd.f32 0.0, %v1999
      %v2001 = vpop.f32.mrf.mxu0
      %v2002 = vpop.f32.mrf.mxu0
      %v2003 = vadd.f32 0.0, %v2002
      %v2004 = vpop.f32.mrf.mxu0
      %2005 = vmatprep.mubr.bf16.mxu0 0
      %2006 = vmatmul.mubr.bf16.gmra.mxu0 %v1785
      %v2007 = vpop.f32.mrf.mxu0
      %v2008 = vadd.f32 0.0, %v2007
      %v2009 = vpop.f32.mrf.mxu0
      %v2010 = vpop.f32.mrf.mxu0
      %v2011 = vadd.f32 0.0, %v2010
      %v2012 = vpop.f32.mrf.mxu0
      %2013 = vmatprep.mubr.bf16.mxu0 0
      %2014 = vmatmul.mubr.bf16.gmra.mxu0 %v1786
      %v2015 = vpop.f32.mrf.mxu0
      %v2016 = vadd.f32 0.0, %v2015
      %v2017 = vpop.f32.mrf.mxu0
      %v2018 = vpop.f32.mrf.mxu0
      %v2019 = vadd.f32 0.0, %v2018
      %v2020 = vpop.f32.mrf.mxu0
      %2021 = vmatprep.mubr.bf16.mxu0 0
      %2022 = vmatmul.mubr.bf16.gmra.mxu0 %v1787
      %v2023 = vpop.f32.mrf.mxu0
      %v2024 = vadd.f32 0.0, %v2023
      %v2025 = vpop.f32.mrf.mxu0
      %v2026 = vpop.f32.mrf.mxu0
      %v2027 = vadd.f32 0.0, %v2026
      %v2028 = vpop.f32.mrf.mxu0
      %2029 = vdwg.mxu0
      %v2030 = vadd.f32 %v1698, %v1888
      %v2031 = vadd.f32 %v1699, %v1891
      %v2032 = vadd.f32 %v1700, %v1896
      %v2033 = vadd.f32 %v1701, %v1899
      %v2034 = vadd.f32 %v1702, %v1904
      %v2035 = vadd.f32 %v1703, %v1907
      %v2036 = vadd.f32 %v1704, %v1912
      %v2037 = vadd.f32 %v1705, %v1915
      %v2038 = vadd.f32 %v1706, %v1920
      %v2039 = vadd.f32 %v1707, %v1923
      %v2040 = vadd.f32 %v1708, %v1928
      %v2041 = vadd.f32 %v1709, %v1931
      %v2042 = vadd.f32 %v1710, %v1936
      %v2043 = vadd.f32 %v1711, %v1939
      %v2044 = vadd.f32 %v1712, %v1944
      %v2045 = vadd.f32 %v1713, %v1947
      %v2046 = vadd.f32 %v1714, %v1952
      %v2047 = vadd.f32 %v1715, %v1955
      %v2048 = vadd.f32 %v1716, %v1960
      %v2049 = vadd.f32 %v1717, %v1963
      %v2050 = vadd.f32 %v1718, %v1968
      %v2051 = vadd.f32 %v1719, %v1971
      %v2052 = vadd.f32 %v1720, %v1976
      %v2053 = vadd.f32 %v1721, %v1979
      %v2054 = vadd.f32 %v1722, %v1984
      %v2055 = vadd.f32 %v1723, %v1987
      %v2056 = vadd.f32 %v1724, %v1992
      %v2057 = vadd.f32 %v1725, %v1995
      %v2058 = vadd.f32 %v1726, %v2000
      %v2059 = vadd.f32 %v1727, %v2003
      %v2060 = vadd.f32 %v1728, %v2008
      %v2061 = vadd.f32 %v1729, %v2011
      %v2062 = vadd.f32 %v1730, %v2016
      %v2063 = vadd.f32 %v1731, %v2019
      %v2064 = vadd.f32 %v1732, %v2024
      %v2065 = vadd.f32 %v1733, %v2027
      %v2066 = vld [vmem:[#allocation2 + $0x13] sm:$0xff]
      %v2067 = vld [vmem:[#allocation2 + $0x1b] sm:$0xff]
      %v2068 = vld [vmem:[#allocation2 + $0x23] sm:$0xff]
      %v2069 = vld [vmem:[#allocation2 + $0x2b] sm:$0xff]
      %v2070 = vld [vmem:[#allocation2 + $0x33] sm:$0xff]
      %v2071 = vld [vmem:[#allocation2 + $0x3b] sm:$0xff]
      %v2072 = vld [vmem:[#allocation2 + $0x43] sm:$0xff]
      %v2073 = vld [vmem:[#allocation2 + $0x4b] sm:$0xff]
      %v2074 = vld [vmem:[#allocation2 + $0x53] sm:$0xff]
      %v2075 = vld [vmem:[#allocation2 + $0x5b] sm:$0xff]
      %v2076 = vld [vmem:[#allocation2 + $0x63] sm:$0xff]
      %v2077 = vld [vmem:[#allocation2 + $0x6b] sm:$0xff]
      %v2078 = vld [vmem:[#allocation2 + $0x73] sm:$0xff]
      %v2079 = vld [vmem:[#allocation2 + $0x7b] sm:$0xff]
      %v2080 = vld [vmem:[#allocation2 + $0x83] sm:$0xff]
      %v2081 = vld [vmem:[#allocation2 + $0x8b] sm:$0xff]
      %v2082 = vld [vmem:[#allocation2 + $0x93] sm:$0xff]
      %v2083 = vld [vmem:[#allocation2 + $0x9b] sm:$0xff]
      %v2084 = vld [vmem:[#allocation2 + $0xa3] sm:$0xff]
      %v2085 = vld [vmem:[#allocation2 + $0xab] sm:$0xff]
      %v2086 = vld [vmem:[#allocation2 + $0xb3] sm:$0xff]
      %v2087 = vld [vmem:[#allocation2 + $0xbb] sm:$0xff]
      %v2088 = vld [vmem:[#allocation2 + $0xc3] sm:$0xff]
      %v2089 = vld [vmem:[#allocation2 + $0xcb] sm:$0xff]
      %v2090 = vld [vmem:[#allocation2 + $0xd3] sm:$0xff]
      %v2091 = vld [vmem:[#allocation2 + $0xdb] sm:$0xff]
      %v2092 = vld [vmem:[#allocation2 + $0xe3] sm:$0xff]
      %v2093 = vld [vmem:[#allocation2 + $0xeb] sm:$0xff]
      %v2094 = vld [vmem:[#allocation2 + $0xf3] sm:$0xff]
      %v2095 = vld [vmem:[#allocation2 + $0xfb] sm:$0xff]
      %v2096 = vld [vmem:[#allocation2 + $0x103] sm:$0xff]
      %v2097 = vld [vmem:[#allocation2 + $0x10b] sm:$0xff]
      %v2098 = vld [vmem:[#allocation2 + $0x113] sm:$0xff]
      %v2099 = vld [vmem:[#allocation2 + $0x11b] sm:$0xff]
      %v2100 = vld [vmem:[#allocation2 + $0x123] sm:$0xff]
      %v2101 = vld [vmem:[#allocation2 + $0x12b] sm:$0xff]
      %v2102 = vpack.c.bf16 %v2067, %v2066
      %v2103 = vpack.c.bf16 %v2069, %v2068
      %v2104 = vpack.c.bf16 %v2071, %v2070
      %v2105 = vpack.c.bf16 %v2073, %v2072
      %v2106 = vpack.c.bf16 %v2075, %v2074
      %v2107 = vpack.c.bf16 %v2077, %v2076
      %v2108 = vpack.c.bf16 %v2079, %v2078
      %v2109 = vpack.c.bf16 %v2081, %v2080
      %v2110 = vpack.c.bf16 %v2083, %v2082
      %v2111 = vpack.c.bf16 %v2085, %v2084
      %v2112 = vpack.c.bf16 %v2087, %v2086
      %v2113 = vpack.c.bf16 %v2089, %v2088
      %v2114 = vpack.c.bf16 %v2091, %v2090
      %v2115 = vpack.c.bf16 %v2093, %v2092
      %v2116 = vpack.c.bf16 %v2095, %v2094
      %v2117 = vpack.c.bf16 %v2097, %v2096
      %v2118 = vpack.c.bf16 %v2099, %v2098
      %v2119 = vpack.c.bf16 %v2101, %v2100
      %s2120 = scalar_lea.vmem %s3, 256
      %v2121 = vld [vmem:[%s2120] sm:$0xf]
      %v2122 = vld [vmem:[%s2120 + $0x4] sm:$0xf]
      %v2123 = vld [vmem:[%s2120 + $0x8] sm:$0xf]
      %v2124 = vld [vmem:[%s2120 + $0xc] sm:$0xf]
      %v2125 = vld [vmem:[%s2120 + $0x10] sm:$0xf]
      %v2126 = vld [vmem:[%s2120 + $0x14] sm:$0xf]
      %v2127 = vld [vmem:[%s2120 + $0x18] sm:$0xf]
      %v2128 = vld [vmem:[%s2120 + $0x1c] sm:$0xf]
      %v2129 = vld [vmem:[%s2120 + $0x20] sm:$0xf]
      %v2130 = vld [vmem:[%s2120 + $0x24] sm:$0xf]
      %v2131 = vld [vmem:[%s2120 + $0x28] sm:$0xf]
      %v2132 = vld [vmem:[%s2120 + $0x2c] sm:$0xf]
      %v2133 = vld [vmem:[%s2120 + $0x30] sm:$0xf]
      %v2134 = vld [vmem:[%s2120 + $0x34] sm:$0xf]
      %v2135 = vld [vmem:[%s2120 + $0x38] sm:$0xf]
      %v2136 = vld [vmem:[%s2120 + $0x3c] sm:$0xf]
      %v2153 = vunpack.c.l.b16 %v2121
      %v2154 = vunpack.c.l.b16 %v2122
      %v2155 = vunpack.c.l.b16 %v2123
      %v2156 = vunpack.c.l.b16 %v2124
      %v2157 = vunpack.c.l.b16 %v2125
      %v2158 = vunpack.c.l.b16 %v2126
      %v2159 = vunpack.c.l.b16 %v2127
      %v2160 = vunpack.c.l.b16 %v2128
      %v2161 = vunpack.c.l.b16 %v2129
      %v2162 = vunpack.c.l.b16 %v2130
      %v2163 = vunpack.c.l.b16 %v2131
      %v2164 = vunpack.c.l.b16 %v2132
      %v2165 = vunpack.c.l.b16 %v2133
      %v2166 = vunpack.c.l.b16 %v2134
      %v2167 = vunpack.c.l.b16 %v2135
      %v2168 = vunpack.c.l.b16 %v2136
      %v2169 = vpack.c.b16 %v2154, %v2153
      %v2170 = vpack.c.b16 %v2156, %v2155
      %v2171 = vpack.c.b16 %v2158, %v2157
      %v2172 = vpack.c.b16 %v2160, %v2159
      %v2173 = vpack.c.b16 %v2162, %v2161
      %v2174 = vpack.c.b16 %v2164, %v2163
      %v2175 = vpack.c.b16 %v2166, %v2165
      %v2176 = vpack.c.b16 %v2168, %v2167
      %2185 = vmatprep.subr.bf16.mxu0 0
      %2186 = vmatpush1.bf16.msra.mxu0 %v2176
      %2187 = vmatprep.subr.bf16.mxu0 0
      %2188 = vmatpush1.bf16.msra.mxu0 %v2175
      %2189 = vmatprep.subr.bf16.mxu0 0
      %2190 = vmatpush1.bf16.msra.mxu0 %v2174
      %2191 = vmatprep.subr.bf16.mxu0 0
      %2192 = vmatpush1.bf16.msra.mxu0 %v2173
      %2193 = vmatprep.subr.bf16.mxu0 0
      %2194 = vmatpush1.bf16.msra.mxu0 %v2172
      %2195 = vmatprep.subr.bf16.mxu0 0
      %2196 = vmatpush1.bf16.msra.mxu0 %v2171
      %2197 = vmatprep.subr.bf16.mxu0 0
      %2198 = vmatpush1.bf16.msra.mxu0 %v2170
      %2199 = vmatprep.subr.bf16.mxu0 0
      %2200 = vmatpush1.bf16.msra.mxu0 %v2169
      %2201 = vmatprep.subr.bf16.mxu0 0
      %2202 = vmatpush2.bf16.msra.mxu0 0
      %2203 = vmatprep.subr.bf16.mxu0 0
      %2204 = vmatpush2.bf16.msra.mxu0 0
      %2205 = vmatprep.subr.bf16.mxu0 0
      %2206 = vmatpush2.bf16.msra.mxu0 0
      %2207 = vmatprep.subr.bf16.mxu0 0
      %2208 = vmatpush2.bf16.msra.mxu0 0
      %2209 = vmatprep.subr.bf16.mxu0 0
      %2210 = vmatpush2.bf16.msra.mxu0 0
      %2211 = vmatprep.subr.bf16.mxu0 0
      %2212 = vmatpush2.bf16.msra.mxu0 0
      %2213 = vmatprep.subr.bf16.mxu0 0
      %2214 = vmatpush2.bf16.msra.mxu0 0
      %2215 = vmatprep.subr.bf16.mxu0 0
      %2216 = vmatpush2.bf16.msra.mxu0 0
      %2217 = vmatprep.mubr.bf16.mxu0 0
      %2218 = vmatmul.mubr.bf16.gmra.mxu0 %v2102
      %v2219 = vpop.f32.mrf.mxu0
      %v2220 = vadd.f32 0.0, %v2219
      %v2221 = vpop.f32.mrf.mxu0
      %v2222 = vpop.f32.mrf.mxu0
      %v2223 = vadd.f32 0.0, %v2222
      %v2224 = vpop.f32.mrf.mxu0
      %2225 = vmatprep.mubr.bf16.mxu0 0
      %2226 = vmatmul.mubr.bf16.gmra.mxu0 %v2103
      %v2227 = vpop.f32.mrf.mxu0
      %v2228 = vadd.f32 0.0, %v2227
      %v2229 = vpop.f32.mrf.mxu0
      %v2230 = vpop.f32.mrf.mxu0
      %v2231 = vadd.f32 0.0, %v2230
      %v2232 = vpop.f32.mrf.mxu0
      %2233 = vmatprep.mubr.bf16.mxu0 0
      %2234 = vmatmul.mubr.bf16.gmra.mxu0 %v2104
      %v2235 = vpop.f32.mrf.mxu0
      %v2236 = vadd.f32 0.0, %v2235
      %v2237 = vpop.f32.mrf.mxu0
      %v2238 = vpop.f32.mrf.mxu0
      %v2239 = vadd.f32 0.0, %v2238
      %v2240 = vpop.f32.mrf.mxu0
      %2241 = vmatprep.mubr.bf16.mxu0 0
      %2242 = vmatmul.mubr.bf16.gmra.mxu0 %v2105
      %v2243 = vpop.f32.mrf.mxu0
      %v2244 = vadd.f32 0.0, %v2243
      %v2245 = vpop.f32.mrf.mxu0
      %v2246 = vpop.f32.mrf.mxu0
      %v2247 = vadd.f32 0.0, %v2246
      %v2248 = vpop.f32.mrf.mxu0
      %2249 = vmatprep.mubr.bf16.mxu0 0
      %2250 = vmatmul.mubr.bf16.gmra.mxu0 %v2106
      %v2251 = vpop.f32.mrf.mxu0
      %v2252 = vadd.f32 0.0, %v2251
      %v2253 = vpop.f32.mrf.mxu0
      %v2254 = vpop.f32.mrf.mxu0
      %v2255 = vadd.f32 0.0, %v2254
      %v2256 = vpop.f32.mrf.mxu0
      %2257 = vmatprep.mubr.bf16.mxu0 0
      %2258 = vmatmul.mubr.bf16.gmra.mxu0 %v2107
      %v2259 = vpop.f32.mrf.mxu0
      %v2260 = vadd.f32 0.0, %v2259
      %v2261 = vpop.f32.mrf.mxu0
      %v2262 = vpop.f32.mrf.mxu0
      %v2263 = vadd.f32 0.0, %v2262
      %v2264 = vpop.f32.mrf.mxu0
      %2265 = vmatprep.mubr.bf16.mxu0 0
      %2266 = vmatmul.mubr.bf16.gmra.mxu0 %v2108
      %v2267 = vpop.f32.mrf.mxu0
      %v2268 = vadd.f32 0.0, %v2267
      %v2269 = vpop.f32.mrf.mxu0
      %v2270 = vpop.f32.mrf.mxu0
      %v2271 = vadd.f32 0.0, %v2270
      %v2272 = vpop.f32.mrf.mxu0
      %2273 = vmatprep.mubr.bf16.mxu0 0
      %2274 = vmatmul.mubr.bf16.gmra.mxu0 %v2109
      %v2275 = vpop.f32.mrf.mxu0
      %v2276 = vadd.f32 0.0, %v2275
      %v2277 = vpop.f32.mrf.mxu0
      %v2278 = vpop.f32.mrf.mxu0
      %v2279 = vadd.f32 0.0, %v2278
      %v2280 = vpop.f32.mrf.mxu0
      %2281 = vmatprep.mubr.bf16.mxu0 0
      %2282 = vmatmul.mubr.bf16.gmra.mxu0 %v2110
      %v2283 = vpop.f32.mrf.mxu0
      %v2284 = vadd.f32 0.0, %v2283
      %v2285 = vpop.f32.mrf.mxu0
      %v2286 = vpop.f32.mrf.mxu0
      %v2287 = vadd.f32 0.0, %v2286
      %v2288 = vpop.f32.mrf.mxu0
      %2289 = vmatprep.mubr.bf16.mxu0 0
      %2290 = vmatmul.mubr.bf16.gmra.mxu0 %v2111
      %v2291 = vpop.f32.mrf.mxu0
      %v2292 = vadd.f32 0.0, %v2291
      %v2293 = vpop.f32.mrf.mxu0
      %v2294 = vpop.f32.mrf.mxu0
      %v2295 = vadd.f32 0.0, %v2294
      %v2296 = vpop.f32.mrf.mxu0
      %2297 = vmatprep.mubr.bf16.mxu0 0
      %2298 = vmatmul.mubr.bf16.gmra.mxu0 %v2112
      %v2299 = vpop.f32.mrf.mxu0
      %v2300 = vadd.f32 0.0, %v2299
      %v2301 = vpop.f32.mrf.mxu0
      %v2302 = vpop.f32.mrf.mxu0
      %v2303 = vadd.f32 0.0, %v2302
      %v2304 = vpop.f32.mrf.mxu0
      %2305 = vmatprep.mubr.bf16.mxu0 0
      %2306 = vmatmul.mubr.bf16.gmra.mxu0 %v2113
      %v2307 = vpop.f32.mrf.mxu0
      %v2308 = vadd.f32 0.0, %v2307
      %v2309 = vpop.f32.mrf.mxu0
      %v2310 = vpop.f32.mrf.mxu0
      %v2311 = vadd.f32 0.0, %v2310
      %v2312 = vpop.f32.mrf.mxu0
      %2313 = vmatprep.mubr.bf16.mxu0 0
      %2314 = vmatmul.mubr.bf16.gmra.mxu0 %v2114
      %v2315 = vpop.f32.mrf.mxu0
      %v2316 = vadd.f32 0.0, %v2315
      %v2317 = vpop.f32.mrf.mxu0
      %v2318 = vpop.f32.mrf.mxu0
      %v2319 = vadd.f32 0.0, %v2318
      %v2320 = vpop.f32.mrf.mxu0
      %2321 = vmatprep.mubr.bf16.mxu0 0
      %2322 = vmatmul.mubr.bf16.gmra.mxu0 %v2115
      %v2323 = vpop.f32.mrf.mxu0
      %v2324 = vadd.f32 0.0, %v2323
      %v2325 = vpop.f32.mrf.mxu0
      %v2326 = vpop.f32.mrf.mxu0
      %v2327 = vadd.f32 0.0, %v2326
      %v2328 = vpop.f32.mrf.mxu0
      %2329 = vmatprep.mubr.bf16.mxu0 0
      %2330 = vmatmul.mubr.bf16.gmra.mxu0 %v2116
      %v2331 = vpop.f32.mrf.mxu0
      %v2332 = vadd.f32 0.0, %v2331
      %v2333 = vpop.f32.mrf.mxu0
      %v2334 = vpop.f32.mrf.mxu0
      %v2335 = vadd.f32 0.0, %v2334
      %v2336 = vpop.f32.mrf.mxu0
      %2337 = vmatprep.mubr.bf16.mxu0 0
      %2338 = vmatmul.mubr.bf16.gmra.mxu0 %v2117
      %v2339 = vpop.f32.mrf.mxu0
      %v2340 = vadd.f32 0.0, %v2339
      %v2341 = vpop.f32.mrf.mxu0
      %v2342 = vpop.f32.mrf.mxu0
      %v2343 = vadd.f32 0.0, %v2342
      %v2344 = vpop.f32.mrf.mxu0
      %2345 = vmatprep.mubr.bf16.mxu0 0
      %2346 = vmatmul.mubr.bf16.gmra.mxu0 %v2118
      %v2347 = vpop.f32.mrf.mxu0
      %v2348 = vadd.f32 0.0, %v2347
      %v2349 = vpop.f32.mrf.mxu0
      %v2350 = vpop.f32.mrf.mxu0
      %v2351 = vadd.f32 0.0, %v2350
      %v2352 = vpop.f32.mrf.mxu0
      %2353 = vmatprep.mubr.bf16.mxu0 0
      %2354 = vmatmul.mubr.bf16.gmra.mxu0 %v2119
      %v2355 = vpop.f32.mrf.mxu0
      %v2356 = vadd.f32 0.0, %v2355
      %v2357 = vpop.f32.mrf.mxu0
      %v2358 = vpop.f32.mrf.mxu0
      %v2359 = vadd.f32 0.0, %v2358
      %v2360 = vpop.f32.mrf.mxu0
      %2361 = vdwg.mxu0
      %v2362 = vadd.f32 %v2030, %v2220
      %v2363 = vadd.f32 %v2031, %v2223
      %v2364 = vadd.f32 %v2032, %v2228
      %v2365 = vadd.f32 %v2033, %v2231
      %v2366 = vadd.f32 %v2034, %v2236
      %v2367 = vadd.f32 %v2035, %v2239
      %v2368 = vadd.f32 %v2036, %v2244
      %v2369 = vadd.f32 %v2037, %v2247
      %v2370 = vadd.f32 %v2038, %v2252
      %v2371 = vadd.f32 %v2039, %v2255
      %v2372 = vadd.f32 %v2040, %v2260
      %v2373 = vadd.f32 %v2041, %v2263
      %v2374 = vadd.f32 %v2042, %v2268
      %v2375 = vadd.f32 %v2043, %v2271
      %v2376 = vadd.f32 %v2044, %v2276
      %v2377 = vadd.f32 %v2045, %v2279
      %v2378 = vadd.f32 %v2046, %v2284
      %v2379 = vadd.f32 %v2047, %v2287
      %v2380 = vadd.f32 %v2048, %v2292
      %v2381 = vadd.f32 %v2049, %v2295
      %v2382 = vadd.f32 %v2050, %v2300
      %v2383 = vadd.f32 %v2051, %v2303
      %v2384 = vadd.f32 %v2052, %v2308
      %v2385 = vadd.f32 %v2053, %v2311
      %v2386 = vadd.f32 %v2054, %v2316
      %v2387 = vadd.f32 %v2055, %v2319
      %v2388 = vadd.f32 %v2056, %v2324
      %v2389 = vadd.f32 %v2057, %v2327
      %v2390 = vadd.f32 %v2058, %v2332
      %v2391 = vadd.f32 %v2059, %v2335
      %v2392 = vadd.f32 %v2060, %v2340
      %v2393 = vadd.f32 %v2061, %v2343
      %v2394 = vadd.f32 %v2062, %v2348
      %v2395 = vadd.f32 %v2063, %v2351
      %v2396 = vadd.f32 %v2064, %v2356
      %v2397 = vadd.f32 %v2065, %v2359
      %v2398 = vld [vmem:[#allocation2 + $0x14] sm:$0xff]
      %v2399 = vld [vmem:[#allocation2 + $0x1c] sm:$0xff]
      %v2400 = vld [vmem:[#allocation2 + $0x24] sm:$0xff]
      %v2401 = vld [vmem:[#allocation2 + $0x2c] sm:$0xff]
      %v2402 = vld [vmem:[#allocation2 + $0x34] sm:$0xff]
      %v2403 = vld [vmem:[#allocation2 + $0x3c] sm:$0xff]
      %v2404 = vld [vmem:[#allocation2 + $0x44] sm:$0xff]
      %v2405 = vld [vmem:[#allocation2 + $0x4c] sm:$0xff]
      %v2406 = vld [vmem:[#allocation2 + $0x54] sm:$0xff]
      %v2407 = vld [vmem:[#allocation2 + $0x5c] sm:$0xff]
      %v2408 = vld [vmem:[#allocation2 + $0x64] sm:$0xff]
      %v2409 = vld [vmem:[#allocation2 + $0x6c] sm:$0xff]
      %v2410 = vld [vmem:[#allocation2 + $0x74] sm:$0xff]
      %v2411 = vld [vmem:[#allocation2 + $0x7c] sm:$0xff]
      %v2412 = vld [vmem:[#allocation2 + $0x84] sm:$0xff]
      %v2413 = vld [vmem:[#allocation2 + $0x8c] sm:$0xff]
      %v2414 = vld [vmem:[#allocation2 + $0x94] sm:$0xff]
      %v2415 = vld [vmem:[#allocation2 + $0x9c] sm:$0xff]
      %v2416 = vld [vmem:[#allocation2 + $0xa4] sm:$0xff]
      %v2417 = vld [vmem:[#allocation2 + $0xac] sm:$0xff]
      %v2418 = vld [vmem:[#allocation2 + $0xb4] sm:$0xff]
      %v2419 = vld [vmem:[#allocation2 + $0xbc] sm:$0xff]
      %v2420 = vld [vmem:[#allocation2 + $0xc4] sm:$0xff]
      %v2421 = vld [vmem:[#allocation2 + $0xcc] sm:$0xff]
      %v2422 = vld [vmem:[#allocation2 + $0xd4] sm:$0xff]
      %v2423 = vld [vmem:[#allocation2 + $0xdc] sm:$0xff]
      %v2424 = vld [vmem:[#allocation2 + $0xe4] sm:$0xff]
      %v2425 = vld [vmem:[#allocation2 + $0xec] sm:$0xff]
      %v2426 = vld [vmem:[#allocation2 + $0xf4] sm:$0xff]
      %v2427 = vld [vmem:[#allocation2 + $0xfc] sm:$0xff]
      %v2428 = vld [vmem:[#allocation2 + $0x104] sm:$0xff]
      %v2429 = vld [vmem:[#allocation2 + $0x10c] sm:$0xff]
      %v2430 = vld [vmem:[#allocation2 + $0x114] sm:$0xff]
      %v2431 = vld [vmem:[#allocation2 + $0x11c] sm:$0xff]
      %v2432 = vld [vmem:[#allocation2 + $0x124] sm:$0xff]
      %v2433 = vld [vmem:[#allocation2 + $0x12c] sm:$0xff]
      %v2434 = vpack.c.bf16 %v2399, %v2398
      %v2435 = vpack.c.bf16 %v2401, %v2400
      %v2436 = vpack.c.bf16 %v2403, %v2402
      %v2437 = vpack.c.bf16 %v2405, %v2404
      %v2438 = vpack.c.bf16 %v2407, %v2406
      %v2439 = vpack.c.bf16 %v2409, %v2408
      %v2440 = vpack.c.bf16 %v2411, %v2410
      %v2441 = vpack.c.bf16 %v2413, %v2412
      %v2442 = vpack.c.bf16 %v2415, %v2414
      %v2443 = vpack.c.bf16 %v2417, %v2416
      %v2444 = vpack.c.bf16 %v2419, %v2418
      %v2445 = vpack.c.bf16 %v2421, %v2420
      %v2446 = vpack.c.bf16 %v2423, %v2422
      %v2447 = vpack.c.bf16 %v2425, %v2424
      %v2448 = vpack.c.bf16 %v2427, %v2426
      %v2449 = vpack.c.bf16 %v2429, %v2428
      %v2450 = vpack.c.bf16 %v2431, %v2430
      %v2451 = vpack.c.bf16 %v2433, %v2432
      %s2452 = scalar_lea.vmem %s3, 320
      %v2453 = vld [vmem:[%s2452] sm:$0xf]
      %v2454 = vld [vmem:[%s2452 + $0x4] sm:$0xf]
      %v2455 = vld [vmem:[%s2452 + $0x8] sm:$0xf]
      %v2456 = vld [vmem:[%s2452 + $0xc] sm:$0xf]
      %v2457 = vld [vmem:[%s2452 + $0x10] sm:$0xf]
      %v2458 = vld [vmem:[%s2452 + $0x14] sm:$0xf]
      %v2459 = vld [vmem:[%s2452 + $0x18] sm:$0xf]
      %v2460 = vld [vmem:[%s2452 + $0x1c] sm:$0xf]
      %v2461 = vld [vmem:[%s2452 + $0x20] sm:$0xf]
      %v2462 = vld [vmem:[%s2452 + $0x24] sm:$0xf]
      %v2463 = vld [vmem:[%s2452 + $0x28] sm:$0xf]
      %v2464 = vld [vmem:[%s2452 + $0x2c] sm:$0xf]
      %v2465 = vld [vmem:[%s2452 + $0x30] sm:$0xf]
      %v2466 = vld [vmem:[%s2452 + $0x34] sm:$0xf]
      %v2467 = vld [vmem:[%s2452 + $0x38] sm:$0xf]
      %v2468 = vld [vmem:[%s2452 + $0x3c] sm:$0xf]
      %v2485 = vunpack.c.l.b16 %v2453
      %v2486 = vunpack.c.l.b16 %v2454
      %v2487 = vunpack.c.l.b16 %v2455
      %v2488 = vunpack.c.l.b16 %v2456
      %v2489 = vunpack.c.l.b16 %v2457
      %v2490 = vunpack.c.l.b16 %v2458
      %v2491 = vunpack.c.l.b16 %v2459
      %v2492 = vunpack.c.l.b16 %v2460
      %v2493 = vunpack.c.l.b16 %v2461
      %v2494 = vunpack.c.l.b16 %v2462
      %v2495 = vunpack.c.l.b16 %v2463
      %v2496 = vunpack.c.l.b16 %v2464
      %v2497 = vunpack.c.l.b16 %v2465
      %v2498 = vunpack.c.l.b16 %v2466
      %v2499 = vunpack.c.l.b16 %v2467
      %v2500 = vunpack.c.l.b16 %v2468
      %v2501 = vpack.c.b16 %v2486, %v2485
      %v2502 = vpack.c.b16 %v2488, %v2487
      %v2503 = vpack.c.b16 %v2490, %v2489
      %v2504 = vpack.c.b16 %v2492, %v2491
      %v2505 = vpack.c.b16 %v2494, %v2493
      %v2506 = vpack.c.b16 %v2496, %v2495
      %v2507 = vpack.c.b16 %v2498, %v2497
      %v2508 = vpack.c.b16 %v2500, %v2499
      %2517 = vmatprep.subr.bf16.mxu0 0
      %2518 = vmatpush1.bf16.msra.mxu0 %v2508
      %2519 = vmatprep.subr.bf16.mxu0 0
      %2520 = vmatpush1.bf16.msra.mxu0 %v2507
      %2521 = vmatprep.subr.bf16.mxu0 0
      %2522 = vmatpush1.bf16.msra.mxu0 %v2506
      %2523 = vmatprep.subr.bf16.mxu0 0
      %2524 = vmatpush1.bf16.msra.mxu0 %v2505
      %2525 = vmatprep.subr.bf16.mxu0 0
      %2526 = vmatpush1.bf16.msra.mxu0 %v2504
      %2527 = vmatprep.subr.bf16.mxu0 0
      %2528 = vmatpush1.bf16.msra.mxu0 %v2503
      %2529 = vmatprep.subr.bf16.mxu0 0
      %2530 = vmatpush1.bf16.msra.mxu0 %v2502
      %2531 = vmatprep.subr.bf16.mxu0 0
      %2532 = vmatpush1.bf16.msra.mxu0 %v2501
      %2533 = vmatprep.subr.bf16.mxu0 0
      %2534 = vmatpush2.bf16.msra.mxu0 0
      %2535 = vmatprep.subr.bf16.mxu0 0
      %2536 = vmatpush2.bf16.msra.mxu0 0
      %2537 = vmatprep.subr.bf16.mxu0 0
      %2538 = vmatpush2.bf16.msra.mxu0 0
      %2539 = vmatprep.subr.bf16.mxu0 0
      %2540 = vmatpush2.bf16.msra.mxu0 0
      %2541 = vmatprep.subr.bf16.mxu0 0
      %2542 = vmatpush2.bf16.msra.mxu0 0
      %2543 = vmatprep.subr.bf16.mxu0 0
      %2544 = vmatpush2.bf16.msra.mxu0 0
      %2545 = vmatprep.subr.bf16.mxu0 0
      %2546 = vmatpush2.bf16.msra.mxu0 0
      %2547 = vmatprep.subr.bf16.mxu0 0
      %2548 = vmatpush2.bf16.msra.mxu0 0
      %2549 = vmatprep.mubr.bf16.mxu0 0
      %2550 = vmatmul.mubr.bf16.gmra.mxu0 %v2434
      %v2551 = vpop.f32.mrf.mxu0
      %v2552 = vadd.f32 0.0, %v2551
      %v2553 = vpop.f32.mrf.mxu0
      %v2554 = vpop.f32.mrf.mxu0
      %v2555 = vadd.f32 0.0, %v2554
      %v2556 = vpop.f32.mrf.mxu0
      %2557 = vmatprep.mubr.bf16.mxu0 0
      %2558 = vmatmul.mubr.bf16.gmra.mxu0 %v2435
      %v2559 = vpop.f32.mrf.mxu0
      %v2560 = vadd.f32 0.0, %v2559
      %v2561 = vpop.f32.mrf.mxu0
      %v2562 = vpop.f32.mrf.mxu0
      %v2563 = vadd.f32 0.0, %v2562
      %v2564 = vpop.f32.mrf.mxu0
      %2565 = vmatprep.mubr.bf16.mxu0 0
      %2566 = vmatmul.mubr.bf16.gmra.mxu0 %v2436
      %v2567 = vpop.f32.mrf.mxu0
      %v2568 = vadd.f32 0.0, %v2567
      %v2569 = vpop.f32.mrf.mxu0
      %v2570 = vpop.f32.mrf.mxu0
      %v2571 = vadd.f32 0.0, %v2570
      %v2572 = vpop.f32.mrf.mxu0
      %2573 = vmatprep.mubr.bf16.mxu0 0
      %2574 = vmatmul.mubr.bf16.gmra.mxu0 %v2437
      %v2575 = vpop.f32.mrf.mxu0
      %v2576 = vadd.f32 0.0, %v2575
      %v2577 = vpop.f32.mrf.mxu0
      %v2578 = vpop.f32.mrf.mxu0
      %v2579 = vadd.f32 0.0, %v2578
      %v2580 = vpop.f32.mrf.mxu0
      %2581 = vmatprep.mubr.bf16.mxu0 0
      %2582 = vmatmul.mubr.bf16.gmra.mxu0 %v2438
      %v2583 = vpop.f32.mrf.mxu0
      %v2584 = vadd.f32 0.0, %v2583
      %v2585 = vpop.f32.mrf.mxu0
      %v2586 = vpop.f32.mrf.mxu0
      %v2587 = vadd.f32 0.0, %v2586
      %v2588 = vpop.f32.mrf.mxu0
      %2589 = vmatprep.mubr.bf16.mxu0 0
      %2590 = vmatmul.mubr.bf16.gmra.mxu0 %v2439
      %v2591 = vpop.f32.mrf.mxu0
      %v2592 = vadd.f32 0.0, %v2591
      %v2593 = vpop.f32.mrf.mxu0
      %v2594 = vpop.f32.mrf.mxu0
      %v2595 = vadd.f32 0.0, %v2594
      %v2596 = vpop.f32.mrf.mxu0
      %2597 = vmatprep.mubr.bf16.mxu0 0
      %2598 = vmatmul.mubr.bf16.gmra.mxu0 %v2440
      %v2599 = vpop.f32.mrf.mxu0
      %v2600 = vadd.f32 0.0, %v2599
      %v2601 = vpop.f32.mrf.mxu0
      %v2602 = vpop.f32.mrf.mxu0
      %v2603 = vadd.f32 0.0, %v2602
      %v2604 = vpop.f32.mrf.mxu0
      %2605 = vmatprep.mubr.bf16.mxu0 0
      %2606 = vmatmul.mubr.bf16.gmra.mxu0 %v2441
      %v2607 = vpop.f32.mrf.mxu0
      %v2608 = vadd.f32 0.0, %v2607
      %v2609 = vpop.f32.mrf.mxu0
      %v2610 = vpop.f32.mrf.mxu0
      %v2611 = vadd.f32 0.0, %v2610
      %v2612 = vpop.f32.mrf.mxu0
      %2613 = vmatprep.mubr.bf16.mxu0 0
      %2614 = vmatmul.mubr.bf16.gmra.mxu0 %v2442
      %v2615 = vpop.f32.mrf.mxu0
      %v2616 = vadd.f32 0.0, %v2615
      %v2617 = vpop.f32.mrf.mxu0
      %v2618 = vpop.f32.mrf.mxu0
      %v2619 = vadd.f32 0.0, %v2618
      %v2620 = vpop.f32.mrf.mxu0
      %2621 = vmatprep.mubr.bf16.mxu0 0
      %2622 = vmatmul.mubr.bf16.gmra.mxu0 %v2443
      %v2623 = vpop.f32.mrf.mxu0
      %v2624 = vadd.f32 0.0, %v2623
      %v2625 = vpop.f32.mrf.mxu0
      %v2626 = vpop.f32.mrf.mxu0
      %v2627 = vadd.f32 0.0, %v2626
      %v2628 = vpop.f32.mrf.mxu0
      %2629 = vmatprep.mubr.bf16.mxu0 0
      %2630 = vmatmul.mubr.bf16.gmra.mxu0 %v2444
      %v2631 = vpop.f32.mrf.mxu0
      %v2632 = vadd.f32 0.0, %v2631
      %v2633 = vpop.f32.mrf.mxu0
      %v2634 = vpop.f32.mrf.mxu0
      %v2635 = vadd.f32 0.0, %v2634
      %v2636 = vpop.f32.mrf.mxu0
      %2637 = vmatprep.mubr.bf16.mxu0 0
      %2638 = vmatmul.mubr.bf16.gmra.mxu0 %v2445
      %v2639 = vpop.f32.mrf.mxu0
      %v2640 = vadd.f32 0.0, %v2639
      %v2641 = vpop.f32.mrf.mxu0
      %v2642 = vpop.f32.mrf.mxu0
      %v2643 = vadd.f32 0.0, %v2642
      %v2644 = vpop.f32.mrf.mxu0
      %2645 = vmatprep.mubr.bf16.mxu0 0
      %2646 = vmatmul.mubr.bf16.gmra.mxu0 %v2446
      %v2647 = vpop.f32.mrf.mxu0
      %v2648 = vadd.f32 0.0, %v2647
      %v2649 = vpop.f32.mrf.mxu0
      %v2650 = vpop.f32.mrf.mxu0
      %v2651 = vadd.f32 0.0, %v2650
      %v2652 = vpop.f32.mrf.mxu0
      %2653 = vmatprep.mubr.bf16.mxu0 0
      %2654 = vmatmul.mubr.bf16.gmra.mxu0 %v2447
      %v2655 = vpop.f32.mrf.mxu0
      %v2656 = vadd.f32 0.0, %v2655
      %v2657 = vpop.f32.mrf.mxu0
      %v2658 = vpop.f32.mrf.mxu0
      %v2659 = vadd.f32 0.0, %v2658
      %v2660 = vpop.f32.mrf.mxu0
      %2661 = vmatprep.mubr.bf16.mxu0 0
      %2662 = vmatmul.mubr.bf16.gmra.mxu0 %v2448
      %v2663 = vpop.f32.mrf.mxu0
      %v2664 = vadd.f32 0.0, %v2663
      %v2665 = vpop.f32.mrf.mxu0
      %v2666 = vpop.f32.mrf.mxu0
      %v2667 = vadd.f32 0.0, %v2666
      %v2668 = vpop.f32.mrf.mxu0
      %2669 = vmatprep.mubr.bf16.mxu0 0
      %2670 = vmatmul.mubr.bf16.gmra.mxu0 %v2449
      %v2671 = vpop.f32.mrf.mxu0
      %v2672 = vadd.f32 0.0, %v2671
      %v2673 = vpop.f32.mrf.mxu0
      %v2674 = vpop.f32.mrf.mxu0
      %v2675 = vadd.f32 0.0, %v2674
      %v2676 = vpop.f32.mrf.mxu0
      %2677 = vmatprep.mubr.bf16.mxu0 0
      %2678 = vmatmul.mubr.bf16.gmra.mxu0 %v2450
      %v2679 = vpop.f32.mrf.mxu0
      %v2680 = vadd.f32 0.0, %v2679
      %v2681 = vpop.f32.mrf.mxu0
      %v2682 = vpop.f32.mrf.mxu0
      %v2683 = vadd.f32 0.0, %v2682
      %v2684 = vpop.f32.mrf.mxu0
      %2685 = vmatprep.mubr.bf16.mxu0 0
      %2686 = vmatmul.mubr.bf16.gmra.mxu0 %v2451
      %v2687 = vpop.f32.mrf.mxu0
      %v2688 = vadd.f32 0.0, %v2687
      %v2689 = vpop.f32.mrf.mxu0
      %v2690 = vpop.f32.mrf.mxu0
      %v2691 = vadd.f32 0.0, %v2690
      %v2692 = vpop.f32.mrf.mxu0
      %2693 = vdwg.mxu0
      %v2694 = vadd.f32 %v2362, %v2552
      %v2695 = vadd.f32 %v2363, %v2555
      %v2696 = vadd.f32 %v2364, %v2560
      %v2697 = vadd.f32 %v2365, %v2563
      %v2698 = vadd.f32 %v2366, %v2568
      %v2699 = vadd.f32 %v2367, %v2571
      %v2700 = vadd.f32 %v2368, %v2576
      %v2701 = vadd.f32 %v2369, %v2579
      %v2702 = vadd.f32 %v2370, %v2584
      %v2703 = vadd.f32 %v2371, %v2587
      %v2704 = vadd.f32 %v2372, %v2592
      %v2705 = vadd.f32 %v2373, %v2595
      %v2706 = vadd.f32 %v2374, %v2600
      %v2707 = vadd.f32 %v2375, %v2603
      %v2708 = vadd.f32 %v2376, %v2608
      %v2709 = vadd.f32 %v2377, %v2611
      %v2710 = vadd.f32 %v2378, %v2616
      %v2711 = vadd.f32 %v2379, %v2619
      %v2712 = vadd.f32 %v2380, %v2624
      %v2713 = vadd.f32 %v2381, %v2627
      %v2714 = vadd.f32 %v2382, %v2632
      %v2715 = vadd.f32 %v2383, %v2635
      %v2716 = vadd.f32 %v2384, %v2640
      %v2717 = vadd.f32 %v2385, %v2643
      %v2718 = vadd.f32 %v2386, %v2648
      %v2719 = vadd.f32 %v2387, %v2651
      %v2720 = vadd.f32 %v2388, %v2656
      %v2721 = vadd.f32 %v2389, %v2659
      %v2722 = vadd.f32 %v2390, %v2664
      %v2723 = vadd.f32 %v2391, %v2667
      %v2724 = vadd.f32 %v2392, %v2672
      %v2725 = vadd.f32 %v2393, %v2675
      %v2726 = vadd.f32 %v2394, %v2680
      %v2727 = vadd.f32 %v2395, %v2683
      %v2728 = vadd.f32 %v2396, %v2688
      %v2729 = vadd.f32 %v2397, %v2691
      %v2730 = vld [vmem:[#allocation2 + $0x24] sm:$0xff]
      %v2731 = vld [vmem:[#allocation2 + $0x2c] sm:$0xff]
      %v2732 = vld [vmem:[#allocation2 + $0x34] sm:$0xff]
      %v2733 = vld [vmem:[#allocation2 + $0x3c] sm:$0xff]
      %v2734 = vld [vmem:[#allocation2 + $0x44] sm:$0xff]
      %v2735 = vld [vmem:[#allocation2 + $0x4c] sm:$0xff]
      %v2736 = vld [vmem:[#allocation2 + $0x54] sm:$0xff]
      %v2737 = vld [vmem:[#allocation2 + $0x5c] sm:$0xff]
      %v2738 = vld [vmem:[#allocation2 + $0x64] sm:$0xff]
      %v2739 = vld [vmem:[#allocation2 + $0x6c] sm:$0xff]
      %v2740 = vld [vmem:[#allocation2 + $0x74] sm:$0xff]
      %v2741 = vld [vmem:[#allocation2 + $0x7c] sm:$0xff]
      %v2742 = vld [vmem:[#allocation2 + $0x84] sm:$0xff]
      %v2743 = vld [vmem:[#allocation2 + $0x8c] sm:$0xff]
      %v2744 = vld [vmem:[#allocation2 + $0x94] sm:$0xff]
      %v2745 = vld [vmem:[#allocation2 + $0x9c] sm:$0xff]
      %v2746 = vld [vmem:[#allocation2 + $0xa4] sm:$0xff]
      %v2747 = vld [vmem:[#allocation2 + $0xac] sm:$0xff]
      %v2748 = vld [vmem:[#allocation2 + $0xb4] sm:$0xff]
      %v2749 = vld [vmem:[#allocation2 + $0xbc] sm:$0xff]
      %v2750 = vld [vmem:[#allocation2 + $0xc4] sm:$0xff]
      %v2751 = vld [vmem:[#allocation2 + $0xcc] sm:$0xff]
      %v2752 = vld [vmem:[#allocation2 + $0xd4] sm:$0xff]
      %v2753 = vld [vmem:[#allocation2 + $0xdc] sm:$0xff]
      %v2754 = vld [vmem:[#allocation2 + $0xe4] sm:$0xff]
      %v2755 = vld [vmem:[#allocation2 + $0xec] sm:$0xff]
      %v2756 = vld [vmem:[#allocation2 + $0xf4] sm:$0xff]
      %v2757 = vld [vmem:[#allocation2 + $0xfc] sm:$0xff]
      %v2758 = vld [vmem:[#allocation2 + $0x104] sm:$0xff]
      %v2759 = vld [vmem:[#allocation2 + $0x10c] sm:$0xff]
      %v2760 = vld [vmem:[#allocation2 + $0x114] sm:$0xff]
      %v2761 = vld [vmem:[#allocation2 + $0x11c] sm:$0xff]
      %v2762 = vld [vmem:[#allocation2 + $0x124] sm:$0xff]
      %v2763 = vld [vmem:[#allocation2 + $0x12c] sm:$0xff]
      %v2764 = vld [vmem:[#allocation2 + $0x134] sm:$0xff]
      %v2765 = vld [vmem:[#allocation2 + $0x13c] sm:$0xff]
      %v2766 = vpack.c.bf16 %v2731, %v2730
      %v2767 = vpack.c.bf16 %v2733, %v2732
      %v2768 = vpack.c.bf16 %v2735, %v2734
      %v2769 = vpack.c.bf16 %v2737, %v2736
      %v2770 = vpack.c.bf16 %v2739, %v2738
      %v2771 = vpack.c.bf16 %v2741, %v2740
      %v2772 = vpack.c.bf16 %v2743, %v2742
      %v2773 = vpack.c.bf16 %v2745, %v2744
      %v2774 = vpack.c.bf16 %v2747, %v2746
      %v2775 = vpack.c.bf16 %v2749, %v2748
      %v2776 = vpack.c.bf16 %v2751, %v2750
      %v2777 = vpack.c.bf16 %v2753, %v2752
      %v2778 = vpack.c.bf16 %v2755, %v2754
      %v2779 = vpack.c.bf16 %v2757, %v2756
      %v2780 = vpack.c.bf16 %v2759, %v2758
      %v2781 = vpack.c.bf16 %v2761, %v2760
      %v2782 = vpack.c.bf16 %v2763, %v2762
      %v2783 = vpack.c.bf16 %v2765, %v2764
      %s2784 = scalar_lea.vmem %s3, 384
      %v2785 = vld [vmem:[%s2784] sm:$0xf]
      %v2786 = vld [vmem:[%s2784 + $0x4] sm:$0xf]
      %v2787 = vld [vmem:[%s2784 + $0x8] sm:$0xf]
      %v2788 = vld [vmem:[%s2784 + $0xc] sm:$0xf]
      %v2789 = vld [vmem:[%s2784 + $0x10] sm:$0xf]
      %v2790 = vld [vmem:[%s2784 + $0x14] sm:$0xf]
      %v2791 = vld [vmem:[%s2784 + $0x18] sm:$0xf]
      %v2792 = vld [vmem:[%s2784 + $0x1c] sm:$0xf]
      %v2793 = vld [vmem:[%s2784 + $0x20] sm:$0xf]
      %v2794 = vld [vmem:[%s2784 + $0x24] sm:$0xf]
      %v2795 = vld [vmem:[%s2784 + $0x28] sm:$0xf]
      %v2796 = vld [vmem:[%s2784 + $0x2c] sm:$0xf]
      %v2797 = vld [vmem:[%s2784 + $0x30] sm:$0xf]
      %v2798 = vld [vmem:[%s2784 + $0x34] sm:$0xf]
      %v2799 = vld [vmem:[%s2784 + $0x38] sm:$0xf]
      %v2800 = vld [vmem:[%s2784 + $0x3c] sm:$0xf]
      %v2817 = vunpack.c.l.b16 %v2785
      %v2818 = vunpack.c.l.b16 %v2786
      %v2819 = vunpack.c.l.b16 %v2787
      %v2820 = vunpack.c.l.b16 %v2788
      %v2821 = vunpack.c.l.b16 %v2789
      %v2822 = vunpack.c.l.b16 %v2790
      %v2823 = vunpack.c.l.b16 %v2791
      %v2824 = vunpack.c.l.b16 %v2792
      %v2825 = vunpack.c.l.b16 %v2793
      %v2826 = vunpack.c.l.b16 %v2794
      %v2827 = vunpack.c.l.b16 %v2795
      %v2828 = vunpack.c.l.b16 %v2796
      %v2829 = vunpack.c.l.b16 %v2797
      %v2830 = vunpack.c.l.b16 %v2798
      %v2831 = vunpack.c.l.b16 %v2799
      %v2832 = vunpack.c.l.b16 %v2800
      %v2833 = vpack.c.b16 %v2818, %v2817
      %v2834 = vpack.c.b16 %v2820, %v2819
      %v2835 = vpack.c.b16 %v2822, %v2821
      %v2836 = vpack.c.b16 %v2824, %v2823
      %v2837 = vpack.c.b16 %v2826, %v2825
      %v2838 = vpack.c.b16 %v2828, %v2827
      %v2839 = vpack.c.b16 %v2830, %v2829
      %v2840 = vpack.c.b16 %v2832, %v2831
      %2849 = vmatprep.subr.bf16.mxu0 0
      %2850 = vmatpush1.bf16.msra.mxu0 %v2840
      %2851 = vmatprep.subr.bf16.mxu0 0
      %2852 = vmatpush1.bf16.msra.mxu0 %v2839
      %2853 = vmatprep.subr.bf16.mxu0 0
      %2854 = vmatpush1.bf16.msra.mxu0 %v2838
      %2855 = vmatprep.subr.bf16.mxu0 0
      %2856 = vmatpush1.bf16.msra.mxu0 %v2837
      %2857 = vmatprep.subr.bf16.mxu0 0
      %2858 = vmatpush1.bf16.msra.mxu0 %v2836
      %2859 = vmatprep.subr.bf16.mxu0 0
      %2860 = vmatpush1.bf16.msra.mxu0 %v2835
      %2861 = vmatprep.subr.bf16.mxu0 0
      %2862 = vmatpush1.bf16.msra.mxu0 %v2834
      %2863 = vmatprep.subr.bf16.mxu0 0
      %2864 = vmatpush1.bf16.msra.mxu0 %v2833
      %2865 = vmatprep.subr.bf16.mxu0 0
      %2866 = vmatpush2.bf16.msra.mxu0 0
      %2867 = vmatprep.subr.bf16.mxu0 0
      %2868 = vmatpush2.bf16.msra.mxu0 0
      %2869 = vmatprep.subr.bf16.mxu0 0
      %2870 = vmatpush2.bf16.msra.mxu0 0
      %2871 = vmatprep.subr.bf16.mxu0 0
      %2872 = vmatpush2.bf16.msra.mxu0 0
      %2873 = vmatprep.subr.bf16.mxu0 0
      %2874 = vmatpush2.bf16.msra.mxu0 0
      %2875 = vmatprep.subr.bf16.mxu0 0
      %2876 = vmatpush2.bf16.msra.mxu0 0
      %2877 = vmatprep.subr.bf16.mxu0 0
      %2878 = vmatpush2.bf16.msra.mxu0 0
      %2879 = vmatprep.subr.bf16.mxu0 0
      %2880 = vmatpush2.bf16.msra.mxu0 0
      %2881 = vmatprep.mubr.bf16.mxu0 0
      %2882 = vmatmul.mubr.bf16.gmra.mxu0 %v2766
      %v2883 = vpop.f32.mrf.mxu0
      %v2884 = vadd.f32 0.0, %v2883
      %v2885 = vpop.f32.mrf.mxu0
      %v2886 = vpop.f32.mrf.mxu0
      %v2887 = vadd.f32 0.0, %v2886
      %v2888 = vpop.f32.mrf.mxu0
      %2889 = vmatprep.mubr.bf16.mxu0 0
      %2890 = vmatmul.mubr.bf16.gmra.mxu0 %v2767
      %v2891 = vpop.f32.mrf.mxu0
      %v2892 = vadd.f32 0.0, %v2891
      %v2893 = vpop.f32.mrf.mxu0
      %v2894 = vpop.f32.mrf.mxu0
      %v2895 = vadd.f32 0.0, %v2894
      %v2896 = vpop.f32.mrf.mxu0
      %2897 = vmatprep.mubr.bf16.mxu0 0
      %2898 = vmatmul.mubr.bf16.gmra.mxu0 %v2768
      %v2899 = vpop.f32.mrf.mxu0
      %v2900 = vadd.f32 0.0, %v2899
      %v2901 = vpop.f32.mrf.mxu0
      %v2902 = vpop.f32.mrf.mxu0
      %v2903 = vadd.f32 0.0, %v2902
      %v2904 = vpop.f32.mrf.mxu0
      %2905 = vmatprep.mubr.bf16.mxu0 0
      %2906 = vmatmul.mubr.bf16.gmra.mxu0 %v2769
      %v2907 = vpop.f32.mrf.mxu0
      %v2908 = vadd.f32 0.0, %v2907
      %v2909 = vpop.f32.mrf.mxu0
      %v2910 = vpop.f32.mrf.mxu0
      %v2911 = vadd.f32 0.0, %v2910
      %v2912 = vpop.f32.mrf.mxu0
      %2913 = vmatprep.mubr.bf16.mxu0 0
      %2914 = vmatmul.mubr.bf16.gmra.mxu0 %v2770
      %v2915 = vpop.f32.mrf.mxu0
      %v2916 = vadd.f32 0.0, %v2915
      %v2917 = vpop.f32.mrf.mxu0
      %v2918 = vpop.f32.mrf.mxu0
      %v2919 = vadd.f32 0.0, %v2918
      %v2920 = vpop.f32.mrf.mxu0
      %2921 = vmatprep.mubr.bf16.mxu0 0
      %2922 = vmatmul.mubr.bf16.gmra.mxu0 %v2771
      %v2923 = vpop.f32.mrf.mxu0
      %v2924 = vadd.f32 0.0, %v2923
      %v2925 = vpop.f32.mrf.mxu0
      %v2926 = vpop.f32.mrf.mxu0
      %v2927 = vadd.f32 0.0, %v2926
      %v2928 = vpop.f32.mrf.mxu0
      %2929 = vmatprep.mubr.bf16.mxu0 0
      %2930 = vmatmul.mubr.bf16.gmra.mxu0 %v2772
      %v2931 = vpop.f32.mrf.mxu0
      %v2932 = vadd.f32 0.0, %v2931
      %v2933 = vpop.f32.mrf.mxu0
      %v2934 = vpop.f32.mrf.mxu0
      %v2935 = vadd.f32 0.0, %v2934
      %v2936 = vpop.f32.mrf.mxu0
      %2937 = vmatprep.mubr.bf16.mxu0 0
      %2938 = vmatmul.mubr.bf16.gmra.mxu0 %v2773
      %v2939 = vpop.f32.mrf.mxu0
      %v2940 = vadd.f32 0.0, %v2939
      %v2941 = vpop.f32.mrf.mxu0
      %v2942 = vpop.f32.mrf.mxu0
      %v2943 = vadd.f32 0.0, %v2942
      %v2944 = vpop.f32.mrf.mxu0
      %2945 = vmatprep.mubr.bf16.mxu0 0
      %2946 = vmatmul.mubr.bf16.gmra.mxu0 %v2774
      %v2947 = vpop.f32.mrf.mxu0
      %v2948 = vadd.f32 0.0, %v2947
      %v2949 = vpop.f32.mrf.mxu0
      %v2950 = vpop.f32.mrf.mxu0
      %v2951 = vadd.f32 0.0, %v2950
      %v2952 = vpop.f32.mrf.mxu0
      %2953 = vmatprep.mubr.bf16.mxu0 0
      %2954 = vmatmul.mubr.bf16.gmra.mxu0 %v2775
      %v2955 = vpop.f32.mrf.mxu0
      %v2956 = vadd.f32 0.0, %v2955
      %v2957 = vpop.f32.mrf.mxu0
      %v2958 = vpop.f32.mrf.mxu0
      %v2959 = vadd.f32 0.0, %v2958
      %v2960 = vpop.f32.mrf.mxu0
      %2961 = vmatprep.mubr.bf16.mxu0 0
      %2962 = vmatmul.mubr.bf16.gmra.mxu0 %v2776
      %v2963 = vpop.f32.mrf.mxu0
      %v2964 = vadd.f32 0.0, %v2963
      %v2965 = vpop.f32.mrf.mxu0
      %v2966 = vpop.f32.mrf.mxu0
      %v2967 = vadd.f32 0.0, %v2966
      %v2968 = vpop.f32.mrf.mxu0
      %2969 = vmatprep.mubr.bf16.mxu0 0
      %2970 = vmatmul.mubr.bf16.gmra.mxu0 %v2777
      %v2971 = vpop.f32.mrf.mxu0
      %v2972 = vadd.f32 0.0, %v2971
      %v2973 = vpop.f32.mrf.mxu0
      %v2974 = vpop.f32.mrf.mxu0
      %v2975 = vadd.f32 0.0, %v2974
      %v2976 = vpop.f32.mrf.mxu0
      %2977 = vmatprep.mubr.bf16.mxu0 0
      %2978 = vmatmul.mubr.bf16.gmra.mxu0 %v2778
      %v2979 = vpop.f32.mrf.mxu0
      %v2980 = vadd.f32 0.0, %v2979
      %v2981 = vpop.f32.mrf.mxu0
      %v2982 = vpop.f32.mrf.mxu0
      %v2983 = vadd.f32 0.0, %v2982
      %v2984 = vpop.f32.mrf.mxu0
      %2985 = vmatprep.mubr.bf16.mxu0 0
      %2986 = vmatmul.mubr.bf16.gmra.mxu0 %v2779
      %v2987 = vpop.f32.mrf.mxu0
      %v2988 = vadd.f32 0.0, %v2987
      %v2989 = vpop.f32.mrf.mxu0
      %v2990 = vpop.f32.mrf.mxu0
      %v2991 = vadd.f32 0.0, %v2990
      %v2992 = vpop.f32.mrf.mxu0
      %2993 = vmatprep.mubr.bf16.mxu0 0
      %2994 = vmatmul.mubr.bf16.gmra.mxu0 %v2780
      %v2995 = vpop.f32.mrf.mxu0
      %v2996 = vadd.f32 0.0, %v2995
      %v2997 = vpop.f32.mrf.mxu0
      %v2998 = vpop.f32.mrf.mxu0
      %v2999 = vadd.f32 0.0, %v2998
      %v3000 = vpop.f32.mrf.mxu0
      %3001 = vmatprep.mubr.bf16.mxu0 0
      %3002 = vmatmul.mubr.bf16.gmra.mxu0 %v2781
      %v3003 = vpop.f32.mrf.mxu0
      %v3004 = vadd.f32 0.0, %v3003
      %v3005 = vpop.f32.mrf.mxu0
      %v3006 = vpop.f32.mrf.mxu0
      %v3007 = vadd.f32 0.0, %v3006
      %v3008 = vpop.f32.mrf.mxu0
      %3009 = vmatprep.mubr.bf16.mxu0 0
      %3010 = vmatmul.mubr.bf16.gmra.mxu0 %v2782
      %v3011 = vpop.f32.mrf.mxu0
      %v3012 = vadd.f32 0.0, %v3011
      %v3013 = vpop.f32.mrf.mxu0
      %v3014 = vpop.f32.mrf.mxu0
      %v3015 = vadd.f32 0.0, %v3014
      %v3016 = vpop.f32.mrf.mxu0
      %3017 = vmatprep.mubr.bf16.mxu0 0
      %3018 = vmatmul.mubr.bf16.gmra.mxu0 %v2783
      %v3019 = vpop.f32.mrf.mxu0
      %v3020 = vadd.f32 0.0, %v3019
      %v3021 = vpop.f32.mrf.mxu0
      %v3022 = vpop.f32.mrf.mxu0
      %v3023 = vadd.f32 0.0, %v3022
      %v3024 = vpop.f32.mrf.mxu0
      %3025 = vdwg.mxu0
      %v3026 = vadd.f32 %v2694, %v2884
      %v3027 = vadd.f32 %v2695, %v2887
      %v3028 = vadd.f32 %v2696, %v2892
      %v3029 = vadd.f32 %v2697, %v2895
      %v3030 = vadd.f32 %v2698, %v2900
      %v3031 = vadd.f32 %v2699, %v2903
      %v3032 = vadd.f32 %v2700, %v2908
      %v3033 = vadd.f32 %v2701, %v2911
      %v3034 = vadd.f32 %v2702, %v2916
      %v3035 = vadd.f32 %v2703, %v2919
      %v3036 = vadd.f32 %v2704, %v2924
      %v3037 = vadd.f32 %v2705, %v2927
      %v3038 = vadd.f32 %v2706, %v2932
      %v3039 = vadd.f32 %v2707, %v2935
      %v3040 = vadd.f32 %v2708, %v2940
      %v3041 = vadd.f32 %v2709, %v2943
      %v3042 = vadd.f32 %v2710, %v2948
      %v3043 = vadd.f32 %v2711, %v2951
      %v3044 = vadd.f32 %v2712, %v2956
      %v3045 = vadd.f32 %v2713, %v2959
      %v3046 = vadd.f32 %v2714, %v2964
      %v3047 = vadd.f32 %v2715, %v2967
      %v3048 = vadd.f32 %v2716, %v2972
      %v3049 = vadd.f32 %v2717, %v2975
      %v3050 = vadd.f32 %v2718, %v2980
      %v3051 = vadd.f32 %v2719, %v2983
      %v3052 = vadd.f32 %v2720, %v2988
      %v3053 = vadd.f32 %v2721, %v2991
      %v3054 = vadd.f32 %v2722, %v2996
      %v3055 = vadd.f32 %v2723, %v2999
      %v3056 = vadd.f32 %v2724, %v3004
      %v3057 = vadd.f32 %v2725, %v3007
      %v3058 = vadd.f32 %v2726, %v3012
      %v3059 = vadd.f32 %v2727, %v3015
      %v3060 = vadd.f32 %v2728, %v3020
      %v3061 = vadd.f32 %v2729, %v3023
      %v3062 = vld [vmem:[#allocation2 + $0x25] sm:$0xff]
      %v3063 = vld [vmem:[#allocation2 + $0x2d] sm:$0xff]
      %v3064 = vld [vmem:[#allocation2 + $0x35] sm:$0xff]
      %v3065 = vld [vmem:[#allocation2 + $0x3d] sm:$0xff]
      %v3066 = vld [vmem:[#allocation2 + $0x45] sm:$0xff]
      %v3067 = vld [vmem:[#allocation2 + $0x4d] sm:$0xff]
      %v3068 = vld [vmem:[#allocation2 + $0x55] sm:$0xff]
      %v3069 = vld [vmem:[#allocation2 + $0x5d] sm:$0xff]
      %v3070 = vld [vmem:[#allocation2 + $0x65] sm:$0xff]
      %v3071 = vld [vmem:[#allocation2 + $0x6d] sm:$0xff]
      %v3072 = vld [vmem:[#allocation2 + $0x75] sm:$0xff]
      %v3073 = vld [vmem:[#allocation2 + $0x7d] sm:$0xff]
      %v3074 = vld [vmem:[#allocation2 + $0x85] sm:$0xff]
      %v3075 = vld [vmem:[#allocation2 + $0x8d] sm:$0xff]
      %v3076 = vld [vmem:[#allocation2 + $0x95] sm:$0xff]
      %v3077 = vld [vmem:[#allocation2 + $0x9d] sm:$0xff]
      %v3078 = vld [vmem:[#allocation2 + $0xa5] sm:$0xff]
      %v3079 = vld [vmem:[#allocation2 + $0xad] sm:$0xff]
      %v3080 = vld [vmem:[#allocation2 + $0xb5] sm:$0xff]
      %v3081 = vld [vmem:[#allocation2 + $0xbd] sm:$0xff]
      %v3082 = vld [vmem:[#allocation2 + $0xc5] sm:$0xff]
      %v3083 = vld [vmem:[#allocation2 + $0xcd] sm:$0xff]
      %v3084 = vld [vmem:[#allocation2 + $0xd5] sm:$0xff]
      %v3085 = vld [vmem:[#allocation2 + $0xdd] sm:$0xff]
      %v3086 = vld [vmem:[#allocation2 + $0xe5] sm:$0xff]
      %v3087 = vld [vmem:[#allocation2 + $0xed] sm:$0xff]
      %v3088 = vld [vmem:[#allocation2 + $0xf5] sm:$0xff]
      %v3089 = vld [vmem:[#allocation2 + $0xfd] sm:$0xff]
      %v3090 = vld [vmem:[#allocation2 + $0x105] sm:$0xff]
      %v3091 = vld [vmem:[#allocation2 + $0x10d] sm:$0xff]
      %v3092 = vld [vmem:[#allocation2 + $0x115] sm:$0xff]
      %v3093 = vld [vmem:[#allocation2 + $0x11d] sm:$0xff]
      %v3094 = vld [vmem:[#allocation2 + $0x125] sm:$0xff]
      %v3095 = vld [vmem:[#allocation2 + $0x12d] sm:$0xff]
      %v3096 = vld [vmem:[#allocation2 + $0x135] sm:$0xff]
      %v3097 = vld [vmem:[#allocation2 + $0x13d] sm:$0xff]
      %v3098 = vpack.c.bf16 %v3063, %v3062
      %v3099 = vpack.c.bf16 %v3065, %v3064
      %v3100 = vpack.c.bf16 %v3067, %v3066
      %v3101 = vpack.c.bf16 %v3069, %v3068
      %v3102 = vpack.c.bf16 %v3071, %v3070
      %v3103 = vpack.c.bf16 %v3073, %v3072
      %v3104 = vpack.c.bf16 %v3075, %v3074
      %v3105 = vpack.c.bf16 %v3077, %v3076
      %v3106 = vpack.c.bf16 %v3079, %v3078
      %v3107 = vpack.c.bf16 %v3081, %v3080
      %v3108 = vpack.c.bf16 %v3083, %v3082
      %v3109 = vpack.c.bf16 %v3085, %v3084
      %v3110 = vpack.c.bf16 %v3087, %v3086
      %v3111 = vpack.c.bf16 %v3089, %v3088
      %v3112 = vpack.c.bf16 %v3091, %v3090
      %v3113 = vpack.c.bf16 %v3093, %v3092
      %v3114 = vpack.c.bf16 %v3095, %v3094
      %v3115 = vpack.c.bf16 %v3097, %v3096
      %s3116 = scalar_lea.vmem %s3, 448
      %v3117 = vld [vmem:[%s3116] sm:$0xf]
      %v3118 = vld [vmem:[%s3116 + $0x4] sm:$0xf]
      %v3119 = vld [vmem:[%s3116 + $0x8] sm:$0xf]
      %v3120 = vld [vmem:[%s3116 + $0xc] sm:$0xf]
      %v3121 = vld [vmem:[%s3116 + $0x10] sm:$0xf]
      %v3122 = vld [vmem:[%s3116 + $0x14] sm:$0xf]
      %v3123 = vld [vmem:[%s3116 + $0x18] sm:$0xf]
      %v3124 = vld [vmem:[%s3116 + $0x1c] sm:$0xf]
      %v3125 = vld [vmem:[%s3116 + $0x20] sm:$0xf]
      %v3126 = vld [vmem:[%s3116 + $0x24] sm:$0xf]
      %v3127 = vld [vmem:[%s3116 + $0x28] sm:$0xf]
      %v3128 = vld [vmem:[%s3116 + $0x2c] sm:$0xf]
      %v3129 = vld [vmem:[%s3116 + $0x30] sm:$0xf]
      %v3130 = vld [vmem:[%s3116 + $0x34] sm:$0xf]
      %v3131 = vld [vmem:[%s3116 + $0x38] sm:$0xf]
      %v3132 = vld [vmem:[%s3116 + $0x3c] sm:$0xf]
      %v3149 = vunpack.c.l.b16 %v3117
      %v3150 = vunpack.c.l.b16 %v3118
      %v3151 = vunpack.c.l.b16 %v3119
      %v3152 = vunpack.c.l.b16 %v3120
      %v3153 = vunpack.c.l.b16 %v3121
      %v3154 = vunpack.c.l.b16 %v3122
      %v3155 = vunpack.c.l.b16 %v3123
      %v3156 = vunpack.c.l.b16 %v3124
      %v3157 = vunpack.c.l.b16 %v3125
      %v3158 = vunpack.c.l.b16 %v3126
      %v3159 = vunpack.c.l.b16 %v3127
      %v3160 = vunpack.c.l.b16 %v3128
      %v3161 = vunpack.c.l.b16 %v3129
      %v3162 = vunpack.c.l.b16 %v3130
      %v3163 = vunpack.c.l.b16 %v3131
      %v3164 = vunpack.c.l.b16 %v3132
      %v3165 = vpack.c.b16 %v3150, %v3149
      %v3166 = vpack.c.b16 %v3152, %v3151
      %v3167 = vpack.c.b16 %v3154, %v3153
      %v3168 = vpack.c.b16 %v3156, %v3155
      %v3169 = vpack.c.b16 %v3158, %v3157
      %v3170 = vpack.c.b16 %v3160, %v3159
      %v3171 = vpack.c.b16 %v3162, %v3161
      %v3172 = vpack.c.b16 %v3164, %v3163
      %3181 = vmatprep.subr.bf16.mxu0 0
      %3182 = vmatpush1.bf16.msra.mxu0 %v3172
      %3183 = vmatprep.subr.bf16.mxu0 0
      %3184 = vmatpush1.bf16.msra.mxu0 %v3171
      %3185 = vmatprep.subr.bf16.mxu0 0
      %3186 = vmatpush1.bf16.msra.mxu0 %v3170
      %3187 = vmatprep.subr.bf16.mxu0 0
      %3188 = vmatpush1.bf16.msra.mxu0 %v3169
      %3189 = vmatprep.subr.bf16.mxu0 0
      %3190 = vmatpush1.bf16.msra.mxu0 %v3168
      %3191 = vmatprep.subr.bf16.mxu0 0
      %3192 = vmatpush1.bf16.msra.mxu0 %v3167
      %3193 = vmatprep.subr.bf16.mxu0 0
      %3194 = vmatpush1.bf16.msra.mxu0 %v3166
      %3195 = vmatprep.subr.bf16.mxu0 0
      %3196 = vmatpush1.bf16.msra.mxu0 %v3165
      %3197 = vmatprep.subr.bf16.mxu0 0
      %3198 = vmatpush2.bf16.msra.mxu0 0
      %3199 = vmatprep.subr.bf16.mxu0 0
      %3200 = vmatpush2.bf16.msra.mxu0 0
      %3201 = vmatprep.subr.bf16.mxu0 0
      %3202 = vmatpush2.bf16.msra.mxu0 0
      %3203 = vmatprep.subr.bf16.mxu0 0
      %3204 = vmatpush2.bf16.msra.mxu0 0
      %3205 = vmatprep.subr.bf16.mxu0 0
      %3206 = vmatpush2.bf16.msra.mxu0 0
      %3207 = vmatprep.subr.bf16.mxu0 0
      %3208 = vmatpush2.bf16.msra.mxu0 0
      %3209 = vmatprep.subr.bf16.mxu0 0
      %3210 = vmatpush2.bf16.msra.mxu0 0
      %3211 = vmatprep.subr.bf16.mxu0 0
      %3212 = vmatpush2.bf16.msra.mxu0 0
      %3213 = vmatprep.mubr.bf16.mxu0 0
      %3214 = vmatmul.mubr.bf16.gmra.mxu0 %v3098
      %v3215 = vpop.f32.mrf.mxu0
      %v3216 = vadd.f32 0.0, %v3215
      %v3217 = vpop.f32.mrf.mxu0
      %v3218 = vpop.f32.mrf.mxu0
      %v3219 = vadd.f32 0.0, %v3218
      %v3220 = vpop.f32.mrf.mxu0
      %3221 = vmatprep.mubr.bf16.mxu0 0
      %3222 = vmatmul.mubr.bf16.gmra.mxu0 %v3099
      %v3223 = vpop.f32.mrf.mxu0
      %v3224 = vadd.f32 0.0, %v3223
      %v3225 = vpop.f32.mrf.mxu0
      %v3226 = vpop.f32.mrf.mxu0
      %v3227 = vadd.f32 0.0, %v3226
      %v3228 = vpop.f32.mrf.mxu0
      %3229 = vmatprep.mubr.bf16.mxu0 0
      %3230 = vmatmul.mubr.bf16.gmra.mxu0 %v3100
      %v3231 = vpop.f32.mrf.mxu0
      %v3232 = vadd.f32 0.0, %v3231
      %v3233 = vpop.f32.mrf.mxu0
      %v3234 = vpop.f32.mrf.mxu0
      %v3235 = vadd.f32 0.0, %v3234
      %v3236 = vpop.f32.mrf.mxu0
      %3237 = vmatprep.mubr.bf16.mxu0 0
      %3238 = vmatmul.mubr.bf16.gmra.mxu0 %v3101
      %v3239 = vpop.f32.mrf.mxu0
      %v3240 = vadd.f32 0.0, %v3239
      %v3241 = vpop.f32.mrf.mxu0
      %v3242 = vpop.f32.mrf.mxu0
      %v3243 = vadd.f32 0.0, %v3242
      %v3244 = vpop.f32.mrf.mxu0
      %3245 = vmatprep.mubr.bf16.mxu0 0
      %3246 = vmatmul.mubr.bf16.gmra.mxu0 %v3102
      %v3247 = vpop.f32.mrf.mxu0
      %v3248 = vadd.f32 0.0, %v3247
      %v3249 = vpop.f32.mrf.mxu0
      %v3250 = vpop.f32.mrf.mxu0
      %v3251 = vadd.f32 0.0, %v3250
      %v3252 = vpop.f32.mrf.mxu0
      %3253 = vmatprep.mubr.bf16.mxu0 0
      %3254 = vmatmul.mubr.bf16.gmra.mxu0 %v3103
      %v3255 = vpop.f32.mrf.mxu0
      %v3256 = vadd.f32 0.0, %v3255
      %v3257 = vpop.f32.mrf.mxu0
      %v3258 = vpop.f32.mrf.mxu0
      %v3259 = vadd.f32 0.0, %v3258
      %v3260 = vpop.f32.mrf.mxu0
      %3261 = vmatprep.mubr.bf16.mxu0 0
      %3262 = vmatmul.mubr.bf16.gmra.mxu0 %v3104
      %v3263 = vpop.f32.mrf.mxu0
      %v3264 = vadd.f32 0.0, %v3263
      %v3265 = vpop.f32.mrf.mxu0
      %v3266 = vpop.f32.mrf.mxu0
      %v3267 = vadd.f32 0.0, %v3266
      %v3268 = vpop.f32.mrf.mxu0
      %3269 = vmatprep.mubr.bf16.mxu0 0
      %3270 = vmatmul.mubr.bf16.gmra.mxu0 %v3105
      %v3271 = vpop.f32.mrf.mxu0
      %v3272 = vadd.f32 0.0, %v3271
      %v3273 = vpop.f32.mrf.mxu0
      %v3274 = vpop.f32.mrf.mxu0
      %v3275 = vadd.f32 0.0, %v3274
      %v3276 = vpop.f32.mrf.mxu0
      %3277 = vmatprep.mubr.bf16.mxu0 0
      %3278 = vmatmul.mubr.bf16.gmra.mxu0 %v3106
      %v3279 = vpop.f32.mrf.mxu0
      %v3280 = vadd.f32 0.0, %v3279
      %v3281 = vpop.f32.mrf.mxu0
      %v3282 = vpop.f32.mrf.mxu0
      %v3283 = vadd.f32 0.0, %v3282
      %v3284 = vpop.f32.mrf.mxu0
      %3285 = vmatprep.mubr.bf16.mxu0 0
      %3286 = vmatmul.mubr.bf16.gmra.mxu0 %v3107
      %v3287 = vpop.f32.mrf.mxu0
      %v3288 = vadd.f32 0.0, %v3287
      %v3289 = vpop.f32.mrf.mxu0
      %v3290 = vpop.f32.mrf.mxu0
      %v3291 = vadd.f32 0.0, %v3290
      %v3292 = vpop.f32.mrf.mxu0
      %3293 = vmatprep.mubr.bf16.mxu0 0
      %3294 = vmatmul.mubr.bf16.gmra.mxu0 %v3108
      %v3295 = vpop.f32.mrf.mxu0
      %v3296 = vadd.f32 0.0, %v3295
      %v3297 = vpop.f32.mrf.mxu0
      %v3298 = vpop.f32.mrf.mxu0
      %v3299 = vadd.f32 0.0, %v3298
      %v3300 = vpop.f32.mrf.mxu0
      %3301 = vmatprep.mubr.bf16.mxu0 0
      %3302 = vmatmul.mubr.bf16.gmra.mxu0 %v3109
      %v3303 = vpop.f32.mrf.mxu0
      %v3304 = vadd.f32 0.0, %v3303
      %v3305 = vpop.f32.mrf.mxu0
      %v3306 = vpop.f32.mrf.mxu0
      %v3307 = vadd.f32 0.0, %v3306
      %v3308 = vpop.f32.mrf.mxu0
      %3309 = vmatprep.mubr.bf16.mxu0 0
      %3310 = vmatmul.mubr.bf16.gmra.mxu0 %v3110
      %v3311 = vpop.f32.mrf.mxu0
      %v3312 = vadd.f32 0.0, %v3311
      %v3313 = vpop.f32.mrf.mxu0
      %v3314 = vpop.f32.mrf.mxu0
      %v3315 = vadd.f32 0.0, %v3314
      %v3316 = vpop.f32.mrf.mxu0
      %3317 = vmatprep.mubr.bf16.mxu0 0
      %3318 = vmatmul.mubr.bf16.gmra.mxu0 %v3111
      %v3319 = vpop.f32.mrf.mxu0
      %v3320 = vadd.f32 0.0, %v3319
      %v3321 = vpop.f32.mrf.mxu0
      %v3322 = vpop.f32.mrf.mxu0
      %v3323 = vadd.f32 0.0, %v3322
      %v3324 = vpop.f32.mrf.mxu0
      %3325 = vmatprep.mubr.bf16.mxu0 0
      %3326 = vmatmul.mubr.bf16.gmra.mxu0 %v3112
      %v3327 = vpop.f32.mrf.mxu0
      %v3328 = vadd.f32 0.0, %v3327
      %v3329 = vpop.f32.mrf.mxu0
      %v3330 = vpop.f32.mrf.mxu0
      %v3331 = vadd.f32 0.0, %v3330
      %v3332 = vpop.f32.mrf.mxu0
      %3333 = vmatprep.mubr.bf16.mxu0 0
      %3334 = vmatmul.mubr.bf16.gmra.mxu0 %v3113
      %v3335 = vpop.f32.mrf.mxu0
      %v3336 = vadd.f32 0.0, %v3335
      %v3337 = vpop.f32.mrf.mxu0
      %v3338 = vpop.f32.mrf.mxu0
      %v3339 = vadd.f32 0.0, %v3338
      %v3340 = vpop.f32.mrf.mxu0
      %3341 = vmatprep.mubr.bf16.mxu0 0
      %3342 = vmatmul.mubr.bf16.gmra.mxu0 %v3114
      %v3343 = vpop.f32.mrf.mxu0
      %v3344 = vadd.f32 0.0, %v3343
      %v3345 = vpop.f32.mrf.mxu0
      %v3346 = vpop.f32.mrf.mxu0
      %v3347 = vadd.f32 0.0, %v3346
      %v3348 = vpop.f32.mrf.mxu0
      %3349 = vmatprep.mubr.bf16.mxu0 0
      %3350 = vmatmul.mubr.bf16.gmra.mxu0 %v3115
      %v3351 = vpop.f32.mrf.mxu0
      %v3352 = vadd.f32 0.0, %v3351
      %v3353 = vpop.f32.mrf.mxu0
      %v3354 = vpop.f32.mrf.mxu0
      %v3355 = vadd.f32 0.0, %v3354
      %v3356 = vpop.f32.mrf.mxu0
      %3357 = vdwg.mxu0
      %v3358 = vadd.f32 %v3026, %v3216
      %v3359 = vadd.f32 %v3027, %v3219
      %v3360 = vadd.f32 %v3028, %v3224
      %v3361 = vadd.f32 %v3029, %v3227
      %v3362 = vadd.f32 %v3030, %v3232
      %v3363 = vadd.f32 %v3031, %v3235
      %v3364 = vadd.f32 %v3032, %v3240
      %v3365 = vadd.f32 %v3033, %v3243
      %v3366 = vadd.f32 %v3034, %v3248
      %v3367 = vadd.f32 %v3035, %v3251
      %v3368 = vadd.f32 %v3036, %v3256
      %v3369 = vadd.f32 %v3037, %v3259
      %v3370 = vadd.f32 %v3038, %v3264
      %v3371 = vadd.f32 %v3039, %v3267
      %v3372 = vadd.f32 %v3040, %v3272
      %v3373 = vadd.f32 %v3041, %v3275
      %v3374 = vadd.f32 %v3042, %v3280
      %v3375 = vadd.f32 %v3043, %v3283
      %v3376 = vadd.f32 %v3044, %v3288
      %v3377 = vadd.f32 %v3045, %v3291
      %v3378 = vadd.f32 %v3046, %v3296
      %v3379 = vadd.f32 %v3047, %v3299
      %v3380 = vadd.f32 %v3048, %v3304
      %v3381 = vadd.f32 %v3049, %v3307
      %v3382 = vadd.f32 %v3050, %v3312
      %v3383 = vadd.f32 %v3051, %v3315
      %v3384 = vadd.f32 %v3052, %v3320
      %v3385 = vadd.f32 %v3053, %v3323
      %v3386 = vadd.f32 %v3054, %v3328
      %v3387 = vadd.f32 %v3055, %v3331
      %v3388 = vadd.f32 %v3056, %v3336
      %v3389 = vadd.f32 %v3057, %v3339
      %v3390 = vadd.f32 %v3058, %v3344
      %v3391 = vadd.f32 %v3059, %v3347
      %v3392 = vadd.f32 %v3060, %v3352
      %v3393 = vadd.f32 %v3061, %v3355
      %v3394 = vld [vmem:[#allocation2 + $0x26] sm:$0xff]
      %v3395 = vld [vmem:[#allocation2 + $0x2e] sm:$0xff]
      %v3396 = vld [vmem:[#allocation2 + $0x36] sm:$0xff]
      %v3397 = vld [vmem:[#allocation2 + $0x3e] sm:$0xff]
      %v3398 = vld [vmem:[#allocation2 + $0x46] sm:$0xff]
      %v3399 = vld [vmem:[#allocation2 + $0x4e] sm:$0xff]
      %v3400 = vld [vmem:[#allocation2 + $0x56] sm:$0xff]
      %v3401 = vld [vmem:[#allocation2 + $0x5e] sm:$0xff]
      %v3402 = vld [vmem:[#allocation2 + $0x66] sm:$0xff]
      %v3403 = vld [vmem:[#allocation2 + $0x6e] sm:$0xff]
      %v3404 = vld [vmem:[#allocation2 + $0x76] sm:$0xff]
      %v3405 = vld [vmem:[#allocation2 + $0x7e] sm:$0xff]
      %v3406 = vld [vmem:[#allocation2 + $0x86] sm:$0xff]
      %v3407 = vld [vmem:[#allocation2 + $0x8e] sm:$0xff]
      %v3408 = vld [vmem:[#allocation2 + $0x96] sm:$0xff]
      %v3409 = vld [vmem:[#allocation2 + $0x9e] sm:$0xff]
      %v3410 = vld [vmem:[#allocation2 + $0xa6] sm:$0xff]
      %v3411 = vld [vmem:[#allocation2 + $0xae] sm:$0xff]
      %v3412 = vld [vmem:[#allocation2 + $0xb6] sm:$0xff]
      %v3413 = vld [vmem:[#allocation2 + $0xbe] sm:$0xff]
      %v3414 = vld [vmem:[#allocation2 + $0xc6] sm:$0xff]
      %v3415 = vld [vmem:[#allocation2 + $0xce] sm:$0xff]
      %v3416 = vld [vmem:[#allocation2 + $0xd6] sm:$0xff]
      %v3417 = vld [vmem:[#allocation2 + $0xde] sm:$0xff]
      %v3418 = vld [vmem:[#allocation2 + $0xe6] sm:$0xff]
      %v3419 = vld [vmem:[#allocation2 + $0xee] sm:$0xff]
      %v3420 = vld [vmem:[#allocation2 + $0xf6] sm:$0xff]
      %v3421 = vld [vmem:[#allocation2 + $0xfe] sm:$0xff]
      %v3422 = vld [vmem:[#allocation2 + $0x106] sm:$0xff]
      %v3423 = vld [vmem:[#allocation2 + $0x10e] sm:$0xff]
      %v3424 = vld [vmem:[#allocation2 + $0x116] sm:$0xff]
      %v3425 = vld [vmem:[#allocation2 + $0x11e] sm:$0xff]
      %v3426 = vld [vmem:[#allocation2 + $0x126] sm:$0xff]
      %v3427 = vld [vmem:[#allocation2 + $0x12e] sm:$0xff]
      %v3428 = vld [vmem:[#allocation2 + $0x136] sm:$0xff]
      %v3429 = vld [vmem:[#allocation2 + $0x13e] sm:$0xff]
      %v3430 = vpack.c.bf16 %v3395, %v3394
      %v3431 = vpack.c.bf16 %v3397, %v3396
      %v3432 = vpack.c.bf16 %v3399, %v3398
      %v3433 = vpack.c.bf16 %v3401, %v3400
      %v3434 = vpack.c.bf16 %v3403, %v3402
      %v3435 = vpack.c.bf16 %v3405, %v3404
      %v3436 = vpack.c.bf16 %v3407, %v3406
      %v3437 = vpack.c.bf16 %v3409, %v3408
      %v3438 = vpack.c.bf16 %v3411, %v3410
      %v3439 = vpack.c.bf16 %v3413, %v3412
      %v3440 = vpack.c.bf16 %v3415, %v3414
      %v3441 = vpack.c.bf16 %v3417, %v3416
      %v3442 = vpack.c.bf16 %v3419, %v3418
      %v3443 = vpack.c.bf16 %v3421, %v3420
      %v3444 = vpack.c.bf16 %v3423, %v3422
      %v3445 = vpack.c.bf16 %v3425, %v3424
      %v3446 = vpack.c.bf16 %v3427, %v3426
      %v3447 = vpack.c.bf16 %v3429, %v3428
      %s3448 = scalar_lea.vmem %s3, 512
      %v3449 = vld [vmem:[%s3448] sm:$0xf]
      %v3450 = vld [vmem:[%s3448 + $0x4] sm:$0xf]
      %v3451 = vld [vmem:[%s3448 + $0x8] sm:$0xf]
      %v3452 = vld [vmem:[%s3448 + $0xc] sm:$0xf]
      %v3453 = vld [vmem:[%s3448 + $0x10] sm:$0xf]
      %v3454 = vld [vmem:[%s3448 + $0x14] sm:$0xf]
      %v3455 = vld [vmem:[%s3448 + $0x18] sm:$0xf]
      %v3456 = vld [vmem:[%s3448 + $0x1c] sm:$0xf]
      %v3457 = vld [vmem:[%s3448 + $0x20] sm:$0xf]
      %v3458 = vld [vmem:[%s3448 + $0x24] sm:$0xf]
      %v3459 = vld [vmem:[%s3448 + $0x28] sm:$0xf]
      %v3460 = vld [vmem:[%s3448 + $0x2c] sm:$0xf]
      %v3461 = vld [vmem:[%s3448 + $0x30] sm:$0xf]
      %v3462 = vld [vmem:[%s3448 + $0x34] sm:$0xf]
      %v3463 = vld [vmem:[%s3448 + $0x38] sm:$0xf]
      %v3464 = vld [vmem:[%s3448 + $0x3c] sm:$0xf]
      %v3481 = vunpack.c.l.b16 %v3449
      %v3482 = vunpack.c.l.b16 %v3450
      %v3483 = vunpack.c.l.b16 %v3451
      %v3484 = vunpack.c.l.b16 %v3452
      %v3485 = vunpack.c.l.b16 %v3453
      %v3486 = vunpack.c.l.b16 %v3454
      %v3487 = vunpack.c.l.b16 %v3455
      %v3488 = vunpack.c.l.b16 %v3456
      %v3489 = vunpack.c.l.b16 %v3457
      %v3490 = vunpack.c.l.b16 %v3458
      %v3491 = vunpack.c.l.b16 %v3459
      %v3492 = vunpack.c.l.b16 %v3460
      %v3493 = vunpack.c.l.b16 %v3461
      %v3494 = vunpack.c.l.b16 %v3462
      %v3495 = vunpack.c.l.b16 %v3463
      %v3496 = vunpack.c.l.b16 %v3464
      %v3497 = vpack.c.b16 %v3482, %v3481
      %v3498 = vpack.c.b16 %v3484, %v3483
      %v3499 = vpack.c.b16 %v3486, %v3485
      %v3500 = vpack.c.b16 %v3488, %v3487
      %v3501 = vpack.c.b16 %v3490, %v3489
      %v3502 = vpack.c.b16 %v3492, %v3491
      %v3503 = vpack.c.b16 %v3494, %v3493
      %v3504 = vpack.c.b16 %v3496, %v3495
      %3513 = vmatprep.subr.bf16.mxu0 0
      %3514 = vmatpush1.bf16.msra.mxu0 %v3504
      %3515 = vmatprep.subr.bf16.mxu0 0
      %3516 = vmatpush1.bf16.msra.mxu0 %v3503
      %3517 = vmatprep.subr.bf16.mxu0 0
      %3518 = vmatpush1.bf16.msra.mxu0 %v3502
      %3519 = vmatprep.subr.bf16.mxu0 0
      %3520 = vmatpush1.bf16.msra.mxu0 %v3501
      %3521 = vmatprep.subr.bf16.mxu0 0
      %3522 = vmatpush1.bf16.msra.mxu0 %v3500
      %3523 = vmatprep.subr.bf16.mxu0 0
      %3524 = vmatpush1.bf16.msra.mxu0 %v3499
      %3525 = vmatprep.subr.bf16.mxu0 0
      %3526 = vmatpush1.bf16.msra.mxu0 %v3498
      %3527 = vmatprep.subr.bf16.mxu0 0
      %3528 = vmatpush1.bf16.msra.mxu0 %v3497
      %3529 = vmatprep.subr.bf16.mxu0 0
      %3530 = vmatpush2.bf16.msra.mxu0 0
      %3531 = vmatprep.subr.bf16.mxu0 0
      %3532 = vmatpush2.bf16.msra.mxu0 0
      %3533 = vmatprep.subr.bf16.mxu0 0
      %3534 = vmatpush2.bf16.msra.mxu0 0
      %3535 = vmatprep.subr.bf16.mxu0 0
      %3536 = vmatpush2.bf16.msra.mxu0 0
      %3537 = vmatprep.subr.bf16.mxu0 0
      %3538 = vmatpush2.bf16.msra.mxu0 0
      %3539 = vmatprep.subr.bf16.mxu0 0
      %3540 = vmatpush2.bf16.msra.mxu0 0
      %3541 = vmatprep.subr.bf16.mxu0 0
      %3542 = vmatpush2.bf16.msra.mxu0 0
      %3543 = vmatprep.subr.bf16.mxu0 0
      %3544 = vmatpush2.bf16.msra.mxu0 0
      %3545 = vmatprep.mubr.bf16.mxu0 0
      %3546 = vmatmul.mubr.bf16.gmra.mxu0 %v3430
      %v3547 = vpop.f32.mrf.mxu0
      %v3548 = vadd.f32 0.0, %v3547
      %v3549 = vpop.f32.mrf.mxu0
      %v3550 = vpop.f32.mrf.mxu0
      %v3551 = vadd.f32 0.0, %v3550
      %v3552 = vpop.f32.mrf.mxu0
      %3553 = vmatprep.mubr.bf16.mxu0 0
      %3554 = vmatmul.mubr.bf16.gmra.mxu0 %v3431
      %v3555 = vpop.f32.mrf.mxu0
      %v3556 = vadd.f32 0.0, %v3555
      %v3557 = vpop.f32.mrf.mxu0
      %v3558 = vpop.f32.mrf.mxu0
      %v3559 = vadd.f32 0.0, %v3558
      %v3560 = vpop.f32.mrf.mxu0
      %3561 = vmatprep.mubr.bf16.mxu0 0
      %3562 = vmatmul.mubr.bf16.gmra.mxu0 %v3432
      %v3563 = vpop.f32.mrf.mxu0
      %v3564 = vadd.f32 0.0, %v3563
      %v3565 = vpop.f32.mrf.mxu0
      %v3566 = vpop.f32.mrf.mxu0
      %v3567 = vadd.f32 0.0, %v3566
      %v3568 = vpop.f32.mrf.mxu0
      %3569 = vmatprep.mubr.bf16.mxu0 0
      %3570 = vmatmul.mubr.bf16.gmra.mxu0 %v3433
      %v3571 = vpop.f32.mrf.mxu0
      %v3572 = vadd.f32 0.0, %v3571
      %v3573 = vpop.f32.mrf.mxu0
      %v3574 = vpop.f32.mrf.mxu0
      %v3575 = vadd.f32 0.0, %v3574
      %v3576 = vpop.f32.mrf.mxu0
      %3577 = vmatprep.mubr.bf16.mxu0 0
      %3578 = vmatmul.mubr.bf16.gmra.mxu0 %v3434
      %v3579 = vpop.f32.mrf.mxu0
      %v3580 = vadd.f32 0.0, %v3579
      %v3581 = vpop.f32.mrf.mxu0
      %v3582 = vpop.f32.mrf.mxu0
      %v3583 = vadd.f32 0.0, %v3582
      %v3584 = vpop.f32.mrf.mxu0
      %3585 = vmatprep.mubr.bf16.mxu0 0
      %3586 = vmatmul.mubr.bf16.gmra.mxu0 %v3435
      %v3587 = vpop.f32.mrf.mxu0
      %v3588 = vadd.f32 0.0, %v3587
      %v3589 = vpop.f32.mrf.mxu0
      %v3590 = vpop.f32.mrf.mxu0
      %v3591 = vadd.f32 0.0, %v3590
      %v3592 = vpop.f32.mrf.mxu0
      %3593 = vmatprep.mubr.bf16.mxu0 0
      %3594 = vmatmul.mubr.bf16.gmra.mxu0 %v3436
      %v3595 = vpop.f32.mrf.mxu0
      %v3596 = vadd.f32 0.0, %v3595
      %v3597 = vpop.f32.mrf.mxu0
      %v3598 = vpop.f32.mrf.mxu0
      %v3599 = vadd.f32 0.0, %v3598
      %v3600 = vpop.f32.mrf.mxu0
      %3601 = vmatprep.mubr.bf16.mxu0 0
      %3602 = vmatmul.mubr.bf16.gmra.mxu0 %v3437
      %v3603 = vpop.f32.mrf.mxu0
      %v3604 = vadd.f32 0.0, %v3603
      %v3605 = vpop.f32.mrf.mxu0
      %v3606 = vpop.f32.mrf.mxu0
      %v3607 = vadd.f32 0.0, %v3606
      %v3608 = vpop.f32.mrf.mxu0
      %3609 = vmatprep.mubr.bf16.mxu0 0
      %3610 = vmatmul.mubr.bf16.gmra.mxu0 %v3438
      %v3611 = vpop.f32.mrf.mxu0
      %v3612 = vadd.f32 0.0, %v3611
      %v3613 = vpop.f32.mrf.mxu0
      %v3614 = vpop.f32.mrf.mxu0
      %v3615 = vadd.f32 0.0, %v3614
      %v3616 = vpop.f32.mrf.mxu0
      %3617 = vmatprep.mubr.bf16.mxu0 0
      %3618 = vmatmul.mubr.bf16.gmra.mxu0 %v3439
      %v3619 = vpop.f32.mrf.mxu0
      %v3620 = vadd.f32 0.0, %v3619
      %v3621 = vpop.f32.mrf.mxu0
      %v3622 = vpop.f32.mrf.mxu0
      %v3623 = vadd.f32 0.0, %v3622
      %v3624 = vpop.f32.mrf.mxu0
      %3625 = vmatprep.mubr.bf16.mxu0 0
      %3626 = vmatmul.mubr.bf16.gmra.mxu0 %v3440
      %v3627 = vpop.f32.mrf.mxu0
      %v3628 = vadd.f32 0.0, %v3627
      %v3629 = vpop.f32.mrf.mxu0
      %v3630 = vpop.f32.mrf.mxu0
      %v3631 = vadd.f32 0.0, %v3630
      %v3632 = vpop.f32.mrf.mxu0
      %3633 = vmatprep.mubr.bf16.mxu0 0
      %3634 = vmatmul.mubr.bf16.gmra.mxu0 %v3441
      %v3635 = vpop.f32.mrf.mxu0
      %v3636 = vadd.f32 0.0, %v3635
      %v3637 = vpop.f32.mrf.mxu0
      %v3638 = vpop.f32.mrf.mxu0
      %v3639 = vadd.f32 0.0, %v3638
      %v3640 = vpop.f32.mrf.mxu0
      %3641 = vmatprep.mubr.bf16.mxu0 0
      %3642 = vmatmul.mubr.bf16.gmra.mxu0 %v3442
      %v3643 = vpop.f32.mrf.mxu0
      %v3644 = vadd.f32 0.0, %v3643
      %v3645 = vpop.f32.mrf.mxu0
      %v3646 = vpop.f32.mrf.mxu0
      %v3647 = vadd.f32 0.0, %v3646
      %v3648 = vpop.f32.mrf.mxu0
      %3649 = vmatprep.mubr.bf16.mxu0 0
      %3650 = vmatmul.mubr.bf16.gmra.mxu0 %v3443
      %v3651 = vpop.f32.mrf.mxu0
      %v3652 = vadd.f32 0.0, %v3651
      %v3653 = vpop.f32.mrf.mxu0
      %v3654 = vpop.f32.mrf.mxu0
      %v3655 = vadd.f32 0.0, %v3654
      %v3656 = vpop.f32.mrf.mxu0
      %3657 = vmatprep.mubr.bf16.mxu0 0
      %3658 = vmatmul.mubr.bf16.gmra.mxu0 %v3444
      %v3659 = vpop.f32.mrf.mxu0
      %v3660 = vadd.f32 0.0, %v3659
      %v3661 = vpop.f32.mrf.mxu0
      %v3662 = vpop.f32.mrf.mxu0
      %v3663 = vadd.f32 0.0, %v3662
      %v3664 = vpop.f32.mrf.mxu0
      %3665 = vmatprep.mubr.bf16.mxu0 0
      %3666 = vmatmul.mubr.bf16.gmra.mxu0 %v3445
      %v3667 = vpop.f32.mrf.mxu0
      %v3668 = vadd.f32 0.0, %v3667
      %v3669 = vpop.f32.mrf.mxu0
      %v3670 = vpop.f32.mrf.mxu0
      %v3671 = vadd.f32 0.0, %v3670
      %v3672 = vpop.f32.mrf.mxu0
      %3673 = vmatprep.mubr.bf16.mxu0 0
      %3674 = vmatmul.mubr.bf16.gmra.mxu0 %v3446
      %v3675 = vpop.f32.mrf.mxu0
      %v3676 = vadd.f32 0.0, %v3675
      %v3677 = vpop.f32.mrf.mxu0
      %v3678 = vpop.f32.mrf.mxu0
      %v3679 = vadd.f32 0.0, %v3678
      %v3680 = vpop.f32.mrf.mxu0
      %3681 = vmatprep.mubr.bf16.mxu0 0
      %3682 = vmatmul.mubr.bf16.gmra.mxu0 %v3447
      %v3683 = vpop.f32.mrf.mxu0
      %v3684 = vadd.f32 0.0, %v3683
      %v3685 = vpop.f32.mrf.mxu0
      %v3686 = vpop.f32.mrf.mxu0
      %v3687 = vadd.f32 0.0, %v3686
      %v3688 = vpop.f32.mrf.mxu0
      %3689 = vdwg.mxu0
      %v3690 = vadd.f32 %v3358, %v3548
      %v3691 = vadd.f32 %v3359, %v3551
      %v3692 = vadd.f32 %v3360, %v3556
      %v3693 = vadd.f32 %v3361, %v3559
      %v3694 = vadd.f32 %v3362, %v3564
      %v3695 = vadd.f32 %v3363, %v3567
      %v3696 = vadd.f32 %v3364, %v3572
      %v3697 = vadd.f32 %v3365, %v3575
      %v3698 = vadd.f32 %v3366, %v3580
      %v3699 = vadd.f32 %v3367, %v3583
      %v3700 = vadd.f32 %v3368, %v3588
      %v3701 = vadd.f32 %v3369, %v3591
      %v3702 = vadd.f32 %v3370, %v3596
      %v3703 = vadd.f32 %v3371, %v3599
      %v3704 = vadd.f32 %v3372, %v3604
      %v3705 = vadd.f32 %v3373, %v3607
      %v3706 = vadd.f32 %v3374, %v3612
      %v3707 = vadd.f32 %v3375, %v3615
      %v3708 = vadd.f32 %v3376, %v3620
      %v3709 = vadd.f32 %v3377, %v3623
      %v3710 = vadd.f32 %v3378, %v3628
      %v3711 = vadd.f32 %v3379, %v3631
      %v3712 = vadd.f32 %v3380, %v3636
      %v3713 = vadd.f32 %v3381, %v3639
      %v3714 = vadd.f32 %v3382, %v3644
      %v3715 = vadd.f32 %v3383, %v3647
      %v3716 = vadd.f32 %v3384, %v3652
      %v3717 = vadd.f32 %v3385, %v3655
      %v3718 = vadd.f32 %v3386, %v3660
      %v3719 = vadd.f32 %v3387, %v3663
      %v3720 = vadd.f32 %v3388, %v3668
      %v3721 = vadd.f32 %v3389, %v3671
      %v3722 = vadd.f32 %v3390, %v3676
      %v3723 = vadd.f32 %v3391, %v3679
      %v3724 = vadd.f32 %v3392, %v3684
      %v3725 = vadd.f32 %v3393, %v3687
      %v3726 = vld [vmem:[%s4] sm:$0x1]
      %v3728 = vlaneseq
      %v3729 = vshrl.u32 %v3728, 7
      %v3730 = vsub.s32 0, %v3729
      %v3731 = vrot.slane %v3726, %v3730
      %v3733 = vadd.f32 %v3690, %v3731
      %v3734 = vadd.f32 %v3691, %v3731
      %v3735 = vadd.f32 %v3692, %v3731
      %v3736 = vadd.f32 %v3693, %v3731
      %v3737 = vadd.f32 %v3694, %v3731
      %v3738 = vadd.f32 %v3695, %v3731
      %v3739 = vadd.f32 %v3696, %v3731
      %v3740 = vadd.f32 %v3697, %v3731
      %v3741 = vadd.f32 %v3698, %v3731
      %v3742 = vadd.f32 %v3699, %v3731
      %v3743 = vadd.f32 %v3700, %v3731
      %v3744 = vadd.f32 %v3701, %v3731
      %v3745 = vadd.f32 %v3702, %v3731
      %v3746 = vadd.f32 %v3703, %v3731
      %v3747 = vadd.f32 %v3704, %v3731
      %v3748 = vadd.f32 %v3705, %v3731
      %v3749 = vadd.f32 %v3706, %v3731
      %v3750 = vadd.f32 %v3707, %v3731
      %v3751 = vadd.f32 %v3708, %v3731
      %v3752 = vadd.f32 %v3709, %v3731
      %v3753 = vadd.f32 %v3710, %v3731
      %v3754 = vadd.f32 %v3711, %v3731
      %v3755 = vadd.f32 %v3712, %v3731
      %v3756 = vadd.f32 %v3713, %v3731
      %v3757 = vadd.f32 %v3714, %v3731
      %v3758 = vadd.f32 %v3715, %v3731
      %v3759 = vadd.f32 %v3716, %v3731
      %v3760 = vadd.f32 %v3717, %v3731
      %v3761 = vadd.f32 %v3718, %v3731
      %v3762 = vadd.f32 %v3719, %v3731
      %v3763 = vadd.f32 %v3720, %v3731
      %v3764 = vadd.f32 %v3721, %v3731
      %v3765 = vadd.f32 %v3722, %v3731
      %v3766 = vadd.f32 %v3723, %v3731
      %v3767 = vadd.f32 %v3724, %v3731
      %v3768 = vadd.f32 %v3725, %v3731
      %3769 = vst [vmem:[%s316] sm:$0xff] %v3733
      %3770 = vst [vmem:[%s316 + $0x8] sm:$0xff] %v3734
      %3771 = vst [vmem:[%s316 + $0x10] sm:$0xff] %v3735
      %3772 = vst [vmem:[%s316 + $0x18] sm:$0xff] %v3736
      %3773 = vst [vmem:[%s316 + $0x20] sm:$0xff] %v3737
      %3774 = vst [vmem:[%s316 + $0x28] sm:$0xff] %v3738
      %3775 = vst [vmem:[%s316 + $0x30] sm:$0xff] %v3739
      %3776 = vst [vmem:[%s316 + $0x38] sm:$0xff] %v3740
      %3777 = vst [vmem:[%s316 + $0x40] sm:$0xff] %v3741
      %3778 = vst [vmem:[%s316 + $0x48] sm:$0xff] %v3742
      %3779 = vst [vmem:[%s316 + $0x50] sm:$0xff] %v3743
      %3780 = vst [vmem:[%s316 + $0x58] sm:$0xff] %v3744
      %3781 = vst [vmem:[%s316 + $0x60] sm:$0xff] %v3745
      %3782 = vst [vmem:[%s316 + $0x68] sm:$0xff] %v3746
      %3783 = vst [vmem:[%s316 + $0x70] sm:$0xff] %v3747
      %3784 = vst [vmem:[%s316 + $0x78] sm:$0xff] %v3748
      %3785 = vst [vmem:[%s316 + $0x80] sm:$0xff] %v3749
      %3786 = vst [vmem:[%s316 + $0x88] sm:$0xff] %v3750
      %3787 = vst [vmem:[%s316 + $0x90] sm:$0xff] %v3751
      %3788 = vst [vmem:[%s316 + $0x98] sm:$0xff] %v3752
      %3789 = vst [vmem:[%s316 + $0xa0] sm:$0xff] %v3753
      %3790 = vst [vmem:[%s316 + $0xa8] sm:$0xff] %v3754
      %3791 = vst [vmem:[%s316 + $0xb0] sm:$0xff] %v3755
      %3792 = vst [vmem:[%s316 + $0xb8] sm:$0xff] %v3756
      %3793 = vst [vmem:[%s316 + $0xc0] sm:$0xff] %v3757
      %3794 = vst [vmem:[%s316 + $0xc8] sm:$0xff] %v3758
      %3795 = vst [vmem:[%s316 + $0xd0] sm:$0xff] %v3759
      %3796 = vst [vmem:[%s316 + $0xd8] sm:$0xff] %v3760
      %3797 = vst [vmem:[%s316 + $0xe0] sm:$0xff] %v3761
      %3798 = vst [vmem:[%s316 + $0xe8] sm:$0xff] %v3762
      %3799 = vst [vmem:[%s316 + $0xf0] sm:$0xff] %v3763
      %3800 = vst [vmem:[%s316 + $0xf8] sm:$0xff] %v3764
      %3801 = vst [vmem:[%s316 + $0x100] sm:$0xff] %v3765
      %3802 = vst [vmem:[%s316 + $0x108] sm:$0xff] %v3766
      %3803 = vst [vmem:[%s316 + $0x110] sm:$0xff] %v3767
      %3804 = vst [vmem:[%s316 + $0x118] sm:$0xff] %v3768
      %v3805 = vmul.f32 %v3733, %v521
      %v3806 = vmul.f32 %v3734, %v526
      %v3807 = vmul.f32 %v3735, %v531
      %v3808 = vmul.f32 %v3736, %v536
      %v3809 = vmul.f32 %v3737, %v541
      %v3810 = vmul.f32 %v3738, %v546
      %v3811 = vmul.f32 %v3739, %v551
      %v3812 = vmul.f32 %v3740, %v556
      %v3813 = vmul.f32 %v3741, %v561
      %v3814 = vmul.f32 %v3742, %v566
      %v3815 = vmul.f32 %v3743, %v571
      %v3816 = vmul.f32 %v3744, %v576
      %v3817 = vmul.f32 %v3745, %v581
      %v3818 = vmul.f32 %v3746, %v586
      %v3819 = vmul.f32 %v3747, %v591
      %v3820 = vmul.f32 %v3748, %v596
      %v3821 = vmul.f32 %v3749, %v601
      %v3822 = vmul.f32 %v3750, %v606
      %v3823 = vmul.f32 %v3751, %v611
      %v3824 = vmul.f32 %v3752, %v616
      %v3825 = vmul.f32 %v3753, %v621
      %v3826 = vmul.f32 %v3754, %v626
      %v3827 = vmul.f32 %v3755, %v631
      %v3828 = vmul.f32 %v3756, %v636
      %v3829 = vmul.f32 %v3757, %v641
      %v3830 = vmul.f32 %v3758, %v646
      %v3831 = vmul.f32 %v3759, %v651
      %v3832 = vmul.f32 %v3760, %v656
      %v3833 = vmul.f32 %v3761, %v661
      %v3834 = vmul.f32 %v3762, %v666
      %v3835 = vmul.f32 %v3763, %v671
      %v3836 = vmul.f32 %v3764, %v676
      %v3837 = vmul.f32 %v3765, %v681
      %v3838 = vmul.f32 %v3766, %v686
      %v3839 = vmul.f32 %v3767, %v691
      %v3840 = vmul.f32 %v3768, %v696
      %v3841 = vadd.f32 %v3805, %v3806
      %v3842 = vadd.f32 %v3841, %v3807
      %v3843 = vadd.f32 %v3842, %v3808
      %v3844 = vadd.f32 %v3843, %v3809
      %v3845 = vadd.f32 %v3844, %v3810
      %v3846 = vadd.f32 %v3845, %v3811
      %v3847 = vadd.f32 %v3846, %v3812
      %v3848 = vadd.f32 %v3847, %v3813
      %v3849 = vadd.f32 %v3848, %v3814
      %v3850 = vadd.f32 %v3849, %v3815
      %v3851 = vadd.f32 %v3850, %v3816
      %v3852 = vadd.f32 %v3851, %v3817
      %v3853 = vadd.f32 %v3852, %v3818
      %v3854 = vadd.f32 %v3853, %v3819
      %v3855 = vadd.f32 %v3854, %v3820
      %v3856 = vadd.f32 %v3855, %v3821
      %v3857 = vadd.f32 %v3856, %v3822
      %v3858 = vadd.f32 %v3857, %v3823
      %v3859 = vadd.f32 %v3858, %v3824
      %v3860 = vadd.f32 %v3859, %v3825
      %v3861 = vadd.f32 %v3860, %v3826
      %v3862 = vadd.f32 %v3861, %v3827
      %v3863 = vadd.f32 %v3862, %v3828
      %v3864 = vadd.f32 %v3863, %v3829
      %v3865 = vadd.f32 %v3864, %v3830
      %v3866 = vadd.f32 %v3865, %v3831
      %v3867 = vadd.f32 %v3866, %v3832
      %v3868 = vadd.f32 %v3867, %v3833
      %v3869 = vadd.f32 %v3868, %v3834
      %v3870 = vadd.f32 %v3869, %v3835
      %v3871 = vadd.f32 %v3870, %v3836
      %v3872 = vadd.f32 %v3871, %v3837
      %v3873 = vadd.f32 %v3872, %v3838
      %v3874 = vadd.f32 %v3873, %v3839
      %v3875 = vadd.f32 %v3874, %v3840
      %v3876 = vrot.slane %v3875, 4
      %v3877 = vadd.f32 %v3875, %v3876
      %v3878 = vrot.slane %v3877, 2
      %v3879 = vadd.f32 %v3877, %v3878
      %v3880 = vrot.slane %v3879, 1
      %v3881 = vadd.f32 %v3879, %v3880
      %3882 = vst [vmem:[%s319] sm:$0x1] %v3881
      %v3883 = vmul.f32 %v3805, %v3733
      %v3884 = vmul.f32 %v3806, %v3734
      %v3885 = vmul.f32 %v3807, %v3735
      %v3886 = vmul.f32 %v3808, %v3736
      %v3887 = vmul.f32 %v3809, %v3737
      %v3888 = vmul.f32 %v3810, %v3738
      %v3889 = vmul.f32 %v3811, %v3739
      %v3890 = vmul.f32 %v3812, %v3740
      %v3891 = vmul.f32 %v3813, %v3741
      %v3892 = vmul.f32 %v3814, %v3742
      %v3893 = vmul.f32 %v3815, %v3743
      %v3894 = vmul.f32 %v3816, %v3744
      %v3895 = vmul.f32 %v3817, %v3745
      %v3896 = vmul.f32 %v3818, %v3746
      %v3897 = vmul.f32 %v3819, %v3747
      %v3898 = vmul.f32 %v3820, %v3748
      %v3899 = vmul.f32 %v3821, %v3749
      %v3900 = vmul.f32 %v3822, %v3750
      %v3901 = vmul.f32 %v3823, %v3751
      %v3902 = vmul.f32 %v3824, %v3752
      %v3903 = vmul.f32 %v3825, %v3753
      %v3904 = vmul.f32 %v3826, %v3754
      %v3905 = vmul.f32 %v3827, %v3755
      %v3906 = vmul.f32 %v3828, %v3756
      %v3907 = vmul.f32 %v3829, %v3757
      %v3908 = vmul.f32 %v3830, %v3758
      %v3909 = vmul.f32 %v3831, %v3759
      %v3910 = vmul.f32 %v3832, %v3760
      %v3911 = vmul.f32 %v3833, %v3761
      %v3912 = vmul.f32 %v3834, %v3762
      %v3913 = vmul.f32 %v3835, %v3763
      %v3914 = vmul.f32 %v3836, %v3764
      %v3915 = vmul.f32 %v3837, %v3765
      %v3916 = vmul.f32 %v3838, %v3766
      %v3917 = vmul.f32 %v3839, %v3767
      %v3918 = vmul.f32 %v3840, %v3768
      %v3919 = vadd.f32 %v3883, %v3884
      %v3920 = vadd.f32 %v3919, %v3885
      %v3921 = vadd.f32 %v3920, %v3886
      %v3922 = vadd.f32 %v3921, %v3887
      %v3923 = vadd.f32 %v3922, %v3888
      %v3924 = vadd.f32 %v3923, %v3889
      %v3925 = vadd.f32 %v3924, %v3890
      %v3926 = vadd.f32 %v3925, %v3891
      %v3927 = vadd.f32 %v3926, %v3892
      %v3928 = vadd.f32 %v3927, %v3893
      %v3929 = vadd.f32 %v3928, %v3894
      %v3930 = vadd.f32 %v3929, %v3895
      %v3931 = vadd.f32 %v3930, %v3896
      %v3932 = vadd.f32 %v3931, %v3897
      %v3933 = vadd.f32 %v3932, %v3898
      %v3934 = vadd.f32 %v3933, %v3899
      %v3935 = vadd.f32 %v3934, %v3900
      %v3936 = vadd.f32 %v3935, %v3901
      %v3937 = vadd.f32 %v3936, %v3902
      %v3938 = vadd.f32 %v3937, %v3903
      %v3939 = vadd.f32 %v3938, %v3904
      %v3940 = vadd.f32 %v3939, %v3905
      %v3941 = vadd.f32 %v3940, %v3906
      %v3942 = vadd.f32 %v3941, %v3907
      %v3943 = vadd.f32 %v3942, %v3908
      %v3944 = vadd.f32 %v3943, %v3909
      %v3945 = vadd.f32 %v3944, %v3910
      %v3946 = vadd.f32 %v3945, %v3911
      %v3947 = vadd.f32 %v3946, %v3912
      %v3948 = vadd.f32 %v3947, %v3913
      %v3949 = vadd.f32 %v3948, %v3914
      %v3950 = vadd.f32 %v3949, %v3915
      %v3951 = vadd.f32 %v3950, %v3916
      %v3952 = vadd.f32 %v3951, %v3917
      %v3953 = vadd.f32 %v3952, %v3918
      %v3954 = vrot.slane %v3953, 4
      %v3955 = vadd.f32 %v3953, %v3954
      %v3956 = vrot.slane %v3955, 2
      %v3957 = vadd.f32 %v3955, %v3956
      %v3958 = vrot.slane %v3957, 1
      %v3959 = vadd.f32 %v3957, %v3958
      %3960 = vst [vmem:[%s322] sm:$0x1] %v3959
      %p3961 = scmp.lt.s32.totalorder %s20, 3
      %s3962 = scalar_select %p3961, %s20, 3
      %s3963 = smul.addr %s3962, 36
      %s3964 = smul.addr %s3963, 8
      %s3965 = scalar_lea.vmem %s6, %s3964
      %p3966 = scmp.lt.s32.totalorder %s20, 3
      %s3967 = scalar_select %p3966, %s20, 3
      %s3968 = scalar_lea.vmem %s7, %s3967
      %p3969 = scmp.lt.s32.totalorder %s20, 3
      %s3970 = scalar_select %p3969, %s20, 3
      %s3971 = scalar_lea.vmem %s8, %s3970
      // Predicated region
      $region45: #{double_convolution_forward.4} parent=43 // pred_check
        %p3972 = pneg %p169
      $region46: #{double_convolution_forward.4} parent=43 // pred_check_branch
        %3974 = sbr.rel (%p3972) target = $region48
      $region47: #{double_convolution_forward.4} parent=43 // pred_region
        _
      $region48: #{double_convolution_forward.4} parent=43 // pred_fallthru
        _
      // Predicated region
      $region49: #{double_convolution_forward.4} parent=43 // pred_check
        %p3975 = pneg %p195
      $region50: #{double_convolution_forward.4} parent=43 // pred_check_branch
        %3977 = sbr.rel (%p3975) target = $region52
      $region51: #{double_convolution_forward.4} parent=43 // pred_region
        _
      $region52: #{double_convolution_forward.4} parent=43 // pred_fallthru
        _
      // Predicated region
      $region53: #{double_convolution_forward.4} parent=43 // pred_check
        %p3978 = pneg %p221
      $region54: #{double_convolution_forward.4} parent=43 // pred_check_branch
        %3980 = sbr.rel (%p3978) target = $region56
      $region55: #{double_convolution_forward.4} parent=43 // pred_region
        _
      $region56: #{double_convolution_forward.4} parent=43 // pred_fallthru
        _
    $region44: #{double_convolution_forward.4} parent=5 // pred_fallthru
      _
    %p3981 = scmp.le.s32.totalorder 2, %s15
    // Predicated region
    $region57: #{double_convolution_forward.4} parent=5 // pred_check
      %p3982 = pneg %p3981
    $region58: #{double_convolution_forward.4} parent=5 // pred_check_branch
      %3984 = sbr.rel (%p3982) target = $region60
    $region59: #{double_convolution_forward.4} parent=5 // pred_region
      %s3985 = ssub.s32 %s15, 2
      // Predicated region
      $region61: #{double_convolution_forward.4} parent=59 // pred_check
        %p3986 = pneg %p175
      $region62: #{double_convolution_forward.4} parent=59 // pred_check_branch
        %3988 = sbr.rel (%p3986) target = $region64
      $region63: #{double_convolution_forward.4} parent=59 // pred_region
        %p3989 = scmp.lt.s32.totalorder %s21, 3
        %s3990 = scalar_select %p3989, %s21, 3
        %s3991 = smul.addr %s3990, 36
        %s3992 = smul.addr %s3991, 8
        %s3993 = scalar_lea.vmem %s6, %s3992
      $region64: #{double_convolution_forward.4} parent=59 // pred_fallthru
        _
      // Predicated region
      $region65: #{double_convolution_forward.4} parent=59 // pred_check
        %p3994 = pneg %p201
      $region66: #{double_convolution_forward.4} parent=59 // pred_check_branch
        %3996 = sbr.rel (%p3994) target = $region68
      $region67: #{double_convolution_forward.4} parent=59 // pred_region
        %p3997 = scmp.lt.s32.totalorder %s21, 3
        %s3998 = scalar_select %p3997, %s21, 3
        %s3999 = scalar_lea.vmem %s7, %s3998
      $region68: #{double_convolution_forward.4} parent=59 // pred_fallthru
        _
      // Predicated region
      $region69: #{double_convolution_forward.4} parent=59 // pred_check
        %p4000 = pneg %p227
      $region70: #{double_convolution_forward.4} parent=59 // pred_check_branch
        %4002 = sbr.rel (%p4000) target = $region72
      $region71: #{double_convolution_forward.4} parent=59 // pred_region
        %p4003 = scmp.lt.s32.totalorder %s21, 3
        %s4004 = scalar_select %p4003, %s21, 3
        %s4005 = scalar_lea.vmem %s8, %s4004
      $region72: #{double_convolution_forward.4} parent=59 // pred_fallthru
        _
    $region60: #{double_convolution_forward.4} parent=5 // pred_fallthru
      _
  $region6: #{double_convolution_forward.4} parent=0 // loop_footer
    %s19 = sadd.s32 1, %s15
  $region7: #{double_convolution_forward.4} parent=0 // loop_footer_branch
    %14 = sbr.rel target = $region3
  $region8: #{double_convolution_forward.4} parent=0 // loop_exit
    _

</llo_original>
